<compile_context>
chip_gen: v7x
topology: tpu7x:2x2x1
jax: 0.10.0
libtpu: 0.0.40
codegen_flags: <defaults>
</compile_context>

<pallas_src>
import functools

import jax
import jax.numpy as jnp
from jax import lax
from jax.experimental import pallas as pl
from jax.experimental.pallas import tpu as pltpu

LANE = 128      # TPU lane width: hidden / output dims padded to this (per gate)
SUBLANE = 8     # f32 sublane width: batch padded to this


def _round_up(x, m):
    return (x + m - 1) // m * m


# --------------------------- fused forward kernel -----------------------------
def _make_fused_kernel(num_layers, seq_len, b_pad, h_pad):
    """All LSTM layers + final Linear in one VMEM-resident kernel."""
    four_h = 4 * h_pad

    def kernel(*refs):
        x_ref = refs[0]
        layer_refs = refs[1:1 + 3 * num_layers]
        wfc_ref = refs[1 + 3 * num_layers]
        bfc_ref = refs[2 + 3 * num_layers]
        out_ref = refs[3 + 3 * num_layers]
        xs_scr, zx_scr, h_scr, c_scr = refs[4 + 3 * num_layers:]

        for layer in range(num_layers):
            wih_ref = layer_refs[3 * layer + 0]
            whh_ref = layer_refs[3 * layer + 1]
            b_ref = layer_refs[3 * layer + 2]

            # ---- batched input projection for all timesteps (one MXU call);
            #      bias folded in here once (hoisted out of the serial loop) ----
            if layer == 0:
                xs = x_ref[...]                      # (T, B_pad, D_in)
            else:
                xs = xs_scr[...]                     # (T, B_pad, H_pad)
            d_in = xs.shape[-1]
            zx = (jnp.dot(xs.reshape(seq_len * b_pad, d_in), wih_ref[...],
                          preferred_element_type=jnp.float32)
                  + b_ref[...])                      # (T*B_pad, 4*H_pad)
            zx_scr[...] = zx.reshape(seq_len, b_pad, four_h)

            # ---- serial recurrence: one small matmul per timestep ----
            h_scr[...] = jnp.zeros_like(h_scr)
            c_scr[...] = jnp.zeros_like(c_scr)

            def step(t, carry, whh_ref=whh_ref):
                h = h_scr[...]
                c = c_scr[...]
                z = zx_scr[t] + jnp.dot(h, whh_ref[...],
                                        preferred_element_type=jnp.float32)
                # PyTorch gate order [i, f, g, o]; each gate occupies a full
                # 128-lane-aligned block (H padded to LANE), so these slices
                # are unmasked full-tile ops.
                i = jax.nn.sigmoid(z[:, 0 * h_pad:1 * h_pad])
                f = jax.nn.sigmoid(z[:, 1 * h_pad:2 * h_pad])
                g = jnp.tanh(z[:, 2 * h_pad:3 * h_pad])
                o = jax.nn.sigmoid(z[:, 3 * h_pad:4 * h_pad])
                c_new = f * c + i * g
                h_new = o * jnp.tanh(c_new)
                h_scr[...] = h_new
                c_scr[...] = c_new
                xs_scr[t] = h_new                    # input for the next layer
                return carry

            lax.fori_loop(0, seq_len, step, 0, unroll=True)

        # ---- fused final Linear on the last layer's final hidden state ----
        out = (jnp.dot(h_scr[...], wfc_ref[...],
                       preferred_element_type=jnp.float32) + bfc_ref[...])
        out_ref[...] = out.astype(out_ref.dtype)

    return kernel


def _fused_forward(x_tm_pad, lstm_params, fc_w, fc_b):
    seq_len, b_pad, _ = x_tm_pad.shape
    h_pad = lstm_params[0][1].shape[0]           # W_hh is (H_pad, 4*H_pad)
    o_pad = fc_w.shape[1]
    num_layers = len(lstm_params)

    inputs = [x_tm_pad]
    for (wih, whh, b) in lstm_params:
        inputs += [wih, whh, b]
    inputs += [fc_w, fc_b]

    kernel = _make_fused_kernel(num_layers, seq_len, b_pad, h_pad)
    return pl.pallas_call(
        kernel,
        out_shape=jax.ShapeDtypeStruct((b_pad, o_pad), jnp.float32),
        scratch_shapes=[
            pltpu.VMEM((seq_len, b_pad, h_pad), jnp.float32),       # layer outputs
            pltpu.VMEM((seq_len, b_pad, 4 * h_pad), jnp.float32),   # x-projection
            pltpu.VMEM((b_pad, h_pad), jnp.float32),                # h carry
            pltpu.VMEM((b_pad, h_pad), jnp.float32),                # c carry
        ],
    )(*inputs)


@functools.partial(jax.jit, static_argnames=("output_size",))
def lstm_predictor_forward(x, padded_params, *, output_size):
    """x: (B, T, input_size) batch-first, like the PyTorch module."""
    B, _, _ = x.shape
    b_pad = _round_up(B, SUBLANE)
    x_tm = jnp.transpose(x, (1, 0, 2)).astype(jnp.float32)      # (T, B, D)
    x_tm = jnp.pad(x_tm, ((0, 0), (0, b_pad - B), (0, 0)))
    out_pad = _fused_forward(x_tm, padded_params["lstm"],
                             padded_params["fc_w"], padded_params["fc_b"])
    return out_pad[:B, :output_size]


# ------------------------------ parameters -----------------------------------
def init_params(key, input_size, hidden_size, num_layers, output_size):
    """Raw (unpadded) params; same init & layout convention as torch.nn.LSTM."""
    k = 1.0 / jnp.sqrt(hidden_size)
    params = {"lstm": []}
    for layer in range(num_layers):
        d_in = input_size if layer == 0 else hidden_size
        key, k1, k2, k3, k4 = jax.random.split(key, 5)
        w_ih = jax.random.uniform(k1, (4 * hidden_size, d_in), jnp.float32, -k, k)
        w_hh = jax.random.uniform(k2, (4 * hidden_size, hidden_size), jnp.float32, -k, k)
        b_ih = jax.random.uniform(k3, (4 * hidden_size,), jnp.float32, -k, k)
        b_hh = jax.random.uniform(k4, (4 * hidden_size,), jnp.float32, -k, k)
        params["lstm"].append(
            (w_ih.T, w_hh.T, (b_ih + b_hh).reshape(1, 4 * hidden_size)))
    key, k5, k6 = jax.random.split(key, 3)
    w_fc = jax.random.uniform(k5, (output_size, hidden_size), jnp.float32, -k, k)
    b_fc = jax.random.uniform(k6, (output_size,), jnp.float32, -k, k)
    params["fc_w_t"] = w_fc.T                        # (H, O)
    params["fc_b"] = b_fc.reshape(1, output_size)    # (1, O)
    return params


def _pad_gate_cols(w, h, h_pad):
    """Pad the last axis from 4*h (gates [i,f,g,o], each h wide) to 4*h_pad."""
    lead = w.shape[:-1]
    w = w.reshape(*lead, 4, h)
    w = jnp.pad(w, [(0, 0)] * len(lead) + [(0, 0), (0, h_pad - h)])
    return w.reshape(*lead, 4 * h_pad)


def pad_params(raw, hidden_size, output_size):
    """Zero-pad hidden/output dims to full 128-lane tiles, per gate."""
    h = hidden_size
    h_pad = _round_up(h, LANE)
    o_pad = _round_up(output_size, LANE)
    padded = {"lstm": []}
    for layer, (w_ih_t, w_hh_t, b) in enumerate(raw["lstm"]):
        w_ih_p = _pad_gate_cols(w_ih_t, h, h_pad)            # (D_in|H, 4*H_pad)
        if layer > 0:    # this layer's input is the previous layer's padded hidden
            w_ih_p = jnp.pad(w_ih_p, ((0, h_pad - h), (0, 0)))
        w_hh_p = _pad_gate_cols(w_hh_t, h, h_pad)
        w_hh_p = jnp.pad(w_hh_p, ((0, h_pad - h), (0, 0)))   # (H_pad, 4*H_pad)
        b_p = _pad_gate_cols(b, h, h_pad)                    # (1, 4*H_pad)
        padded["lstm"].append((w_ih_p, w_hh_p, b_p))
    padded["fc_w"] = jnp.pad(raw["fc_w_t"],
                             ((0, h_pad - h), (0, o_pad - output_size)))
    padded["fc_b"] = jnp.pad(raw["fc_b"], ((0, 0), (0, o_pad - output_size)))
    return padded


# --------------------------- pure-JAX reference -------------------------------
def _reference_forward(x, raw):
    x_tm = jnp.transpose(x, (1, 0, 2)).astype(jnp.float32)
    for (w_ih_t, w_hh_t, b) in raw["lstm"]:
        H = w_hh_t.shape[0]
        B = x_tm.shape[1]

        def step(carry, x_t, w_ih_t=w_ih_t, w_hh_t=w_hh_t, b=b, H=H):
            h, c = carry
            z = x_t @ w_ih_t + h @ w_hh_t + b
            i = jax.nn.sigmoid(z[:, 0 * H:1 * H])
            f = jax.nn.sigmoid(z[:, 1 * H:2 * H])
            g = jnp.tanh(z[:, 2 * H:3 * H])
            o = jax.nn.sigmoid(z[:, 3 * H:4 * H])
            c = f * c + i * g
            h = o * jnp.tanh(c)
            return (h, c), h

        init = (jnp.zeros((B, H), jnp.float32), jnp.zeros((B, H), jnp.float32))
        _, hs = lax.scan(step, init, x_tm)
        x_tm = hs
    return x_tm[-1] @ raw["fc_w_t"] + raw["fc_b"]


if __name__ == "__main__":
    B, T = 2, 8
    INPUT_SIZE, HIDDEN_SIZE, NUM_LAYERS, OUTPUT_SIZE = 16, 32, 2, 4

    key = jax.random.PRNGKey(0)
    key, kx = jax.random.split(key)
    x = jax.random.normal(kx, (B, T, INPUT_SIZE), dtype=jnp.float32)

    raw_params = init_params(key, INPUT_SIZE, HIDDEN_SIZE, NUM_LAYERS, OUTPUT_SIZE)
    padded_params = pad_params(raw_params, HIDDEN_SIZE, OUTPUT_SIZE)

    out = lstm_predictor_forward(x, padded_params, output_size=OUTPUT_SIZE)
    out = jax.block_until_ready(out)

    ref = _reference_forward(x, raw_params)
    assert out.shape == (B, OUTPUT_SIZE)
    assert jnp.allclose(out, ref, atol=1e-4, rtol=1e-4), "mismatch vs reference"

    print("KERNEL_OK")
</pallas_src>

<mosaic_0001>
module attributes {stable_mosaic.version = 11 : i64} {
  func.func @kernel(%arg0: memref<8x8x16xf32, #tpu.memory_space<vmem>>, %arg1: memref<16x512xf32, #tpu.memory_space<vmem>>, %arg2: memref<128x512xf32, #tpu.memory_space<vmem>>, %arg3: memref<1x512xf32, #tpu.memory_space<vmem>>, %arg4: memref<128x512xf32, #tpu.memory_space<vmem>>, %arg5: memref<128x512xf32, #tpu.memory_space<vmem>>, %arg6: memref<1x512xf32, #tpu.memory_space<vmem>>, %arg7: memref<128x128xf32, #tpu.memory_space<vmem>>, %arg8: memref<1x128xf32, #tpu.memory_space<vmem>>, %arg9: memref<8x128xf32, #tpu.memory_space<vmem>>, %arg10: memref<8x8x128xf32, #tpu.memory_space<vmem>>, %arg11: memref<8x8x512xf32, #tpu.memory_space<vmem>>, %arg12: memref<8x128xf32, #tpu.memory_space<vmem>>, %arg13: memref<8x128xf32, #tpu.memory_space<vmem>>) attributes {dimension_semantics = [], scalar_prefetch = 0 : i64, scratch_operands = 4 : i64, tpu.core_type = #tpu.core_type<tc>} {
    %c0 = arith.constant 0 : index
    %c0_0 = arith.constant 0 : index
    %c0_1 = arith.constant 0 : index
    %0 = vector.load %arg0[%c0, %c0_0, %c0_1] : memref<8x8x16xf32, #tpu.memory_space<vmem>>, vector<8x8x16xf32>
    %1 = vector.shape_cast %0 : vector<8x8x16xf32> to vector<64x16xf32>
    %c0_2 = arith.constant 0 : index
    %c0_3 = arith.constant 0 : index
    %2 = vector.load %arg1[%c0_2, %c0_3] : memref<16x512xf32, #tpu.memory_space<vmem>>, vector<16x512xf32>
    %cst = arith.constant dense<0.000000e+00> : vector<64x512xf32>
    %3 = tpu.matmul %1, %2, %cst {dimension_numbers = #tpu.dot_dimension_numbers<[1], [0], [0], [1], [0, 0, 1, 1], [], []>} : vector<64x16xf32>, vector<16x512xf32>, vector<64x512xf32> -> vector<64x512xf32>
    %c0_4 = arith.constant 0 : index
    %c0_5 = arith.constant 0 : index
    %4 = vector.load %arg3[%c0_4, %c0_5] : memref<1x512xf32, #tpu.memory_space<vmem>>, vector<1x512xf32>
    %5 = vector.broadcast %4 : vector<1x512xf32> to vector<64x512xf32>
    %6 = arith.addf %3, %5 : vector<64x512xf32>
    %7 = vector.shape_cast %6 : vector<64x512xf32> to vector<8x8x512xf32>
    %c0_6 = arith.constant 0 : index
    %c0_7 = arith.constant 0 : index
    %c0_8 = arith.constant 0 : index
    %8 = vector.load %arg11[%c0_6, %c0_7, %c0_8] : memref<8x8x512xf32, #tpu.memory_space<vmem>>, vector<8x8x512xf32>
    tpu.vector_store %arg11[%c0_6, %c0_7, %c0_8], %7 {strides = array<i32>} : memref<8x8x512xf32, #tpu.memory_space<vmem>>, vector<8x8x512xf32>,
    %cst_9 = arith.constant 0.000000e+00 : f32
    %9 = vector.broadcast %cst_9 : f32 to vector<8x128xf32>
    %c0_10 = arith.constant 0 : index
    %c0_11 = arith.constant 0 : index
    %10 = vector.load %arg12[%c0_10, %c0_11] : memref<8x128xf32, #tpu.memory_space<vmem>>, vector<8x128xf32>
    tpu.vector_store %arg12[%c0_10, %c0_11], %9 {strides = array<i32>} : memref<8x128xf32, #tpu.memory_space<vmem>>, vector<8x128xf32>,
    %cst_12 = arith.constant 0.000000e+00 : f32
    %11 = vector.broadcast %cst_12 : f32 to vector<8x128xf32>
    %c0_13 = arith.constant 0 : index
    %c0_14 = arith.constant 0 : index
    %12 = vector.load %arg13[%c0_13, %c0_14] : memref<8x128xf32, #tpu.memory_space<vmem>>, vector<8x128xf32>
    tpu.vector_store %arg13[%c0_13, %c0_14], %11 {strides = array<i32>} : memref<8x128xf32, #tpu.memory_space<vmem>>, vector<8x128xf32>,
    %c0_i32 = arith.constant 0 : i32
    %c0_15 = arith.constant 0 : index
    %c0_16 = arith.constant 0 : index
    %13 = vector.load %arg12[%c0_15, %c0_16] : memref<8x128xf32, #tpu.memory_space<vmem>>, vector<8x128xf32>
    %c0_17 = arith.constant 0 : index
    %c0_18 = arith.constant 0 : index
    %14 = vector.load %arg13[%c0_17, %c0_18] : memref<8x128xf32, #tpu.memory_space<vmem>>, vector<8x128xf32>
    %15 = arith.index_cast %c0_i32 : i32 to index
    %c0_19 = arith.constant 0 : index
    %c0_20 = arith.constant 0 : index
    %16 = vector.load %arg11[%15, %c0_19, %c0_20] : memref<8x8x512xf32, #tpu.memory_space<vmem>>, vector<1x8x512xf32>
    %17 = vector.shape_cast %16 : vector<1x8x512xf32> to vector<8x512xf32>
    %c0_21 = arith.constant 0 : index
    %c0_22 = arith.constant 0 : index
    %18 = vector.load %arg2[%c0_21, %c0_22] : memref<128x512xf32, #tpu.memory_space<vmem>>, vector<128x512xf32>
    %cst_23 = arith.constant dense<0.000000e+00> : vector<8x512xf32>
    %19 = tpu.matmul %13, %18, %cst_23 {dimension_numbers = #tpu.dot_dimension_numbers<[1], [0], [0], [1], [0, 0, 1, 1], [], []>} : vector<8x128xf32>, vector<128x512xf32>, vector<8x512xf32> -> vector<8x512xf32>
    %20 = arith.addf %17, %19 : vector<8x512xf32>
    %21 = vector.extract_strided_slice %20 {offsets = [0, 0], sizes = [8, 128], strides = [1, 1]} : vector<8x512xf32> to vector<8x128xf32>
    %22 = arith.negf %21 : vector<8x128xf32>
    %23 = math.exp %22 : vector<8x128xf32>
    %cst_24 = arith.constant 1.000000e+00 : f32
    %24 = vector.broadcast %cst_24 : f32 to vector<8x128xf32>
    %25 = arith.addf %24, %23 : vector<8x128xf32>
    %26 = arith.divf %24, %25 : vector<8x128xf32>
    %27 = vector.extract_strided_slice %20 {offsets = [0, 128], sizes = [8, 128], strides = [1, 1]} : vector<8x512xf32> to vector<8x128xf32>
    %28 = arith.negf %27 : vector<8x128xf32>
    %29 = math.exp %28 : vector<8x128xf32>
    %cst_25 = arith.constant 1.000000e+00 : f32
    %30 = vector.broadcast %cst_25 : f32 to vector<8x128xf32>
    %31 = arith.addf %30, %29 : vector<8x128xf32>
    %32 = arith.divf %30, %31 : vector<8x128xf32>
    %33 = vector.extract_strided_slice %20 {offsets = [0, 256], sizes = [8, 128], strides = [1, 1]} : vector<8x512xf32> to vector<8x128xf32>
    %34 = math.tanh %33 : vector<8x128xf32>
    %35 = vector.extract_strided_slice %20 {offsets = [0, 384], sizes = [8, 128], strides = [1, 1]} : vector<8x512xf32> to vector<8x128xf32>
    %36 = arith.negf %35 : vector<8x128xf32>
    %37 = math.exp %36 : vector<8x128xf32>
    %cst_26 = arith.constant 1.000000e+00 : f32
    %38 = vector.broadcast %cst_26 : f32 to vector<8x128xf32>
    %39 = arith.addf %38, %37 : vector<8x128xf32>
    %40 = arith.divf %38, %39 : vector<8x128xf32>
    %41 = arith.mulf %32, %14 : vector<8x128xf32>
    %42 = arith.mulf %26, %34 : vector<8x128xf32>
    %43 = arith.addf %41, %42 : vector<8x128xf32>
    %44 = math.tanh %43 : vector<8x128xf32>
    %45 = arith.mulf %40, %44 : vector<8x128xf32>
    %c0_27 = arith.constant 0 : index
    %c0_28 = arith.constant 0 : index
    %46 = vector.load %arg12[%c0_27, %c0_28] : memref<8x128xf32, #tpu.memory_space<vmem>>, vector<8x128xf32>
    tpu.vector_store %arg12[%c0_27, %c0_28], %45 {strides = array<i32>} : memref<8x128xf32, #tpu.memory_space<vmem>>, vector<8x128xf32>,
    %c0_29 = arith.constant 0 : index
    %c0_30 = arith.constant 0 : index
    %47 = vector.load %arg13[%c0_29, %c0_30] : memref<8x128xf32, #tpu.memory_space<vmem>>, vector<8x128xf32>
    tpu.vector_store %arg13[%c0_29, %c0_30], %43 {strides = array<i32>} : memref<8x128xf32, #tpu.memory_space<vmem>>, vector<8x128xf32>,
    %48 = arith.index_cast %c0_i32 : i32 to index
    %c0_31 = arith.constant 0 : index
    %c0_32 = arith.constant 0 : index
    %49 = vector.load %arg10[%48, %c0_31, %c0_32] : memref<8x8x128xf32, #tpu.memory_space<vmem>>, vector<1x8x128xf32>
    %50 = vector.shape_cast %49 : vector<1x8x128xf32> to vector<8x128xf32>
    %51 = vector.shape_cast %45 : vector<8x128xf32> to vector<1x8x128xf32>
    tpu.vector_store %arg10[%48, %c0_31, %c0_32], %51 {strides = array<i32>} : memref<8x8x128xf32, #tpu.memory_space<vmem>>, vector<1x8x128xf32>,
    %c1_i32 = arith.constant 1 : i32
    %c0_33 = arith.constant 0 : index
    %c0_34 = arith.constant 0 : index
    %52 = vector.load %arg12[%c0_33, %c0_34] : memref<8x128xf32, #tpu.memory_space<vmem>>, vector<8x128xf32>
    %c0_35 = arith.constant 0 : index
    %c0_36 = arith.constant 0 : index
    %53 = vector.load %arg13[%c0_35, %c0_36] : memref<8x128xf32, #tpu.memory_space<vmem>>, vector<8x128xf32>
    %54 = arith.index_cast %c1_i32 : i32 to index
    %c0_37 = arith.constant 0 : index
    %c0_38 = arith.constant 0 : index
    %55 = vector.load %arg11[%54, %c0_37, %c0_38] : memref<8x8x512xf32, #tpu.memory_space<vmem>>, vector<1x8x512xf32>
    %56 = vector.shape_cast %55 : vector<1x8x512xf32> to vector<8x512xf32>
    %c0_39 = arith.constant 0 : index
    %c0_40 = arith.constant 0 : index
    %57 = vector.load %arg2[%c0_39, %c0_40] : memref<128x512xf32, #tpu.memory_space<vmem>>, vector<128x512xf32>
    %cst_41 = arith.constant dense<0.000000e+00> : vector<8x512xf32>
    %58 = tpu.matmul %52, %57, %cst_41 {dimension_numbers = #tpu.dot_dimension_numbers<[1], [0], [0], [1], [0, 0, 1, 1], [], []>} : vector<8x128xf32>, vector<128x512xf32>, vector<8x512xf32> -> vector<8x512xf32>
    %59 = arith.addf %56, %58 : vector<8x512xf32>
    %60 = vector.extract_strided_slice %59 {offsets = [0, 0], sizes = [8, 128], strides = [1, 1]} : vector<8x512xf32> to vector<8x128xf32>
    %61 = arith.negf %60 : vector<8x128xf32>
    %62 = math.exp %61 : vector<8x128xf32>
    %cst_42 = arith.constant 1.000000e+00 : f32
    %63 = vector.broadcast %cst_42 : f32 to vector<8x128xf32>
    %64 = arith.addf %63, %62 : vector<8x128xf32>
    %65 = arith.divf %63, %64 : vector<8x128xf32>
    %66 = vector.extract_strided_slice %59 {offsets = [0, 128], sizes = [8, 128], strides = [1, 1]} : vector<8x512xf32> to vector<8x128xf32>
    %67 = arith.negf %66 : vector<8x128xf32>
    %68 = math.exp %67 : vector<8x128xf32>
    %cst_43 = arith.constant 1.000000e+00 : f32
    %69 = vector.broadcast %cst_43 : f32 to vector<8x128xf32>
    %70 = arith.addf %69, %68 : vector<8x128xf32>
    %71 = arith.divf %69, %70 : vector<8x128xf32>
    %72 = vector.extract_strided_slice %59 {offsets = [0, 256], sizes = [8, 128], strides = [1, 1]} : vector<8x512xf32> to vector<8x128xf32>
    %73 = math.tanh %72 : vector<8x128xf32>
    %74 = vector.extract_strided_slice %59 {offsets = [0, 384], sizes = [8, 128], strides = [1, 1]} : vector<8x512xf32> to vector<8x128xf32>
    %75 = arith.negf %74 : vector<8x128xf32>
    %76 = math.exp %75 : vector<8x128xf32>
    %cst_44 = arith.constant 1.000000e+00 : f32
    %77 = vector.broadcast %cst_44 : f32 to vector<8x128xf32>
    %78 = arith.addf %77, %76 : vector<8x128xf32>
    %79 = arith.divf %77, %78 : vector<8x128xf32>
    %80 = arith.mulf %71, %53 : vector<8x128xf32>
    %81 = arith.mulf %65, %73 : vector<8x128xf32>
    %82 = arith.addf %80, %81 : vector<8x128xf32>
    %83 = math.tanh %82 : vector<8x128xf32>
    %84 = arith.mulf %79, %83 : vector<8x128xf32>
    %c0_45 = arith.constant 0 : index
    %c0_46 = arith.constant 0 : index
    %85 = vector.load %arg12[%c0_45, %c0_46] : memref<8x128xf32, #tpu.memory_space<vmem>>, vector<8x128xf32>
    tpu.vector_store %arg12[%c0_45, %c0_46], %84 {strides = array<i32>} : memref<8x128xf32, #tpu.memory_space<vmem>>, vector<8x128xf32>,
    %c0_47 = arith.constant 0 : index
    %c0_48 = arith.constant 0 : index
    %86 = vector.load %arg13[%c0_47, %c0_48] : memref<8x128xf32, #tpu.memory_space<vmem>>, vector<8x128xf32>
    tpu.vector_store %arg13[%c0_47, %c0_48], %82 {strides = array<i32>} : memref<8x128xf32, #tpu.memory_space<vmem>>, vector<8x128xf32>,
    %87 = arith.index_cast %c1_i32 : i32 to index
    %c0_49 = arith.constant 0 : index
    %c0_50 = arith.constant 0 : index
    %88 = vector.load %arg10[%87, %c0_49, %c0_50] : memref<8x8x128xf32, #tpu.memory_space<vmem>>, vector<1x8x128xf32>
    %89 = vector.shape_cast %88 : vector<1x8x128xf32> to vector<8x128xf32>
    %90 = vector.shape_cast %84 : vector<8x128xf32> to vector<1x8x128xf32>
    tpu.vector_store %arg10[%87, %c0_49, %c0_50], %90 {strides = array<i32>} : memref<8x8x128xf32, #tpu.memory_space<vmem>>, vector<1x8x128xf32>,
    %c2_i32 = arith.constant 2 : i32
    %c0_51 = arith.constant 0 : index
    %c0_52 = arith.constant 0 : index
    %91 = vector.load %arg12[%c0_51, %c0_52] : memref<8x128xf32, #tpu.memory_space<vmem>>, vector<8x128xf32>
    %c0_53 = arith.constant 0 : index
    %c0_54 = arith.constant 0 : index
    %92 = vector.load %arg13[%c0_53, %c0_54] : memref<8x128xf32, #tpu.memory_space<vmem>>, vector<8x128xf32>
    %93 = arith.index_cast %c2_i32 : i32 to index
    %c0_55 = arith.constant 0 : index
    %c0_56 = arith.constant 0 : index
    %94 = vector.load %arg11[%93, %c0_55, %c0_56] : memref<8x8x512xf32, #tpu.memory_space<vmem>>, vector<1x8x512xf32>
    %95 = vector.shape_cast %94 : vector<1x8x512xf32> to vector<8x512xf32>
    %c0_57 = arith.constant 0 : index
    %c0_58 = arith.constant 0 : index
    %96 = vector.load %arg2[%c0_57, %c0_58] : memref<128x512xf32, #tpu.memory_space<vmem>>, vector<128x512xf32>
    %cst_59 = arith.constant dense<0.000000e+00> : vector<8x512xf32>
    %97 = tpu.matmul %91, %96, %cst_59 {dimension_numbers = #tpu.dot_dimension_numbers<[1], [0], [0], [1], [0, 0, 1, 1], [], []>} : vector<8x128xf32>, vector<128x512xf32>, vector<8x512xf32> -> vector<8x512xf32>
    %98 = arith.addf %95, %97 : vector<8x512xf32>
    %99 = vector.extract_strided_slice %98 {offsets = [0, 0], sizes = [8, 128], strides = [1, 1]} : vector<8x512xf32> to vector<8x128xf32>
    %100 = arith.negf %99 : vector<8x128xf32>
    %101 = math.exp %100 : vector<8x128xf32>
    %cst_60 = arith.constant 1.000000e+00 : f32
    %102 = vector.broadcast %cst_60 : f32 to vector<8x128xf32>
    %103 = arith.addf %102, %101 : vector<8x128xf32>
    %104 = arith.divf %102, %103 : vector<8x128xf32>
    %105 = vector.extract_strided_slice %98 {offsets = [0, 128], sizes = [8, 128], strides = [1, 1]} : vector<8x512xf32> to vector<8x128xf32>
    %106 = arith.negf %105 : vector<8x128xf32>
    %107 = math.exp %106 : vector<8x128xf32>
    %cst_61 = arith.constant 1.000000e+00 : f32
    %108 = vector.broadcast %cst_61 : f32 to vector<8x128xf32>
    %109 = arith.addf %108, %107 : vector<8x128xf32>
    %110 = arith.divf %108, %109 : vector<8x128xf32>
    %111 = vector.extract_strided_slice %98 {offsets = [0, 256], sizes = [8, 128], strides = [1, 1]} : vector<8x512xf32> to vector<8x128xf32>
    %112 = math.tanh %111 : vector<8x128xf32>
    %113 = vector.extract_strided_slice %98 {offsets = [0, 384], sizes = [8, 128], strides = [1, 1]} : vector<8x512xf32> to vector<8x128xf32>
    %114 = arith.negf %113 : vector<8x128xf32>
    %115 = math.exp %114 : vector<8x128xf32>
    %cst_62 = arith.constant 1.000000e+00 : f32
    %116 = vector.broadcast %cst_62 : f32 to vector<8x128xf32>
    %117 = arith.addf %116, %115 : vector<8x128xf32>
    %118 = arith.divf %116, %117 : vector<8x128xf32>
    %119 = arith.mulf %110, %92 : vector<8x128xf32>
    %120 = arith.mulf %104, %112 : vector<8x128xf32>
    %121 = arith.addf %119, %120 : vector<8x128xf32>
    %122 = math.tanh %121 : vector<8x128xf32>
    %123 = arith.mulf %118, %122 : vector<8x128xf32>
    %c0_63 = arith.constant 0 : index
    %c0_64 = arith.constant 0 : index
    %124 = vector.load %arg12[%c0_63, %c0_64] : memref<8x128xf32, #tpu.memory_space<vmem>>, vector<8x128xf32>
    tpu.vector_store %arg12[%c0_63, %c0_64], %123 {strides = array<i32>} : memref<8x128xf32, #tpu.memory_space<vmem>>, vector<8x128xf32>,
    %c0_65 = arith.constant 0 : index
    %c0_66 = arith.constant 0 : index
    %125 = vector.load %arg13[%c0_65, %c0_66] : memref<8x128xf32, #tpu.memory_space<vmem>>, vector<8x128xf32>
    tpu.vector_store %arg13[%c0_65, %c0_66], %121 {strides = array<i32>} : memref<8x128xf32, #tpu.memory_space<vmem>>, vector<8x128xf32>,
    %126 = arith.index_cast %c2_i32 : i32 to index
    %c0_67 = arith.constant 0 : index
    %c0_68 = arith.constant 0 : index
    %127 = vector.load %arg10[%126, %c0_67, %c0_68] : memref<8x8x128xf32, #tpu.memory_space<vmem>>, vector<1x8x128xf32>
    %128 = vector.shape_cast %127 : vector<1x8x128xf32> to vector<8x128xf32>
    %129 = vector.shape_cast %123 : vector<8x128xf32> to vector<1x8x128xf32>
    tpu.vector_store %arg10[%126, %c0_67, %c0_68], %129 {strides = array<i32>} : memref<8x8x128xf32, #tpu.memory_space<vmem>>, vector<1x8x128xf32>,
    %c3_i32 = arith.constant 3 : i32
    %c0_69 = arith.constant 0 : index
    %c0_70 = arith.constant 0 : index
    %130 = vector.load %arg12[%c0_69, %c0_70] : memref<8x128xf32, #tpu.memory_space<vmem>>, vector<8x128xf32>
    %c0_71 = arith.constant 0 : index
    %c0_72 = arith.constant 0 : index
    %131 = vector.load %arg13[%c0_71, %c0_72] : memref<8x128xf32, #tpu.memory_space<vmem>>, vector<8x128xf32>
    %132 = arith.index_cast %c3_i32 : i32 to index
    %c0_73 = arith.constant 0 : index
    %c0_74 = arith.constant 0 : index
    %133 = vector.load %arg11[%132, %c0_73, %c0_74] : memref<8x8x512xf32, #tpu.memory_space<vmem>>, vector<1x8x512xf32>
    %134 = vector.shape_cast %133 : vector<1x8x512xf32> to vector<8x512xf32>
    %c0_75 = arith.constant 0 : index
    %c0_76 = arith.constant 0 : index
    %135 = vector.load %arg2[%c0_75, %c0_76] : memref<128x512xf32, #tpu.memory_space<vmem>>, vector<128x512xf32>
    %cst_77 = arith.constant dense<0.000000e+00> : vector<8x512xf32>
    %136 = tpu.matmul %130, %135, %cst_77 {dimension_numbers = #tpu.dot_dimension_numbers<[1], [0], [0], [1], [0, 0, 1, 1], [], []>} : vector<8x128xf32>, vector<128x512xf32>, vector<8x512xf32> -> vector<8x512xf32>
    %137 = arith.addf %134, %136 : vector<8x512xf32>
    %138 = vector.extract_strided_slice %137 {offsets = [0, 0], sizes = [8, 128], strides = [1, 1]} : vector<8x512xf32> to vector<8x128xf32>
    %139 = arith.negf %138 : vector<8x128xf32>
    %140 = math.exp %139 : vector<8x128xf32>
    %cst_78 = arith.constant 1.000000e+00 : f32
    %141 = vector.broadcast %cst_78 : f32 to vector<8x128xf32>
    %142 = arith.addf %141, %140 : vector<8x128xf32>
    %143 = arith.divf %141, %142 : vector<8x128xf32>
    %144 = vector.extract_strided_slice %137 {offsets = [0, 128], sizes = [8, 128], strides = [1, 1]} : vector<8x512xf32> to vector<8x128xf32>
    %145 = arith.negf %144 : vector<8x128xf32>
    %146 = math.exp %145 : vector<8x128xf32>
    %cst_79 = arith.constant 1.000000e+00 : f32
    %147 = vector.broadcast %cst_79 : f32 to vector<8x128xf32>
    %148 = arith.addf %147, %146 : vector<8x128xf32>
    %149 = arith.divf %147, %148 : vector<8x128xf32>
    %150 = vector.extract_strided_slice %137 {offsets = [0, 256], sizes = [8, 128], strides = [1, 1]} : vector<8x512xf32> to vector<8x128xf32>
    %151 = math.tanh %150 : vector<8x128xf32>
    %152 = vector.extract_strided_slice %137 {offsets = [0, 384], sizes = [8, 128], strides = [1, 1]} : vector<8x512xf32> to vector<8x128xf32>
    %153 = arith.negf %152 : vector<8x128xf32>
    %154 = math.exp %153 : vector<8x128xf32>
    %cst_80 = arith.constant 1.000000e+00 : f32
    %155 = vector.broadcast %cst_80 : f32 to vector<8x128xf32>
    %156 = arith.addf %155, %154 : vector<8x128xf32>
    %157 = arith.divf %155, %156 : vector<8x128xf32>
    %158 = arith.mulf %149, %131 : vector<8x128xf32>
    %159 = arith.mulf %143, %151 : vector<8x128xf32>
    %160 = arith.addf %158, %159 : vector<8x128xf32>
    %161 = math.tanh %160 : vector<8x128xf32>
    %162 = arith.mulf %157, %161 : vector<8x128xf32>
    %c0_81 = arith.constant 0 : index
    %c0_82 = arith.constant 0 : index
    %163 = vector.load %arg12[%c0_81, %c0_82] : memref<8x128xf32, #tpu.memory_space<vmem>>, vector<8x128xf32>
    tpu.vector_store %arg12[%c0_81, %c0_82], %162 {strides = array<i32>} : memref<8x128xf32, #tpu.memory_space<vmem>>, vector<8x128xf32>,
    %c0_83 = arith.constant 0 : index
    %c0_84 = arith.constant 0 : index
    %164 = vector.load %arg13[%c0_83, %c0_84] : memref<8x128xf32, #tpu.memory_space<vmem>>, vector<8x128xf32>
    tpu.vector_store %arg13[%c0_83, %c0_84], %160 {strides = array<i32>} : memref<8x128xf32, #tpu.memory_space<vmem>>, vector<8x128xf32>,
    %165 = arith.index_cast %c3_i32 : i32 to index
    %c0_85 = arith.constant 0 : index
    %c0_86 = arith.constant 0 : index
    %166 = vector.load %arg10[%165, %c0_85, %c0_86] : memref<8x8x128xf32, #tpu.memory_space<vmem>>, vector<1x8x128xf32>
    %167 = vector.shape_cast %166 : vector<1x8x128xf32> to vector<8x128xf32>
    %168 = vector.shape_cast %162 : vector<8x128xf32> to vector<1x8x128xf32>
    tpu.vector_store %arg10[%165, %c0_85, %c0_86], %168 {strides = array<i32>} : memref<8x8x128xf32, #tpu.memory_space<vmem>>, vector<1x8x128xf32>,
    %c4_i32 = arith.constant 4 : i32
    %c0_87 = arith.constant 0 : index
    %c0_88 = arith.constant 0 : index
    %169 = vector.load %arg12[%c0_87, %c0_88] : memref<8x128xf32, #tpu.memory_space<vmem>>, vector<8x128xf32>
    %c0_89 = arith.constant 0 : index
    %c0_90 = arith.constant 0 : index
    %170 = vector.load %arg13[%c0_89, %c0_90] : memref<8x128xf32, #tpu.memory_space<vmem>>, vector<8x128xf32>
    %171 = arith.index_cast %c4_i32 : i32 to index
    %c0_91 = arith.constant 0 : index
    %c0_92 = arith.constant 0 : index
    %172 = vector.load %arg11[%171, %c0_91, %c0_92] : memref<8x8x512xf32, #tpu.memory_space<vmem>>, vector<1x8x512xf32>
    %173 = vector.shape_cast %172 : vector<1x8x512xf32> to vector<8x512xf32>
    %c0_93 = arith.constant 0 : index
    %c0_94 = arith.constant 0 : index
    %174 = vector.load %arg2[%c0_93, %c0_94] : memref<128x512xf32, #tpu.memory_space<vmem>>, vector<128x512xf32>
    %cst_95 = arith.constant dense<0.000000e+00> : vector<8x512xf32>
    %175 = tpu.matmul %169, %174, %cst_95 {dimension_numbers = #tpu.dot_dimension_numbers<[1], [0], [0], [1], [0, 0, 1, 1], [], []>} : vector<8x128xf32>, vector<128x512xf32>, vector<8x512xf32> -> vector<8x512xf32>
    %176 = arith.addf %173, %175 : vector<8x512xf32>
    %177 = vector.extract_strided_slice %176 {offsets = [0, 0], sizes = [8, 128], strides = [1, 1]} : vector<8x512xf32> to vector<8x128xf32>
    %178 = arith.negf %177 : vector<8x128xf32>
    %179 = math.exp %178 : vector<8x128xf32>
    %cst_96 = arith.constant 1.000000e+00 : f32
    %180 = vector.broadcast %cst_96 : f32 to vector<8x128xf32>
    %181 = arith.addf %180, %179 : vector<8x128xf32>
    %182 = arith.divf %180, %181 : vector<8x128xf32>
    %183 = vector.extract_strided_slice %176 {offsets = [0, 128], sizes = [8, 128], strides = [1, 1]} : vector<8x512xf32> to vector<8x128xf32>
    %184 = arith.negf %183 : vector<8x128xf32>
    %185 = math.exp %184 : vector<8x128xf32>
    %cst_97 = arith.constant 1.000000e+00 : f32
    %186 = vector.broadcast %cst_97 : f32 to vector<8x128xf32>
    %187 = arith.addf %186, %185 : vector<8x128xf32>
    %188 = arith.divf %186, %187 : vector<8x128xf32>
    %189 = vector.extract_strided_slice %176 {offsets = [0, 256], sizes = [8, 128], strides = [1, 1]} : vector<8x512xf32> to vector<8x128xf32>
    %190 = math.tanh %189 : vector<8x128xf32>
    %191 = vector.extract_strided_slice %176 {offsets = [0, 384], sizes = [8, 128], strides = [1, 1]} : vector<8x512xf32> to vector<8x128xf32>
    %192 = arith.negf %191 : vector<8x128xf32>
    %193 = math.exp %192 : vector<8x128xf32>
    %cst_98 = arith.constant 1.000000e+00 : f32
    %194 = vector.broadcast %cst_98 : f32 to vector<8x128xf32>
    %195 = arith.addf %194, %193 : vector<8x128xf32>
    %196 = arith.divf %194, %195 : vector<8x128xf32>
    %197 = arith.mulf %188, %170 : vector<8x128xf32>
    %198 = arith.mulf %182, %190 : vector<8x128xf32>
    %199 = arith.addf %197, %198 : vector<8x128xf32>
    %200 = math.tanh %199 : vector<8x128xf32>
    %201 = arith.mulf %196, %200 : vector<8x128xf32>
    %c0_99 = arith.constant 0 : index
    %c0_100 = arith.constant 0 : index
    %202 = vector.load %arg12[%c0_99, %c0_100] : memref<8x128xf32, #tpu.memory_space<vmem>>, vector<8x128xf32>
    tpu.vector_store %arg12[%c0_99, %c0_100], %201 {strides = array<i32>} : memref<8x128xf32, #tpu.memory_space<vmem>>, vector<8x128xf32>,
    %c0_101 = arith.constant 0 : index
    %c0_102 = arith.constant 0 : index
    %203 = vector.load %arg13[%c0_101, %c0_102] : memref<8x128xf32, #tpu.memory_space<vmem>>, vector<8x128xf32>
    tpu.vector_store %arg13[%c0_101, %c0_102], %199 {strides = array<i32>} : memref<8x128xf32, #tpu.memory_space<vmem>>, vector<8x128xf32>,
    %204 = arith.index_cast %c4_i32 : i32 to index
    %c0_103 = arith.constant 0 : index
    %c0_104 = arith.constant 0 : index
    %205 = vector.load %arg10[%204, %c0_103, %c0_104] : memref<8x8x128xf32, #tpu.memory_space<vmem>>, vector<1x8x128xf32>
    %206 = vector.shape_cast %205 : vector<1x8x128xf32> to vector<8x128xf32>
    %207 = vector.shape_cast %201 : vector<8x128xf32> to vector<1x8x128xf32>
    tpu.vector_store %arg10[%204, %c0_103, %c0_104], %207 {strides = array<i32>} : memref<8x8x128xf32, #tpu.memory_space<vmem>>, vector<1x8x128xf32>,
    %c5_i32 = arith.constant 5 : i32
    %c0_105 = arith.constant 0 : index
    %c0_106 = arith.constant 0 : index
    %208 = vector.load %arg12[%c0_105, %c0_106] : memref<8x128xf32, #tpu.memory_space<vmem>>, vector<8x128xf32>
    %c0_107 = arith.constant 0 : index
    %c0_108 = arith.constant 0 : index
    %209 = vector.load %arg13[%c0_107, %c0_108] : memref<8x128xf32, #tpu.memory_space<vmem>>, vector<8x128xf32>
    %210 = arith.index_cast %c5_i32 : i32 to index
    %c0_109 = arith.constant 0 : index
    %c0_110 = arith.constant 0 : index
    %211 = vector.load %arg11[%210, %c0_109, %c0_110] : memref<8x8x512xf32, #tpu.memory_space<vmem>>, vector<1x8x512xf32>
    %212 = vector.shape_cast %211 : vector<1x8x512xf32> to vector<8x512xf32>
    %c0_111 = arith.constant 0 : index
    %c0_112 = arith.constant 0 : index
    %213 = vector.load %arg2[%c0_111, %c0_112] : memref<128x512xf32, #tpu.memory_space<vmem>>, vector<128x512xf32>
    %cst_113 = arith.constant dense<0.000000e+00> : vector<8x512xf32>
    %214 = tpu.matmul %208, %213, %cst_113 {dimension_numbers = #tpu.dot_dimension_numbers<[1], [0], [0], [1], [0, 0, 1, 1], [], []>} : vector<8x128xf32>, vector<128x512xf32>, vector<8x512xf32> -> vector<8x512xf32>
    %215 = arith.addf %212, %214 : vector<8x512xf32>
    %216 = vector.extract_strided_slice %215 {offsets = [0, 0], sizes = [8, 128], strides = [1, 1]} : vector<8x512xf32> to vector<8x128xf32>
    %217 = arith.negf %216 : vector<8x128xf32>
    %218 = math.exp %217 : vector<8x128xf32>
    %cst_114 = arith.constant 1.000000e+00 : f32
    %219 = vector.broadcast %cst_114 : f32 to vector<8x128xf32>
    %220 = arith.addf %219, %218 : vector<8x128xf32>
    %221 = arith.divf %219, %220 : vector<8x128xf32>
    %222 = vector.extract_strided_slice %215 {offsets = [0, 128], sizes = [8, 128], strides = [1, 1]} : vector<8x512xf32> to vector<8x128xf32>
    %223 = arith.negf %222 : vector<8x128xf32>
    %224 = math.exp %223 : vector<8x128xf32>
    %cst_115 = arith.constant 1.000000e+00 : f32
    %225 = vector.broadcast %cst_115 : f32 to vector<8x128xf32>
    %226 = arith.addf %225, %224 : vector<8x128xf32>
    %227 = arith.divf %225, %226 : vector<8x128xf32>
    %228 = vector.extract_strided_slice %215 {offsets = [0, 256], sizes = [8, 128], strides = [1, 1]} : vector<8x512xf32> to vector<8x128xf32>
    %229 = math.tanh %228 : vector<8x128xf32>
    %230 = vector.extract_strided_slice %215 {offsets = [0, 384], sizes = [8, 128], strides = [1, 1]} : vector<8x512xf32> to vector<8x128xf32>
    %231 = arith.negf %230 : vector<8x128xf32>
    %232 = math.exp %231 : vector<8x128xf32>
    %cst_116 = arith.constant 1.000000e+00 : f32
    %233 = vector.broadcast %cst_116 : f32 to vector<8x128xf32>
    %234 = arith.addf %233, %232 : vector<8x128xf32>
    %235 = arith.divf %233, %234 : vector<8x128xf32>
    %236 = arith.mulf %227, %209 : vector<8x128xf32>
    %237 = arith.mulf %221, %229 : vector<8x128xf32>
    %238 = arith.addf %236, %237 : vector<8x128xf32>
    %239 = math.tanh %238 : vector<8x128xf32>
    %240 = arith.mulf %235, %239 : vector<8x128xf32>
    %c0_117 = arith.constant 0 : index
    %c0_118 = arith.constant 0 : index
    %241 = vector.load %arg12[%c0_117, %c0_118] : memref<8x128xf32, #tpu.memory_space<vmem>>, vector<8x128xf32>
    tpu.vector_store %arg12[%c0_117, %c0_118], %240 {strides = array<i32>} : memref<8x128xf32, #tpu.memory_space<vmem>>, vector<8x128xf32>,
    %c0_119 = arith.constant 0 : index
    %c0_120 = arith.constant 0 : index
    %242 = vector.load %arg13[%c0_119, %c0_120] : memref<8x128xf32, #tpu.memory_space<vmem>>, vector<8x128xf32>
    tpu.vector_store %arg13[%c0_119, %c0_120], %238 {strides = array<i32>} : memref<8x128xf32, #tpu.memory_space<vmem>>, vector<8x128xf32>,
    %243 = arith.index_cast %c5_i32 : i32 to index
    %c0_121 = arith.constant 0 : index
    %c0_122 = arith.constant 0 : index
    %244 = vector.load %arg10[%243, %c0_121, %c0_122] : memref<8x8x128xf32, #tpu.memory_space<vmem>>, vector<1x8x128xf32>
    %245 = vector.shape_cast %244 : vector<1x8x128xf32> to vector<8x128xf32>
    %246 = vector.shape_cast %240 : vector<8x128xf32> to vector<1x8x128xf32>
    tpu.vector_store %arg10[%243, %c0_121, %c0_122], %246 {strides = array<i32>} : memref<8x8x128xf32, #tpu.memory_space<vmem>>, vector<1x8x128xf32>,
    %c6_i32 = arith.constant 6 : i32
    %c0_123 = arith.constant 0 : index
    %c0_124 = arith.constant 0 : index
    %247 = vector.load %arg12[%c0_123, %c0_124] : memref<8x128xf32, #tpu.memory_space<vmem>>, vector<8x128xf32>
    %c0_125 = arith.constant 0 : index
    %c0_126 = arith.constant 0 : index
    %248 = vector.load %arg13[%c0_125, %c0_126] : memref<8x128xf32, #tpu.memory_space<vmem>>, vector<8x128xf32>
    %249 = arith.index_cast %c6_i32 : i32 to index
    %c0_127 = arith.constant 0 : index
    %c0_128 = arith.constant 0 : index
    %250 = vector.load %arg11[%249, %c0_127, %c0_128] : memref<8x8x512xf32, #tpu.memory_space<vmem>>, vector<1x8x512xf32>
    %251 = vector.shape_cast %250 : vector<1x8x512xf32> to vector<8x512xf32>
    %c0_129 = arith.constant 0 : index
    %c0_130 = arith.constant 0 : index
    %252 = vector.load %arg2[%c0_129, %c0_130] : memref<128x512xf32, #tpu.memory_space<vmem>>, vector<128x512xf32>
    %cst_131 = arith.constant dense<0.000000e+00> : vector<8x512xf32>
    %253 = tpu.matmul %247, %252, %cst_131 {dimension_numbers = #tpu.dot_dimension_numbers<[1], [0], [0], [1], [0, 0, 1, 1], [], []>} : vector<8x128xf32>, vector<128x512xf32>, vector<8x512xf32> -> vector<8x512xf32>
    %254 = arith.addf %251, %253 : vector<8x512xf32>
    %255 = vector.extract_strided_slice %254 {offsets = [0, 0], sizes = [8, 128], strides = [1, 1]} : vector<8x512xf32> to vector<8x128xf32>
    %256 = arith.negf %255 : vector<8x128xf32>
    %257 = math.exp %256 : vector<8x128xf32>
    %cst_132 = arith.constant 1.000000e+00 : f32
    %258 = vector.broadcast %cst_132 : f32 to vector<8x128xf32>
    %259 = arith.addf %258, %257 : vector<8x128xf32>
    %260 = arith.divf %258, %259 : vector<8x128xf32>
    %261 = vector.extract_strided_slice %254 {offsets = [0, 128], sizes = [8, 128], strides = [1, 1]} : vector<8x512xf32> to vector<8x128xf32>
    %262 = arith.negf %261 : vector<8x128xf32>
    %263 = math.exp %262 : vector<8x128xf32>
    %cst_133 = arith.constant 1.000000e+00 : f32
    %264 = vector.broadcast %cst_133 : f32 to vector<8x128xf32>
    %265 = arith.addf %264, %263 : vector<8x128xf32>
    %266 = arith.divf %264, %265 : vector<8x128xf32>
    %267 = vector.extract_strided_slice %254 {offsets = [0, 256], sizes = [8, 128], strides = [1, 1]} : vector<8x512xf32> to vector<8x128xf32>
    %268 = math.tanh %267 : vector<8x128xf32>
    %269 = vector.extract_strided_slice %254 {offsets = [0, 384], sizes = [8, 128], strides = [1, 1]} : vector<8x512xf32> to vector<8x128xf32>
    %270 = arith.negf %269 : vector<8x128xf32>
    %271 = math.exp %270 : vector<8x128xf32>
    %cst_134 = arith.constant 1.000000e+00 : f32
    %272 = vector.broadcast %cst_134 : f32 to vector<8x128xf32>
    %273 = arith.addf %272, %271 : vector<8x128xf32>
    %274 = arith.divf %272, %273 : vector<8x128xf32>
    %275 = arith.mulf %266, %248 : vector<8x128xf32>
    %276 = arith.mulf %260, %268 : vector<8x128xf32>
    %277 = arith.addf %275, %276 : vector<8x128xf32>
    %278 = math.tanh %277 : vector<8x128xf32>
    %279 = arith.mulf %274, %278 : vector<8x128xf32>
    %c0_135 = arith.constant 0 : index
    %c0_136 = arith.constant 0 : index
    %280 = vector.load %arg12[%c0_135, %c0_136] : memref<8x128xf32, #tpu.memory_space<vmem>>, vector<8x128xf32>
    tpu.vector_store %arg12[%c0_135, %c0_136], %279 {strides = array<i32>} : memref<8x128xf32, #tpu.memory_space<vmem>>, vector<8x128xf32>,
    %c0_137 = arith.constant 0 : index
    %c0_138 = arith.constant 0 : index
    %281 = vector.load %arg13[%c0_137, %c0_138] : memref<8x128xf32, #tpu.memory_space<vmem>>, vector<8x128xf32>
    tpu.vector_store %arg13[%c0_137, %c0_138], %277 {strides = array<i32>} : memref<8x128xf32, #tpu.memory_space<vmem>>, vector<8x128xf32>,
    %282 = arith.index_cast %c6_i32 : i32 to index
    %c0_139 = arith.constant 0 : index
    %c0_140 = arith.constant 0 : index
    %283 = vector.load %arg10[%282, %c0_139, %c0_140] : memref<8x8x128xf32, #tpu.memory_space<vmem>>, vector<1x8x128xf32>
    %284 = vector.shape_cast %283 : vector<1x8x128xf32> to vector<8x128xf32>
    %285 = vector.shape_cast %279 : vector<8x128xf32> to vector<1x8x128xf32>
    tpu.vector_store %arg10[%282, %c0_139, %c0_140], %285 {strides = array<i32>} : memref<8x8x128xf32, #tpu.memory_space<vmem>>, vector<1x8x128xf32>,
    %c7_i32 = arith.constant 7 : i32
    %c0_141 = arith.constant 0 : index
    %c0_142 = arith.constant 0 : index
    %286 = vector.load %arg12[%c0_141, %c0_142] : memref<8x128xf32, #tpu.memory_space<vmem>>, vector<8x128xf32>
    %c0_143 = arith.constant 0 : index
    %c0_144 = arith.constant 0 : index
    %287 = vector.load %arg13[%c0_143, %c0_144] : memref<8x128xf32, #tpu.memory_space<vmem>>, vector<8x128xf32>
    %288 = arith.index_cast %c7_i32 : i32 to index
    %c0_145 = arith.constant 0 : index
    %c0_146 = arith.constant 0 : index
    %289 = vector.load %arg11[%288, %c0_145, %c0_146] : memref<8x8x512xf32, #tpu.memory_space<vmem>>, vector<1x8x512xf32>
    %290 = vector.shape_cast %289 : vector<1x8x512xf32> to vector<8x512xf32>
    %c0_147 = arith.constant 0 : index
    %c0_148 = arith.constant 0 : index
    %291 = vector.load %arg2[%c0_147, %c0_148] : memref<128x512xf32, #tpu.memory_space<vmem>>, vector<128x512xf32>
    %cst_149 = arith.constant dense<0.000000e+00> : vector<8x512xf32>
    %292 = tpu.matmul %286, %291, %cst_149 {dimension_numbers = #tpu.dot_dimension_numbers<[1], [0], [0], [1], [0, 0, 1, 1], [], []>} : vector<8x128xf32>, vector<128x512xf32>, vector<8x512xf32> -> vector<8x512xf32>
    %293 = arith.addf %290, %292 : vector<8x512xf32>
    %294 = vector.extract_strided_slice %293 {offsets = [0, 0], sizes = [8, 128], strides = [1, 1]} : vector<8x512xf32> to vector<8x128xf32>
    %295 = arith.negf %294 : vector<8x128xf32>
    %296 = math.exp %295 : vector<8x128xf32>
    %cst_150 = arith.constant 1.000000e+00 : f32
    %297 = vector.broadcast %cst_150 : f32 to vector<8x128xf32>
    %298 = arith.addf %297, %296 : vector<8x128xf32>
    %299 = arith.divf %297, %298 : vector<8x128xf32>
    %300 = vector.extract_strided_slice %293 {offsets = [0, 128], sizes = [8, 128], strides = [1, 1]} : vector<8x512xf32> to vector<8x128xf32>
    %301 = arith.negf %300 : vector<8x128xf32>
    %302 = math.exp %301 : vector<8x128xf32>
    %cst_151 = arith.constant 1.000000e+00 : f32
    %303 = vector.broadcast %cst_151 : f32 to vector<8x128xf32>
    %304 = arith.addf %303, %302 : vector<8x128xf32>
    %305 = arith.divf %303, %304 : vector<8x128xf32>
    %306 = vector.extract_strided_slice %293 {offsets = [0, 256], sizes = [8, 128], strides = [1, 1]} : vector<8x512xf32> to vector<8x128xf32>
    %307 = math.tanh %306 : vector<8x128xf32>
    %308 = vector.extract_strided_slice %293 {offsets = [0, 384], sizes = [8, 128], strides = [1, 1]} : vector<8x512xf32> to vector<8x128xf32>
    %309 = arith.negf %308 : vector<8x128xf32>
    %310 = math.exp %309 : vector<8x128xf32>
    %cst_152 = arith.constant 1.000000e+00 : f32
    %311 = vector.broadcast %cst_152 : f32 to vector<8x128xf32>
    %312 = arith.addf %311, %310 : vector<8x128xf32>
    %313 = arith.divf %311, %312 : vector<8x128xf32>
    %314 = arith.mulf %305, %287 : vector<8x128xf32>
    %315 = arith.mulf %299, %307 : vector<8x128xf32>
    %316 = arith.addf %314, %315 : vector<8x128xf32>
    %317 = math.tanh %316 : vector<8x128xf32>
    %318 = arith.mulf %313, %317 : vector<8x128xf32>
    %c0_153 = arith.constant 0 : index
    %c0_154 = arith.constant 0 : index
    %319 = vector.load %arg12[%c0_153, %c0_154] : memref<8x128xf32, #tpu.memory_space<vmem>>, vector<8x128xf32>
    tpu.vector_store %arg12[%c0_153, %c0_154], %318 {strides = array<i32>} : memref<8x128xf32, #tpu.memory_space<vmem>>, vector<8x128xf32>,
    %c0_155 = arith.constant 0 : index
    %c0_156 = arith.constant 0 : index
    %320 = vector.load %arg13[%c0_155, %c0_156] : memref<8x128xf32, #tpu.memory_space<vmem>>, vector<8x128xf32>
    tpu.vector_store %arg13[%c0_155, %c0_156], %316 {strides = array<i32>} : memref<8x128xf32, #tpu.memory_space<vmem>>, vector<8x128xf32>,
    %321 = arith.index_cast %c7_i32 : i32 to index
    %c0_157 = arith.constant 0 : index
    %c0_158 = arith.constant 0 : index
    %322 = vector.load %arg10[%321, %c0_157, %c0_158] : memref<8x8x128xf32, #tpu.memory_space<vmem>>, vector<1x8x128xf32>
    %323 = vector.shape_cast %322 : vector<1x8x128xf32> to vector<8x128xf32>
    %324 = vector.shape_cast %318 : vector<8x128xf32> to vector<1x8x128xf32>
    tpu.vector_store %arg10[%321, %c0_157, %c0_158], %324 {strides = array<i32>} : memref<8x8x128xf32, #tpu.memory_space<vmem>>, vector<1x8x128xf32>,
    %c8_i32 = arith.constant 8 : i32
    %c0_159 = arith.constant 0 : index
    %c0_160 = arith.constant 0 : index
    %c0_161 = arith.constant 0 : index
    %325 = vector.load %arg10[%c0_159, %c0_160, %c0_161] : memref<8x8x128xf32, #tpu.memory_space<vmem>>, vector<8x8x128xf32>
    %326 = vector.shape_cast %325 : vector<8x8x128xf32> to vector<64x128xf32>
    %c0_162 = arith.constant 0 : index
    %c0_163 = arith.constant 0 : index
    %327 = vector.load %arg4[%c0_162, %c0_163] : memref<128x512xf32, #tpu.memory_space<vmem>>, vector<128x512xf32>
    %cst_164 = arith.constant dense<0.000000e+00> : vector<64x512xf32>
    %328 = tpu.matmul %326, %327, %cst_164 {dimension_numbers = #tpu.dot_dimension_numbers<[1], [0], [0], [1], [0, 0, 1, 1], [], []>} : vector<64x128xf32>, vector<128x512xf32>, vector<64x512xf32> -> vector<64x512xf32>
    %c0_165 = arith.constant 0 : index
    %c0_166 = arith.constant 0 : index
    %329 = vector.load %arg6[%c0_165, %c0_166] : memref<1x512xf32, #tpu.memory_space<vmem>>, vector<1x512xf32>
    %330 = vector.broadcast %329 : vector<1x512xf32> to vector<64x512xf32>
    %331 = arith.addf %328, %330 : vector<64x512xf32>
    %332 = vector.shape_cast %331 : vector<64x512xf32> to vector<8x8x512xf32>
    %c0_167 = arith.constant 0 : index
    %c0_168 = arith.constant 0 : index
    %c0_169 = arith.constant 0 : index
    %333 = vector.load %arg11[%c0_167, %c0_168, %c0_169] : memref<8x8x512xf32, #tpu.memory_space<vmem>>, vector<8x8x512xf32>
    tpu.vector_store %arg11[%c0_167, %c0_168, %c0_169], %332 {strides = array<i32>} : memref<8x8x512xf32, #tpu.memory_space<vmem>>, vector<8x8x512xf32>,
    %cst_170 = arith.constant 0.000000e+00 : f32
    %334 = vector.broadcast %cst_170 : f32 to vector<8x128xf32>
    %c0_171 = arith.constant 0 : index
    %c0_172 = arith.constant 0 : index
    %335 = vector.load %arg12[%c0_171, %c0_172] : memref<8x128xf32, #tpu.memory_space<vmem>>, vector<8x128xf32>
    tpu.vector_store %arg12[%c0_171, %c0_172], %334 {strides = array<i32>} : memref<8x128xf32, #tpu.memory_space<vmem>>, vector<8x128xf32>,
    %cst_173 = arith.constant 0.000000e+00 : f32
    %336 = vector.broadcast %cst_173 : f32 to vector<8x128xf32>
    %c0_174 = arith.constant 0 : index
    %c0_175 = arith.constant 0 : index
    %337 = vector.load %arg13[%c0_174, %c0_175] : memref<8x128xf32, #tpu.memory_space<vmem>>, vector<8x128xf32>
    tpu.vector_store %arg13[%c0_174, %c0_175], %336 {strides = array<i32>} : memref<8x128xf32, #tpu.memory_space<vmem>>, vector<8x128xf32>,
    %c0_i32_176 = arith.constant 0 : i32
    %c0_177 = arith.constant 0 : index
    %c0_178 = arith.constant 0 : index
    %338 = vector.load %arg12[%c0_177, %c0_178] : memref<8x128xf32, #tpu.memory_space<vmem>>, vector<8x128xf32>
    %c0_179 = arith.constant 0 : index
    %c0_180 = arith.constant 0 : index
    %339 = vector.load %arg13[%c0_179, %c0_180] : memref<8x128xf32, #tpu.memory_space<vmem>>, vector<8x128xf32>
    %340 = arith.index_cast %c0_i32_176 : i32 to index
    %c0_181 = arith.constant 0 : index
    %c0_182 = arith.constant 0 : index
    %341 = vector.load %arg11[%340, %c0_181, %c0_182] : memref<8x8x512xf32, #tpu.memory_space<vmem>>, vector<1x8x512xf32>
    %342 = vector.shape_cast %341 : vector<1x8x512xf32> to vector<8x512xf32>
    %c0_183 = arith.constant 0 : index
    %c0_184 = arith.constant 0 : index
    %343 = vector.load %arg5[%c0_183, %c0_184] : memref<128x512xf32, #tpu.memory_space<vmem>>, vector<128x512xf32>
    %cst_185 = arith.constant dense<0.000000e+00> : vector<8x512xf32>
    %344 = tpu.matmul %338, %343, %cst_185 {dimension_numbers = #tpu.dot_dimension_numbers<[1], [0], [0], [1], [0, 0, 1, 1], [], []>} : vector<8x128xf32>, vector<128x512xf32>, vector<8x512xf32> -> vector<8x512xf32>
    %345 = arith.addf %342, %344 : vector<8x512xf32>
    %346 = vector.extract_strided_slice %345 {offsets = [0, 0], sizes = [8, 128], strides = [1, 1]} : vector<8x512xf32> to vector<8x128xf32>
    %347 = arith.negf %346 : vector<8x128xf32>
    %348 = math.exp %347 : vector<8x128xf32>
    %cst_186 = arith.constant 1.000000e+00 : f32
    %349 = vector.broadcast %cst_186 : f32 to vector<8x128xf32>
    %350 = arith.addf %349, %348 : vector<8x128xf32>
    %351 = arith.divf %349, %350 : vector<8x128xf32>
    %352 = vector.extract_strided_slice %345 {offsets = [0, 128], sizes = [8, 128], strides = [1, 1]} : vector<8x512xf32> to vector<8x128xf32>
    %353 = arith.negf %352 : vector<8x128xf32>
    %354 = math.exp %353 : vector<8x128xf32>
    %cst_187 = arith.constant 1.000000e+00 : f32
    %355 = vector.broadcast %cst_187 : f32 to vector<8x128xf32>
    %356 = arith.addf %355, %354 : vector<8x128xf32>
    %357 = arith.divf %355, %356 : vector<8x128xf32>
    %358 = vector.extract_strided_slice %345 {offsets = [0, 256], sizes = [8, 128], strides = [1, 1]} : vector<8x512xf32> to vector<8x128xf32>
    %359 = math.tanh %358 : vector<8x128xf32>
    %360 = vector.extract_strided_slice %345 {offsets = [0, 384], sizes = [8, 128], strides = [1, 1]} : vector<8x512xf32> to vector<8x128xf32>
    %361 = arith.negf %360 : vector<8x128xf32>
    %362 = math.exp %361 : vector<8x128xf32>
    %cst_188 = arith.constant 1.000000e+00 : f32
    %363 = vector.broadcast %cst_188 : f32 to vector<8x128xf32>
    %364 = arith.addf %363, %362 : vector<8x128xf32>
    %365 = arith.divf %363, %364 : vector<8x128xf32>
    %366 = arith.mulf %357, %339 : vector<8x128xf32>
    %367 = arith.mulf %351, %359 : vector<8x128xf32>
    %368 = arith.addf %366, %367 : vector<8x128xf32>
    %369 = math.tanh %368 : vector<8x128xf32>
    %370 = arith.mulf %365, %369 : vector<8x128xf32>
    %c0_189 = arith.constant 0 : index
    %c0_190 = arith.constant 0 : index
    %371 = vector.load %arg12[%c0_189, %c0_190] : memref<8x128xf32, #tpu.memory_space<vmem>>, vector<8x128xf32>
    tpu.vector_store %arg12[%c0_189, %c0_190], %370 {strides = array<i32>} : memref<8x128xf32, #tpu.memory_space<vmem>>, vector<8x128xf32>,
    %c0_191 = arith.constant 0 : index
    %c0_192 = arith.constant 0 : index
    %372 = vector.load %arg13[%c0_191, %c0_192] : memref<8x128xf32, #tpu.memory_space<vmem>>, vector<8x128xf32>
    tpu.vector_store %arg13[%c0_191, %c0_192], %368 {strides = array<i32>} : memref<8x128xf32, #tpu.memory_space<vmem>>, vector<8x128xf32>,
    %373 = arith.index_cast %c0_i32_176 : i32 to index
    %c0_193 = arith.constant 0 : index
    %c0_194 = arith.constant 0 : index
    %374 = vector.load %arg10[%373, %c0_193, %c0_194] : memref<8x8x128xf32, #tpu.memory_space<vmem>>, vector<1x8x128xf32>
    %375 = vector.shape_cast %374 : vector<1x8x128xf32> to vector<8x128xf32>
    %376 = vector.shape_cast %370 : vector<8x128xf32> to vector<1x8x128xf32>
    tpu.vector_store %arg10[%373, %c0_193, %c0_194], %376 {strides = array<i32>} : memref<8x8x128xf32, #tpu.memory_space<vmem>>, vector<1x8x128xf32>,
    %c1_i32_195 = arith.constant 1 : i32
    %c0_196 = arith.constant 0 : index
    %c0_197 = arith.constant 0 : index
    %377 = vector.load %arg12[%c0_196, %c0_197] : memref<8x128xf32, #tpu.memory_space<vmem>>, vector<8x128xf32>
    %c0_198 = arith.constant 0 : index
    %c0_199 = arith.constant 0 : index
    %378 = vector.load %arg13[%c0_198, %c0_199] : memref<8x128xf32, #tpu.memory_space<vmem>>, vector<8x128xf32>
    %379 = arith.index_cast %c1_i32_195 : i32 to index
    %c0_200 = arith.constant 0 : index
    %c0_201 = arith.constant 0 : index
    %380 = vector.load %arg11[%379, %c0_200, %c0_201] : memref<8x8x512xf32, #tpu.memory_space<vmem>>, vector<1x8x512xf32>
    %381 = vector.shape_cast %380 : vector<1x8x512xf32> to vector<8x512xf32>
    %c0_202 = arith.constant 0 : index
    %c0_203 = arith.constant 0 : index
    %382 = vector.load %arg5[%c0_202, %c0_203] : memref<128x512xf32, #tpu.memory_space<vmem>>, vector<128x512xf32>
    %cst_204 = arith.constant dense<0.000000e+00> : vector<8x512xf32>
    %383 = tpu.matmul %377, %382, %cst_204 {dimension_numbers = #tpu.dot_dimension_numbers<[1], [0], [0], [1], [0, 0, 1, 1], [], []>} : vector<8x128xf32>, vector<128x512xf32>, vector<8x512xf32> -> vector<8x512xf32>
    %384 = arith.addf %381, %383 : vector<8x512xf32>
    %385 = vector.extract_strided_slice %384 {offsets = [0, 0], sizes = [8, 128], strides = [1, 1]} : vector<8x512xf32> to vector<8x128xf32>
    %386 = arith.negf %385 : vector<8x128xf32>
    %387 = math.exp %386 : vector<8x128xf32>
    %cst_205 = arith.constant 1.000000e+00 : f32
    %388 = vector.broadcast %cst_205 : f32 to vector<8x128xf32>
    %389 = arith.addf %388, %387 : vector<8x128xf32>
    %390 = arith.divf %388, %389 : vector<8x128xf32>
    %391 = vector.extract_strided_slice %384 {offsets = [0, 128], sizes = [8, 128], strides = [1, 1]} : vector<8x512xf32> to vector<8x128xf32>
    %392 = arith.negf %391 : vector<8x128xf32>
    %393 = math.exp %392 : vector<8x128xf32>
    %cst_206 = arith.constant 1.000000e+00 : f32
    %394 = vector.broadcast %cst_206 : f32 to vector<8x128xf32>
    %395 = arith.addf %394, %393 : vector<8x128xf32>
    %396 = arith.divf %394, %395 : vector<8x128xf32>
    %397 = vector.extract_strided_slice %384 {offsets = [0, 256], sizes = [8, 128], strides = [1, 1]} : vector<8x512xf32> to vector<8x128xf32>
    %398 = math.tanh %397 : vector<8x128xf32>
    %399 = vector.extract_strided_slice %384 {offsets = [0, 384], sizes = [8, 128], strides = [1, 1]} : vector<8x512xf32> to vector<8x128xf32>
    %400 = arith.negf %399 : vector<8x128xf32>
    %401 = math.exp %400 : vector<8x128xf32>
    %cst_207 = arith.constant 1.000000e+00 : f32
    %402 = vector.broadcast %cst_207 : f32 to vector<8x128xf32>
    %403 = arith.addf %402, %401 : vector<8x128xf32>
    %404 = arith.divf %402, %403 : vector<8x128xf32>
    %405 = arith.mulf %396, %378 : vector<8x128xf32>
    %406 = arith.mulf %390, %398 : vector<8x128xf32>
    %407 = arith.addf %405, %406 : vector<8x128xf32>
    %408 = math.tanh %407 : vector<8x128xf32>
    %409 = arith.mulf %404, %408 : vector<8x128xf32>
    %c0_208 = arith.constant 0 : index
    %c0_209 = arith.constant 0 : index
    %410 = vector.load %arg12[%c0_208, %c0_209] : memref<8x128xf32, #tpu.memory_space<vmem>>, vector<8x128xf32>
    tpu.vector_store %arg12[%c0_208, %c0_209], %409 {strides = array<i32>} : memref<8x128xf32, #tpu.memory_space<vmem>>, vector<8x128xf32>,
    %c0_210 = arith.constant 0 : index
    %c0_211 = arith.constant 0 : index
    %411 = vector.load %arg13[%c0_210, %c0_211] : memref<8x128xf32, #tpu.memory_space<vmem>>, vector<8x128xf32>
    tpu.vector_store %arg13[%c0_210, %c0_211], %407 {strides = array<i32>} : memref<8x128xf32, #tpu.memory_space<vmem>>, vector<8x128xf32>,
    %412 = arith.index_cast %c1_i32_195 : i32 to index
    %c0_212 = arith.constant 0 : index
    %c0_213 = arith.constant 0 : index
    %413 = vector.load %arg10[%412, %c0_212, %c0_213] : memref<8x8x128xf32, #tpu.memory_space<vmem>>, vector<1x8x128xf32>
    %414 = vector.shape_cast %413 : vector<1x8x128xf32> to vector<8x128xf32>
    %415 = vector.shape_cast %409 : vector<8x128xf32> to vector<1x8x128xf32>
    tpu.vector_store %arg10[%412, %c0_212, %c0_213], %415 {strides = array<i32>} : memref<8x8x128xf32, #tpu.memory_space<vmem>>, vector<1x8x128xf32>,
    %c2_i32_214 = arith.constant 2 : i32
    %c0_215 = arith.constant 0 : index
    %c0_216 = arith.constant 0 : index
    %416 = vector.load %arg12[%c0_215, %c0_216] : memref<8x128xf32, #tpu.memory_space<vmem>>, vector<8x128xf32>
    %c0_217 = arith.constant 0 : index
    %c0_218 = arith.constant 0 : index
    %417 = vector.load %arg13[%c0_217, %c0_218] : memref<8x128xf32, #tpu.memory_space<vmem>>, vector<8x128xf32>
    %418 = arith.index_cast %c2_i32_214 : i32 to index
    %c0_219 = arith.constant 0 : index
    %c0_220 = arith.constant 0 : index
    %419 = vector.load %arg11[%418, %c0_219, %c0_220] : memref<8x8x512xf32, #tpu.memory_space<vmem>>, vector<1x8x512xf32>
    %420 = vector.shape_cast %419 : vector<1x8x512xf32> to vector<8x512xf32>
    %c0_221 = arith.constant 0 : index
    %c0_222 = arith.constant 0 : index
    %421 = vector.load %arg5[%c0_221, %c0_222] : memref<128x512xf32, #tpu.memory_space<vmem>>, vector<128x512xf32>
    %cst_223 = arith.constant dense<0.000000e+00> : vector<8x512xf32>
    %422 = tpu.matmul %416, %421, %cst_223 {dimension_numbers = #tpu.dot_dimension_numbers<[1], [0], [0], [1], [0, 0, 1, 1], [], []>} : vector<8x128xf32>, vector<128x512xf32>, vector<8x512xf32> -> vector<8x512xf32>
    %423 = arith.addf %420, %422 : vector<8x512xf32>
    %424 = vector.extract_strided_slice %423 {offsets = [0, 0], sizes = [8, 128], strides = [1, 1]} : vector<8x512xf32> to vector<8x128xf32>
    %425 = arith.negf %424 : vector<8x128xf32>
    %426 = math.exp %425 : vector<8x128xf32>
    %cst_224 = arith.constant 1.000000e+00 : f32
    %427 = vector.broadcast %cst_224 : f32 to vector<8x128xf32>
    %428 = arith.addf %427, %426 : vector<8x128xf32>
    %429 = arith.divf %427, %428 : vector<8x128xf32>
    %430 = vector.extract_strided_slice %423 {offsets = [0, 128], sizes = [8, 128], strides = [1, 1]} : vector<8x512xf32> to vector<8x128xf32>
    %431 = arith.negf %430 : vector<8x128xf32>
    %432 = math.exp %431 : vector<8x128xf32>
    %cst_225 = arith.constant 1.000000e+00 : f32
    %433 = vector.broadcast %cst_225 : f32 to vector<8x128xf32>
    %434 = arith.addf %433, %432 : vector<8x128xf32>
    %435 = arith.divf %433, %434 : vector<8x128xf32>
    %436 = vector.extract_strided_slice %423 {offsets = [0, 256], sizes = [8, 128], strides = [1, 1]} : vector<8x512xf32> to vector<8x128xf32>
    %437 = math.tanh %436 : vector<8x128xf32>
    %438 = vector.extract_strided_slice %423 {offsets = [0, 384], sizes = [8, 128], strides = [1, 1]} : vector<8x512xf32> to vector<8x128xf32>
    %439 = arith.negf %438 : vector<8x128xf32>
    %440 = math.exp %439 : vector<8x128xf32>
    %cst_226 = arith.constant 1.000000e+00 : f32
    %441 = vector.broadcast %cst_226 : f32 to vector<8x128xf32>
    %442 = arith.addf %441, %440 : vector<8x128xf32>
    %443 = arith.divf %441, %442 : vector<8x128xf32>
    %444 = arith.mulf %435, %417 : vector<8x128xf32>
    %445 = arith.mulf %429, %437 : vector<8x128xf32>
    %446 = arith.addf %444, %445 : vector<8x128xf32>
    %447 = math.tanh %446 : vector<8x128xf32>
    %448 = arith.mulf %443, %447 : vector<8x128xf32>
    %c0_227 = arith.constant 0 : index
    %c0_228 = arith.constant 0 : index
    %449 = vector.load %arg12[%c0_227, %c0_228] : memref<8x128xf32, #tpu.memory_space<vmem>>, vector<8x128xf32>
    tpu.vector_store %arg12[%c0_227, %c0_228], %448 {strides = array<i32>} : memref<8x128xf32, #tpu.memory_space<vmem>>, vector<8x128xf32>,
    %c0_229 = arith.constant 0 : index
    %c0_230 = arith.constant 0 : index
    %450 = vector.load %arg13[%c0_229, %c0_230] : memref<8x128xf32, #tpu.memory_space<vmem>>, vector<8x128xf32>
    tpu.vector_store %arg13[%c0_229, %c0_230], %446 {strides = array<i32>} : memref<8x128xf32, #tpu.memory_space<vmem>>, vector<8x128xf32>,
    %451 = arith.index_cast %c2_i32_214 : i32 to index
    %c0_231 = arith.constant 0 : index
    %c0_232 = arith.constant 0 : index
    %452 = vector.load %arg10[%451, %c0_231, %c0_232] : memref<8x8x128xf32, #tpu.memory_space<vmem>>, vector<1x8x128xf32>
    %453 = vector.shape_cast %452 : vector<1x8x128xf32> to vector<8x128xf32>
    %454 = vector.shape_cast %448 : vector<8x128xf32> to vector<1x8x128xf32>
    tpu.vector_store %arg10[%451, %c0_231, %c0_232], %454 {strides = array<i32>} : memref<8x8x128xf32, #tpu.memory_space<vmem>>, vector<1x8x128xf32>,
    %c3_i32_233 = arith.constant 3 : i32
    %c0_234 = arith.constant 0 : index
    %c0_235 = arith.constant 0 : index
    %455 = vector.load %arg12[%c0_234, %c0_235] : memref<8x128xf32, #tpu.memory_space<vmem>>, vector<8x128xf32>
    %c0_236 = arith.constant 0 : index
    %c0_237 = arith.constant 0 : index
    %456 = vector.load %arg13[%c0_236, %c0_237] : memref<8x128xf32, #tpu.memory_space<vmem>>, vector<8x128xf32>
    %457 = arith.index_cast %c3_i32_233 : i32 to index
    %c0_238 = arith.constant 0 : index
    %c0_239 = arith.constant 0 : index
    %458 = vector.load %arg11[%457, %c0_238, %c0_239] : memref<8x8x512xf32, #tpu.memory_space<vmem>>, vector<1x8x512xf32>
    %459 = vector.shape_cast %458 : vector<1x8x512xf32> to vector<8x512xf32>
    %c0_240 = arith.constant 0 : index
    %c0_241 = arith.constant 0 : index
    %460 = vector.load %arg5[%c0_240, %c0_241] : memref<128x512xf32, #tpu.memory_space<vmem>>, vector<128x512xf32>
    %cst_242 = arith.constant dense<0.000000e+00> : vector<8x512xf32>
    %461 = tpu.matmul %455, %460, %cst_242 {dimension_numbers = #tpu.dot_dimension_numbers<[1], [0], [0], [1], [0, 0, 1, 1], [], []>} : vector<8x128xf32>, vector<128x512xf32>, vector<8x512xf32> -> vector<8x512xf32>
    %462 = arith.addf %459, %461 : vector<8x512xf32>
    %463 = vector.extract_strided_slice %462 {offsets = [0, 0], sizes = [8, 128], strides = [1, 1]} : vector<8x512xf32> to vector<8x128xf32>
    %464 = arith.negf %463 : vector<8x128xf32>
    %465 = math.exp %464 : vector<8x128xf32>
    %cst_243 = arith.constant 1.000000e+00 : f32
    %466 = vector.broadcast %cst_243 : f32 to vector<8x128xf32>
    %467 = arith.addf %466, %465 : vector<8x128xf32>
    %468 = arith.divf %466, %467 : vector<8x128xf32>
    %469 = vector.extract_strided_slice %462 {offsets = [0, 128], sizes = [8, 128], strides = [1, 1]} : vector<8x512xf32> to vector<8x128xf32>
    %470 = arith.negf %469 : vector<8x128xf32>
    %471 = math.exp %470 : vector<8x128xf32>
    %cst_244 = arith.constant 1.000000e+00 : f32
    %472 = vector.broadcast %cst_244 : f32 to vector<8x128xf32>
    %473 = arith.addf %472, %471 : vector<8x128xf32>
    %474 = arith.divf %472, %473 : vector<8x128xf32>
    %475 = vector.extract_strided_slice %462 {offsets = [0, 256], sizes = [8, 128], strides = [1, 1]} : vector<8x512xf32> to vector<8x128xf32>
    %476 = math.tanh %475 : vector<8x128xf32>
    %477 = vector.extract_strided_slice %462 {offsets = [0, 384], sizes = [8, 128], strides = [1, 1]} : vector<8x512xf32> to vector<8x128xf32>
    %478 = arith.negf %477 : vector<8x128xf32>
    %479 = math.exp %478 : vector<8x128xf32>
    %cst_245 = arith.constant 1.000000e+00 : f32
    %480 = vector.broadcast %cst_245 : f32 to vector<8x128xf32>
    %481 = arith.addf %480, %479 : vector<8x128xf32>
    %482 = arith.divf %480, %481 : vector<8x128xf32>
    %483 = arith.mulf %474, %456 : vector<8x128xf32>
    %484 = arith.mulf %468, %476 : vector<8x128xf32>
    %485 = arith.addf %483, %484 : vector<8x128xf32>
    %486 = math.tanh %485 : vector<8x128xf32>
    %487 = arith.mulf %482, %486 : vector<8x128xf32>
    %c0_246 = arith.constant 0 : index
    %c0_247 = arith.constant 0 : index
    %488 = vector.load %arg12[%c0_246, %c0_247] : memref<8x128xf32, #tpu.memory_space<vmem>>, vector<8x128xf32>
    tpu.vector_store %arg12[%c0_246, %c0_247], %487 {strides = array<i32>} : memref<8x128xf32, #tpu.memory_space<vmem>>, vector<8x128xf32>,
    %c0_248 = arith.constant 0 : index
    %c0_249 = arith.constant 0 : index
    %489 = vector.load %arg13[%c0_248, %c0_249] : memref<8x128xf32, #tpu.memory_space<vmem>>, vector<8x128xf32>
    tpu.vector_store %arg13[%c0_248, %c0_249], %485 {strides = array<i32>} : memref<8x128xf32, #tpu.memory_space<vmem>>, vector<8x128xf32>,
    %490 = arith.index_cast %c3_i32_233 : i32 to index
    %c0_250 = arith.constant 0 : index
    %c0_251 = arith.constant 0 : index
    %491 = vector.load %arg10[%490, %c0_250, %c0_251] : memref<8x8x128xf32, #tpu.memory_space<vmem>>, vector<1x8x128xf32>
    %492 = vector.shape_cast %491 : vector<1x8x128xf32> to vector<8x128xf32>
    %493 = vector.shape_cast %487 : vector<8x128xf32> to vector<1x8x128xf32>
    tpu.vector_store %arg10[%490, %c0_250, %c0_251], %493 {strides = array<i32>} : memref<8x8x128xf32, #tpu.memory_space<vmem>>, vector<1x8x128xf32>,
    %c4_i32_252 = arith.constant 4 : i32
    %c0_253 = arith.constant 0 : index
    %c0_254 = arith.constant 0 : index
    %494 = vector.load %arg12[%c0_253, %c0_254] : memref<8x128xf32, #tpu.memory_space<vmem>>, vector<8x128xf32>
    %c0_255 = arith.constant 0 : index
    %c0_256 = arith.constant 0 : index
    %495 = vector.load %arg13[%c0_255, %c0_256] : memref<8x128xf32, #tpu.memory_space<vmem>>, vector<8x128xf32>
    %496 = arith.index_cast %c4_i32_252 : i32 to index
    %c0_257 = arith.constant 0 : index
    %c0_258 = arith.constant 0 : index
    %497 = vector.load %arg11[%496, %c0_257, %c0_258] : memref<8x8x512xf32, #tpu.memory_space<vmem>>, vector<1x8x512xf32>
    %498 = vector.shape_cast %497 : vector<1x8x512xf32> to vector<8x512xf32>
    %c0_259 = arith.constant 0 : index
    %c0_260 = arith.constant 0 : index
    %499 = vector.load %arg5[%c0_259, %c0_260] : memref<128x512xf32, #tpu.memory_space<vmem>>, vector<128x512xf32>
    %cst_261 = arith.constant dense<0.000000e+00> : vector<8x512xf32>
    %500 = tpu.matmul %494, %499, %cst_261 {dimension_numbers = #tpu.dot_dimension_numbers<[1], [0], [0], [1], [0, 0, 1, 1], [], []>} : vector<8x128xf32>, vector<128x512xf32>, vector<8x512xf32> -> vector<8x512xf32>
    %501 = arith.addf %498, %500 : vector<8x512xf32>
    %502 = vector.extract_strided_slice %501 {offsets = [0, 0], sizes = [8, 128], strides = [1, 1]} : vector<8x512xf32> to vector<8x128xf32>
    %503 = arith.negf %502 : vector<8x128xf32>
    %504 = math.exp %503 : vector<8x128xf32>
    %cst_262 = arith.constant 1.000000e+00 : f32
    %505 = vector.broadcast %cst_262 : f32 to vector<8x128xf32>
    %506 = arith.addf %505, %504 : vector<8x128xf32>
    %507 = arith.divf %505, %506 : vector<8x128xf32>
    %508 = vector.extract_strided_slice %501 {offsets = [0, 128], sizes = [8, 128], strides = [1, 1]} : vector<8x512xf32> to vector<8x128xf32>
    %509 = arith.negf %508 : vector<8x128xf32>
    %510 = math.exp %509 : vector<8x128xf32>
    %cst_263 = arith.constant 1.000000e+00 : f32
    %511 = vector.broadcast %cst_263 : f32 to vector<8x128xf32>
    %512 = arith.addf %511, %510 : vector<8x128xf32>
    %513 = arith.divf %511, %512 : vector<8x128xf32>
    %514 = vector.extract_strided_slice %501 {offsets = [0, 256], sizes = [8, 128], strides = [1, 1]} : vector<8x512xf32> to vector<8x128xf32>
    %515 = math.tanh %514 : vector<8x128xf32>
    %516 = vector.extract_strided_slice %501 {offsets = [0, 384], sizes = [8, 128], strides = [1, 1]} : vector<8x512xf32> to vector<8x128xf32>
    %517 = arith.negf %516 : vector<8x128xf32>
    %518 = math.exp %517 : vector<8x128xf32>
    %cst_264 = arith.constant 1.000000e+00 : f32
    %519 = vector.broadcast %cst_264 : f32 to vector<8x128xf32>
    %520 = arith.addf %519, %518 : vector<8x128xf32>
    %521 = arith.divf %519, %520 : vector<8x128xf32>
    %522 = arith.mulf %513, %495 : vector<8x128xf32>
    %523 = arith.mulf %507, %515 : vector<8x128xf32>
    %524 = arith.addf %522, %523 : vector<8x128xf32>
    %525 = math.tanh %524 : vector<8x128xf32>
    %526 = arith.mulf %521, %525 : vector<8x128xf32>
    %c0_265 = arith.constant 0 : index
    %c0_266 = arith.constant 0 : index
    %527 = vector.load %arg12[%c0_265, %c0_266] : memref<8x128xf32, #tpu.memory_space<vmem>>, vector<8x128xf32>
    tpu.vector_store %arg12[%c0_265, %c0_266], %526 {strides = array<i32>} : memref<8x128xf32, #tpu.memory_space<vmem>>, vector<8x128xf32>,
    %c0_267 = arith.constant 0 : index
    %c0_268 = arith.constant 0 : index
    %528 = vector.load %arg13[%c0_267, %c0_268] : memref<8x128xf32, #tpu.memory_space<vmem>>, vector<8x128xf32>
    tpu.vector_store %arg13[%c0_267, %c0_268], %524 {strides = array<i32>} : memref<8x128xf32, #tpu.memory_space<vmem>>, vector<8x128xf32>,
    %529 = arith.index_cast %c4_i32_252 : i32 to index
    %c0_269 = arith.constant 0 : index
    %c0_270 = arith.constant 0 : index
    %530 = vector.load %arg10[%529, %c0_269, %c0_270] : memref<8x8x128xf32, #tpu.memory_space<vmem>>, vector<1x8x128xf32>
    %531 = vector.shape_cast %530 : vector<1x8x128xf32> to vector<8x128xf32>
    %532 = vector.shape_cast %526 : vector<8x128xf32> to vector<1x8x128xf32>
    tpu.vector_store %arg10[%529, %c0_269, %c0_270], %532 {strides = array<i32>} : memref<8x8x128xf32, #tpu.memory_space<vmem>>, vector<1x8x128xf32>,
    %c5_i32_271 = arith.constant 5 : i32
    %c0_272 = arith.constant 0 : index
    %c0_273 = arith.constant 0 : index
    %533 = vector.load %arg12[%c0_272, %c0_273] : memref<8x128xf32, #tpu.memory_space<vmem>>, vector<8x128xf32>
    %c0_274 = arith.constant 0 : index
    %c0_275 = arith.constant 0 : index
    %534 = vector.load %arg13[%c0_274, %c0_275] : memref<8x128xf32, #tpu.memory_space<vmem>>, vector<8x128xf32>
    %535 = arith.index_cast %c5_i32_271 : i32 to index
    %c0_276 = arith.constant 0 : index
    %c0_277 = arith.constant 0 : index
    %536 = vector.load %arg11[%535, %c0_276, %c0_277] : memref<8x8x512xf32, #tpu.memory_space<vmem>>, vector<1x8x512xf32>
    %537 = vector.shape_cast %536 : vector<1x8x512xf32> to vector<8x512xf32>
    %c0_278 = arith.constant 0 : index
    %c0_279 = arith.constant 0 : index
    %538 = vector.load %arg5[%c0_278, %c0_279] : memref<128x512xf32, #tpu.memory_space<vmem>>, vector<128x512xf32>
    %cst_280 = arith.constant dense<0.000000e+00> : vector<8x512xf32>
    %539 = tpu.matmul %533, %538, %cst_280 {dimension_numbers = #tpu.dot_dimension_numbers<[1], [0], [0], [1], [0, 0, 1, 1], [], []>} : vector<8x128xf32>, vector<128x512xf32>, vector<8x512xf32> -> vector<8x512xf32>
    %540 = arith.addf %537, %539 : vector<8x512xf32>
    %541 = vector.extract_strided_slice %540 {offsets = [0, 0], sizes = [8, 128], strides = [1, 1]} : vector<8x512xf32> to vector<8x128xf32>
    %542 = arith.negf %541 : vector<8x128xf32>
    %543 = math.exp %542 : vector<8x128xf32>
    %cst_281 = arith.constant 1.000000e+00 : f32
    %544 = vector.broadcast %cst_281 : f32 to vector<8x128xf32>
    %545 = arith.addf %544, %543 : vector<8x128xf32>
    %546 = arith.divf %544, %545 : vector<8x128xf32>
    %547 = vector.extract_strided_slice %540 {offsets = [0, 128], sizes = [8, 128], strides = [1, 1]} : vector<8x512xf32> to vector<8x128xf32>
    %548 = arith.negf %547 : vector<8x128xf32>
    %549 = math.exp %548 : vector<8x128xf32>
    %cst_282 = arith.constant 1.000000e+00 : f32
    %550 = vector.broadcast %cst_282 : f32 to vector<8x128xf32>
    %551 = arith.addf %550, %549 : vector<8x128xf32>
    %552 = arith.divf %550, %551 : vector<8x128xf32>
    %553 = vector.extract_strided_slice %540 {offsets = [0, 256], sizes = [8, 128], strides = [1, 1]} : vector<8x512xf32> to vector<8x128xf32>
    %554 = math.tanh %553 : vector<8x128xf32>
    %555 = vector.extract_strided_slice %540 {offsets = [0, 384], sizes = [8, 128], strides = [1, 1]} : vector<8x512xf32> to vector<8x128xf32>
    %556 = arith.negf %555 : vector<8x128xf32>
    %557 = math.exp %556 : vector<8x128xf32>
    %cst_283 = arith.constant 1.000000e+00 : f32
    %558 = vector.broadcast %cst_283 : f32 to vector<8x128xf32>
    %559 = arith.addf %558, %557 : vector<8x128xf32>
    %560 = arith.divf %558, %559 : vector<8x128xf32>
    %561 = arith.mulf %552, %534 : vector<8x128xf32>
    %562 = arith.mulf %546, %554 : vector<8x128xf32>
    %563 = arith.addf %561, %562 : vector<8x128xf32>
    %564 = math.tanh %563 : vector<8x128xf32>
    %565 = arith.mulf %560, %564 : vector<8x128xf32>
    %c0_284 = arith.constant 0 : index
    %c0_285 = arith.constant 0 : index
    %566 = vector.load %arg12[%c0_284, %c0_285] : memref<8x128xf32, #tpu.memory_space<vmem>>, vector<8x128xf32>
    tpu.vector_store %arg12[%c0_284, %c0_285], %565 {strides = array<i32>} : memref<8x128xf32, #tpu.memory_space<vmem>>, vector<8x128xf32>,
    %c0_286 = arith.constant 0 : index
    %c0_287 = arith.constant 0 : index
    %567 = vector.load %arg13[%c0_286, %c0_287] : memref<8x128xf32, #tpu.memory_space<vmem>>, vector<8x128xf32>
    tpu.vector_store %arg13[%c0_286, %c0_287], %563 {strides = array<i32>} : memref<8x128xf32, #tpu.memory_space<vmem>>, vector<8x128xf32>,
    %568 = arith.index_cast %c5_i32_271 : i32 to index
    %c0_288 = arith.constant 0 : index
    %c0_289 = arith.constant 0 : index
    %569 = vector.load %arg10[%568, %c0_288, %c0_289] : memref<8x8x128xf32, #tpu.memory_space<vmem>>, vector<1x8x128xf32>
    %570 = vector.shape_cast %569 : vector<1x8x128xf32> to vector<8x128xf32>
    %571 = vector.shape_cast %565 : vector<8x128xf32> to vector<1x8x128xf32>
    tpu.vector_store %arg10[%568, %c0_288, %c0_289], %571 {strides = array<i32>} : memref<8x8x128xf32, #tpu.memory_space<vmem>>, vector<1x8x128xf32>,
    %c6_i32_290 = arith.constant 6 : i32
    %c0_291 = arith.constant 0 : index
    %c0_292 = arith.constant 0 : index
    %572 = vector.load %arg12[%c0_291, %c0_292] : memref<8x128xf32, #tpu.memory_space<vmem>>, vector<8x128xf32>
    %c0_293 = arith.constant 0 : index
    %c0_294 = arith.constant 0 : index
    %573 = vector.load %arg13[%c0_293, %c0_294] : memref<8x128xf32, #tpu.memory_space<vmem>>, vector<8x128xf32>
    %574 = arith.index_cast %c6_i32_290 : i32 to index
    %c0_295 = arith.constant 0 : index
    %c0_296 = arith.constant 0 : index
    %575 = vector.load %arg11[%574, %c0_295, %c0_296] : memref<8x8x512xf32, #tpu.memory_space<vmem>>, vector<1x8x512xf32>
    %576 = vector.shape_cast %575 : vector<1x8x512xf32> to vector<8x512xf32>
    %c0_297 = arith.constant 0 : index
    %c0_298 = arith.constant 0 : index
    %577 = vector.load %arg5[%c0_297, %c0_298] : memref<128x512xf32, #tpu.memory_space<vmem>>, vector<128x512xf32>
    %cst_299 = arith.constant dense<0.000000e+00> : vector<8x512xf32>
    %578 = tpu.matmul %572, %577, %cst_299 {dimension_numbers = #tpu.dot_dimension_numbers<[1], [0], [0], [1], [0, 0, 1, 1], [], []>} : vector<8x128xf32>, vector<128x512xf32>, vector<8x512xf32> -> vector<8x512xf32>
    %579 = arith.addf %576, %578 : vector<8x512xf32>
    %580 = vector.extract_strided_slice %579 {offsets = [0, 0], sizes = [8, 128], strides = [1, 1]} : vector<8x512xf32> to vector<8x128xf32>
    %581 = arith.negf %580 : vector<8x128xf32>
    %582 = math.exp %581 : vector<8x128xf32>
    %cst_300 = arith.constant 1.000000e+00 : f32
    %583 = vector.broadcast %cst_300 : f32 to vector<8x128xf32>
    %584 = arith.addf %583, %582 : vector<8x128xf32>
    %585 = arith.divf %583, %584 : vector<8x128xf32>
    %586 = vector.extract_strided_slice %579 {offsets = [0, 128], sizes = [8, 128], strides = [1, 1]} : vector<8x512xf32> to vector<8x128xf32>
    %587 = arith.negf %586 : vector<8x128xf32>
    %588 = math.exp %587 : vector<8x128xf32>
    %cst_301 = arith.constant 1.000000e+00 : f32
    %589 = vector.broadcast %cst_301 : f32 to vector<8x128xf32>
    %590 = arith.addf %589, %588 : vector<8x128xf32>
    %591 = arith.divf %589, %590 : vector<8x128xf32>
    %592 = vector.extract_strided_slice %579 {offsets = [0, 256], sizes = [8, 128], strides = [1, 1]} : vector<8x512xf32> to vector<8x128xf32>
    %593 = math.tanh %592 : vector<8x128xf32>
    %594 = vector.extract_strided_slice %579 {offsets = [0, 384], sizes = [8, 128], strides = [1, 1]} : vector<8x512xf32> to vector<8x128xf32>
    %595 = arith.negf %594 : vector<8x128xf32>
    %596 = math.exp %595 : vector<8x128xf32>
    %cst_302 = arith.constant 1.000000e+00 : f32
    %597 = vector.broadcast %cst_302 : f32 to vector<8x128xf32>
    %598 = arith.addf %597, %596 : vector<8x128xf32>
    %599 = arith.divf %597, %598 : vector<8x128xf32>
    %600 = arith.mulf %591, %573 : vector<8x128xf32>
    %601 = arith.mulf %585, %593 : vector<8x128xf32>
    %602 = arith.addf %600, %601 : vector<8x128xf32>
    %603 = math.tanh %602 : vector<8x128xf32>
    %604 = arith.mulf %599, %603 : vector<8x128xf32>
    %c0_303 = arith.constant 0 : index
    %c0_304 = arith.constant 0 : index
    %605 = vector.load %arg12[%c0_303, %c0_304] : memref<8x128xf32, #tpu.memory_space<vmem>>, vector<8x128xf32>
    tpu.vector_store %arg12[%c0_303, %c0_304], %604 {strides = array<i32>} : memref<8x128xf32, #tpu.memory_space<vmem>>, vector<8x128xf32>,
    %c0_305 = arith.constant 0 : index
    %c0_306 = arith.constant 0 : index
    %606 = vector.load %arg13[%c0_305, %c0_306] : memref<8x128xf32, #tpu.memory_space<vmem>>, vector<8x128xf32>
    tpu.vector_store %arg13[%c0_305, %c0_306], %602 {strides = array<i32>} : memref<8x128xf32, #tpu.memory_space<vmem>>, vector<8x128xf32>,
    %607 = arith.index_cast %c6_i32_290 : i32 to index
    %c0_307 = arith.constant 0 : index
    %c0_308 = arith.constant 0 : index
    %608 = vector.load %arg10[%607, %c0_307, %c0_308] : memref<8x8x128xf32, #tpu.memory_space<vmem>>, vector<1x8x128xf32>
    %609 = vector.shape_cast %608 : vector<1x8x128xf32> to vector<8x128xf32>
    %610 = vector.shape_cast %604 : vector<8x128xf32> to vector<1x8x128xf32>
    tpu.vector_store %arg10[%607, %c0_307, %c0_308], %610 {strides = array<i32>} : memref<8x8x128xf32, #tpu.memory_space<vmem>>, vector<1x8x128xf32>,
    %c7_i32_309 = arith.constant 7 : i32
    %c0_310 = arith.constant 0 : index
    %c0_311 = arith.constant 0 : index
    %611 = vector.load %arg12[%c0_310, %c0_311] : memref<8x128xf32, #tpu.memory_space<vmem>>, vector<8x128xf32>
    %c0_312 = arith.constant 0 : index
    %c0_313 = arith.constant 0 : index
    %612 = vector.load %arg13[%c0_312, %c0_313] : memref<8x128xf32, #tpu.memory_space<vmem>>, vector<8x128xf32>
    %613 = arith.index_cast %c7_i32_309 : i32 to index
    %c0_314 = arith.constant 0 : index
    %c0_315 = arith.constant 0 : index
    %614 = vector.load %arg11[%613, %c0_314, %c0_315] : memref<8x8x512xf32, #tpu.memory_space<vmem>>, vector<1x8x512xf32>
    %615 = vector.shape_cast %614 : vector<1x8x512xf32> to vector<8x512xf32>
    %c0_316 = arith.constant 0 : index
    %c0_317 = arith.constant 0 : index
    %616 = vector.load %arg5[%c0_316, %c0_317] : memref<128x512xf32, #tpu.memory_space<vmem>>, vector<128x512xf32>
    %cst_318 = arith.constant dense<0.000000e+00> : vector<8x512xf32>
    %617 = tpu.matmul %611, %616, %cst_318 {dimension_numbers = #tpu.dot_dimension_numbers<[1], [0], [0], [1], [0, 0, 1, 1], [], []>} : vector<8x128xf32>, vector<128x512xf32>, vector<8x512xf32> -> vector<8x512xf32>
    %618 = arith.addf %615, %617 : vector<8x512xf32>
    %619 = vector.extract_strided_slice %618 {offsets = [0, 0], sizes = [8, 128], strides = [1, 1]} : vector<8x512xf32> to vector<8x128xf32>
    %620 = arith.negf %619 : vector<8x128xf32>
    %621 = math.exp %620 : vector<8x128xf32>
    %cst_319 = arith.constant 1.000000e+00 : f32
    %622 = vector.broadcast %cst_319 : f32 to vector<8x128xf32>
    %623 = arith.addf %622, %621 : vector<8x128xf32>
    %624 = arith.divf %622, %623 : vector<8x128xf32>
    %625 = vector.extract_strided_slice %618 {offsets = [0, 128], sizes = [8, 128], strides = [1, 1]} : vector<8x512xf32> to vector<8x128xf32>
    %626 = arith.negf %625 : vector<8x128xf32>
    %627 = math.exp %626 : vector<8x128xf32>
    %cst_320 = arith.constant 1.000000e+00 : f32
    %628 = vector.broadcast %cst_320 : f32 to vector<8x128xf32>
    %629 = arith.addf %628, %627 : vector<8x128xf32>
    %630 = arith.divf %628, %629 : vector<8x128xf32>
    %631 = vector.extract_strided_slice %618 {offsets = [0, 256], sizes = [8, 128], strides = [1, 1]} : vector<8x512xf32> to vector<8x128xf32>
    %632 = math.tanh %631 : vector<8x128xf32>
    %633 = vector.extract_strided_slice %618 {offsets = [0, 384], sizes = [8, 128], strides = [1, 1]} : vector<8x512xf32> to vector<8x128xf32>
    %634 = arith.negf %633 : vector<8x128xf32>
    %635 = math.exp %634 : vector<8x128xf32>
    %cst_321 = arith.constant 1.000000e+00 : f32
    %636 = vector.broadcast %cst_321 : f32 to vector<8x128xf32>
    %637 = arith.addf %636, %635 : vector<8x128xf32>
    %638 = arith.divf %636, %637 : vector<8x128xf32>
    %639 = arith.mulf %630, %612 : vector<8x128xf32>
    %640 = arith.mulf %624, %632 : vector<8x128xf32>
    %641 = arith.addf %639, %640 : vector<8x128xf32>
    %642 = math.tanh %641 : vector<8x128xf32>
    %643 = arith.mulf %638, %642 : vector<8x128xf32>
    %c0_322 = arith.constant 0 : index
    %c0_323 = arith.constant 0 : index
    %644 = vector.load %arg12[%c0_322, %c0_323] : memref<8x128xf32, #tpu.memory_space<vmem>>, vector<8x128xf32>
    tpu.vector_store %arg12[%c0_322, %c0_323], %643 {strides = array<i32>} : memref<8x128xf32, #tpu.memory_space<vmem>>, vector<8x128xf32>,
    %c0_324 = arith.constant 0 : index
    %c0_325 = arith.constant 0 : index
    %645 = vector.load %arg13[%c0_324, %c0_325] : memref<8x128xf32, #tpu.memory_space<vmem>>, vector<8x128xf32>
    tpu.vector_store %arg13[%c0_324, %c0_325], %641 {strides = array<i32>} : memref<8x128xf32, #tpu.memory_space<vmem>>, vector<8x128xf32>,
    %646 = arith.index_cast %c7_i32_309 : i32 to index
    %c0_326 = arith.constant 0 : index
    %c0_327 = arith.constant 0 : index
    %647 = vector.load %arg10[%646, %c0_326, %c0_327] : memref<8x8x128xf32, #tpu.memory_space<vmem>>, vector<1x8x128xf32>
    %648 = vector.shape_cast %647 : vector<1x8x128xf32> to vector<8x128xf32>
    %649 = vector.shape_cast %643 : vector<8x128xf32> to vector<1x8x128xf32>
    tpu.vector_store %arg10[%646, %c0_326, %c0_327], %649 {strides = array<i32>} : memref<8x8x128xf32, #tpu.memory_space<vmem>>, vector<1x8x128xf32>,
    %c8_i32_328 = arith.constant 8 : i32
    %c0_329 = arith.constant 0 : index
    %c0_330 = arith.constant 0 : index
    %650 = vector.load %arg12[%c0_329, %c0_330] : memref<8x128xf32, #tpu.memory_space<vmem>>, vector<8x128xf32>
    %c0_331 = arith.constant 0 : index
    %c0_332 = arith.constant 0 : index
    %651 = vector.load %arg7[%c0_331, %c0_332] : memref<128x128xf32, #tpu.memory_space<vmem>>, vector<128x128xf32>
    %cst_333 = arith.constant dense<0.000000e+00> : vector<8x128xf32>
    %652 = tpu.matmul %650, %651, %cst_333 {dimension_numbers = #tpu.dot_dimension_numbers<[1], [0], [0], [1], [0, 0, 1, 1], [], []>} : vector<8x128xf32>, vector<128x128xf32>, vector<8x128xf32> -> vector<8x128xf32>
    %c0_334 = arith.constant 0 : index
    %c0_335 = arith.constant 0 : index
    %653 = vector.load %arg8[%c0_334, %c0_335] : memref<1x128xf32, #tpu.memory_space<vmem>>, vector<1x128xf32>
    %654 = vector.broadcast %653 : vector<1x128xf32> to vector<8x128xf32>
    %655 = arith.addf %652, %654 : vector<8x128xf32>
    %c0_336 = arith.constant 0 : index
    %c0_337 = arith.constant 0 : index
    %656 = vector.load %arg9[%c0_336, %c0_337] : memref<8x128xf32, #tpu.memory_space<vmem>>, vector<8x128xf32>
    tpu.vector_store %arg9[%c0_336, %c0_337], %655 {strides = array<i32>} : memref<8x128xf32, #tpu.memory_space<vmem>>, vector<8x128xf32>,
    return
  }
}

</mosaic_0001>

<llo_original>
// kernel: lstm_predictor_forward.1
$region0: #{lstm_predictor_forward.1}
  #allocation0 [shape = 'u32[]', space=smem, size = 0x4, offset = 0x4, fixed_abs, tag = 'smem constant byte address 0x4 - core index']
  #allocation1 [shape = 'u32[144,128]{1,0:T(1,128)}', space=vmem, size = 0x12000, scoped, tag = 'internal scratch']
  #allocation2 [shape = 'f32[8,8,128]{2,1,0:T(8,128)}', space=vmem, size = 0x8000, scoped, tag = 'scratch operand']
  #allocation3 [shape = 'f32[8,8,512]{2,1,0:T(8,128)}', space=vmem, size = 0x20000, scoped, tag = 'scratch operand']
  #allocation4 [shape = 'f32[8,128]{1,0:T(8,128)}', space=vmem, size = 0x1000, scoped, tag = 'scratch operand']
  #allocation5 [shape = 'f32[8,128]{1,0:T(8,128)}', space=vmem, size = 0x1000, scoped, tag = 'scratch operand']
  %s0 = inlined_call_operand.vmem [shape: f32[8,8,16], index: 0, kind: input, shape index: {}]
  %s1 = inlined_call_operand.vmem [shape: f32[16,512], index: 1, kind: input, shape index: {}]
  %s2 = inlined_call_operand.hbm [shape: f32[128,512], index: 2, kind: input, shape index: {}]
  %s3 = inlined_call_operand.vmem [shape: f32[1,512], index: 3, kind: input, shape index: {}]
  %s4 = inlined_call_operand.hbm [shape: f32[128,512], index: 4, kind: input, shape index: {}]
  %s5 = inlined_call_operand.hbm [shape: f32[128,512], index: 5, kind: input, shape index: {}]
  %s6 = inlined_call_operand.vmem [shape: f32[1,512], index: 6, kind: input, shape index: {}]
  %s7 = inlined_call_operand.hbm [shape: f32[128,128], index: 7, kind: input, shape index: {}]
  %s8 = inlined_call_operand.vmem [shape: f32[1,128], index: 8, kind: input, shape index: {}]
  %s9 = inlined_call_operand.vmem [shape: f32[8,128], index: 9, kind: output, shape index: {}]
  %s10 = sld [smem:[#allocation0]]
  $region62: #{lstm_predictor_forward.1} parent=0
    _
  %s12 = ssub.s32 1, %s10
  %s13 = scalar_select 0, %s12, %s10
  $region1: #{lstm_predictor_forward.1} parent=0
    #allocation6 [shape = 'u8[262144]{0}', space=vmem, size = 0x40000, scoped, tag = 'input window, operand 2, single buffered']
    #allocation7 [shape = 's32[1]{0}', space=sflag, size = 0x4, scoped, tag = 'scoped memory for lstm_predictor_forward.1']
    #allocation8 [shape = 'u8[262144]{0}', space=vmem, size = 0x40000, scoped, tag = 'input window, operand 4, single buffered']
    #allocation9 [shape = 's32[1]{0}', space=sflag, size = 0x4, scoped, tag = 'scoped memory for lstm_predictor_forward.1']
    #allocation10 [shape = 'u8[262144]{0}', space=vmem, size = 0x40000, scoped, tag = 'input window, operand 5, single buffered']
    #allocation11 [shape = 'u8[65536]{0}', space=vmem, size = 0x10000, scoped, tag = 'input window, operand 7, single buffered']
    #allocation12 [shape = 's32[1]{0}', space=sflag, size = 0x4, scoped, tag = 'scoped memory for lstm_predictor_forward.1']
    %14 = vsyncpa [#allocation7], 0
    %15 = vsyncpa [#allocation9], 0
    %16 = vsyncpa [#allocation12], 0
    // Predicated region
    $region2: #{lstm_predictor_forward.1} parent=1 // pred_check
      _
    $region3: #{lstm_predictor_forward.1} parent=1 // pred_check_branch
      %18 = sbr.rel (0) target = $region5
    $region4: #{lstm_predictor_forward.1} parent=1 // pred_region
      _
    $region5: #{lstm_predictor_forward.1} parent=1 // pred_fallthru
      _
    // Predicated region
    $region6: #{lstm_predictor_forward.1} parent=1 // pred_check
      _
    $region7: #{lstm_predictor_forward.1} parent=1 // pred_check_branch
      %20 = sbr.rel (0) target = $region9
    $region8: #{lstm_predictor_forward.1} parent=1 // pred_region
      _
    $region9: #{lstm_predictor_forward.1} parent=1 // pred_fallthru
      _
    // Predicated region
    $region10: #{lstm_predictor_forward.1} parent=1 // pred_check
      _
    $region11: #{lstm_predictor_forward.1} parent=1 // pred_check_branch
      %22 = sbr.rel (0) target = $region13
    $region12: #{lstm_predictor_forward.1} parent=1 // pred_region
      %s24 = ssub.s32 8192, 8192
      %25 = vsyncadd [#allocation7], %s24
      %s26 = sshll.u32 [#allocation6], 4
      %s27 = int_to_ptr.vmem [resolvable:$true] %s26
      %32 = dma.hbm_to_vmem [thread:$0]  %s2, 8192, %s27, [#allocation7], 512, 512, 32
    $region13: #{lstm_predictor_forward.1} parent=1 // pred_fallthru
      _
    // Predicated region
    $region14: #{lstm_predictor_forward.1} parent=1 // pred_check
      _
    $region15: #{lstm_predictor_forward.1} parent=1 // pred_check_branch
      %34 = sbr.rel (0) target = $region17
    $region16: #{lstm_predictor_forward.1} parent=1 // pred_region
      _
    $region17: #{lstm_predictor_forward.1} parent=1 // pred_fallthru
      _
    // Predicated region
    $region18: #{lstm_predictor_forward.1} parent=1 // pred_check
      _
    $region19: #{lstm_predictor_forward.1} parent=1 // pred_check_branch
      %36 = sbr.rel (0) target = $region21
    $region20: #{lstm_predictor_forward.1} parent=1 // pred_region
      %s38 = ssub.s32 8192, 8192
      %39 = vsyncadd [#allocation9], %s38
      %s40 = sshll.u32 [#allocation8], 4
      %s41 = int_to_ptr.vmem [resolvable:$true] %s40
      %46 = dma.hbm_to_vmem [thread:$0]  %s4, 8192, %s41, [#allocation9], 512, 512, 32
    $region21: #{lstm_predictor_forward.1} parent=1 // pred_fallthru
      _
    // Predicated region
    $region22: #{lstm_predictor_forward.1} parent=1 // pred_check
      _
    $region23: #{lstm_predictor_forward.1} parent=1 // pred_check_branch
      %48 = sbr.rel (0) target = $region25
    $region24: #{lstm_predictor_forward.1} parent=1 // pred_region
      %s50 = ssub.s32 8192, 8192
      %51 = vsyncadd [#allocation9], %s50
      %s52 = sshll.u32 [#allocation10], 4
      %s53 = int_to_ptr.vmem [resolvable:$true] %s52
      %58 = dma.hbm_to_vmem [thread:$0]  %s5, 8192, %s53, [#allocation9], 512, 512, 32
    $region25: #{lstm_predictor_forward.1} parent=1 // pred_fallthru
      _
    // Predicated region
    $region26: #{lstm_predictor_forward.1} parent=1 // pred_check
      _
    $region27: #{lstm_predictor_forward.1} parent=1 // pred_check_branch
      %60 = sbr.rel (0) target = $region29
    $region28: #{lstm_predictor_forward.1} parent=1 // pred_region
      _
    $region29: #{lstm_predictor_forward.1} parent=1 // pred_fallthru
      _
    // Predicated region
    $region30: #{lstm_predictor_forward.1} parent=1 // pred_check
      _
    $region31: #{lstm_predictor_forward.1} parent=1 // pred_check_branch
      %62 = sbr.rel (0) target = $region33
    $region32: #{lstm_predictor_forward.1} parent=1 // pred_region
      %s64 = ssub.s32 2048, 2048
      %65 = vsyncadd [#allocation12], %s64
      %s66 = sshll.u32 [#allocation11], 4
      %s67 = int_to_ptr.vmem [resolvable:$true] %s66
      %72 = dma.hbm_to_vmem [thread:$0]  %s7, 2048, %s67, [#allocation12], 128, 128, 8
    $region33: #{lstm_predictor_forward.1} parent=1 // pred_fallthru
      _
    // Predicated region
    $region34: #{lstm_predictor_forward.1} parent=1 // pred_check
      _
    $region35: #{lstm_predictor_forward.1} parent=1 // pred_check_branch
      %74 = sbr.rel (0) target = $region37
    $region36: #{lstm_predictor_forward.1} parent=1 // pred_region
      _
    $region37: #{lstm_predictor_forward.1} parent=1 // pred_fallthru
      _
    // Predicated region
    $region38: #{lstm_predictor_forward.1} parent=1 // pred_check
      _
    $region39: #{lstm_predictor_forward.1} parent=1 // pred_check_branch
      %76 = sbr.rel (0) target = $region41
    $region40: #{lstm_predictor_forward.1} parent=1 // pred_region
      %77 = dma.done [#allocation7], 8192
    $region41: #{lstm_predictor_forward.1} parent=1 // pred_fallthru
      _
    // Predicated region
    $region42: #{lstm_predictor_forward.1} parent=1 // pred_check
      _
    $region43: #{lstm_predictor_forward.1} parent=1 // pred_check_branch
      %79 = sbr.rel (0) target = $region45
    $region44: #{lstm_predictor_forward.1} parent=1 // pred_region
      %80 = dma.done [#allocation9], 8192
    $region45: #{lstm_predictor_forward.1} parent=1 // pred_fallthru
      _
    // Predicated region
    $region46: #{lstm_predictor_forward.1} parent=1 // pred_check
      _
    $region47: #{lstm_predictor_forward.1} parent=1 // pred_check_branch
      %82 = sbr.rel (0) target = $region49
    $region48: #{lstm_predictor_forward.1} parent=1 // pred_region
      %83 = dma.done [#allocation9], 8192
    $region49: #{lstm_predictor_forward.1} parent=1 // pred_fallthru
      _
    // Predicated region
    $region50: #{lstm_predictor_forward.1} parent=1 // pred_check
      _
    $region51: #{lstm_predictor_forward.1} parent=1 // pred_check_branch
      %85 = sbr.rel (0) target = $region53
    $region52: #{lstm_predictor_forward.1} parent=1 // pred_region
      %86 = dma.done [#allocation12], 2048
    $region53: #{lstm_predictor_forward.1} parent=1 // pred_fallthru
      _
    %v87 = vld [vmem:[%s0] sm:$0xff]
    %v88 = vld [vmem:[%s0 + $0x8] sm:$0xff]
    %v89 = vld [vmem:[%s0 + $0x10] sm:$0xff]
    %v90 = vld [vmem:[%s0 + $0x18] sm:$0xff]
    %v91 = vld [vmem:[%s0 + $0x20] sm:$0xff]
    %v92 = vld [vmem:[%s0 + $0x28] sm:$0xff]
    %v93 = vld [vmem:[%s0 + $0x30] sm:$0xff]
    %v94 = vld [vmem:[%s0 + $0x38] sm:$0xff]
    %v95 = vld [vmem:[%s1] sm:$0xff]
    %v96 = vld [vmem:[%s1 + $0x8] sm:$0xff]
    %v97 = vld [vmem:[%s1 + $0x10] sm:$0xff]
    %v98 = vld [vmem:[%s1 + $0x18] sm:$0xff]
    %v99 = vld [vmem:[%s1 + $0x20] sm:$0xff]
    %v100 = vld [vmem:[%s1 + $0x28] sm:$0xff]
    %v101 = vld [vmem:[%s1 + $0x30] sm:$0xff]
    %v102 = vld [vmem:[%s1 + $0x38] sm:$0xff]
    %v103 = vld [vmem:[%s3] sm:$0xf]
    %v105 = vlaneseq
    %v106 = vshrl.u32 %v105, 7
    %v107 = vsub.s32 0, %v106
    %v108 = vrot.slane %v103, %v107
    %v109 = vlaneseq
    %v110 = vshrl.u32 %v109, 7
    %v111 = vsub.s32 1, %v110
    %v112 = vrot.slane %v103, %v111
    %v113 = vlaneseq
    %v114 = vshrl.u32 %v113, 7
    %v115 = vsub.s32 2, %v114
    %v116 = vrot.slane %v103, %v115
    %v117 = vlaneseq
    %v118 = vshrl.u32 %v117, 7
    %v119 = vsub.s32 3, %v118
    %v120 = vrot.slane %v103, %v119
    %vm125 = vcmask 130048
    %v127 = vsel %vm125, %v87, 0
    %v130 = vsel %vm125, %v88, 0
    %v133 = vsel %vm125, %v89, 0
    %v136 = vsel %vm125, %v90, 0
    %v139 = vsel %vm125, %v91, 0
    %v142 = vsel %vm125, %v92, 0
    %v145 = vsel %vm125, %v93, 0
    %v148 = vsel %vm125, %v94, 0
    %150 = vmatprep.subr.mxu0 %v96
    %151 = vmatpush1.msra.mxu0 %v95
    %152 = vmatprep.subr.mxu0 %v100
    %153 = vmatpush1.msra.mxu0 %v99
    %154 = vmatprep.subr.mxu0 0.0
    %155 = vmatpush1.msra.mxu0 0.0
    %156 = vmatprep.subr.mxu0 0.0
    %157 = vmatpush1.msra.mxu0 0.0
    %158 = vmatprep.subr.mxu0 0.0
    %159 = vmatpush1.msra.mxu0 0.0
    %160 = vmatprep.subr.mxu0 0.0
    %161 = vmatpush1.msra.mxu0 0.0
    %162 = vmatprep.subr.mxu0 0.0
    %163 = vmatpush1.msra.mxu0 0.0
    %164 = vmatprep.subr.mxu0 0.0
    %165 = vmatpush1.msra.mxu0 0.0
    %166 = vmatprep.subr.mxu0 0.0
    %167 = vmatpush1.msra.mxu0 0.0
    %168 = vmatprep.subr.mxu0 0.0
    %169 = vmatpush1.msra.mxu0 0.0
    %170 = vmatprep.subr.mxu0 0.0
    %171 = vmatpush1.msra.mxu0 0.0
    %172 = vmatprep.subr.mxu0 0.0
    %173 = vmatpush1.msra.mxu0 0.0
    %174 = vmatprep.subr.mxu0 0.0
    %175 = vmatpush1.msra.mxu0 0.0
    %176 = vmatprep.subr.mxu0 0.0
    %177 = vmatpush1.msra.mxu0 0.0
    %178 = vmatprep.subr.mxu0 0.0
    %179 = vmatpush1.msra.mxu0 0.0
    %180 = vmatprep.subr.mxu0 0.0
    %181 = vmatpush1.msra.mxu0 0.0
    %182 = vmatprep.subr.mxu0 0.0
    %183 = vmatpush1.msra.mxu0 0.0
    %184 = vmatprep.subr.mxu0 0.0
    %185 = vmatpush1.msra.mxu0 0.0
    %186 = vmatprep.subr.mxu0 0.0
    %187 = vmatpush1.msra.mxu0 0.0
    %188 = vmatprep.subr.mxu0 0.0
    %189 = vmatpush1.msra.mxu0 0.0
    %190 = vmatprep.subr.mxu0 0.0
    %191 = vmatpush1.msra.mxu0 0.0
    %192 = vmatprep.subr.mxu0 0.0
    %193 = vmatpush1.msra.mxu0 0.0
    %194 = vmatprep.subr.mxu0 0.0
    %195 = vmatpush1.msra.mxu0 0.0
    %196 = vmatprep.subr.mxu0 0.0
    %197 = vmatpush1.msra.mxu0 0.0
    %198 = vmatprep.subr.mxu0 0.0
    %199 = vmatpush1.msra.mxu0 0.0
    %200 = vmatprep.subr.mxu0 0.0
    %201 = vmatpush1.msra.mxu0 0.0
    %202 = vmatprep.subr.mxu0 0.0
    %203 = vmatpush1.msra.mxu0 0.0
    %204 = vmatprep.subr.mxu0 0.0
    %205 = vmatpush1.msra.mxu0 0.0
    %206 = vmatprep.subr.mxu0 0.0
    %207 = vmatpush1.msra.mxu0 0.0
    %208 = vmatprep.subr.mxu0 0.0
    %209 = vmatpush1.msra.mxu0 0.0
    %210 = vmatprep.subr.mxu0 0.0
    %211 = vmatpush1.msra.mxu0 0.0
    %212 = vmatprep.subr.mxu0 0.0
    %213 = vmatpush1.msra.mxu0 0.0
    %214 = vmatprep.mubr.f32.mxu0 0.0
    %215 = vmatmul.mubr.f32.gmra.mrb[0].mxu0 %v127
    %v216 = vpop.f32.mrb[0].mxu0
    %v217 = vadd.f32 %v108, %v216
    %v218 = vpop.f32.mrb[0].mxu0
    %v219 = vadd.f32 %v112, %v218
    %220 = vmatprep.mubr.f32.mxu0 0.0
    %221 = vmatmul.mubr.f32.gmra.mrb[0].mxu0 %v130
    %v222 = vpop.f32.mrb[0].mxu0
    %v223 = vadd.f32 %v108, %v222
    %v224 = vpop.f32.mrb[0].mxu0
    %v225 = vadd.f32 %v112, %v224
    %226 = vmatprep.mubr.f32.mxu0 0.0
    %227 = vmatmul.mubr.f32.gmra.mrb[0].mxu0 %v133
    %v228 = vpop.f32.mrb[0].mxu0
    %v229 = vadd.f32 %v108, %v228
    %v230 = vpop.f32.mrb[0].mxu0
    %v231 = vadd.f32 %v112, %v230
    %232 = vmatprep.mubr.f32.mxu0 0.0
    %233 = vmatmul.mubr.f32.gmra.mrb[0].mxu0 %v136
    %v234 = vpop.f32.mrb[0].mxu0
    %v235 = vadd.f32 %v108, %v234
    %v236 = vpop.f32.mrb[0].mxu0
    %v237 = vadd.f32 %v112, %v236
    %238 = vmatprep.mubr.f32.mxu0 0.0
    %239 = vmatmul.mubr.f32.gmra.mrb[0].mxu0 %v139
    %v240 = vpop.f32.mrb[0].mxu0
    %v241 = vadd.f32 %v108, %v240
    %v242 = vpop.f32.mrb[0].mxu0
    %v243 = vadd.f32 %v112, %v242
    %244 = vmatprep.mubr.f32.mxu0 0.0
    %245 = vmatmul.mubr.f32.gmra.mrb[0].mxu0 %v142
    %v246 = vpop.f32.mrb[0].mxu0
    %v247 = vadd.f32 %v108, %v246
    %v248 = vpop.f32.mrb[0].mxu0
    %v249 = vadd.f32 %v112, %v248
    %250 = vmatprep.mubr.f32.mxu0 0.0
    %251 = vmatmul.mubr.f32.gmra.mrb[0].mxu0 %v145
    %v252 = vpop.f32.mrb[0].mxu0
    %v253 = vadd.f32 %v108, %v252
    %v254 = vpop.f32.mrb[0].mxu0
    %v255 = vadd.f32 %v112, %v254
    %256 = vmatprep.mubr.f32.mxu0 0.0
    %257 = vmatmul.mubr.f32.gmra.mrb[0].mxu0 %v148
    %v258 = vpop.f32.mrb[0].mxu0
    %v259 = vadd.f32 %v108, %v258
    %v260 = vpop.f32.mrb[0].mxu0
    %v261 = vadd.f32 %v112, %v260
    %262 = vdwg.mxu0
    %263 = vmatprep.subr.mxu0 %v98
    %264 = vmatpush1.msra.mxu0 %v97
    %265 = vmatprep.subr.mxu0 %v102
    %266 = vmatpush1.msra.mxu0 %v101
    %267 = vmatprep.subr.mxu0 0.0
    %268 = vmatpush1.msra.mxu0 0.0
    %269 = vmatprep.subr.mxu0 0.0
    %270 = vmatpush1.msra.mxu0 0.0
    %271 = vmatprep.subr.mxu0 0.0
    %272 = vmatpush1.msra.mxu0 0.0
    %273 = vmatprep.subr.mxu0 0.0
    %274 = vmatpush1.msra.mxu0 0.0
    %275 = vmatprep.subr.mxu0 0.0
    %276 = vmatpush1.msra.mxu0 0.0
    %277 = vmatprep.subr.mxu0 0.0
    %278 = vmatpush1.msra.mxu0 0.0
    %279 = vmatprep.subr.mxu0 0.0
    %280 = vmatpush1.msra.mxu0 0.0
    %281 = vmatprep.subr.mxu0 0.0
    %282 = vmatpush1.msra.mxu0 0.0
    %283 = vmatprep.subr.mxu0 0.0
    %284 = vmatpush1.msra.mxu0 0.0
    %285 = vmatprep.subr.mxu0 0.0
    %286 = vmatpush1.msra.mxu0 0.0
    %287 = vmatprep.subr.mxu0 0.0
    %288 = vmatpush1.msra.mxu0 0.0
    %289 = vmatprep.subr.mxu0 0.0
    %290 = vmatpush1.msra.mxu0 0.0
    %291 = vmatprep.subr.mxu0 0.0
    %292 = vmatpush1.msra.mxu0 0.0
    %293 = vmatprep.subr.mxu0 0.0
    %294 = vmatpush1.msra.mxu0 0.0
    %295 = vmatprep.subr.mxu0 0.0
    %296 = vmatpush1.msra.mxu0 0.0
    %297 = vmatprep.subr.mxu0 0.0
    %298 = vmatpush1.msra.mxu0 0.0
    %299 = vmatprep.subr.mxu0 0.0
    %300 = vmatpush1.msra.mxu0 0.0
    %301 = vmatprep.subr.mxu0 0.0
    %302 = vmatpush1.msra.mxu0 0.0
    %303 = vmatprep.subr.mxu0 0.0
    %304 = vmatpush1.msra.mxu0 0.0
    %305 = vmatprep.subr.mxu0 0.0
    %306 = vmatpush1.msra.mxu0 0.0
    %307 = vmatprep.subr.mxu0 0.0
    %308 = vmatpush1.msra.mxu0 0.0
    %309 = vmatprep.subr.mxu0 0.0
    %310 = vmatpush1.msra.mxu0 0.0
    %311 = vmatprep.subr.mxu0 0.0
    %312 = vmatpush1.msra.mxu0 0.0
    %313 = vmatprep.subr.mxu0 0.0
    %314 = vmatpush1.msra.mxu0 0.0
    %315 = vmatprep.subr.mxu0 0.0
    %316 = vmatpush1.msra.mxu0 0.0
    %317 = vmatprep.subr.mxu0 0.0
    %318 = vmatpush1.msra.mxu0 0.0
    %319 = vmatprep.subr.mxu0 0.0
    %320 = vmatpush1.msra.mxu0 0.0
    %321 = vmatprep.subr.mxu0 0.0
    %322 = vmatpush1.msra.mxu0 0.0
    %323 = vmatprep.subr.mxu0 0.0
    %324 = vmatpush1.msra.mxu0 0.0
    %325 = vmatprep.subr.mxu0 0.0
    %326 = vmatpush1.msra.mxu0 0.0
    %327 = vmatprep.mubr.f32.mxu0 0.0
    %328 = vmatmul.mubr.f32.gmra.mrb[0].mxu0 %v127
    %v329 = vpop.f32.mrb[0].mxu0
    %v330 = vadd.f32 %v116, %v329
    %v331 = vpop.f32.mrb[0].mxu0
    %v332 = vadd.f32 %v120, %v331
    %333 = vmatprep.mubr.f32.mxu0 0.0
    %334 = vmatmul.mubr.f32.gmra.mrb[0].mxu0 %v130
    %v335 = vpop.f32.mrb[0].mxu0
    %v336 = vadd.f32 %v116, %v335
    %v337 = vpop.f32.mrb[0].mxu0
    %v338 = vadd.f32 %v120, %v337
    %339 = vmatprep.mubr.f32.mxu0 0.0
    %340 = vmatmul.mubr.f32.gmra.mrb[0].mxu0 %v133
    %v341 = vpop.f32.mrb[0].mxu0
    %v342 = vadd.f32 %v116, %v341
    %v343 = vpop.f32.mrb[0].mxu0
    %v344 = vadd.f32 %v120, %v343
    %345 = vmatprep.mubr.f32.mxu0 0.0
    %346 = vmatmul.mubr.f32.gmra.mrb[0].mxu0 %v136
    %v347 = vpop.f32.mrb[0].mxu0
    %v348 = vadd.f32 %v116, %v347
    %v349 = vpop.f32.mrb[0].mxu0
    %v350 = vadd.f32 %v120, %v349
    %351 = vmatprep.mubr.f32.mxu0 0.0
    %352 = vmatmul.mubr.f32.gmra.mrb[0].mxu0 %v139
    %v353 = vpop.f32.mrb[0].mxu0
    %v354 = vadd.f32 %v116, %v353
    %v355 = vpop.f32.mrb[0].mxu0
    %v356 = vadd.f32 %v120, %v355
    %357 = vmatprep.mubr.f32.mxu0 0.0
    %358 = vmatmul.mubr.f32.gmra.mrb[0].mxu0 %v142
    %v359 = vpop.f32.mrb[0].mxu0
    %v360 = vadd.f32 %v116, %v359
    %v361 = vpop.f32.mrb[0].mxu0
    %v362 = vadd.f32 %v120, %v361
    %363 = vmatprep.mubr.f32.mxu0 0.0
    %364 = vmatmul.mubr.f32.gmra.mrb[0].mxu0 %v145
    %v365 = vpop.f32.mrb[0].mxu0
    %v366 = vadd.f32 %v116, %v365
    %v367 = vpop.f32.mrb[0].mxu0
    %v368 = vadd.f32 %v120, %v367
    %369 = vmatprep.mubr.f32.mxu0 0.0
    %370 = vmatmul.mubr.f32.gmra.mrb[0].mxu0 %v148
    %v371 = vpop.f32.mrb[0].mxu0
    %v372 = vadd.f32 %v116, %v371
    %v373 = vpop.f32.mrb[0].mxu0
    %v374 = vadd.f32 %v120, %v373
    %375 = vdwg.mxu0
    %376 = vst [vmem:[#allocation3] sm:$0xff] %v217
    %377 = vst [vmem:[#allocation3 + $0x8] sm:$0xff] %v219
    %378 = vst [vmem:[#allocation3 + $0x10] sm:$0xff] %v330
    %379 = vst [vmem:[#allocation3 + $0x18] sm:$0xff] %v332
    %380 = vst [vmem:[#allocation3 + $0x20] sm:$0xff] %v223
    %381 = vst [vmem:[#allocation3 + $0x28] sm:$0xff] %v225
    %382 = vst [vmem:[#allocation3 + $0x30] sm:$0xff] %v336
    %383 = vst [vmem:[#allocation3 + $0x38] sm:$0xff] %v338
    %384 = vst [vmem:[#allocation3 + $0x40] sm:$0xff] %v229
    %385 = vst [vmem:[#allocation3 + $0x48] sm:$0xff] %v231
    %386 = vst [vmem:[#allocation3 + $0x50] sm:$0xff] %v342
    %387 = vst [vmem:[#allocation3 + $0x58] sm:$0xff] %v344
    %388 = vst [vmem:[#allocation3 + $0x60] sm:$0xff] %v235
    %389 = vst [vmem:[#allocation3 + $0x68] sm:$0xff] %v237
    %390 = vst [vmem:[#allocation3 + $0x70] sm:$0xff] %v348
    %391 = vst [vmem:[#allocation3 + $0x78] sm:$0xff] %v350
    %392 = vst [vmem:[#allocation3 + $0x80] sm:$0xff] %v241
    %393 = vst [vmem:[#allocation3 + $0x88] sm:$0xff] %v243
    %394 = vst [vmem:[#allocation3 + $0x90] sm:$0xff] %v354
    %395 = vst [vmem:[#allocation3 + $0x98] sm:$0xff] %v356
    %396 = vst [vmem:[#allocation3 + $0xa0] sm:$0xff] %v247
    %397 = vst [vmem:[#allocation3 + $0xa8] sm:$0xff] %v249
    %398 = vst [vmem:[#allocation3 + $0xb0] sm:$0xff] %v360
    %399 = vst [vmem:[#allocation3 + $0xb8] sm:$0xff] %v362
    %400 = vst [vmem:[#allocation3 + $0xc0] sm:$0xff] %v253
    %401 = vst [vmem:[#allocation3 + $0xc8] sm:$0xff] %v255
    %402 = vst [vmem:[#allocation3 + $0xd0] sm:$0xff] %v366
    %403 = vst [vmem:[#allocation3 + $0xd8] sm:$0xff] %v368
    %404 = vst [vmem:[#allocation3 + $0xe0] sm:$0xff] %v259
    %405 = vst [vmem:[#allocation3 + $0xe8] sm:$0xff] %v261
    %406 = vst [vmem:[#allocation3 + $0xf0] sm:$0xff] %v372
    %407 = vst [vmem:[#allocation3 + $0xf8] sm:$0xff] %v374
    %408 = vst [vmem:[#allocation4] sm:$0xff] 0.0
    %409 = vst [vmem:[#allocation5] sm:$0xff] 0.0
    %v410 = vld [vmem:[#allocation4] sm:$0xff]
    %v411 = vld [vmem:[#allocation5] sm:$0xff]
    %v412 = vld [vmem:[#allocation3] sm:$0xff]
    %v413 = vld [vmem:[#allocation3 + $0x8] sm:$0xff]
    %v414 = vld [vmem:[#allocation3 + $0x10] sm:$0xff]
    %v415 = vld [vmem:[#allocation3 + $0x18] sm:$0xff]
    %v416 = vld [vmem:[#allocation6] sm:$0xff]
    %v417 = vld [vmem:[#allocation6 + $0x8] sm:$0xff]
    %v418 = vld [vmem:[#allocation6 + $0x10] sm:$0xff]
    %v419 = vld [vmem:[#allocation6 + $0x18] sm:$0xff]
    %v420 = vld [vmem:[#allocation6 + $0x20] sm:$0xff]
    %v421 = vld [vmem:[#allocation6 + $0x28] sm:$0xff]
    %v422 = vld [vmem:[#allocation6 + $0x30] sm:$0xff]
    %v423 = vld [vmem:[#allocation6 + $0x38] sm:$0xff]
    %v424 = vld [vmem:[#allocation6 + $0x40] sm:$0xff]
    %v425 = vld [vmem:[#allocation6 + $0x48] sm:$0xff]
    %v426 = vld [vmem:[#allocation6 + $0x50] sm:$0xff]
    %v427 = vld [vmem:[#allocation6 + $0x58] sm:$0xff]
    %v428 = vld [vmem:[#allocation6 + $0x60] sm:$0xff]
    %v429 = vld [vmem:[#allocation6 + $0x68] sm:$0xff]
    %v430 = vld [vmem:[#allocation6 + $0x70] sm:$0xff]
    %v431 = vld [vmem:[#allocation6 + $0x78] sm:$0xff]
    %v432 = vld [vmem:[#allocation6 + $0x80] sm:$0xff]
    %v433 = vld [vmem:[#allocation6 + $0x88] sm:$0xff]
    %v434 = vld [vmem:[#allocation6 + $0x90] sm:$0xff]
    %v435 = vld [vmem:[#allocation6 + $0x98] sm:$0xff]
    %v436 = vld [vmem:[#allocation6 + $0xa0] sm:$0xff]
    %v437 = vld [vmem:[#allocation6 + $0xa8] sm:$0xff]
    %v438 = vld [vmem:[#allocation6 + $0xb0] sm:$0xff]
    %v439 = vld [vmem:[#allocation6 + $0xb8] sm:$0xff]
    %v440 = vld [vmem:[#allocation6 + $0xc0] sm:$0xff]
    %v441 = vld [vmem:[#allocation6 + $0xc8] sm:$0xff]
    %v442 = vld [vmem:[#allocation6 + $0xd0] sm:$0xff]
    %v443 = vld [vmem:[#allocation6 + $0xd8] sm:$0xff]
    %v444 = vld [vmem:[#allocation6 + $0xe0] sm:$0xff]
    %v445 = vld [vmem:[#allocation6 + $0xe8] sm:$0xff]
    %v446 = vld [vmem:[#allocation6 + $0xf0] sm:$0xff]
    %v447 = vld [vmem:[#allocation6 + $0xf8] sm:$0xff]
    %v448 = vld [vmem:[#allocation6 + $0x100] sm:$0xff]
    %v449 = vld [vmem:[#allocation6 + $0x108] sm:$0xff]
    %v450 = vld [vmem:[#allocation6 + $0x110] sm:$0xff]
    %v451 = vld [vmem:[#allocation6 + $0x118] sm:$0xff]
    %v452 = vld [vmem:[#allocation6 + $0x120] sm:$0xff]
    %v453 = vld [vmem:[#allocation6 + $0x128] sm:$0xff]
    %v454 = vld [vmem:[#allocation6 + $0x130] sm:$0xff]
    %v455 = vld [vmem:[#allocation6 + $0x138] sm:$0xff]
    %v456 = vld [vmem:[#allocation6 + $0x140] sm:$0xff]
    %v457 = vld [vmem:[#allocation6 + $0x148] sm:$0xff]
    %v458 = vld [vmem:[#allocation6 + $0x150] sm:$0xff]
    %v459 = vld [vmem:[#allocation6 + $0x158] sm:$0xff]
    %v460 = vld [vmem:[#allocation6 + $0x160] sm:$0xff]
    %v461 = vld [vmem:[#allocation6 + $0x168] sm:$0xff]
    %v462 = vld [vmem:[#allocation6 + $0x170] sm:$0xff]
    %v463 = vld [vmem:[#allocation6 + $0x178] sm:$0xff]
    %v464 = vld [vmem:[#allocation6 + $0x180] sm:$0xff]
    %v465 = vld [vmem:[#allocation6 + $0x188] sm:$0xff]
    %v466 = vld [vmem:[#allocation6 + $0x190] sm:$0xff]
    %v467 = vld [vmem:[#allocation6 + $0x198] sm:$0xff]
    %v468 = vld [vmem:[#allocation6 + $0x1a0] sm:$0xff]
    %v469 = vld [vmem:[#allocation6 + $0x1a8] sm:$0xff]
    %v470 = vld [vmem:[#allocation6 + $0x1b0] sm:$0xff]
    %v471 = vld [vmem:[#allocation6 + $0x1b8] sm:$0xff]
    %v472 = vld [vmem:[#allocation6 + $0x1c0] sm:$0xff]
    %v473 = vld [vmem:[#allocation6 + $0x1c8] sm:$0xff]
    %v474 = vld [vmem:[#allocation6 + $0x1d0] sm:$0xff]
    %v475 = vld [vmem:[#allocation6 + $0x1d8] sm:$0xff]
    %v476 = vld [vmem:[#allocation6 + $0x1e0] sm:$0xff]
    %v477 = vld [vmem:[#allocation6 + $0x1e8] sm:$0xff]
    %v478 = vld [vmem:[#allocation6 + $0x1f0] sm:$0xff]
    %v479 = vld [vmem:[#allocation6 + $0x1f8] sm:$0xff]
    %480 = vmatprep.subr.mxu0 %v417
    %481 = vmatpush1.msra.mxu0 %v416
    %482 = vmatprep.subr.mxu0 %v421
    %483 = vmatpush1.msra.mxu0 %v420
    %484 = vmatprep.subr.mxu0 %v425
    %485 = vmatpush1.msra.mxu0 %v424
    %486 = vmatprep.subr.mxu0 %v429
    %487 = vmatpush1.msra.mxu0 %v428
    %488 = vmatprep.subr.mxu0 %v433
    %489 = vmatpush1.msra.mxu0 %v432
    %490 = vmatprep.subr.mxu0 %v437
    %491 = vmatpush1.msra.mxu0 %v436
    %492 = vmatprep.subr.mxu0 %v441
    %493 = vmatpush1.msra.mxu0 %v440
    %494 = vmatprep.subr.mxu0 %v445
    %495 = vmatpush1.msra.mxu0 %v444
    %496 = vmatprep.subr.mxu0 %v449
    %497 = vmatpush1.msra.mxu0 %v448
    %498 = vmatprep.subr.mxu0 %v453
    %499 = vmatpush1.msra.mxu0 %v452
    %500 = vmatprep.subr.mxu0 %v457
    %501 = vmatpush1.msra.mxu0 %v456
    %502 = vmatprep.subr.mxu0 %v461
    %503 = vmatpush1.msra.mxu0 %v460
    %504 = vmatprep.subr.mxu0 %v465
    %505 = vmatpush1.msra.mxu0 %v464
    %506 = vmatprep.subr.mxu0 %v469
    %507 = vmatpush1.msra.mxu0 %v468
    %508 = vmatprep.subr.mxu0 %v473
    %509 = vmatpush1.msra.mxu0 %v472
    %510 = vmatprep.subr.mxu0 %v477
    %511 = vmatpush1.msra.mxu0 %v476
    %512 = vmatprep.subr.mxu0 0.0
    %513 = vmatpush1.msra.mxu0 0.0
    %514 = vmatprep.subr.mxu0 0.0
    %515 = vmatpush1.msra.mxu0 0.0
    %516 = vmatprep.subr.mxu0 0.0
    %517 = vmatpush1.msra.mxu0 0.0
    %518 = vmatprep.subr.mxu0 0.0
    %519 = vmatpush1.msra.mxu0 0.0
    %520 = vmatprep.subr.mxu0 0.0
    %521 = vmatpush1.msra.mxu0 0.0
    %522 = vmatprep.subr.mxu0 0.0
    %523 = vmatpush1.msra.mxu0 0.0
    %524 = vmatprep.subr.mxu0 0.0
    %525 = vmatpush1.msra.mxu0 0.0
    %526 = vmatprep.subr.mxu0 0.0
    %527 = vmatpush1.msra.mxu0 0.0
    %528 = vmatprep.subr.mxu0 0.0
    %529 = vmatpush1.msra.mxu0 0.0
    %530 = vmatprep.subr.mxu0 0.0
    %531 = vmatpush1.msra.mxu0 0.0
    %532 = vmatprep.subr.mxu0 0.0
    %533 = vmatpush1.msra.mxu0 0.0
    %534 = vmatprep.subr.mxu0 0.0
    %535 = vmatpush1.msra.mxu0 0.0
    %536 = vmatprep.subr.mxu0 0.0
    %537 = vmatpush1.msra.mxu0 0.0
    %538 = vmatprep.subr.mxu0 0.0
    %539 = vmatpush1.msra.mxu0 0.0
    %540 = vmatprep.subr.mxu0 0.0
    %541 = vmatpush1.msra.mxu0 0.0
    %542 = vmatprep.subr.mxu0 0.0
    %543 = vmatpush1.msra.mxu0 0.0
    %544 = vmatprep.mubr.f32.mxu0 0.0
    %545 = vmatmul.mubr.f32.gmra.mrb[0].mxu0 %v410
    %v546 = vpop.f32.mrb[0].mxu0
    %v547 = vadd.f32 0.0, %v546
    %v548 = vpop.f32.mrb[0].mxu0
    %v549 = vadd.f32 0.0, %v548
    %550 = vdwg.mxu0
    %551 = vmatprep.subr.mxu0 %v419
    %552 = vmatpush1.msra.mxu0 %v418
    %553 = vmatprep.subr.mxu0 %v423
    %554 = vmatpush1.msra.mxu0 %v422
    %555 = vmatprep.subr.mxu0 %v427
    %556 = vmatpush1.msra.mxu0 %v426
    %557 = vmatprep.subr.mxu0 %v431
    %558 = vmatpush1.msra.mxu0 %v430
    %559 = vmatprep.subr.mxu0 %v435
    %560 = vmatpush1.msra.mxu0 %v434
    %561 = vmatprep.subr.mxu0 %v439
    %562 = vmatpush1.msra.mxu0 %v438
    %563 = vmatprep.subr.mxu0 %v443
    %564 = vmatpush1.msra.mxu0 %v442
    %565 = vmatprep.subr.mxu0 %v447
    %566 = vmatpush1.msra.mxu0 %v446
    %567 = vmatprep.subr.mxu0 %v451
    %568 = vmatpush1.msra.mxu0 %v450
    %569 = vmatprep.subr.mxu0 %v455
    %570 = vmatpush1.msra.mxu0 %v454
    %571 = vmatprep.subr.mxu0 %v459
    %572 = vmatpush1.msra.mxu0 %v458
    %573 = vmatprep.subr.mxu0 %v463
    %574 = vmatpush1.msra.mxu0 %v462
    %575 = vmatprep.subr.mxu0 %v467
    %576 = vmatpush1.msra.mxu0 %v466
    %577 = vmatprep.subr.mxu0 %v471
    %578 = vmatpush1.msra.mxu0 %v470
    %579 = vmatprep.subr.mxu0 %v475
    %580 = vmatpush1.msra.mxu0 %v474
    %581 = vmatprep.subr.mxu0 %v479
    %582 = vmatpush1.msra.mxu0 %v478
    %583 = vmatprep.subr.mxu0 0.0
    %584 = vmatpush1.msra.mxu0 0.0
    %585 = vmatprep.subr.mxu0 0.0
    %586 = vmatpush1.msra.mxu0 0.0
    %587 = vmatprep.subr.mxu0 0.0
    %588 = vmatpush1.msra.mxu0 0.0
    %589 = vmatprep.subr.mxu0 0.0
    %590 = vmatpush1.msra.mxu0 0.0
    %591 = vmatprep.subr.mxu0 0.0
    %592 = vmatpush1.msra.mxu0 0.0
    %593 = vmatprep.subr.mxu0 0.0
    %594 = vmatpush1.msra.mxu0 0.0
    %595 = vmatprep.subr.mxu0 0.0
    %596 = vmatpush1.msra.mxu0 0.0
    %597 = vmatprep.subr.mxu0 0.0
    %598 = vmatpush1.msra.mxu0 0.0
    %599 = vmatprep.subr.mxu0 0.0
    %600 = vmatpush1.msra.mxu0 0.0
    %601 = vmatprep.subr.mxu0 0.0
    %602 = vmatpush1.msra.mxu0 0.0
    %603 = vmatprep.subr.mxu0 0.0
    %604 = vmatpush1.msra.mxu0 0.0
    %605 = vmatprep.subr.mxu0 0.0
    %606 = vmatpush1.msra.mxu0 0.0
    %607 = vmatprep.subr.mxu0 0.0
    %608 = vmatpush1.msra.mxu0 0.0
    %609 = vmatprep.subr.mxu0 0.0
    %610 = vmatpush1.msra.mxu0 0.0
    %611 = vmatprep.subr.mxu0 0.0
    %612 = vmatpush1.msra.mxu0 0.0
    %613 = vmatprep.subr.mxu0 0.0
    %614 = vmatpush1.msra.mxu0 0.0
    %615 = vmatprep.mubr.f32.mxu0 0.0
    %616 = vmatmul.mubr.f32.gmra.mrb[0].mxu0 %v410
    %v617 = vpop.f32.mrb[0].mxu0
    %v618 = vadd.f32 0.0, %v617
    %v619 = vpop.f32.mrb[0].mxu0
    %v620 = vadd.f32 0.0, %v619
    %621 = vdwg.mxu0
    %v622 = vadd.f32 %v412, %v547
    %v623 = vadd.f32 %v413, %v549
    %v624 = vadd.f32 %v414, %v618
    %v625 = vadd.f32 %v415, %v620
    %v626 = vxor.u32 %v622, 2147483648
    %v627 = vmul.f32 %v626, 1.442695
    %v628 = vpow.pop %v627
    %v629 = vadd.f32 %v628, 1.0
    %v630 = vrcp.pop %v629
    %v631 = vmul.f32 1.0, %v630
    %v632 = vxor.u32 %v623, 2147483648
    %v633 = vmul.f32 %v632, 1.442695
    %v634 = vpow.pop %v633
    %v635 = vadd.f32 %v634, 1.0
    %v636 = vrcp.pop %v635
    %v637 = vmul.f32 1.0, %v636
    %v638 = vtanh.pop %v624
    %v639 = vxor.u32 %v625, 2147483648
    %v640 = vmul.f32 %v639, 1.442695
    %v641 = vpow.pop %v640
    %v642 = vadd.f32 %v641, 1.0
    %v643 = vrcp.pop %v642
    %v644 = vmul.f32 1.0, %v643
    %v645 = vmul.f32 %v637, %v411
    %v646 = vmul.f32 %v631, %v638
    %v647 = vadd.f32 %v645, %v646
    %v648 = vtanh.pop %v647
    %v649 = vmul.f32 %v644, %v648
    %650 = vst [vmem:[#allocation4] sm:$0xff] %v649
    %651 = vst [vmem:[#allocation5] sm:$0xff] %v647
    %652 = vst [vmem:[#allocation2] sm:$0xff] %v649
    %v653 = vld [vmem:[#allocation4] sm:$0xff]
    %v654 = vld [vmem:[#allocation5] sm:$0xff]
    %s655 = scalar_lea.vmem [#allocation3], 32
    %v656 = vld [vmem:[%s655] sm:$0xff]
    %v657 = vld [vmem:[%s655 + $0x8] sm:$0xff]
    %v658 = vld [vmem:[%s655 + $0x10] sm:$0xff]
    %v659 = vld [vmem:[%s655 + $0x18] sm:$0xff]
    %v660 = vld [vmem:[#allocation6] sm:$0xff]
    %v661 = vld [vmem:[#allocation6 + $0x8] sm:$0xff]
    %v662 = vld [vmem:[#allocation6 + $0x10] sm:$0xff]
    %v663 = vld [vmem:[#allocation6 + $0x18] sm:$0xff]
    %v664 = vld [vmem:[#allocation6 + $0x20] sm:$0xff]
    %v665 = vld [vmem:[#allocation6 + $0x28] sm:$0xff]
    %v666 = vld [vmem:[#allocation6 + $0x30] sm:$0xff]
    %v667 = vld [vmem:[#allocation6 + $0x38] sm:$0xff]
    %v668 = vld [vmem:[#allocation6 + $0x40] sm:$0xff]
    %v669 = vld [vmem:[#allocation6 + $0x48] sm:$0xff]
    %v670 = vld [vmem:[#allocation6 + $0x50] sm:$0xff]
    %v671 = vld [vmem:[#allocation6 + $0x58] sm:$0xff]
    %v672 = vld [vmem:[#allocation6 + $0x60] sm:$0xff]
    %v673 = vld [vmem:[#allocation6 + $0x68] sm:$0xff]
    %v674 = vld [vmem:[#allocation6 + $0x70] sm:$0xff]
    %v675 = vld [vmem:[#allocation6 + $0x78] sm:$0xff]
    %v676 = vld [vmem:[#allocation6 + $0x80] sm:$0xff]
    %v677 = vld [vmem:[#allocation6 + $0x88] sm:$0xff]
    %v678 = vld [vmem:[#allocation6 + $0x90] sm:$0xff]
    %v679 = vld [vmem:[#allocation6 + $0x98] sm:$0xff]
    %v680 = vld [vmem:[#allocation6 + $0xa0] sm:$0xff]
    %v681 = vld [vmem:[#allocation6 + $0xa8] sm:$0xff]
    %v682 = vld [vmem:[#allocation6 + $0xb0] sm:$0xff]
    %v683 = vld [vmem:[#allocation6 + $0xb8] sm:$0xff]
    %v684 = vld [vmem:[#allocation6 + $0xc0] sm:$0xff]
    %v685 = vld [vmem:[#allocation6 + $0xc8] sm:$0xff]
    %v686 = vld [vmem:[#allocation6 + $0xd0] sm:$0xff]
    %v687 = vld [vmem:[#allocation6 + $0xd8] sm:$0xff]
    %v688 = vld [vmem:[#allocation6 + $0xe0] sm:$0xff]
    %v689 = vld [vmem:[#allocation6 + $0xe8] sm:$0xff]
    %v690 = vld [vmem:[#allocation6 + $0xf0] sm:$0xff]
    %v691 = vld [vmem:[#allocation6 + $0xf8] sm:$0xff]
    %v692 = vld [vmem:[#allocation6 + $0x100] sm:$0xff]
    %v693 = vld [vmem:[#allocation6 + $0x108] sm:$0xff]
    %v694 = vld [vmem:[#allocation6 + $0x110] sm:$0xff]
    %v695 = vld [vmem:[#allocation6 + $0x118] sm:$0xff]
    %v696 = vld [vmem:[#allocation6 + $0x120] sm:$0xff]
    %v697 = vld [vmem:[#allocation6 + $0x128] sm:$0xff]
    %v698 = vld [vmem:[#allocation6 + $0x130] sm:$0xff]
    %v699 = vld [vmem:[#allocation6 + $0x138] sm:$0xff]
    %v700 = vld [vmem:[#allocation6 + $0x140] sm:$0xff]
    %v701 = vld [vmem:[#allocation6 + $0x148] sm:$0xff]
    %v702 = vld [vmem:[#allocation6 + $0x150] sm:$0xff]
    %v703 = vld [vmem:[#allocation6 + $0x158] sm:$0xff]
    %v704 = vld [vmem:[#allocation6 + $0x160] sm:$0xff]
    %v705 = vld [vmem:[#allocation6 + $0x168] sm:$0xff]
    %v706 = vld [vmem:[#allocation6 + $0x170] sm:$0xff]
    %v707 = vld [vmem:[#allocation6 + $0x178] sm:$0xff]
    %v708 = vld [vmem:[#allocation6 + $0x180] sm:$0xff]
    %v709 = vld [vmem:[#allocation6 + $0x188] sm:$0xff]
    %v710 = vld [vmem:[#allocation6 + $0x190] sm:$0xff]
    %v711 = vld [vmem:[#allocation6 + $0x198] sm:$0xff]
    %v712 = vld [vmem:[#allocation6 + $0x1a0] sm:$0xff]
    %v713 = vld [vmem:[#allocation6 + $0x1a8] sm:$0xff]
    %v714 = vld [vmem:[#allocation6 + $0x1b0] sm:$0xff]
    %v715 = vld [vmem:[#allocation6 + $0x1b8] sm:$0xff]
    %v716 = vld [vmem:[#allocation6 + $0x1c0] sm:$0xff]
    %v717 = vld [vmem:[#allocation6 + $0x1c8] sm:$0xff]
    %v718 = vld [vmem:[#allocation6 + $0x1d0] sm:$0xff]
    %v719 = vld [vmem:[#allocation6 + $0x1d8] sm:$0xff]
    %v720 = vld [vmem:[#allocation6 + $0x1e0] sm:$0xff]
    %v721 = vld [vmem:[#allocation6 + $0x1e8] sm:$0xff]
    %v722 = vld [vmem:[#allocation6 + $0x1f0] sm:$0xff]
    %v723 = vld [vmem:[#allocation6 + $0x1f8] sm:$0xff]
    %724 = vmatprep.subr.mxu0 %v661
    %725 = vmatpush1.msra.mxu0 %v660
    %726 = vmatprep.subr.mxu0 %v665
    %727 = vmatpush1.msra.mxu0 %v664
    %728 = vmatprep.subr.mxu0 %v669
    %729 = vmatpush1.msra.mxu0 %v668
    %730 = vmatprep.subr.mxu0 %v673
    %731 = vmatpush1.msra.mxu0 %v672
    %732 = vmatprep.subr.mxu0 %v677
    %733 = vmatpush1.msra.mxu0 %v676
    %734 = vmatprep.subr.mxu0 %v681
    %735 = vmatpush1.msra.mxu0 %v680
    %736 = vmatprep.subr.mxu0 %v685
    %737 = vmatpush1.msra.mxu0 %v684
    %738 = vmatprep.subr.mxu0 %v689
    %739 = vmatpush1.msra.mxu0 %v688
    %740 = vmatprep.subr.mxu0 %v693
    %741 = vmatpush1.msra.mxu0 %v692
    %742 = vmatprep.subr.mxu0 %v697
    %743 = vmatpush1.msra.mxu0 %v696
    %744 = vmatprep.subr.mxu0 %v701
    %745 = vmatpush1.msra.mxu0 %v700
    %746 = vmatprep.subr.mxu0 %v705
    %747 = vmatpush1.msra.mxu0 %v704
    %748 = vmatprep.subr.mxu0 %v709
    %749 = vmatpush1.msra.mxu0 %v708
    %750 = vmatprep.subr.mxu0 %v713
    %751 = vmatpush1.msra.mxu0 %v712
    %752 = vmatprep.subr.mxu0 %v717
    %753 = vmatpush1.msra.mxu0 %v716
    %754 = vmatprep.subr.mxu0 %v721
    %755 = vmatpush1.msra.mxu0 %v720
    %756 = vmatprep.subr.mxu0 0.0
    %757 = vmatpush1.msra.mxu0 0.0
    %758 = vmatprep.subr.mxu0 0.0
    %759 = vmatpush1.msra.mxu0 0.0
    %760 = vmatprep.subr.mxu0 0.0
    %761 = vmatpush1.msra.mxu0 0.0
    %762 = vmatprep.subr.mxu0 0.0
    %763 = vmatpush1.msra.mxu0 0.0
    %764 = vmatprep.subr.mxu0 0.0
    %765 = vmatpush1.msra.mxu0 0.0
    %766 = vmatprep.subr.mxu0 0.0
    %767 = vmatpush1.msra.mxu0 0.0
    %768 = vmatprep.subr.mxu0 0.0
    %769 = vmatpush1.msra.mxu0 0.0
    %770 = vmatprep.subr.mxu0 0.0
    %771 = vmatpush1.msra.mxu0 0.0
    %772 = vmatprep.subr.mxu0 0.0
    %773 = vmatpush1.msra.mxu0 0.0
    %774 = vmatprep.subr.mxu0 0.0
    %775 = vmatpush1.msra.mxu0 0.0
    %776 = vmatprep.subr.mxu0 0.0
    %777 = vmatpush1.msra.mxu0 0.0
    %778 = vmatprep.subr.mxu0 0.0
    %779 = vmatpush1.msra.mxu0 0.0
    %780 = vmatprep.subr.mxu0 0.0
    %781 = vmatpush1.msra.mxu0 0.0
    %782 = vmatprep.subr.mxu0 0.0
    %783 = vmatpush1.msra.mxu0 0.0
    %784 = vmatprep.subr.mxu0 0.0
    %785 = vmatpush1.msra.mxu0 0.0
    %786 = vmatprep.subr.mxu0 0.0
    %787 = vmatpush1.msra.mxu0 0.0
    %788 = vmatprep.mubr.f32.mxu0 0.0
    %789 = vmatmul.mubr.f32.gmra.mrb[0].mxu0 %v653
    %v790 = vpop.f32.mrb[0].mxu0
    %v791 = vadd.f32 0.0, %v790
    %v792 = vpop.f32.mrb[0].mxu0
    %v793 = vadd.f32 0.0, %v792
    %794 = vdwg.mxu0
    %795 = vmatprep.subr.mxu0 %v663
    %796 = vmatpush1.msra.mxu0 %v662
    %797 = vmatprep.subr.mxu0 %v667
    %798 = vmatpush1.msra.mxu0 %v666
    %799 = vmatprep.subr.mxu0 %v671
    %800 = vmatpush1.msra.mxu0 %v670
    %801 = vmatprep.subr.mxu0 %v675
    %802 = vmatpush1.msra.mxu0 %v674
    %803 = vmatprep.subr.mxu0 %v679
    %804 = vmatpush1.msra.mxu0 %v678
    %805 = vmatprep.subr.mxu0 %v683
    %806 = vmatpush1.msra.mxu0 %v682
    %807 = vmatprep.subr.mxu0 %v687
    %808 = vmatpush1.msra.mxu0 %v686
    %809 = vmatprep.subr.mxu0 %v691
    %810 = vmatpush1.msra.mxu0 %v690
    %811 = vmatprep.subr.mxu0 %v695
    %812 = vmatpush1.msra.mxu0 %v694
    %813 = vmatprep.subr.mxu0 %v699
    %814 = vmatpush1.msra.mxu0 %v698
    %815 = vmatprep.subr.mxu0 %v703
    %816 = vmatpush1.msra.mxu0 %v702
    %817 = vmatprep.subr.mxu0 %v707
    %818 = vmatpush1.msra.mxu0 %v706
    %819 = vmatprep.subr.mxu0 %v711
    %820 = vmatpush1.msra.mxu0 %v710
    %821 = vmatprep.subr.mxu0 %v715
    %822 = vmatpush1.msra.mxu0 %v714
    %823 = vmatprep.subr.mxu0 %v719
    %824 = vmatpush1.msra.mxu0 %v718
    %825 = vmatprep.subr.mxu0 %v723
    %826 = vmatpush1.msra.mxu0 %v722
    %827 = vmatprep.subr.mxu0 0.0
    %828 = vmatpush1.msra.mxu0 0.0
    %829 = vmatprep.subr.mxu0 0.0
    %830 = vmatpush1.msra.mxu0 0.0
    %831 = vmatprep.subr.mxu0 0.0
    %832 = vmatpush1.msra.mxu0 0.0
    %833 = vmatprep.subr.mxu0 0.0
    %834 = vmatpush1.msra.mxu0 0.0
    %835 = vmatprep.subr.mxu0 0.0
    %836 = vmatpush1.msra.mxu0 0.0
    %837 = vmatprep.subr.mxu0 0.0
    %838 = vmatpush1.msra.mxu0 0.0
    %839 = vmatprep.subr.mxu0 0.0
    %840 = vmatpush1.msra.mxu0 0.0
    %841 = vmatprep.subr.mxu0 0.0
    %842 = vmatpush1.msra.mxu0 0.0
    %843 = vmatprep.subr.mxu0 0.0
    %844 = vmatpush1.msra.mxu0 0.0
    %845 = vmatprep.subr.mxu0 0.0
    %846 = vmatpush1.msra.mxu0 0.0
    %847 = vmatprep.subr.mxu0 0.0
    %848 = vmatpush1.msra.mxu0 0.0
    %849 = vmatprep.subr.mxu0 0.0
    %850 = vmatpush1.msra.mxu0 0.0
    %851 = vmatprep.subr.mxu0 0.0
    %852 = vmatpush1.msra.mxu0 0.0
    %853 = vmatprep.subr.mxu0 0.0
    %854 = vmatpush1.msra.mxu0 0.0
    %855 = vmatprep.subr.mxu0 0.0
    %856 = vmatpush1.msra.mxu0 0.0
    %857 = vmatprep.subr.mxu0 0.0
    %858 = vmatpush1.msra.mxu0 0.0
    %859 = vmatprep.mubr.f32.mxu0 0.0
    %860 = vmatmul.mubr.f32.gmra.mrb[0].mxu0 %v653
    %v861 = vpop.f32.mrb[0].mxu0
    %v862 = vadd.f32 0.0, %v861
    %v863 = vpop.f32.mrb[0].mxu0
    %v864 = vadd.f32 0.0, %v863
    %865 = vdwg.mxu0
    %v866 = vadd.f32 %v656, %v791
    %v867 = vadd.f32 %v657, %v793
    %v868 = vadd.f32 %v658, %v862
    %v869 = vadd.f32 %v659, %v864
    %v870 = vxor.u32 %v866, 2147483648
    %v871 = vmul.f32 %v870, 1.442695
    %v872 = vpow.pop %v871
    %v873 = vadd.f32 %v872, 1.0
    %v874 = vrcp.pop %v873
    %v875 = vmul.f32 1.0, %v874
    %v876 = vxor.u32 %v867, 2147483648
    %v877 = vmul.f32 %v876, 1.442695
    %v878 = vpow.pop %v877
    %v879 = vadd.f32 %v878, 1.0
    %v880 = vrcp.pop %v879
    %v881 = vmul.f32 1.0, %v880
    %v882 = vtanh.pop %v868
    %v883 = vxor.u32 %v869, 2147483648
    %v884 = vmul.f32 %v883, 1.442695
    %v885 = vpow.pop %v884
    %v886 = vadd.f32 %v885, 1.0
    %v887 = vrcp.pop %v886
    %v888 = vmul.f32 1.0, %v887
    %v889 = vmul.f32 %v881, %v654
    %v890 = vmul.f32 %v875, %v882
    %v891 = vadd.f32 %v889, %v890
    %v892 = vtanh.pop %v891
    %v893 = vmul.f32 %v888, %v892
    %894 = vst [vmem:[#allocation4] sm:$0xff] %v893
    %895 = vst [vmem:[#allocation5] sm:$0xff] %v891
    %s896 = scalar_lea.vmem [#allocation2], 8
    %897 = vst [vmem:[%s896] sm:$0xff] %v893
    %v898 = vld [vmem:[#allocation4] sm:$0xff]
    %v899 = vld [vmem:[#allocation5] sm:$0xff]
    %s900 = scalar_lea.vmem [#allocation3], 64
    %v901 = vld [vmem:[%s900] sm:$0xff]
    %v902 = vld [vmem:[%s900 + $0x8] sm:$0xff]
    %v903 = vld [vmem:[%s900 + $0x10] sm:$0xff]
    %v904 = vld [vmem:[%s900 + $0x18] sm:$0xff]
    %v905 = vld [vmem:[#allocation6] sm:$0xff]
    %v906 = vld [vmem:[#allocation6 + $0x8] sm:$0xff]
    %v907 = vld [vmem:[#allocation6 + $0x10] sm:$0xff]
    %v908 = vld [vmem:[#allocation6 + $0x18] sm:$0xff]
    %v909 = vld [vmem:[#allocation6 + $0x20] sm:$0xff]
    %v910 = vld [vmem:[#allocation6 + $0x28] sm:$0xff]
    %v911 = vld [vmem:[#allocation6 + $0x30] sm:$0xff]
    %v912 = vld [vmem:[#allocation6 + $0x38] sm:$0xff]
    %v913 = vld [vmem:[#allocation6 + $0x40] sm:$0xff]
    %v914 = vld [vmem:[#allocation6 + $0x48] sm:$0xff]
    %v915 = vld [vmem:[#allocation6 + $0x50] sm:$0xff]
    %v916 = vld [vmem:[#allocation6 + $0x58] sm:$0xff]
    %v917 = vld [vmem:[#allocation6 + $0x60] sm:$0xff]
    %v918 = vld [vmem:[#allocation6 + $0x68] sm:$0xff]
    %v919 = vld [vmem:[#allocation6 + $0x70] sm:$0xff]
    %v920 = vld [vmem:[#allocation6 + $0x78] sm:$0xff]
    %v921 = vld [vmem:[#allocation6 + $0x80] sm:$0xff]
    %v922 = vld [vmem:[#allocation6 + $0x88] sm:$0xff]
    %v923 = vld [vmem:[#allocation6 + $0x90] sm:$0xff]
    %v924 = vld [vmem:[#allocation6 + $0x98] sm:$0xff]
    %v925 = vld [vmem:[#allocation6 + $0xa0] sm:$0xff]
    %v926 = vld [vmem:[#allocation6 + $0xa8] sm:$0xff]
    %v927 = vld [vmem:[#allocation6 + $0xb0] sm:$0xff]
    %v928 = vld [vmem:[#allocation6 + $0xb8] sm:$0xff]
    %v929 = vld [vmem:[#allocation6 + $0xc0] sm:$0xff]
    %v930 = vld [vmem:[#allocation6 + $0xc8] sm:$0xff]
    %v931 = vld [vmem:[#allocation6 + $0xd0] sm:$0xff]
    %v932 = vld [vmem:[#allocation6 + $0xd8] sm:$0xff]
    %v933 = vld [vmem:[#allocation6 + $0xe0] sm:$0xff]
    %v934 = vld [vmem:[#allocation6 + $0xe8] sm:$0xff]
    %v935 = vld [vmem:[#allocation6 + $0xf0] sm:$0xff]
    %v936 = vld [vmem:[#allocation6 + $0xf8] sm:$0xff]
    %v937 = vld [vmem:[#allocation6 + $0x100] sm:$0xff]
    %v938 = vld [vmem:[#allocation6 + $0x108] sm:$0xff]
    %v939 = vld [vmem:[#allocation6 + $0x110] sm:$0xff]
    %v940 = vld [vmem:[#allocation6 + $0x118] sm:$0xff]
    %v941 = vld [vmem:[#allocation6 + $0x120] sm:$0xff]
    %v942 = vld [vmem:[#allocation6 + $0x128] sm:$0xff]
    %v943 = vld [vmem:[#allocation6 + $0x130] sm:$0xff]
    %v944 = vld [vmem:[#allocation6 + $0x138] sm:$0xff]
    %v945 = vld [vmem:[#allocation6 + $0x140] sm:$0xff]
    %v946 = vld [vmem:[#allocation6 + $0x148] sm:$0xff]
    %v947 = vld [vmem:[#allocation6 + $0x150] sm:$0xff]
    %v948 = vld [vmem:[#allocation6 + $0x158] sm:$0xff]
    %v949 = vld [vmem:[#allocation6 + $0x160] sm:$0xff]
    %v950 = vld [vmem:[#allocation6 + $0x168] sm:$0xff]
    %v951 = vld [vmem:[#allocation6 + $0x170] sm:$0xff]
    %v952 = vld [vmem:[#allocation6 + $0x178] sm:$0xff]
    %v953 = vld [vmem:[#allocation6 + $0x180] sm:$0xff]
    %v954 = vld [vmem:[#allocation6 + $0x188] sm:$0xff]
    %v955 = vld [vmem:[#allocation6 + $0x190] sm:$0xff]
    %v956 = vld [vmem:[#allocation6 + $0x198] sm:$0xff]
    %v957 = vld [vmem:[#allocation6 + $0x1a0] sm:$0xff]
    %v958 = vld [vmem:[#allocation6 + $0x1a8] sm:$0xff]
    %v959 = vld [vmem:[#allocation6 + $0x1b0] sm:$0xff]
    %v960 = vld [vmem:[#allocation6 + $0x1b8] sm:$0xff]
    %v961 = vld [vmem:[#allocation6 + $0x1c0] sm:$0xff]
    %v962 = vld [vmem:[#allocation6 + $0x1c8] sm:$0xff]
    %v963 = vld [vmem:[#allocation6 + $0x1d0] sm:$0xff]
    %v964 = vld [vmem:[#allocation6 + $0x1d8] sm:$0xff]
    %v965 = vld [vmem:[#allocation6 + $0x1e0] sm:$0xff]
    %v966 = vld [vmem:[#allocation6 + $0x1e8] sm:$0xff]
    %v967 = vld [vmem:[#allocation6 + $0x1f0] sm:$0xff]
    %v968 = vld [vmem:[#allocation6 + $0x1f8] sm:$0xff]
    %969 = vmatprep.subr.mxu0 %v906
    %970 = vmatpush1.msra.mxu0 %v905
    %971 = vmatprep.subr.mxu0 %v910
    %972 = vmatpush1.msra.mxu0 %v909
    %973 = vmatprep.subr.mxu0 %v914
    %974 = vmatpush1.msra.mxu0 %v913
    %975 = vmatprep.subr.mxu0 %v918
    %976 = vmatpush1.msra.mxu0 %v917
    %977 = vmatprep.subr.mxu0 %v922
    %978 = vmatpush1.msra.mxu0 %v921
    %979 = vmatprep.subr.mxu0 %v926
    %980 = vmatpush1.msra.mxu0 %v925
    %981 = vmatprep.subr.mxu0 %v930
    %982 = vmatpush1.msra.mxu0 %v929
    %983 = vmatprep.subr.mxu0 %v934
    %984 = vmatpush1.msra.mxu0 %v933
    %985 = vmatprep.subr.mxu0 %v938
    %986 = vmatpush1.msra.mxu0 %v937
    %987 = vmatprep.subr.mxu0 %v942
    %988 = vmatpush1.msra.mxu0 %v941
    %989 = vmatprep.subr.mxu0 %v946
    %990 = vmatpush1.msra.mxu0 %v945
    %991 = vmatprep.subr.mxu0 %v950
    %992 = vmatpush1.msra.mxu0 %v949
    %993 = vmatprep.subr.mxu0 %v954
    %994 = vmatpush1.msra.mxu0 %v953
    %995 = vmatprep.subr.mxu0 %v958
    %996 = vmatpush1.msra.mxu0 %v957
    %997 = vmatprep.subr.mxu0 %v962
    %998 = vmatpush1.msra.mxu0 %v961
    %999 = vmatprep.subr.mxu0 %v966
    %1000 = vmatpush1.msra.mxu0 %v965
    %1001 = vmatprep.subr.mxu0 0.0
    %1002 = vmatpush1.msra.mxu0 0.0
    %1003 = vmatprep.subr.mxu0 0.0
    %1004 = vmatpush1.msra.mxu0 0.0
    %1005 = vmatprep.subr.mxu0 0.0
    %1006 = vmatpush1.msra.mxu0 0.0
    %1007 = vmatprep.subr.mxu0 0.0
    %1008 = vmatpush1.msra.mxu0 0.0
    %1009 = vmatprep.subr.mxu0 0.0
    %1010 = vmatpush1.msra.mxu0 0.0
    %1011 = vmatprep.subr.mxu0 0.0
    %1012 = vmatpush1.msra.mxu0 0.0
    %1013 = vmatprep.subr.mxu0 0.0
    %1014 = vmatpush1.msra.mxu0 0.0
    %1015 = vmatprep.subr.mxu0 0.0
    %1016 = vmatpush1.msra.mxu0 0.0
    %1017 = vmatprep.subr.mxu0 0.0
    %1018 = vmatpush1.msra.mxu0 0.0
    %1019 = vmatprep.subr.mxu0 0.0
    %1020 = vmatpush1.msra.mxu0 0.0
    %1021 = vmatprep.subr.mxu0 0.0
    %1022 = vmatpush1.msra.mxu0 0.0
    %1023 = vmatprep.subr.mxu0 0.0
    %1024 = vmatpush1.msra.mxu0 0.0
    %1025 = vmatprep.subr.mxu0 0.0
    %1026 = vmatpush1.msra.mxu0 0.0
    %1027 = vmatprep.subr.mxu0 0.0
    %1028 = vmatpush1.msra.mxu0 0.0
    %1029 = vmatprep.subr.mxu0 0.0
    %1030 = vmatpush1.msra.mxu0 0.0
    %1031 = vmatprep.subr.mxu0 0.0
    %1032 = vmatpush1.msra.mxu0 0.0
    %1033 = vmatprep.mubr.f32.mxu0 0.0
    %1034 = vmatmul.mubr.f32.gmra.mrb[0].mxu0 %v898
    %v1035 = vpop.f32.mrb[0].mxu0
    %v1036 = vadd.f32 0.0, %v1035
    %v1037 = vpop.f32.mrb[0].mxu0
    %v1038 = vadd.f32 0.0, %v1037
    %1039 = vdwg.mxu0
    %1040 = vmatprep.subr.mxu0 %v908
    %1041 = vmatpush1.msra.mxu0 %v907
    %1042 = vmatprep.subr.mxu0 %v912
    %1043 = vmatpush1.msra.mxu0 %v911
    %1044 = vmatprep.subr.mxu0 %v916
    %1045 = vmatpush1.msra.mxu0 %v915
    %1046 = vmatprep.subr.mxu0 %v920
    %1047 = vmatpush1.msra.mxu0 %v919
    %1048 = vmatprep.subr.mxu0 %v924
    %1049 = vmatpush1.msra.mxu0 %v923
    %1050 = vmatprep.subr.mxu0 %v928
    %1051 = vmatpush1.msra.mxu0 %v927
    %1052 = vmatprep.subr.mxu0 %v932
    %1053 = vmatpush1.msra.mxu0 %v931
    %1054 = vmatprep.subr.mxu0 %v936
    %1055 = vmatpush1.msra.mxu0 %v935
    %1056 = vmatprep.subr.mxu0 %v940
    %1057 = vmatpush1.msra.mxu0 %v939
    %1058 = vmatprep.subr.mxu0 %v944
    %1059 = vmatpush1.msra.mxu0 %v943
    %1060 = vmatprep.subr.mxu0 %v948
    %1061 = vmatpush1.msra.mxu0 %v947
    %1062 = vmatprep.subr.mxu0 %v952
    %1063 = vmatpush1.msra.mxu0 %v951
    %1064 = vmatprep.subr.mxu0 %v956
    %1065 = vmatpush1.msra.mxu0 %v955
    %1066 = vmatprep.subr.mxu0 %v960
    %1067 = vmatpush1.msra.mxu0 %v959
    %1068 = vmatprep.subr.mxu0 %v964
    %1069 = vmatpush1.msra.mxu0 %v963
    %1070 = vmatprep.subr.mxu0 %v968
    %1071 = vmatpush1.msra.mxu0 %v967
    %1072 = vmatprep.subr.mxu0 0.0
    %1073 = vmatpush1.msra.mxu0 0.0
    %1074 = vmatprep.subr.mxu0 0.0
    %1075 = vmatpush1.msra.mxu0 0.0
    %1076 = vmatprep.subr.mxu0 0.0
    %1077 = vmatpush1.msra.mxu0 0.0
    %1078 = vmatprep.subr.mxu0 0.0
    %1079 = vmatpush1.msra.mxu0 0.0
    %1080 = vmatprep.subr.mxu0 0.0
    %1081 = vmatpush1.msra.mxu0 0.0
    %1082 = vmatprep.subr.mxu0 0.0
    %1083 = vmatpush1.msra.mxu0 0.0
    %1084 = vmatprep.subr.mxu0 0.0
    %1085 = vmatpush1.msra.mxu0 0.0
    %1086 = vmatprep.subr.mxu0 0.0
    %1087 = vmatpush1.msra.mxu0 0.0
    %1088 = vmatprep.subr.mxu0 0.0
    %1089 = vmatpush1.msra.mxu0 0.0
    %1090 = vmatprep.subr.mxu0 0.0
    %1091 = vmatpush1.msra.mxu0 0.0
    %1092 = vmatprep.subr.mxu0 0.0
    %1093 = vmatpush1.msra.mxu0 0.0
    %1094 = vmatprep.subr.mxu0 0.0
    %1095 = vmatpush1.msra.mxu0 0.0
    %1096 = vmatprep.subr.mxu0 0.0
    %1097 = vmatpush1.msra.mxu0 0.0
    %1098 = vmatprep.subr.mxu0 0.0
    %1099 = vmatpush1.msra.mxu0 0.0
    %1100 = vmatprep.subr.mxu0 0.0
    %1101 = vmatpush1.msra.mxu0 0.0
    %1102 = vmatprep.subr.mxu0 0.0
    %1103 = vmatpush1.msra.mxu0 0.0
    %1104 = vmatprep.mubr.f32.mxu0 0.0
    %1105 = vmatmul.mubr.f32.gmra.mrb[0].mxu0 %v898
    %v1106 = vpop.f32.mrb[0].mxu0
    %v1107 = vadd.f32 0.0, %v1106
    %v1108 = vpop.f32.mrb[0].mxu0
    %v1109 = vadd.f32 0.0, %v1108
    %1110 = vdwg.mxu0
    %v1111 = vadd.f32 %v901, %v1036
    %v1112 = vadd.f32 %v902, %v1038
    %v1113 = vadd.f32 %v903, %v1107
    %v1114 = vadd.f32 %v904, %v1109
    %v1115 = vxor.u32 %v1111, 2147483648
    %v1116 = vmul.f32 %v1115, 1.442695
    %v1117 = vpow.pop %v1116
    %v1118 = vadd.f32 %v1117, 1.0
    %v1119 = vrcp.pop %v1118
    %v1120 = vmul.f32 1.0, %v1119
    %v1121 = vxor.u32 %v1112, 2147483648
    %v1122 = vmul.f32 %v1121, 1.442695
    %v1123 = vpow.pop %v1122
    %v1124 = vadd.f32 %v1123, 1.0
    %v1125 = vrcp.pop %v1124
    %v1126 = vmul.f32 1.0, %v1125
    %v1127 = vtanh.pop %v1113
    %v1128 = vxor.u32 %v1114, 2147483648
    %v1129 = vmul.f32 %v1128, 1.442695
    %v1130 = vpow.pop %v1129
    %v1131 = vadd.f32 %v1130, 1.0
    %v1132 = vrcp.pop %v1131
    %v1133 = vmul.f32 1.0, %v1132
    %v1134 = vmul.f32 %v1126, %v899
    %v1135 = vmul.f32 %v1120, %v1127
    %v1136 = vadd.f32 %v1134, %v1135
    %v1137 = vtanh.pop %v1136
    %v1138 = vmul.f32 %v1133, %v1137
    %1139 = vst [vmem:[#allocation4] sm:$0xff] %v1138
    %1140 = vst [vmem:[#allocation5] sm:$0xff] %v1136
    %s1141 = scalar_lea.vmem [#allocation2], 16
    %1142 = vst [vmem:[%s1141] sm:$0xff] %v1138
    %v1143 = vld [vmem:[#allocation4] sm:$0xff]
    %v1144 = vld [vmem:[#allocation5] sm:$0xff]
    %s1145 = scalar_lea.vmem [#allocation3], 96
    %v1146 = vld [vmem:[%s1145] sm:$0xff]
    %v1147 = vld [vmem:[%s1145 + $0x8] sm:$0xff]
    %v1148 = vld [vmem:[%s1145 + $0x10] sm:$0xff]
    %v1149 = vld [vmem:[%s1145 + $0x18] sm:$0xff]
    %v1150 = vld [vmem:[#allocation6] sm:$0xff]
    %v1151 = vld [vmem:[#allocation6 + $0x8] sm:$0xff]
    %v1152 = vld [vmem:[#allocation6 + $0x10] sm:$0xff]
    %v1153 = vld [vmem:[#allocation6 + $0x18] sm:$0xff]
    %v1154 = vld [vmem:[#allocation6 + $0x20] sm:$0xff]
    %v1155 = vld [vmem:[#allocation6 + $0x28] sm:$0xff]
    %v1156 = vld [vmem:[#allocation6 + $0x30] sm:$0xff]
    %v1157 = vld [vmem:[#allocation6 + $0x38] sm:$0xff]
    %v1158 = vld [vmem:[#allocation6 + $0x40] sm:$0xff]
    %v1159 = vld [vmem:[#allocation6 + $0x48] sm:$0xff]
    %v1160 = vld [vmem:[#allocation6 + $0x50] sm:$0xff]
    %v1161 = vld [vmem:[#allocation6 + $0x58] sm:$0xff]
    %v1162 = vld [vmem:[#allocation6 + $0x60] sm:$0xff]
    %v1163 = vld [vmem:[#allocation6 + $0x68] sm:$0xff]
    %v1164 = vld [vmem:[#allocation6 + $0x70] sm:$0xff]
    %v1165 = vld [vmem:[#allocation6 + $0x78] sm:$0xff]
    %v1166 = vld [vmem:[#allocation6 + $0x80] sm:$0xff]
    %v1167 = vld [vmem:[#allocation6 + $0x88] sm:$0xff]
    %v1168 = vld [vmem:[#allocation6 + $0x90] sm:$0xff]
    %v1169 = vld [vmem:[#allocation6 + $0x98] sm:$0xff]
    %v1170 = vld [vmem:[#allocation6 + $0xa0] sm:$0xff]
    %v1171 = vld [vmem:[#allocation6 + $0xa8] sm:$0xff]
    %v1172 = vld [vmem:[#allocation6 + $0xb0] sm:$0xff]
    %v1173 = vld [vmem:[#allocation6 + $0xb8] sm:$0xff]
    %v1174 = vld [vmem:[#allocation6 + $0xc0] sm:$0xff]
    %v1175 = vld [vmem:[#allocation6 + $0xc8] sm:$0xff]
    %v1176 = vld [vmem:[#allocation6 + $0xd0] sm:$0xff]
    %v1177 = vld [vmem:[#allocation6 + $0xd8] sm:$0xff]
    %v1178 = vld [vmem:[#allocation6 + $0xe0] sm:$0xff]
    %v1179 = vld [vmem:[#allocation6 + $0xe8] sm:$0xff]
    %v1180 = vld [vmem:[#allocation6 + $0xf0] sm:$0xff]
    %v1181 = vld [vmem:[#allocation6 + $0xf8] sm:$0xff]
    %v1182 = vld [vmem:[#allocation6 + $0x100] sm:$0xff]
    %v1183 = vld [vmem:[#allocation6 + $0x108] sm:$0xff]
    %v1184 = vld [vmem:[#allocation6 + $0x110] sm:$0xff]
    %v1185 = vld [vmem:[#allocation6 + $0x118] sm:$0xff]
    %v1186 = vld [vmem:[#allocation6 + $0x120] sm:$0xff]
    %v1187 = vld [vmem:[#allocation6 + $0x128] sm:$0xff]
    %v1188 = vld [vmem:[#allocation6 + $0x130] sm:$0xff]
    %v1189 = vld [vmem:[#allocation6 + $0x138] sm:$0xff]
    %v1190 = vld [vmem:[#allocation6 + $0x140] sm:$0xff]
    %v1191 = vld [vmem:[#allocation6 + $0x148] sm:$0xff]
    %v1192 = vld [vmem:[#allocation6 + $0x150] sm:$0xff]
    %v1193 = vld [vmem:[#allocation6 + $0x158] sm:$0xff]
    %v1194 = vld [vmem:[#allocation6 + $0x160] sm:$0xff]
    %v1195 = vld [vmem:[#allocation6 + $0x168] sm:$0xff]
    %v1196 = vld [vmem:[#allocation6 + $0x170] sm:$0xff]
    %v1197 = vld [vmem:[#allocation6 + $0x178] sm:$0xff]
    %v1198 = vld [vmem:[#allocation6 + $0x180] sm:$0xff]
    %v1199 = vld [vmem:[#allocation6 + $0x188] sm:$0xff]
    %v1200 = vld [vmem:[#allocation6 + $0x190] sm:$0xff]
    %v1201 = vld [vmem:[#allocation6 + $0x198] sm:$0xff]
    %v1202 = vld [vmem:[#allocation6 + $0x1a0] sm:$0xff]
    %v1203 = vld [vmem:[#allocation6 + $0x1a8] sm:$0xff]
    %v1204 = vld [vmem:[#allocation6 + $0x1b0] sm:$0xff]
    %v1205 = vld [vmem:[#allocation6 + $0x1b8] sm:$0xff]
    %v1206 = vld [vmem:[#allocation6 + $0x1c0] sm:$0xff]
    %v1207 = vld [vmem:[#allocation6 + $0x1c8] sm:$0xff]
    %v1208 = vld [vmem:[#allocation6 + $0x1d0] sm:$0xff]
    %v1209 = vld [vmem:[#allocation6 + $0x1d8] sm:$0xff]
    %v1210 = vld [vmem:[#allocation6 + $0x1e0] sm:$0xff]
    %v1211 = vld [vmem:[#allocation6 + $0x1e8] sm:$0xff]
    %v1212 = vld [vmem:[#allocation6 + $0x1f0] sm:$0xff]
    %v1213 = vld [vmem:[#allocation6 + $0x1f8] sm:$0xff]
    %1214 = vmatprep.subr.mxu0 %v1151
    %1215 = vmatpush1.msra.mxu0 %v1150
    %1216 = vmatprep.subr.mxu0 %v1155
    %1217 = vmatpush1.msra.mxu0 %v1154
    %1218 = vmatprep.subr.mxu0 %v1159
    %1219 = vmatpush1.msra.mxu0 %v1158
    %1220 = vmatprep.subr.mxu0 %v1163
    %1221 = vmatpush1.msra.mxu0 %v1162
    %1222 = vmatprep.subr.mxu0 %v1167
    %1223 = vmatpush1.msra.mxu0 %v1166
    %1224 = vmatprep.subr.mxu0 %v1171
    %1225 = vmatpush1.msra.mxu0 %v1170
    %1226 = vmatprep.subr.mxu0 %v1175
    %1227 = vmatpush1.msra.mxu0 %v1174
    %1228 = vmatprep.subr.mxu0 %v1179
    %1229 = vmatpush1.msra.mxu0 %v1178
    %1230 = vmatprep.subr.mxu0 %v1183
    %1231 = vmatpush1.msra.mxu0 %v1182
    %1232 = vmatprep.subr.mxu0 %v1187
    %1233 = vmatpush1.msra.mxu0 %v1186
    %1234 = vmatprep.subr.mxu0 %v1191
    %1235 = vmatpush1.msra.mxu0 %v1190
    %1236 = vmatprep.subr.mxu0 %v1195
    %1237 = vmatpush1.msra.mxu0 %v1194
    %1238 = vmatprep.subr.mxu0 %v1199
    %1239 = vmatpush1.msra.mxu0 %v1198
    %1240 = vmatprep.subr.mxu0 %v1203
    %1241 = vmatpush1.msra.mxu0 %v1202
    %1242 = vmatprep.subr.mxu0 %v1207
    %1243 = vmatpush1.msra.mxu0 %v1206
    %1244 = vmatprep.subr.mxu0 %v1211
    %1245 = vmatpush1.msra.mxu0 %v1210
    %1246 = vmatprep.subr.mxu0 0.0
    %1247 = vmatpush1.msra.mxu0 0.0
    %1248 = vmatprep.subr.mxu0 0.0
    %1249 = vmatpush1.msra.mxu0 0.0
    %1250 = vmatprep.subr.mxu0 0.0
    %1251 = vmatpush1.msra.mxu0 0.0
    %1252 = vmatprep.subr.mxu0 0.0
    %1253 = vmatpush1.msra.mxu0 0.0
    %1254 = vmatprep.subr.mxu0 0.0
    %1255 = vmatpush1.msra.mxu0 0.0
    %1256 = vmatprep.subr.mxu0 0.0
    %1257 = vmatpush1.msra.mxu0 0.0
    %1258 = vmatprep.subr.mxu0 0.0
    %1259 = vmatpush1.msra.mxu0 0.0
    %1260 = vmatprep.subr.mxu0 0.0
    %1261 = vmatpush1.msra.mxu0 0.0
    %1262 = vmatprep.subr.mxu0 0.0
    %1263 = vmatpush1.msra.mxu0 0.0
    %1264 = vmatprep.subr.mxu0 0.0
    %1265 = vmatpush1.msra.mxu0 0.0
    %1266 = vmatprep.subr.mxu0 0.0
    %1267 = vmatpush1.msra.mxu0 0.0
    %1268 = vmatprep.subr.mxu0 0.0
    %1269 = vmatpush1.msra.mxu0 0.0
    %1270 = vmatprep.subr.mxu0 0.0
    %1271 = vmatpush1.msra.mxu0 0.0
    %1272 = vmatprep.subr.mxu0 0.0
    %1273 = vmatpush1.msra.mxu0 0.0
    %1274 = vmatprep.subr.mxu0 0.0
    %1275 = vmatpush1.msra.mxu0 0.0
    %1276 = vmatprep.subr.mxu0 0.0
    %1277 = vmatpush1.msra.mxu0 0.0
    %1278 = vmatprep.mubr.f32.mxu0 0.0
    %1279 = vmatmul.mubr.f32.gmra.mrb[0].mxu0 %v1143
    %v1280 = vpop.f32.mrb[0].mxu0
    %v1281 = vadd.f32 0.0, %v1280
    %v1282 = vpop.f32.mrb[0].mxu0
    %v1283 = vadd.f32 0.0, %v1282
    %1284 = vdwg.mxu0
    %1285 = vmatprep.subr.mxu0 %v1153
    %1286 = vmatpush1.msra.mxu0 %v1152
    %1287 = vmatprep.subr.mxu0 %v1157
    %1288 = vmatpush1.msra.mxu0 %v1156
    %1289 = vmatprep.subr.mxu0 %v1161
    %1290 = vmatpush1.msra.mxu0 %v1160
    %1291 = vmatprep.subr.mxu0 %v1165
    %1292 = vmatpush1.msra.mxu0 %v1164
    %1293 = vmatprep.subr.mxu0 %v1169
    %1294 = vmatpush1.msra.mxu0 %v1168
    %1295 = vmatprep.subr.mxu0 %v1173
    %1296 = vmatpush1.msra.mxu0 %v1172
    %1297 = vmatprep.subr.mxu0 %v1177
    %1298 = vmatpush1.msra.mxu0 %v1176
    %1299 = vmatprep.subr.mxu0 %v1181
    %1300 = vmatpush1.msra.mxu0 %v1180
    %1301 = vmatprep.subr.mxu0 %v1185
    %1302 = vmatpush1.msra.mxu0 %v1184
    %1303 = vmatprep.subr.mxu0 %v1189
    %1304 = vmatpush1.msra.mxu0 %v1188
    %1305 = vmatprep.subr.mxu0 %v1193
    %1306 = vmatpush1.msra.mxu0 %v1192
    %1307 = vmatprep.subr.mxu0 %v1197
    %1308 = vmatpush1.msra.mxu0 %v1196
    %1309 = vmatprep.subr.mxu0 %v1201
    %1310 = vmatpush1.msra.mxu0 %v1200
    %1311 = vmatprep.subr.mxu0 %v1205
    %1312 = vmatpush1.msra.mxu0 %v1204
    %1313 = vmatprep.subr.mxu0 %v1209
    %1314 = vmatpush1.msra.mxu0 %v1208
    %1315 = vmatprep.subr.mxu0 %v1213
    %1316 = vmatpush1.msra.mxu0 %v1212
    %1317 = vmatprep.subr.mxu0 0.0
    %1318 = vmatpush1.msra.mxu0 0.0
    %1319 = vmatprep.subr.mxu0 0.0
    %1320 = vmatpush1.msra.mxu0 0.0
    %1321 = vmatprep.subr.mxu0 0.0
    %1322 = vmatpush1.msra.mxu0 0.0
    %1323 = vmatprep.subr.mxu0 0.0
    %1324 = vmatpush1.msra.mxu0 0.0
    %1325 = vmatprep.subr.mxu0 0.0
    %1326 = vmatpush1.msra.mxu0 0.0
    %1327 = vmatprep.subr.mxu0 0.0
    %1328 = vmatpush1.msra.mxu0 0.0
    %1329 = vmatprep.subr.mxu0 0.0
    %1330 = vmatpush1.msra.mxu0 0.0
    %1331 = vmatprep.subr.mxu0 0.0
    %1332 = vmatpush1.msra.mxu0 0.0
    %1333 = vmatprep.subr.mxu0 0.0
    %1334 = vmatpush1.msra.mxu0 0.0
    %1335 = vmatprep.subr.mxu0 0.0
    %1336 = vmatpush1.msra.mxu0 0.0
    %1337 = vmatprep.subr.mxu0 0.0
    %1338 = vmatpush1.msra.mxu0 0.0
    %1339 = vmatprep.subr.mxu0 0.0
    %1340 = vmatpush1.msra.mxu0 0.0
    %1341 = vmatprep.subr.mxu0 0.0
    %1342 = vmatpush1.msra.mxu0 0.0
    %1343 = vmatprep.subr.mxu0 0.0
    %1344 = vmatpush1.msra.mxu0 0.0
    %1345 = vmatprep.subr.mxu0 0.0
    %1346 = vmatpush1.msra.mxu0 0.0
    %1347 = vmatprep.subr.mxu0 0.0
    %1348 = vmatpush1.msra.mxu0 0.0
    %1349 = vmatprep.mubr.f32.mxu0 0.0
    %1350 = vmatmul.mubr.f32.gmra.mrb[0].mxu0 %v1143
    %v1351 = vpop.f32.mrb[0].mxu0
    %v1352 = vadd.f32 0.0, %v1351
    %v1353 = vpop.f32.mrb[0].mxu0
    %v1354 = vadd.f32 0.0, %v1353
    %1355 = vdwg.mxu0
    %v1356 = vadd.f32 %v1146, %v1281
    %v1357 = vadd.f32 %v1147, %v1283
    %v1358 = vadd.f32 %v1148, %v1352
    %v1359 = vadd.f32 %v1149, %v1354
    %v1360 = vxor.u32 %v1356, 2147483648
    %v1361 = vmul.f32 %v1360, 1.442695
    %v1362 = vpow.pop %v1361
    %v1363 = vadd.f32 %v1362, 1.0
    %v1364 = vrcp.pop %v1363
    %v1365 = vmul.f32 1.0, %v1364
    %v1366 = vxor.u32 %v1357, 2147483648
    %v1367 = vmul.f32 %v1366, 1.442695
    %v1368 = vpow.pop %v1367
    %v1369 = vadd.f32 %v1368, 1.0
    %v1370 = vrcp.pop %v1369
    %v1371 = vmul.f32 1.0, %v1370
    %v1372 = vtanh.pop %v1358
    %v1373 = vxor.u32 %v1359, 2147483648
    %v1374 = vmul.f32 %v1373, 1.442695
    %v1375 = vpow.pop %v1374
    %v1376 = vadd.f32 %v1375, 1.0
    %v1377 = vrcp.pop %v1376
    %v1378 = vmul.f32 1.0, %v1377
    %v1379 = vmul.f32 %v1371, %v1144
    %v1380 = vmul.f32 %v1365, %v1372
    %v1381 = vadd.f32 %v1379, %v1380
    %v1382 = vtanh.pop %v1381
    %v1383 = vmul.f32 %v1378, %v1382
    %1384 = vst [vmem:[#allocation4] sm:$0xff] %v1383
    %1385 = vst [vmem:[#allocation5] sm:$0xff] %v1381
    %s1386 = scalar_lea.vmem [#allocation2], 24
    %1387 = vst [vmem:[%s1386] sm:$0xff] %v1383
    %v1388 = vld [vmem:[#allocation4] sm:$0xff]
    %v1389 = vld [vmem:[#allocation5] sm:$0xff]
    %s1390 = scalar_lea.vmem [#allocation3], 128
    %v1391 = vld [vmem:[%s1390] sm:$0xff]
    %v1392 = vld [vmem:[%s1390 + $0x8] sm:$0xff]
    %v1393 = vld [vmem:[%s1390 + $0x10] sm:$0xff]
    %v1394 = vld [vmem:[%s1390 + $0x18] sm:$0xff]
    %v1395 = vld [vmem:[#allocation6] sm:$0xff]
    %v1396 = vld [vmem:[#allocation6 + $0x8] sm:$0xff]
    %v1397 = vld [vmem:[#allocation6 + $0x10] sm:$0xff]
    %v1398 = vld [vmem:[#allocation6 + $0x18] sm:$0xff]
    %v1399 = vld [vmem:[#allocation6 + $0x20] sm:$0xff]
    %v1400 = vld [vmem:[#allocation6 + $0x28] sm:$0xff]
    %v1401 = vld [vmem:[#allocation6 + $0x30] sm:$0xff]
    %v1402 = vld [vmem:[#allocation6 + $0x38] sm:$0xff]
    %v1403 = vld [vmem:[#allocation6 + $0x40] sm:$0xff]
    %v1404 = vld [vmem:[#allocation6 + $0x48] sm:$0xff]
    %v1405 = vld [vmem:[#allocation6 + $0x50] sm:$0xff]
    %v1406 = vld [vmem:[#allocation6 + $0x58] sm:$0xff]
    %v1407 = vld [vmem:[#allocation6 + $0x60] sm:$0xff]
    %v1408 = vld [vmem:[#allocation6 + $0x68] sm:$0xff]
    %v1409 = vld [vmem:[#allocation6 + $0x70] sm:$0xff]
    %v1410 = vld [vmem:[#allocation6 + $0x78] sm:$0xff]
    %v1411 = vld [vmem:[#allocation6 + $0x80] sm:$0xff]
    %v1412 = vld [vmem:[#allocation6 + $0x88] sm:$0xff]
    %v1413 = vld [vmem:[#allocation6 + $0x90] sm:$0xff]
    %v1414 = vld [vmem:[#allocation6 + $0x98] sm:$0xff]
    %v1415 = vld [vmem:[#allocation6 + $0xa0] sm:$0xff]
    %v1416 = vld [vmem:[#allocation6 + $0xa8] sm:$0xff]
    %v1417 = vld [vmem:[#allocation6 + $0xb0] sm:$0xff]
    %v1418 = vld [vmem:[#allocation6 + $0xb8] sm:$0xff]
    %v1419 = vld [vmem:[#allocation6 + $0xc0] sm:$0xff]
    %v1420 = vld [vmem:[#allocation6 + $0xc8] sm:$0xff]
    %v1421 = vld [vmem:[#allocation6 + $0xd0] sm:$0xff]
    %v1422 = vld [vmem:[#allocation6 + $0xd8] sm:$0xff]
    %v1423 = vld [vmem:[#allocation6 + $0xe0] sm:$0xff]
    %v1424 = vld [vmem:[#allocation6 + $0xe8] sm:$0xff]
    %v1425 = vld [vmem:[#allocation6 + $0xf0] sm:$0xff]
    %v1426 = vld [vmem:[#allocation6 + $0xf8] sm:$0xff]
    %v1427 = vld [vmem:[#allocation6 + $0x100] sm:$0xff]
    %v1428 = vld [vmem:[#allocation6 + $0x108] sm:$0xff]
    %v1429 = vld [vmem:[#allocation6 + $0x110] sm:$0xff]
    %v1430 = vld [vmem:[#allocation6 + $0x118] sm:$0xff]
    %v1431 = vld [vmem:[#allocation6 + $0x120] sm:$0xff]
    %v1432 = vld [vmem:[#allocation6 + $0x128] sm:$0xff]
    %v1433 = vld [vmem:[#allocation6 + $0x130] sm:$0xff]
    %v1434 = vld [vmem:[#allocation6 + $0x138] sm:$0xff]
    %v1435 = vld [vmem:[#allocation6 + $0x140] sm:$0xff]
    %v1436 = vld [vmem:[#allocation6 + $0x148] sm:$0xff]
    %v1437 = vld [vmem:[#allocation6 + $0x150] sm:$0xff]
    %v1438 = vld [vmem:[#allocation6 + $0x158] sm:$0xff]
    %v1439 = vld [vmem:[#allocation6 + $0x160] sm:$0xff]
    %v1440 = vld [vmem:[#allocation6 + $0x168] sm:$0xff]
    %v1441 = vld [vmem:[#allocation6 + $0x170] sm:$0xff]
    %v1442 = vld [vmem:[#allocation6 + $0x178] sm:$0xff]
    %v1443 = vld [vmem:[#allocation6 + $0x180] sm:$0xff]
    %v1444 = vld [vmem:[#allocation6 + $0x188] sm:$0xff]
    %v1445 = vld [vmem:[#allocation6 + $0x190] sm:$0xff]
    %v1446 = vld [vmem:[#allocation6 + $0x198] sm:$0xff]
    %v1447 = vld [vmem:[#allocation6 + $0x1a0] sm:$0xff]
    %v1448 = vld [vmem:[#allocation6 + $0x1a8] sm:$0xff]
    %v1449 = vld [vmem:[#allocation6 + $0x1b0] sm:$0xff]
    %v1450 = vld [vmem:[#allocation6 + $0x1b8] sm:$0xff]
    %v1451 = vld [vmem:[#allocation6 + $0x1c0] sm:$0xff]
    %v1452 = vld [vmem:[#allocation6 + $0x1c8] sm:$0xff]
    %v1453 = vld [vmem:[#allocation6 + $0x1d0] sm:$0xff]
    %v1454 = vld [vmem:[#allocation6 + $0x1d8] sm:$0xff]
    %v1455 = vld [vmem:[#allocation6 + $0x1e0] sm:$0xff]
    %v1456 = vld [vmem:[#allocation6 + $0x1e8] sm:$0xff]
    %v1457 = vld [vmem:[#allocation6 + $0x1f0] sm:$0xff]
    %v1458 = vld [vmem:[#allocation6 + $0x1f8] sm:$0xff]
    %1459 = vmatprep.subr.mxu0 %v1396
    %1460 = vmatpush1.msra.mxu0 %v1395
    %1461 = vmatprep.subr.mxu0 %v1400
    %1462 = vmatpush1.msra.mxu0 %v1399
    %1463 = vmatprep.subr.mxu0 %v1404
    %1464 = vmatpush1.msra.mxu0 %v1403
    %1465 = vmatprep.subr.mxu0 %v1408
    %1466 = vmatpush1.msra.mxu0 %v1407
    %1467 = vmatprep.subr.mxu0 %v1412
    %1468 = vmatpush1.msra.mxu0 %v1411
    %1469 = vmatprep.subr.mxu0 %v1416
    %1470 = vmatpush1.msra.mxu0 %v1415
    %1471 = vmatprep.subr.mxu0 %v1420
    %1472 = vmatpush1.msra.mxu0 %v1419
    %1473 = vmatprep.subr.mxu0 %v1424
    %1474 = vmatpush1.msra.mxu0 %v1423
    %1475 = vmatprep.subr.mxu0 %v1428
    %1476 = vmatpush1.msra.mxu0 %v1427
    %1477 = vmatprep.subr.mxu0 %v1432
    %1478 = vmatpush1.msra.mxu0 %v1431
    %1479 = vmatprep.subr.mxu0 %v1436
    %1480 = vmatpush1.msra.mxu0 %v1435
    %1481 = vmatprep.subr.mxu0 %v1440
    %1482 = vmatpush1.msra.mxu0 %v1439
    %1483 = vmatprep.subr.mxu0 %v1444
    %1484 = vmatpush1.msra.mxu0 %v1443
    %1485 = vmatprep.subr.mxu0 %v1448
    %1486 = vmatpush1.msra.mxu0 %v1447
    %1487 = vmatprep.subr.mxu0 %v1452
    %1488 = vmatpush1.msra.mxu0 %v1451
    %1489 = vmatprep.subr.mxu0 %v1456
    %1490 = vmatpush1.msra.mxu0 %v1455
    %1491 = vmatprep.subr.mxu0 0.0
    %1492 = vmatpush1.msra.mxu0 0.0
    %1493 = vmatprep.subr.mxu0 0.0
    %1494 = vmatpush1.msra.mxu0 0.0
    %1495 = vmatprep.subr.mxu0 0.0
    %1496 = vmatpush1.msra.mxu0 0.0
    %1497 = vmatprep.subr.mxu0 0.0
    %1498 = vmatpush1.msra.mxu0 0.0
    %1499 = vmatprep.subr.mxu0 0.0
    %1500 = vmatpush1.msra.mxu0 0.0
    %1501 = vmatprep.subr.mxu0 0.0
    %1502 = vmatpush1.msra.mxu0 0.0
    %1503 = vmatprep.subr.mxu0 0.0
    %1504 = vmatpush1.msra.mxu0 0.0
    %1505 = vmatprep.subr.mxu0 0.0
    %1506 = vmatpush1.msra.mxu0 0.0
    %1507 = vmatprep.subr.mxu0 0.0
    %1508 = vmatpush1.msra.mxu0 0.0
    %1509 = vmatprep.subr.mxu0 0.0
    %1510 = vmatpush1.msra.mxu0 0.0
    %1511 = vmatprep.subr.mxu0 0.0
    %1512 = vmatpush1.msra.mxu0 0.0
    %1513 = vmatprep.subr.mxu0 0.0
    %1514 = vmatpush1.msra.mxu0 0.0
    %1515 = vmatprep.subr.mxu0 0.0
    %1516 = vmatpush1.msra.mxu0 0.0
    %1517 = vmatprep.subr.mxu0 0.0
    %1518 = vmatpush1.msra.mxu0 0.0
    %1519 = vmatprep.subr.mxu0 0.0
    %1520 = vmatpush1.msra.mxu0 0.0
    %1521 = vmatprep.subr.mxu0 0.0
    %1522 = vmatpush1.msra.mxu0 0.0
    %1523 = vmatprep.mubr.f32.mxu0 0.0
    %1524 = vmatmul.mubr.f32.gmra.mrb[0].mxu0 %v1388
    %v1525 = vpop.f32.mrb[0].mxu0
    %v1526 = vadd.f32 0.0, %v1525
    %v1527 = vpop.f32.mrb[0].mxu0
    %v1528 = vadd.f32 0.0, %v1527
    %1529 = vdwg.mxu0
    %1530 = vmatprep.subr.mxu0 %v1398
    %1531 = vmatpush1.msra.mxu0 %v1397
    %1532 = vmatprep.subr.mxu0 %v1402
    %1533 = vmatpush1.msra.mxu0 %v1401
    %1534 = vmatprep.subr.mxu0 %v1406
    %1535 = vmatpush1.msra.mxu0 %v1405
    %1536 = vmatprep.subr.mxu0 %v1410
    %1537 = vmatpush1.msra.mxu0 %v1409
    %1538 = vmatprep.subr.mxu0 %v1414
    %1539 = vmatpush1.msra.mxu0 %v1413
    %1540 = vmatprep.subr.mxu0 %v1418
    %1541 = vmatpush1.msra.mxu0 %v1417
    %1542 = vmatprep.subr.mxu0 %v1422
    %1543 = vmatpush1.msra.mxu0 %v1421
    %1544 = vmatprep.subr.mxu0 %v1426
    %1545 = vmatpush1.msra.mxu0 %v1425
    %1546 = vmatprep.subr.mxu0 %v1430
    %1547 = vmatpush1.msra.mxu0 %v1429
    %1548 = vmatprep.subr.mxu0 %v1434
    %1549 = vmatpush1.msra.mxu0 %v1433
    %1550 = vmatprep.subr.mxu0 %v1438
    %1551 = vmatpush1.msra.mxu0 %v1437
    %1552 = vmatprep.subr.mxu0 %v1442
    %1553 = vmatpush1.msra.mxu0 %v1441
    %1554 = vmatprep.subr.mxu0 %v1446
    %1555 = vmatpush1.msra.mxu0 %v1445
    %1556 = vmatprep.subr.mxu0 %v1450
    %1557 = vmatpush1.msra.mxu0 %v1449
    %1558 = vmatprep.subr.mxu0 %v1454
    %1559 = vmatpush1.msra.mxu0 %v1453
    %1560 = vmatprep.subr.mxu0 %v1458
    %1561 = vmatpush1.msra.mxu0 %v1457
    %1562 = vmatprep.subr.mxu0 0.0
    %1563 = vmatpush1.msra.mxu0 0.0
    %1564 = vmatprep.subr.mxu0 0.0
    %1565 = vmatpush1.msra.mxu0 0.0
    %1566 = vmatprep.subr.mxu0 0.0
    %1567 = vmatpush1.msra.mxu0 0.0
    %1568 = vmatprep.subr.mxu0 0.0
    %1569 = vmatpush1.msra.mxu0 0.0
    %1570 = vmatprep.subr.mxu0 0.0
    %1571 = vmatpush1.msra.mxu0 0.0
    %1572 = vmatprep.subr.mxu0 0.0
    %1573 = vmatpush1.msra.mxu0 0.0
    %1574 = vmatprep.subr.mxu0 0.0
    %1575 = vmatpush1.msra.mxu0 0.0
    %1576 = vmatprep.subr.mxu0 0.0
    %1577 = vmatpush1.msra.mxu0 0.0
    %1578 = vmatprep.subr.mxu0 0.0
    %1579 = vmatpush1.msra.mxu0 0.0
    %1580 = vmatprep.subr.mxu0 0.0
    %1581 = vmatpush1.msra.mxu0 0.0
    %1582 = vmatprep.subr.mxu0 0.0
    %1583 = vmatpush1.msra.mxu0 0.0
    %1584 = vmatprep.subr.mxu0 0.0
    %1585 = vmatpush1.msra.mxu0 0.0
    %1586 = vmatprep.subr.mxu0 0.0
    %1587 = vmatpush1.msra.mxu0 0.0
    %1588 = vmatprep.subr.mxu0 0.0
    %1589 = vmatpush1.msra.mxu0 0.0
    %1590 = vmatprep.subr.mxu0 0.0
    %1591 = vmatpush1.msra.mxu0 0.0
    %1592 = vmatprep.subr.mxu0 0.0
    %1593 = vmatpush1.msra.mxu0 0.0
    %1594 = vmatprep.mubr.f32.mxu0 0.0
    %1595 = vmatmul.mubr.f32.gmra.mrb[0].mxu0 %v1388
    %v1596 = vpop.f32.mrb[0].mxu0
    %v1597 = vadd.f32 0.0, %v1596
    %v1598 = vpop.f32.mrb[0].mxu0
    %v1599 = vadd.f32 0.0, %v1598
    %1600 = vdwg.mxu0
    %v1601 = vadd.f32 %v1391, %v1526
    %v1602 = vadd.f32 %v1392, %v1528
    %v1603 = vadd.f32 %v1393, %v1597
    %v1604 = vadd.f32 %v1394, %v1599
    %v1605 = vxor.u32 %v1601, 2147483648
    %v1606 = vmul.f32 %v1605, 1.442695
    %v1607 = vpow.pop %v1606
    %v1608 = vadd.f32 %v1607, 1.0
    %v1609 = vrcp.pop %v1608
    %v1610 = vmul.f32 1.0, %v1609
    %v1611 = vxor.u32 %v1602, 2147483648
    %v1612 = vmul.f32 %v1611, 1.442695
    %v1613 = vpow.pop %v1612
    %v1614 = vadd.f32 %v1613, 1.0
    %v1615 = vrcp.pop %v1614
    %v1616 = vmul.f32 1.0, %v1615
    %v1617 = vtanh.pop %v1603
    %v1618 = vxor.u32 %v1604, 2147483648
    %v1619 = vmul.f32 %v1618, 1.442695
    %v1620 = vpow.pop %v1619
    %v1621 = vadd.f32 %v1620, 1.0
    %v1622 = vrcp.pop %v1621
    %v1623 = vmul.f32 1.0, %v1622
    %v1624 = vmul.f32 %v1616, %v1389
    %v1625 = vmul.f32 %v1610, %v1617
    %v1626 = vadd.f32 %v1624, %v1625
    %v1627 = vtanh.pop %v1626
    %v1628 = vmul.f32 %v1623, %v1627
    %1629 = vst [vmem:[#allocation4] sm:$0xff] %v1628
    %1630 = vst [vmem:[#allocation5] sm:$0xff] %v1626
    %s1631 = scalar_lea.vmem [#allocation2], 32
    %1632 = vst [vmem:[%s1631] sm:$0xff] %v1628
    %v1633 = vld [vmem:[#allocation4] sm:$0xff]
    %v1634 = vld [vmem:[#allocation5] sm:$0xff]
    %s1635 = scalar_lea.vmem [#allocation3], 160
    %v1636 = vld [vmem:[%s1635] sm:$0xff]
    %v1637 = vld [vmem:[%s1635 + $0x8] sm:$0xff]
    %v1638 = vld [vmem:[%s1635 + $0x10] sm:$0xff]
    %v1639 = vld [vmem:[%s1635 + $0x18] sm:$0xff]
    %v1640 = vld [vmem:[#allocation6] sm:$0xff]
    %v1641 = vld [vmem:[#allocation6 + $0x8] sm:$0xff]
    %v1642 = vld [vmem:[#allocation6 + $0x10] sm:$0xff]
    %v1643 = vld [vmem:[#allocation6 + $0x18] sm:$0xff]
    %v1644 = vld [vmem:[#allocation6 + $0x20] sm:$0xff]
    %v1645 = vld [vmem:[#allocation6 + $0x28] sm:$0xff]
    %v1646 = vld [vmem:[#allocation6 + $0x30] sm:$0xff]
    %v1647 = vld [vmem:[#allocation6 + $0x38] sm:$0xff]
    %v1648 = vld [vmem:[#allocation6 + $0x40] sm:$0xff]
    %v1649 = vld [vmem:[#allocation6 + $0x48] sm:$0xff]
    %v1650 = vld [vmem:[#allocation6 + $0x50] sm:$0xff]
    %v1651 = vld [vmem:[#allocation6 + $0x58] sm:$0xff]
    %v1652 = vld [vmem:[#allocation6 + $0x60] sm:$0xff]
    %v1653 = vld [vmem:[#allocation6 + $0x68] sm:$0xff]
    %v1654 = vld [vmem:[#allocation6 + $0x70] sm:$0xff]
    %v1655 = vld [vmem:[#allocation6 + $0x78] sm:$0xff]
    %v1656 = vld [vmem:[#allocation6 + $0x80] sm:$0xff]
    %v1657 = vld [vmem:[#allocation6 + $0x88] sm:$0xff]
    %v1658 = vld [vmem:[#allocation6 + $0x90] sm:$0xff]
    %v1659 = vld [vmem:[#allocation6 + $0x98] sm:$0xff]
    %v1660 = vld [vmem:[#allocation6 + $0xa0] sm:$0xff]
    %v1661 = vld [vmem:[#allocation6 + $0xa8] sm:$0xff]
    %v1662 = vld [vmem:[#allocation6 + $0xb0] sm:$0xff]
    %v1663 = vld [vmem:[#allocation6 + $0xb8] sm:$0xff]
    %v1664 = vld [vmem:[#allocation6 + $0xc0] sm:$0xff]
    %v1665 = vld [vmem:[#allocation6 + $0xc8] sm:$0xff]
    %v1666 = vld [vmem:[#allocation6 + $0xd0] sm:$0xff]
    %v1667 = vld [vmem:[#allocation6 + $0xd8] sm:$0xff]
    %v1668 = vld [vmem:[#allocation6 + $0xe0] sm:$0xff]
    %v1669 = vld [vmem:[#allocation6 + $0xe8] sm:$0xff]
    %v1670 = vld [vmem:[#allocation6 + $0xf0] sm:$0xff]
    %v1671 = vld [vmem:[#allocation6 + $0xf8] sm:$0xff]
    %v1672 = vld [vmem:[#allocation6 + $0x100] sm:$0xff]
    %v1673 = vld [vmem:[#allocation6 + $0x108] sm:$0xff]
    %v1674 = vld [vmem:[#allocation6 + $0x110] sm:$0xff]
    %v1675 = vld [vmem:[#allocation6 + $0x118] sm:$0xff]
    %v1676 = vld [vmem:[#allocation6 + $0x120] sm:$0xff]
    %v1677 = vld [vmem:[#allocation6 + $0x128] sm:$0xff]
    %v1678 = vld [vmem:[#allocation6 + $0x130] sm:$0xff]
    %v1679 = vld [vmem:[#allocation6 + $0x138] sm:$0xff]
    %v1680 = vld [vmem:[#allocation6 + $0x140] sm:$0xff]
    %v1681 = vld [vmem:[#allocation6 + $0x148] sm:$0xff]
    %v1682 = vld [vmem:[#allocation6 + $0x150] sm:$0xff]
    %v1683 = vld [vmem:[#allocation6 + $0x158] sm:$0xff]
    %v1684 = vld [vmem:[#allocation6 + $0x160] sm:$0xff]
    %v1685 = vld [vmem:[#allocation6 + $0x168] sm:$0xff]
    %v1686 = vld [vmem:[#allocation6 + $0x170] sm:$0xff]
    %v1687 = vld [vmem:[#allocation6 + $0x178] sm:$0xff]
    %v1688 = vld [vmem:[#allocation6 + $0x180] sm:$0xff]
    %v1689 = vld [vmem:[#allocation6 + $0x188] sm:$0xff]
    %v1690 = vld [vmem:[#allocation6 + $0x190] sm:$0xff]
    %v1691 = vld [vmem:[#allocation6 + $0x198] sm:$0xff]
    %v1692 = vld [vmem:[#allocation6 + $0x1a0] sm:$0xff]
    %v1693 = vld [vmem:[#allocation6 + $0x1a8] sm:$0xff]
    %v1694 = vld [vmem:[#allocation6 + $0x1b0] sm:$0xff]
    %v1695 = vld [vmem:[#allocation6 + $0x1b8] sm:$0xff]
    %v1696 = vld [vmem:[#allocation6 + $0x1c0] sm:$0xff]
    %v1697 = vld [vmem:[#allocation6 + $0x1c8] sm:$0xff]
    %v1698 = vld [vmem:[#allocation6 + $0x1d0] sm:$0xff]
    %v1699 = vld [vmem:[#allocation6 + $0x1d8] sm:$0xff]
    %v1700 = vld [vmem:[#allocation6 + $0x1e0] sm:$0xff]
    %v1701 = vld [vmem:[#allocation6 + $0x1e8] sm:$0xff]
    %v1702 = vld [vmem:[#allocation6 + $0x1f0] sm:$0xff]
    %v1703 = vld [vmem:[#allocation6 + $0x1f8] sm:$0xff]
    %1704 = vmatprep.subr.mxu0 %v1641
    %1705 = vmatpush1.msra.mxu0 %v1640
    %1706 = vmatprep.subr.mxu0 %v1645
    %1707 = vmatpush1.msra.mxu0 %v1644
    %1708 = vmatprep.subr.mxu0 %v1649
    %1709 = vmatpush1.msra.mxu0 %v1648
    %1710 = vmatprep.subr.mxu0 %v1653
    %1711 = vmatpush1.msra.mxu0 %v1652
    %1712 = vmatprep.subr.mxu0 %v1657
    %1713 = vmatpush1.msra.mxu0 %v1656
    %1714 = vmatprep.subr.mxu0 %v1661
    %1715 = vmatpush1.msra.mxu0 %v1660
    %1716 = vmatprep.subr.mxu0 %v1665
    %1717 = vmatpush1.msra.mxu0 %v1664
    %1718 = vmatprep.subr.mxu0 %v1669
    %1719 = vmatpush1.msra.mxu0 %v1668
    %1720 = vmatprep.subr.mxu0 %v1673
    %1721 = vmatpush1.msra.mxu0 %v1672
    %1722 = vmatprep.subr.mxu0 %v1677
    %1723 = vmatpush1.msra.mxu0 %v1676
    %1724 = vmatprep.subr.mxu0 %v1681
    %1725 = vmatpush1.msra.mxu0 %v1680
    %1726 = vmatprep.subr.mxu0 %v1685
    %1727 = vmatpush1.msra.mxu0 %v1684
    %1728 = vmatprep.subr.mxu0 %v1689
    %1729 = vmatpush1.msra.mxu0 %v1688
    %1730 = vmatprep.subr.mxu0 %v1693
    %1731 = vmatpush1.msra.mxu0 %v1692
    %1732 = vmatprep.subr.mxu0 %v1697
    %1733 = vmatpush1.msra.mxu0 %v1696
    %1734 = vmatprep.subr.mxu0 %v1701
    %1735 = vmatpush1.msra.mxu0 %v1700
    %1736 = vmatprep.subr.mxu0 0.0
    %1737 = vmatpush1.msra.mxu0 0.0
    %1738 = vmatprep.subr.mxu0 0.0
    %1739 = vmatpush1.msra.mxu0 0.0
    %1740 = vmatprep.subr.mxu0 0.0
    %1741 = vmatpush1.msra.mxu0 0.0
    %1742 = vmatprep.subr.mxu0 0.0
    %1743 = vmatpush1.msra.mxu0 0.0
    %1744 = vmatprep.subr.mxu0 0.0
    %1745 = vmatpush1.msra.mxu0 0.0
    %1746 = vmatprep.subr.mxu0 0.0
    %1747 = vmatpush1.msra.mxu0 0.0
    %1748 = vmatprep.subr.mxu0 0.0
    %1749 = vmatpush1.msra.mxu0 0.0
    %1750 = vmatprep.subr.mxu0 0.0
    %1751 = vmatpush1.msra.mxu0 0.0
    %1752 = vmatprep.subr.mxu0 0.0
    %1753 = vmatpush1.msra.mxu0 0.0
    %1754 = vmatprep.subr.mxu0 0.0
    %1755 = vmatpush1.msra.mxu0 0.0
    %1756 = vmatprep.subr.mxu0 0.0
    %1757 = vmatpush1.msra.mxu0 0.0
    %1758 = vmatprep.subr.mxu0 0.0
    %1759 = vmatpush1.msra.mxu0 0.0
    %1760 = vmatprep.subr.mxu0 0.0
    %1761 = vmatpush1.msra.mxu0 0.0
    %1762 = vmatprep.subr.mxu0 0.0
    %1763 = vmatpush1.msra.mxu0 0.0
    %1764 = vmatprep.subr.mxu0 0.0
    %1765 = vmatpush1.msra.mxu0 0.0
    %1766 = vmatprep.subr.mxu0 0.0
    %1767 = vmatpush1.msra.mxu0 0.0
    %1768 = vmatprep.mubr.f32.mxu0 0.0
    %1769 = vmatmul.mubr.f32.gmra.mrb[0].mxu0 %v1633
    %v1770 = vpop.f32.mrb[0].mxu0
    %v1771 = vadd.f32 0.0, %v1770
    %v1772 = vpop.f32.mrb[0].mxu0
    %v1773 = vadd.f32 0.0, %v1772
    %1774 = vdwg.mxu0
    %1775 = vmatprep.subr.mxu0 %v1643
    %1776 = vmatpush1.msra.mxu0 %v1642
    %1777 = vmatprep.subr.mxu0 %v1647
    %1778 = vmatpush1.msra.mxu0 %v1646
    %1779 = vmatprep.subr.mxu0 %v1651
    %1780 = vmatpush1.msra.mxu0 %v1650
    %1781 = vmatprep.subr.mxu0 %v1655
    %1782 = vmatpush1.msra.mxu0 %v1654
    %1783 = vmatprep.subr.mxu0 %v1659
    %1784 = vmatpush1.msra.mxu0 %v1658
    %1785 = vmatprep.subr.mxu0 %v1663
    %1786 = vmatpush1.msra.mxu0 %v1662
    %1787 = vmatprep.subr.mxu0 %v1667
    %1788 = vmatpush1.msra.mxu0 %v1666
    %1789 = vmatprep.subr.mxu0 %v1671
    %1790 = vmatpush1.msra.mxu0 %v1670
    %1791 = vmatprep.subr.mxu0 %v1675
    %1792 = vmatpush1.msra.mxu0 %v1674
    %1793 = vmatprep.subr.mxu0 %v1679
    %1794 = vmatpush1.msra.mxu0 %v1678
    %1795 = vmatprep.subr.mxu0 %v1683
    %1796 = vmatpush1.msra.mxu0 %v1682
    %1797 = vmatprep.subr.mxu0 %v1687
    %1798 = vmatpush1.msra.mxu0 %v1686
    %1799 = vmatprep.subr.mxu0 %v1691
    %1800 = vmatpush1.msra.mxu0 %v1690
    %1801 = vmatprep.subr.mxu0 %v1695
    %1802 = vmatpush1.msra.mxu0 %v1694
    %1803 = vmatprep.subr.mxu0 %v1699
    %1804 = vmatpush1.msra.mxu0 %v1698
    %1805 = vmatprep.subr.mxu0 %v1703
    %1806 = vmatpush1.msra.mxu0 %v1702
    %1807 = vmatprep.subr.mxu0 0.0
    %1808 = vmatpush1.msra.mxu0 0.0
    %1809 = vmatprep.subr.mxu0 0.0
    %1810 = vmatpush1.msra.mxu0 0.0
    %1811 = vmatprep.subr.mxu0 0.0
    %1812 = vmatpush1.msra.mxu0 0.0
    %1813 = vmatprep.subr.mxu0 0.0
    %1814 = vmatpush1.msra.mxu0 0.0
    %1815 = vmatprep.subr.mxu0 0.0
    %1816 = vmatpush1.msra.mxu0 0.0
    %1817 = vmatprep.subr.mxu0 0.0
    %1818 = vmatpush1.msra.mxu0 0.0
    %1819 = vmatprep.subr.mxu0 0.0
    %1820 = vmatpush1.msra.mxu0 0.0
    %1821 = vmatprep.subr.mxu0 0.0
    %1822 = vmatpush1.msra.mxu0 0.0
    %1823 = vmatprep.subr.mxu0 0.0
    %1824 = vmatpush1.msra.mxu0 0.0
    %1825 = vmatprep.subr.mxu0 0.0
    %1826 = vmatpush1.msra.mxu0 0.0
    %1827 = vmatprep.subr.mxu0 0.0
    %1828 = vmatpush1.msra.mxu0 0.0
    %1829 = vmatprep.subr.mxu0 0.0
    %1830 = vmatpush1.msra.mxu0 0.0
    %1831 = vmatprep.subr.mxu0 0.0
    %1832 = vmatpush1.msra.mxu0 0.0
    %1833 = vmatprep.subr.mxu0 0.0
    %1834 = vmatpush1.msra.mxu0 0.0
    %1835 = vmatprep.subr.mxu0 0.0
    %1836 = vmatpush1.msra.mxu0 0.0
    %1837 = vmatprep.subr.mxu0 0.0
    %1838 = vmatpush1.msra.mxu0 0.0
    %1839 = vmatprep.mubr.f32.mxu0 0.0
    %1840 = vmatmul.mubr.f32.gmra.mrb[0].mxu0 %v1633
    %v1841 = vpop.f32.mrb[0].mxu0
    %v1842 = vadd.f32 0.0, %v1841
    %v1843 = vpop.f32.mrb[0].mxu0
    %v1844 = vadd.f32 0.0, %v1843
    %1845 = vdwg.mxu0
    %v1846 = vadd.f32 %v1636, %v1771
    %v1847 = vadd.f32 %v1637, %v1773
    %v1848 = vadd.f32 %v1638, %v1842
    %v1849 = vadd.f32 %v1639, %v1844
    %v1850 = vxor.u32 %v1846, 2147483648
    %v1851 = vmul.f32 %v1850, 1.442695
    %v1852 = vpow.pop %v1851
    %v1853 = vadd.f32 %v1852, 1.0
    %v1854 = vrcp.pop %v1853
    %v1855 = vmul.f32 1.0, %v1854
    %v1856 = vxor.u32 %v1847, 2147483648
    %v1857 = vmul.f32 %v1856, 1.442695
    %v1858 = vpow.pop %v1857
    %v1859 = vadd.f32 %v1858, 1.0
    %v1860 = vrcp.pop %v1859
    %v1861 = vmul.f32 1.0, %v1860
    %v1862 = vtanh.pop %v1848
    %v1863 = vxor.u32 %v1849, 2147483648
    %v1864 = vmul.f32 %v1863, 1.442695
    %v1865 = vpow.pop %v1864
    %v1866 = vadd.f32 %v1865, 1.0
    %v1867 = vrcp.pop %v1866
    %v1868 = vmul.f32 1.0, %v1867
    %v1869 = vmul.f32 %v1861, %v1634
    %v1870 = vmul.f32 %v1855, %v1862
    %v1871 = vadd.f32 %v1869, %v1870
    %v1872 = vtanh.pop %v1871
    %v1873 = vmul.f32 %v1868, %v1872
    %1874 = vst [vmem:[#allocation4] sm:$0xff] %v1873
    %1875 = vst [vmem:[#allocation5] sm:$0xff] %v1871
    %s1876 = scalar_lea.vmem [#allocation2], 40
    %1877 = vst [vmem:[%s1876] sm:$0xff] %v1873
    %v1878 = vld [vmem:[#allocation4] sm:$0xff]
    %v1879 = vld [vmem:[#allocation5] sm:$0xff]
    %s1880 = scalar_lea.vmem [#allocation3], 192
    %v1881 = vld [vmem:[%s1880] sm:$0xff]
    %v1882 = vld [vmem:[%s1880 + $0x8] sm:$0xff]
    %v1883 = vld [vmem:[%s1880 + $0x10] sm:$0xff]
    %v1884 = vld [vmem:[%s1880 + $0x18] sm:$0xff]
    %v1885 = vld [vmem:[#allocation6] sm:$0xff]
    %v1886 = vld [vmem:[#allocation6 + $0x8] sm:$0xff]
    %v1887 = vld [vmem:[#allocation6 + $0x10] sm:$0xff]
    %v1888 = vld [vmem:[#allocation6 + $0x18] sm:$0xff]
    %v1889 = vld [vmem:[#allocation6 + $0x20] sm:$0xff]
    %v1890 = vld [vmem:[#allocation6 + $0x28] sm:$0xff]
    %v1891 = vld [vmem:[#allocation6 + $0x30] sm:$0xff]
    %v1892 = vld [vmem:[#allocation6 + $0x38] sm:$0xff]
    %v1893 = vld [vmem:[#allocation6 + $0x40] sm:$0xff]
    %v1894 = vld [vmem:[#allocation6 + $0x48] sm:$0xff]
    %v1895 = vld [vmem:[#allocation6 + $0x50] sm:$0xff]
    %v1896 = vld [vmem:[#allocation6 + $0x58] sm:$0xff]
    %v1897 = vld [vmem:[#allocation6 + $0x60] sm:$0xff]
    %v1898 = vld [vmem:[#allocation6 + $0x68] sm:$0xff]
    %v1899 = vld [vmem:[#allocation6 + $0x70] sm:$0xff]
    %v1900 = vld [vmem:[#allocation6 + $0x78] sm:$0xff]
    %v1901 = vld [vmem:[#allocation6 + $0x80] sm:$0xff]
    %v1902 = vld [vmem:[#allocation6 + $0x88] sm:$0xff]
    %v1903 = vld [vmem:[#allocation6 + $0x90] sm:$0xff]
    %v1904 = vld [vmem:[#allocation6 + $0x98] sm:$0xff]
    %v1905 = vld [vmem:[#allocation6 + $0xa0] sm:$0xff]
    %v1906 = vld [vmem:[#allocation6 + $0xa8] sm:$0xff]
    %v1907 = vld [vmem:[#allocation6 + $0xb0] sm:$0xff]
    %v1908 = vld [vmem:[#allocation6 + $0xb8] sm:$0xff]
    %v1909 = vld [vmem:[#allocation6 + $0xc0] sm:$0xff]
    %v1910 = vld [vmem:[#allocation6 + $0xc8] sm:$0xff]
    %v1911 = vld [vmem:[#allocation6 + $0xd0] sm:$0xff]
    %v1912 = vld [vmem:[#allocation6 + $0xd8] sm:$0xff]
    %v1913 = vld [vmem:[#allocation6 + $0xe0] sm:$0xff]
    %v1914 = vld [vmem:[#allocation6 + $0xe8] sm:$0xff]
    %v1915 = vld [vmem:[#allocation6 + $0xf0] sm:$0xff]
    %v1916 = vld [vmem:[#allocation6 + $0xf8] sm:$0xff]
    %v1917 = vld [vmem:[#allocation6 + $0x100] sm:$0xff]
    %v1918 = vld [vmem:[#allocation6 + $0x108] sm:$0xff]
    %v1919 = vld [vmem:[#allocation6 + $0x110] sm:$0xff]
    %v1920 = vld [vmem:[#allocation6 + $0x118] sm:$0xff]
    %v1921 = vld [vmem:[#allocation6 + $0x120] sm:$0xff]
    %v1922 = vld [vmem:[#allocation6 + $0x128] sm:$0xff]
    %v1923 = vld [vmem:[#allocation6 + $0x130] sm:$0xff]
    %v1924 = vld [vmem:[#allocation6 + $0x138] sm:$0xff]
    %v1925 = vld [vmem:[#allocation6 + $0x140] sm:$0xff]
    %v1926 = vld [vmem:[#allocation6 + $0x148] sm:$0xff]
    %v1927 = vld [vmem:[#allocation6 + $0x150] sm:$0xff]
    %v1928 = vld [vmem:[#allocation6 + $0x158] sm:$0xff]
    %v1929 = vld [vmem:[#allocation6 + $0x160] sm:$0xff]
    %v1930 = vld [vmem:[#allocation6 + $0x168] sm:$0xff]
    %v1931 = vld [vmem:[#allocation6 + $0x170] sm:$0xff]
    %v1932 = vld [vmem:[#allocation6 + $0x178] sm:$0xff]
    %v1933 = vld [vmem:[#allocation6 + $0x180] sm:$0xff]
    %v1934 = vld [vmem:[#allocation6 + $0x188] sm:$0xff]
    %v1935 = vld [vmem:[#allocation6 + $0x190] sm:$0xff]
    %v1936 = vld [vmem:[#allocation6 + $0x198] sm:$0xff]
    %v1937 = vld [vmem:[#allocation6 + $0x1a0] sm:$0xff]
    %v1938 = vld [vmem:[#allocation6 + $0x1a8] sm:$0xff]
    %v1939 = vld [vmem:[#allocation6 + $0x1b0] sm:$0xff]
    %v1940 = vld [vmem:[#allocation6 + $0x1b8] sm:$0xff]
    %v1941 = vld [vmem:[#allocation6 + $0x1c0] sm:$0xff]
    %v1942 = vld [vmem:[#allocation6 + $0x1c8] sm:$0xff]
    %v1943 = vld [vmem:[#allocation6 + $0x1d0] sm:$0xff]
    %v1944 = vld [vmem:[#allocation6 + $0x1d8] sm:$0xff]
    %v1945 = vld [vmem:[#allocation6 + $0x1e0] sm:$0xff]
    %v1946 = vld [vmem:[#allocation6 + $0x1e8] sm:$0xff]
    %v1947 = vld [vmem:[#allocation6 + $0x1f0] sm:$0xff]
    %v1948 = vld [vmem:[#allocation6 + $0x1f8] sm:$0xff]
    %1949 = vmatprep.subr.mxu0 %v1886
    %1950 = vmatpush1.msra.mxu0 %v1885
    %1951 = vmatprep.subr.mxu0 %v1890
    %1952 = vmatpush1.msra.mxu0 %v1889
    %1953 = vmatprep.subr.mxu0 %v1894
    %1954 = vmatpush1.msra.mxu0 %v1893
    %1955 = vmatprep.subr.mxu0 %v1898
    %1956 = vmatpush1.msra.mxu0 %v1897
    %1957 = vmatprep.subr.mxu0 %v1902
    %1958 = vmatpush1.msra.mxu0 %v1901
    %1959 = vmatprep.subr.mxu0 %v1906
    %1960 = vmatpush1.msra.mxu0 %v1905
    %1961 = vmatprep.subr.mxu0 %v1910
    %1962 = vmatpush1.msra.mxu0 %v1909
    %1963 = vmatprep.subr.mxu0 %v1914
    %1964 = vmatpush1.msra.mxu0 %v1913
    %1965 = vmatprep.subr.mxu0 %v1918
    %1966 = vmatpush1.msra.mxu0 %v1917
    %1967 = vmatprep.subr.mxu0 %v1922
    %1968 = vmatpush1.msra.mxu0 %v1921
    %1969 = vmatprep.subr.mxu0 %v1926
    %1970 = vmatpush1.msra.mxu0 %v1925
    %1971 = vmatprep.subr.mxu0 %v1930
    %1972 = vmatpush1.msra.mxu0 %v1929
    %1973 = vmatprep.subr.mxu0 %v1934
    %1974 = vmatpush1.msra.mxu0 %v1933
    %1975 = vmatprep.subr.mxu0 %v1938
    %1976 = vmatpush1.msra.mxu0 %v1937
    %1977 = vmatprep.subr.mxu0 %v1942
    %1978 = vmatpush1.msra.mxu0 %v1941
    %1979 = vmatprep.subr.mxu0 %v1946
    %1980 = vmatpush1.msra.mxu0 %v1945
    %1981 = vmatprep.subr.mxu0 0.0
    %1982 = vmatpush1.msra.mxu0 0.0
    %1983 = vmatprep.subr.mxu0 0.0
    %1984 = vmatpush1.msra.mxu0 0.0
    %1985 = vmatprep.subr.mxu0 0.0
    %1986 = vmatpush1.msra.mxu0 0.0
    %1987 = vmatprep.subr.mxu0 0.0
    %1988 = vmatpush1.msra.mxu0 0.0
    %1989 = vmatprep.subr.mxu0 0.0
    %1990 = vmatpush1.msra.mxu0 0.0
    %1991 = vmatprep.subr.mxu0 0.0
    %1992 = vmatpush1.msra.mxu0 0.0
    %1993 = vmatprep.subr.mxu0 0.0
    %1994 = vmatpush1.msra.mxu0 0.0
    %1995 = vmatprep.subr.mxu0 0.0
    %1996 = vmatpush1.msra.mxu0 0.0
    %1997 = vmatprep.subr.mxu0 0.0
    %1998 = vmatpush1.msra.mxu0 0.0
    %1999 = vmatprep.subr.mxu0 0.0
    %2000 = vmatpush1.msra.mxu0 0.0
    %2001 = vmatprep.subr.mxu0 0.0
    %2002 = vmatpush1.msra.mxu0 0.0
    %2003 = vmatprep.subr.mxu0 0.0
    %2004 = vmatpush1.msra.mxu0 0.0
    %2005 = vmatprep.subr.mxu0 0.0
    %2006 = vmatpush1.msra.mxu0 0.0
    %2007 = vmatprep.subr.mxu0 0.0
    %2008 = vmatpush1.msra.mxu0 0.0
    %2009 = vmatprep.subr.mxu0 0.0
    %2010 = vmatpush1.msra.mxu0 0.0
    %2011 = vmatprep.subr.mxu0 0.0
    %2012 = vmatpush1.msra.mxu0 0.0
    %2013 = vmatprep.mubr.f32.mxu0 0.0
    %2014 = vmatmul.mubr.f32.gmra.mrb[0].mxu0 %v1878
    %v2015 = vpop.f32.mrb[0].mxu0
    %v2016 = vadd.f32 0.0, %v2015
    %v2017 = vpop.f32.mrb[0].mxu0
    %v2018 = vadd.f32 0.0, %v2017
    %2019 = vdwg.mxu0
    %2020 = vmatprep.subr.mxu0 %v1888
    %2021 = vmatpush1.msra.mxu0 %v1887
    %2022 = vmatprep.subr.mxu0 %v1892
    %2023 = vmatpush1.msra.mxu0 %v1891
    %2024 = vmatprep.subr.mxu0 %v1896
    %2025 = vmatpush1.msra.mxu0 %v1895
    %2026 = vmatprep.subr.mxu0 %v1900
    %2027 = vmatpush1.msra.mxu0 %v1899
    %2028 = vmatprep.subr.mxu0 %v1904
    %2029 = vmatpush1.msra.mxu0 %v1903
    %2030 = vmatprep.subr.mxu0 %v1908
    %2031 = vmatpush1.msra.mxu0 %v1907
    %2032 = vmatprep.subr.mxu0 %v1912
    %2033 = vmatpush1.msra.mxu0 %v1911
    %2034 = vmatprep.subr.mxu0 %v1916
    %2035 = vmatpush1.msra.mxu0 %v1915
    %2036 = vmatprep.subr.mxu0 %v1920
    %2037 = vmatpush1.msra.mxu0 %v1919
    %2038 = vmatprep.subr.mxu0 %v1924
    %2039 = vmatpush1.msra.mxu0 %v1923
    %2040 = vmatprep.subr.mxu0 %v1928
    %2041 = vmatpush1.msra.mxu0 %v1927
    %2042 = vmatprep.subr.mxu0 %v1932
    %2043 = vmatpush1.msra.mxu0 %v1931
    %2044 = vmatprep.subr.mxu0 %v1936
    %2045 = vmatpush1.msra.mxu0 %v1935
    %2046 = vmatprep.subr.mxu0 %v1940
    %2047 = vmatpush1.msra.mxu0 %v1939
    %2048 = vmatprep.subr.mxu0 %v1944
    %2049 = vmatpush1.msra.mxu0 %v1943
    %2050 = vmatprep.subr.mxu0 %v1948
    %2051 = vmatpush1.msra.mxu0 %v1947
    %2052 = vmatprep.subr.mxu0 0.0
    %2053 = vmatpush1.msra.mxu0 0.0
    %2054 = vmatprep.subr.mxu0 0.0
    %2055 = vmatpush1.msra.mxu0 0.0
    %2056 = vmatprep.subr.mxu0 0.0
    %2057 = vmatpush1.msra.mxu0 0.0
    %2058 = vmatprep.subr.mxu0 0.0
    %2059 = vmatpush1.msra.mxu0 0.0
    %2060 = vmatprep.subr.mxu0 0.0
    %2061 = vmatpush1.msra.mxu0 0.0
    %2062 = vmatprep.subr.mxu0 0.0
    %2063 = vmatpush1.msra.mxu0 0.0
    %2064 = vmatprep.subr.mxu0 0.0
    %2065 = vmatpush1.msra.mxu0 0.0
    %2066 = vmatprep.subr.mxu0 0.0
    %2067 = vmatpush1.msra.mxu0 0.0
    %2068 = vmatprep.subr.mxu0 0.0
    %2069 = vmatpush1.msra.mxu0 0.0
    %2070 = vmatprep.subr.mxu0 0.0
    %2071 = vmatpush1.msra.mxu0 0.0
    %2072 = vmatprep.subr.mxu0 0.0
    %2073 = vmatpush1.msra.mxu0 0.0
    %2074 = vmatprep.subr.mxu0 0.0
    %2075 = vmatpush1.msra.mxu0 0.0
    %2076 = vmatprep.subr.mxu0 0.0
    %2077 = vmatpush1.msra.mxu0 0.0
    %2078 = vmatprep.subr.mxu0 0.0
    %2079 = vmatpush1.msra.mxu0 0.0
    %2080 = vmatprep.subr.mxu0 0.0
    %2081 = vmatpush1.msra.mxu0 0.0
    %2082 = vmatprep.subr.mxu0 0.0
    %2083 = vmatpush1.msra.mxu0 0.0
    %2084 = vmatprep.mubr.f32.mxu0 0.0
    %2085 = vmatmul.mubr.f32.gmra.mrb[0].mxu0 %v1878
    %v2086 = vpop.f32.mrb[0].mxu0
    %v2087 = vadd.f32 0.0, %v2086
    %v2088 = vpop.f32.mrb[0].mxu0
    %v2089 = vadd.f32 0.0, %v2088
    %2090 = vdwg.mxu0
    %v2091 = vadd.f32 %v1881, %v2016
    %v2092 = vadd.f32 %v1882, %v2018
    %v2093 = vadd.f32 %v1883, %v2087
    %v2094 = vadd.f32 %v1884, %v2089
    %v2095 = vxor.u32 %v2091, 2147483648
    %v2096 = vmul.f32 %v2095, 1.442695
    %v2097 = vpow.pop %v2096
    %v2098 = vadd.f32 %v2097, 1.0
    %v2099 = vrcp.pop %v2098
    %v2100 = vmul.f32 1.0, %v2099
    %v2101 = vxor.u32 %v2092, 2147483648
    %v2102 = vmul.f32 %v2101, 1.442695
    %v2103 = vpow.pop %v2102
    %v2104 = vadd.f32 %v2103, 1.0
    %v2105 = vrcp.pop %v2104
    %v2106 = vmul.f32 1.0, %v2105
    %v2107 = vtanh.pop %v2093
    %v2108 = vxor.u32 %v2094, 2147483648
    %v2109 = vmul.f32 %v2108, 1.442695
    %v2110 = vpow.pop %v2109
    %v2111 = vadd.f32 %v2110, 1.0
    %v2112 = vrcp.pop %v2111
    %v2113 = vmul.f32 1.0, %v2112
    %v2114 = vmul.f32 %v2106, %v1879
    %v2115 = vmul.f32 %v2100, %v2107
    %v2116 = vadd.f32 %v2114, %v2115
    %v2117 = vtanh.pop %v2116
    %v2118 = vmul.f32 %v2113, %v2117
    %2119 = vst [vmem:[#allocation4] sm:$0xff] %v2118
    %2120 = vst [vmem:[#allocation5] sm:$0xff] %v2116
    %s2121 = scalar_lea.vmem [#allocation2], 48
    %2122 = vst [vmem:[%s2121] sm:$0xff] %v2118
    %v2123 = vld [vmem:[#allocation4] sm:$0xff]
    %v2124 = vld [vmem:[#allocation5] sm:$0xff]
    %s2125 = scalar_lea.vmem [#allocation3], 224
    %v2126 = vld [vmem:[%s2125] sm:$0xff]
    %v2127 = vld [vmem:[%s2125 + $0x8] sm:$0xff]
    %v2128 = vld [vmem:[%s2125 + $0x10] sm:$0xff]
    %v2129 = vld [vmem:[%s2125 + $0x18] sm:$0xff]
    %v2130 = vld [vmem:[#allocation6] sm:$0xff]
    %v2131 = vld [vmem:[#allocation6 + $0x8] sm:$0xff]
    %v2132 = vld [vmem:[#allocation6 + $0x10] sm:$0xff]
    %v2133 = vld [vmem:[#allocation6 + $0x18] sm:$0xff]
    %v2134 = vld [vmem:[#allocation6 + $0x20] sm:$0xff]
    %v2135 = vld [vmem:[#allocation6 + $0x28] sm:$0xff]
    %v2136 = vld [vmem:[#allocation6 + $0x30] sm:$0xff]
    %v2137 = vld [vmem:[#allocation6 + $0x38] sm:$0xff]
    %v2138 = vld [vmem:[#allocation6 + $0x40] sm:$0xff]
    %v2139 = vld [vmem:[#allocation6 + $0x48] sm:$0xff]
    %v2140 = vld [vmem:[#allocation6 + $0x50] sm:$0xff]
    %v2141 = vld [vmem:[#allocation6 + $0x58] sm:$0xff]
    %v2142 = vld [vmem:[#allocation6 + $0x60] sm:$0xff]
    %v2143 = vld [vmem:[#allocation6 + $0x68] sm:$0xff]
    %v2144 = vld [vmem:[#allocation6 + $0x70] sm:$0xff]
    %v2145 = vld [vmem:[#allocation6 + $0x78] sm:$0xff]
    %v2146 = vld [vmem:[#allocation6 + $0x80] sm:$0xff]
    %v2147 = vld [vmem:[#allocation6 + $0x88] sm:$0xff]
    %v2148 = vld [vmem:[#allocation6 + $0x90] sm:$0xff]
    %v2149 = vld [vmem:[#allocation6 + $0x98] sm:$0xff]
    %v2150 = vld [vmem:[#allocation6 + $0xa0] sm:$0xff]
    %v2151 = vld [vmem:[#allocation6 + $0xa8] sm:$0xff]
    %v2152 = vld [vmem:[#allocation6 + $0xb0] sm:$0xff]
    %v2153 = vld [vmem:[#allocation6 + $0xb8] sm:$0xff]
    %v2154 = vld [vmem:[#allocation6 + $0xc0] sm:$0xff]
    %v2155 = vld [vmem:[#allocation6 + $0xc8] sm:$0xff]
    %v2156 = vld [vmem:[#allocation6 + $0xd0] sm:$0xff]
    %v2157 = vld [vmem:[#allocation6 + $0xd8] sm:$0xff]
    %v2158 = vld [vmem:[#allocation6 + $0xe0] sm:$0xff]
    %v2159 = vld [vmem:[#allocation6 + $0xe8] sm:$0xff]
    %v2160 = vld [vmem:[#allocation6 + $0xf0] sm:$0xff]
    %v2161 = vld [vmem:[#allocation6 + $0xf8] sm:$0xff]
    %v2162 = vld [vmem:[#allocation6 + $0x100] sm:$0xff]
    %v2163 = vld [vmem:[#allocation6 + $0x108] sm:$0xff]
    %v2164 = vld [vmem:[#allocation6 + $0x110] sm:$0xff]
    %v2165 = vld [vmem:[#allocation6 + $0x118] sm:$0xff]
    %v2166 = vld [vmem:[#allocation6 + $0x120] sm:$0xff]
    %v2167 = vld [vmem:[#allocation6 + $0x128] sm:$0xff]
    %v2168 = vld [vmem:[#allocation6 + $0x130] sm:$0xff]
    %v2169 = vld [vmem:[#allocation6 + $0x138] sm:$0xff]
    %v2170 = vld [vmem:[#allocation6 + $0x140] sm:$0xff]
    %v2171 = vld [vmem:[#allocation6 + $0x148] sm:$0xff]
    %v2172 = vld [vmem:[#allocation6 + $0x150] sm:$0xff]
    %v2173 = vld [vmem:[#allocation6 + $0x158] sm:$0xff]
    %v2174 = vld [vmem:[#allocation6 + $0x160] sm:$0xff]
    %v2175 = vld [vmem:[#allocation6 + $0x168] sm:$0xff]
    %v2176 = vld [vmem:[#allocation6 + $0x170] sm:$0xff]
    %v2177 = vld [vmem:[#allocation6 + $0x178] sm:$0xff]
    %v2178 = vld [vmem:[#allocation6 + $0x180] sm:$0xff]
    %v2179 = vld [vmem:[#allocation6 + $0x188] sm:$0xff]
    %v2180 = vld [vmem:[#allocation6 + $0x190] sm:$0xff]
    %v2181 = vld [vmem:[#allocation6 + $0x198] sm:$0xff]
    %v2182 = vld [vmem:[#allocation6 + $0x1a0] sm:$0xff]
    %v2183 = vld [vmem:[#allocation6 + $0x1a8] sm:$0xff]
    %v2184 = vld [vmem:[#allocation6 + $0x1b0] sm:$0xff]
    %v2185 = vld [vmem:[#allocation6 + $0x1b8] sm:$0xff]
    %v2186 = vld [vmem:[#allocation6 + $0x1c0] sm:$0xff]
    %v2187 = vld [vmem:[#allocation6 + $0x1c8] sm:$0xff]
    %v2188 = vld [vmem:[#allocation6 + $0x1d0] sm:$0xff]
    %v2189 = vld [vmem:[#allocation6 + $0x1d8] sm:$0xff]
    %v2190 = vld [vmem:[#allocation6 + $0x1e0] sm:$0xff]
    %v2191 = vld [vmem:[#allocation6 + $0x1e8] sm:$0xff]
    %v2192 = vld [vmem:[#allocation6 + $0x1f0] sm:$0xff]
    %v2193 = vld [vmem:[#allocation6 + $0x1f8] sm:$0xff]
    %2194 = vmatprep.subr.mxu0 %v2131
    %2195 = vmatpush1.msra.mxu0 %v2130
    %2196 = vmatprep.subr.mxu0 %v2135
    %2197 = vmatpush1.msra.mxu0 %v2134
    %2198 = vmatprep.subr.mxu0 %v2139
    %2199 = vmatpush1.msra.mxu0 %v2138
    %2200 = vmatprep.subr.mxu0 %v2143
    %2201 = vmatpush1.msra.mxu0 %v2142
    %2202 = vmatprep.subr.mxu0 %v2147
    %2203 = vmatpush1.msra.mxu0 %v2146
    %2204 = vmatprep.subr.mxu0 %v2151
    %2205 = vmatpush1.msra.mxu0 %v2150
    %2206 = vmatprep.subr.mxu0 %v2155
    %2207 = vmatpush1.msra.mxu0 %v2154
    %2208 = vmatprep.subr.mxu0 %v2159
    %2209 = vmatpush1.msra.mxu0 %v2158
    %2210 = vmatprep.subr.mxu0 %v2163
    %2211 = vmatpush1.msra.mxu0 %v2162
    %2212 = vmatprep.subr.mxu0 %v2167
    %2213 = vmatpush1.msra.mxu0 %v2166
    %2214 = vmatprep.subr.mxu0 %v2171
    %2215 = vmatpush1.msra.mxu0 %v2170
    %2216 = vmatprep.subr.mxu0 %v2175
    %2217 = vmatpush1.msra.mxu0 %v2174
    %2218 = vmatprep.subr.mxu0 %v2179
    %2219 = vmatpush1.msra.mxu0 %v2178
    %2220 = vmatprep.subr.mxu0 %v2183
    %2221 = vmatpush1.msra.mxu0 %v2182
    %2222 = vmatprep.subr.mxu0 %v2187
    %2223 = vmatpush1.msra.mxu0 %v2186
    %2224 = vmatprep.subr.mxu0 %v2191
    %2225 = vmatpush1.msra.mxu0 %v2190
    %2226 = vmatprep.subr.mxu0 0.0
    %2227 = vmatpush1.msra.mxu0 0.0
    %2228 = vmatprep.subr.mxu0 0.0
    %2229 = vmatpush1.msra.mxu0 0.0
    %2230 = vmatprep.subr.mxu0 0.0
    %2231 = vmatpush1.msra.mxu0 0.0
    %2232 = vmatprep.subr.mxu0 0.0
    %2233 = vmatpush1.msra.mxu0 0.0
    %2234 = vmatprep.subr.mxu0 0.0
    %2235 = vmatpush1.msra.mxu0 0.0
    %2236 = vmatprep.subr.mxu0 0.0
    %2237 = vmatpush1.msra.mxu0 0.0
    %2238 = vmatprep.subr.mxu0 0.0
    %2239 = vmatpush1.msra.mxu0 0.0
    %2240 = vmatprep.subr.mxu0 0.0
    %2241 = vmatpush1.msra.mxu0 0.0
    %2242 = vmatprep.subr.mxu0 0.0
    %2243 = vmatpush1.msra.mxu0 0.0
    %2244 = vmatprep.subr.mxu0 0.0
    %2245 = vmatpush1.msra.mxu0 0.0
    %2246 = vmatprep.subr.mxu0 0.0
    %2247 = vmatpush1.msra.mxu0 0.0
    %2248 = vmatprep.subr.mxu0 0.0
    %2249 = vmatpush1.msra.mxu0 0.0
    %2250 = vmatprep.subr.mxu0 0.0
    %2251 = vmatpush1.msra.mxu0 0.0
    %2252 = vmatprep.subr.mxu0 0.0
    %2253 = vmatpush1.msra.mxu0 0.0
    %2254 = vmatprep.subr.mxu0 0.0
    %2255 = vmatpush1.msra.mxu0 0.0
    %2256 = vmatprep.subr.mxu0 0.0
    %2257 = vmatpush1.msra.mxu0 0.0
    %2258 = vmatprep.mubr.f32.mxu0 0.0
    %2259 = vmatmul.mubr.f32.gmra.mrb[0].mxu0 %v2123
    %v2260 = vpop.f32.mrb[0].mxu0
    %v2261 = vadd.f32 0.0, %v2260
    %v2262 = vpop.f32.mrb[0].mxu0
    %v2263 = vadd.f32 0.0, %v2262
    %2264 = vdwg.mxu0
    %2265 = vmatprep.subr.mxu0 %v2133
    %2266 = vmatpush1.msra.mxu0 %v2132
    %2267 = vmatprep.subr.mxu0 %v2137
    %2268 = vmatpush1.msra.mxu0 %v2136
    %2269 = vmatprep.subr.mxu0 %v2141
    %2270 = vmatpush1.msra.mxu0 %v2140
    %2271 = vmatprep.subr.mxu0 %v2145
    %2272 = vmatpush1.msra.mxu0 %v2144
    %2273 = vmatprep.subr.mxu0 %v2149
    %2274 = vmatpush1.msra.mxu0 %v2148
    %2275 = vmatprep.subr.mxu0 %v2153
    %2276 = vmatpush1.msra.mxu0 %v2152
    %2277 = vmatprep.subr.mxu0 %v2157
    %2278 = vmatpush1.msra.mxu0 %v2156
    %2279 = vmatprep.subr.mxu0 %v2161
    %2280 = vmatpush1.msra.mxu0 %v2160
    %2281 = vmatprep.subr.mxu0 %v2165
    %2282 = vmatpush1.msra.mxu0 %v2164
    %2283 = vmatprep.subr.mxu0 %v2169
    %2284 = vmatpush1.msra.mxu0 %v2168
    %2285 = vmatprep.subr.mxu0 %v2173
    %2286 = vmatpush1.msra.mxu0 %v2172
    %2287 = vmatprep.subr.mxu0 %v2177
    %2288 = vmatpush1.msra.mxu0 %v2176
    %2289 = vmatprep.subr.mxu0 %v2181
    %2290 = vmatpush1.msra.mxu0 %v2180
    %2291 = vmatprep.subr.mxu0 %v2185
    %2292 = vmatpush1.msra.mxu0 %v2184
    %2293 = vmatprep.subr.mxu0 %v2189
    %2294 = vmatpush1.msra.mxu0 %v2188
    %2295 = vmatprep.subr.mxu0 %v2193
    %2296 = vmatpush1.msra.mxu0 %v2192
    %2297 = vmatprep.subr.mxu0 0.0
    %2298 = vmatpush1.msra.mxu0 0.0
    %2299 = vmatprep.subr.mxu0 0.0
    %2300 = vmatpush1.msra.mxu0 0.0
    %2301 = vmatprep.subr.mxu0 0.0
    %2302 = vmatpush1.msra.mxu0 0.0
    %2303 = vmatprep.subr.mxu0 0.0
    %2304 = vmatpush1.msra.mxu0 0.0
    %2305 = vmatprep.subr.mxu0 0.0
    %2306 = vmatpush1.msra.mxu0 0.0
    %2307 = vmatprep.subr.mxu0 0.0
    %2308 = vmatpush1.msra.mxu0 0.0
    %2309 = vmatprep.subr.mxu0 0.0
    %2310 = vmatpush1.msra.mxu0 0.0
    %2311 = vmatprep.subr.mxu0 0.0
    %2312 = vmatpush1.msra.mxu0 0.0
    %2313 = vmatprep.subr.mxu0 0.0
    %2314 = vmatpush1.msra.mxu0 0.0
    %2315 = vmatprep.subr.mxu0 0.0
    %2316 = vmatpush1.msra.mxu0 0.0
    %2317 = vmatprep.subr.mxu0 0.0
    %2318 = vmatpush1.msra.mxu0 0.0
    %2319 = vmatprep.subr.mxu0 0.0
    %2320 = vmatpush1.msra.mxu0 0.0
    %2321 = vmatprep.subr.mxu0 0.0
    %2322 = vmatpush1.msra.mxu0 0.0
    %2323 = vmatprep.subr.mxu0 0.0
    %2324 = vmatpush1.msra.mxu0 0.0
    %2325 = vmatprep.subr.mxu0 0.0
    %2326 = vmatpush1.msra.mxu0 0.0
    %2327 = vmatprep.subr.mxu0 0.0
    %2328 = vmatpush1.msra.mxu0 0.0
    %2329 = vmatprep.mubr.f32.mxu0 0.0
    %2330 = vmatmul.mubr.f32.gmra.mrb[0].mxu0 %v2123
    %v2331 = vpop.f32.mrb[0].mxu0
    %v2332 = vadd.f32 0.0, %v2331
    %v2333 = vpop.f32.mrb[0].mxu0
    %v2334 = vadd.f32 0.0, %v2333
    %2335 = vdwg.mxu0
    %v2336 = vadd.f32 %v2126, %v2261
    %v2337 = vadd.f32 %v2127, %v2263
    %v2338 = vadd.f32 %v2128, %v2332
    %v2339 = vadd.f32 %v2129, %v2334
    %v2340 = vxor.u32 %v2336, 2147483648
    %v2341 = vmul.f32 %v2340, 1.442695
    %v2342 = vpow.pop %v2341
    %v2343 = vadd.f32 %v2342, 1.0
    %v2344 = vrcp.pop %v2343
    %v2345 = vmul.f32 1.0, %v2344
    %v2346 = vxor.u32 %v2337, 2147483648
    %v2347 = vmul.f32 %v2346, 1.442695
    %v2348 = vpow.pop %v2347
    %v2349 = vadd.f32 %v2348, 1.0
    %v2350 = vrcp.pop %v2349
    %v2351 = vmul.f32 1.0, %v2350
    %v2352 = vtanh.pop %v2338
    %v2353 = vxor.u32 %v2339, 2147483648
    %v2354 = vmul.f32 %v2353, 1.442695
    %v2355 = vpow.pop %v2354
    %v2356 = vadd.f32 %v2355, 1.0
    %v2357 = vrcp.pop %v2356
    %v2358 = vmul.f32 1.0, %v2357
    %v2359 = vmul.f32 %v2351, %v2124
    %v2360 = vmul.f32 %v2345, %v2352
    %v2361 = vadd.f32 %v2359, %v2360
    %v2362 = vtanh.pop %v2361
    %v2363 = vmul.f32 %v2358, %v2362
    %2364 = vst [vmem:[#allocation4] sm:$0xff] %v2363
    %2365 = vst [vmem:[#allocation5] sm:$0xff] %v2361
    %s2366 = scalar_lea.vmem [#allocation2], 56
    %2367 = vst [vmem:[%s2366] sm:$0xff] %v2363
    %v2368 = vld [vmem:[#allocation2] sm:$0xff]
    %v2369 = vld [vmem:[#allocation2 + $0x8] sm:$0xff]
    %v2370 = vld [vmem:[#allocation2 + $0x10] sm:$0xff]
    %v2371 = vld [vmem:[#allocation2 + $0x18] sm:$0xff]
    %v2372 = vld [vmem:[#allocation2 + $0x20] sm:$0xff]
    %v2373 = vld [vmem:[#allocation2 + $0x28] sm:$0xff]
    %v2374 = vld [vmem:[#allocation2 + $0x30] sm:$0xff]
    %v2375 = vld [vmem:[#allocation2 + $0x38] sm:$0xff]
    %v2376 = vld [vmem:[#allocation8] sm:$0xff]
    %v2377 = vld [vmem:[#allocation8 + $0x8] sm:$0xff]
    %v2378 = vld [vmem:[#allocation8 + $0x10] sm:$0xff]
    %v2379 = vld [vmem:[#allocation8 + $0x18] sm:$0xff]
    %v2380 = vld [vmem:[#allocation8 + $0x20] sm:$0xff]
    %v2381 = vld [vmem:[#allocation8 + $0x28] sm:$0xff]
    %v2382 = vld [vmem:[#allocation8 + $0x30] sm:$0xff]
    %v2383 = vld [vmem:[#allocation8 + $0x38] sm:$0xff]
    %v2384 = vld [vmem:[#allocation8 + $0x40] sm:$0xff]
    %v2385 = vld [vmem:[#allocation8 + $0x48] sm:$0xff]
    %v2386 = vld [vmem:[#allocation8 + $0x50] sm:$0xff]
    %v2387 = vld [vmem:[#allocation8 + $0x58] sm:$0xff]
    %v2388 = vld [vmem:[#allocation8 + $0x60] sm:$0xff]
    %v2389 = vld [vmem:[#allocation8 + $0x68] sm:$0xff]
    %v2390 = vld [vmem:[#allocation8 + $0x70] sm:$0xff]
    %v2391 = vld [vmem:[#allocation8 + $0x78] sm:$0xff]
    %v2392 = vld [vmem:[#allocation8 + $0x80] sm:$0xff]
    %v2393 = vld [vmem:[#allocation8 + $0x88] sm:$0xff]
    %v2394 = vld [vmem:[#allocation8 + $0x90] sm:$0xff]
    %v2395 = vld [vmem:[#allocation8 + $0x98] sm:$0xff]
    %v2396 = vld [vmem:[#allocation8 + $0xa0] sm:$0xff]
    %v2397 = vld [vmem:[#allocation8 + $0xa8] sm:$0xff]
    %v2398 = vld [vmem:[#allocation8 + $0xb0] sm:$0xff]
    %v2399 = vld [vmem:[#allocation8 + $0xb8] sm:$0xff]
    %v2400 = vld [vmem:[#allocation8 + $0xc0] sm:$0xff]
    %v2401 = vld [vmem:[#allocation8 + $0xc8] sm:$0xff]
    %v2402 = vld [vmem:[#allocation8 + $0xd0] sm:$0xff]
    %v2403 = vld [vmem:[#allocation8 + $0xd8] sm:$0xff]
    %v2404 = vld [vmem:[#allocation8 + $0xe0] sm:$0xff]
    %v2405 = vld [vmem:[#allocation8 + $0xe8] sm:$0xff]
    %v2406 = vld [vmem:[#allocation8 + $0xf0] sm:$0xff]
    %v2407 = vld [vmem:[#allocation8 + $0xf8] sm:$0xff]
    %v2408 = vld [vmem:[#allocation8 + $0x100] sm:$0xff]
    %v2409 = vld [vmem:[#allocation8 + $0x108] sm:$0xff]
    %v2410 = vld [vmem:[#allocation8 + $0x110] sm:$0xff]
    %v2411 = vld [vmem:[#allocation8 + $0x118] sm:$0xff]
    %v2412 = vld [vmem:[#allocation8 + $0x120] sm:$0xff]
    %v2413 = vld [vmem:[#allocation8 + $0x128] sm:$0xff]
    %v2414 = vld [vmem:[#allocation8 + $0x130] sm:$0xff]
    %v2415 = vld [vmem:[#allocation8 + $0x138] sm:$0xff]
    %v2416 = vld [vmem:[#allocation8 + $0x140] sm:$0xff]
    %v2417 = vld [vmem:[#allocation8 + $0x148] sm:$0xff]
    %v2418 = vld [vmem:[#allocation8 + $0x150] sm:$0xff]
    %v2419 = vld [vmem:[#allocation8 + $0x158] sm:$0xff]
    %v2420 = vld [vmem:[#allocation8 + $0x160] sm:$0xff]
    %v2421 = vld [vmem:[#allocation8 + $0x168] sm:$0xff]
    %v2422 = vld [vmem:[#allocation8 + $0x170] sm:$0xff]
    %v2423 = vld [vmem:[#allocation8 + $0x178] sm:$0xff]
    %v2424 = vld [vmem:[#allocation8 + $0x180] sm:$0xff]
    %v2425 = vld [vmem:[#allocation8 + $0x188] sm:$0xff]
    %v2426 = vld [vmem:[#allocation8 + $0x190] sm:$0xff]
    %v2427 = vld [vmem:[#allocation8 + $0x198] sm:$0xff]
    %v2428 = vld [vmem:[#allocation8 + $0x1a0] sm:$0xff]
    %v2429 = vld [vmem:[#allocation8 + $0x1a8] sm:$0xff]
    %v2430 = vld [vmem:[#allocation8 + $0x1b0] sm:$0xff]
    %v2431 = vld [vmem:[#allocation8 + $0x1b8] sm:$0xff]
    %v2432 = vld [vmem:[#allocation8 + $0x1c0] sm:$0xff]
    %v2433 = vld [vmem:[#allocation8 + $0x1c8] sm:$0xff]
    %v2434 = vld [vmem:[#allocation8 + $0x1d0] sm:$0xff]
    %v2435 = vld [vmem:[#allocation8 + $0x1d8] sm:$0xff]
    %v2436 = vld [vmem:[#allocation8 + $0x1e0] sm:$0xff]
    %v2437 = vld [vmem:[#allocation8 + $0x1e8] sm:$0xff]
    %v2438 = vld [vmem:[#allocation8 + $0x1f0] sm:$0xff]
    %v2439 = vld [vmem:[#allocation8 + $0x1f8] sm:$0xff]
    %v2440 = vld [vmem:[%s6] sm:$0xf]
    %v2442 = vlaneseq
    %v2443 = vshrl.u32 %v2442, 7
    %v2444 = vsub.s32 0, %v2443
    %v2445 = vrot.slane %v2440, %v2444
    %v2446 = vlaneseq
    %v2447 = vshrl.u32 %v2446, 7
    %v2448 = vsub.s32 1, %v2447
    %v2449 = vrot.slane %v2440, %v2448
    %v2450 = vlaneseq
    %v2451 = vshrl.u32 %v2450, 7
    %v2452 = vsub.s32 2, %v2451
    %v2453 = vrot.slane %v2440, %v2452
    %v2454 = vlaneseq
    %v2455 = vshrl.u32 %v2454, 7
    %v2456 = vsub.s32 3, %v2455
    %v2457 = vrot.slane %v2440, %v2456
    %2462 = vmatprep.subr.mxu0 %v2377
    %2463 = vmatpush1.msra.mxu0 %v2376
    %2464 = vmatprep.subr.mxu0 %v2381
    %2465 = vmatpush1.msra.mxu0 %v2380
    %2466 = vmatprep.subr.mxu0 %v2385
    %2467 = vmatpush1.msra.mxu0 %v2384
    %2468 = vmatprep.subr.mxu0 %v2389
    %2469 = vmatpush1.msra.mxu0 %v2388
    %2470 = vmatprep.subr.mxu0 %v2393
    %2471 = vmatpush1.msra.mxu0 %v2392
    %2472 = vmatprep.subr.mxu0 %v2397
    %2473 = vmatpush1.msra.mxu0 %v2396
    %2474 = vmatprep.subr.mxu0 %v2401
    %2475 = vmatpush1.msra.mxu0 %v2400
    %2476 = vmatprep.subr.mxu0 %v2405
    %2477 = vmatpush1.msra.mxu0 %v2404
    %2478 = vmatprep.subr.mxu0 %v2409
    %2479 = vmatpush1.msra.mxu0 %v2408
    %2480 = vmatprep.subr.mxu0 %v2413
    %2481 = vmatpush1.msra.mxu0 %v2412
    %2482 = vmatprep.subr.mxu0 %v2417
    %2483 = vmatpush1.msra.mxu0 %v2416
    %2484 = vmatprep.subr.mxu0 %v2421
    %2485 = vmatpush1.msra.mxu0 %v2420
    %2486 = vmatprep.subr.mxu0 %v2425
    %2487 = vmatpush1.msra.mxu0 %v2424
    %2488 = vmatprep.subr.mxu0 %v2429
    %2489 = vmatpush1.msra.mxu0 %v2428
    %2490 = vmatprep.subr.mxu0 %v2433
    %2491 = vmatpush1.msra.mxu0 %v2432
    %2492 = vmatprep.subr.mxu0 %v2437
    %2493 = vmatpush1.msra.mxu0 %v2436
    %2494 = vmatprep.subr.mxu0 0.0
    %2495 = vmatpush1.msra.mxu0 0.0
    %2496 = vmatprep.subr.mxu0 0.0
    %2497 = vmatpush1.msra.mxu0 0.0
    %2498 = vmatprep.subr.mxu0 0.0
    %2499 = vmatpush1.msra.mxu0 0.0
    %2500 = vmatprep.subr.mxu0 0.0
    %2501 = vmatpush1.msra.mxu0 0.0
    %2502 = vmatprep.subr.mxu0 0.0
    %2503 = vmatpush1.msra.mxu0 0.0
    %2504 = vmatprep.subr.mxu0 0.0
    %2505 = vmatpush1.msra.mxu0 0.0
    %2506 = vmatprep.subr.mxu0 0.0
    %2507 = vmatpush1.msra.mxu0 0.0
    %2508 = vmatprep.subr.mxu0 0.0
    %2509 = vmatpush1.msra.mxu0 0.0
    %2510 = vmatprep.subr.mxu0 0.0
    %2511 = vmatpush1.msra.mxu0 0.0
    %2512 = vmatprep.subr.mxu0 0.0
    %2513 = vmatpush1.msra.mxu0 0.0
    %2514 = vmatprep.subr.mxu0 0.0
    %2515 = vmatpush1.msra.mxu0 0.0
    %2516 = vmatprep.subr.mxu0 0.0
    %2517 = vmatpush1.msra.mxu0 0.0
    %2518 = vmatprep.subr.mxu0 0.0
    %2519 = vmatpush1.msra.mxu0 0.0
    %2520 = vmatprep.subr.mxu0 0.0
    %2521 = vmatpush1.msra.mxu0 0.0
    %2522 = vmatprep.subr.mxu0 0.0
    %2523 = vmatpush1.msra.mxu0 0.0
    %2524 = vmatprep.subr.mxu0 0.0
    %2525 = vmatpush1.msra.mxu0 0.0
    %2526 = vmatprep.mubr.f32.mxu0 0.0
    %2527 = vmatmul.mubr.f32.gmra.mrb[0].mxu0 %v2368
    %v2528 = vpop.f32.mrb[0].mxu0
    %v2529 = vadd.f32 %v2445, %v2528
    %v2530 = vpop.f32.mrb[0].mxu0
    %v2531 = vadd.f32 %v2449, %v2530
    %2532 = vmatprep.mubr.f32.mxu0 0.0
    %2533 = vmatmul.mubr.f32.gmra.mrb[0].mxu0 %v2369
    %v2534 = vpop.f32.mrb[0].mxu0
    %v2535 = vadd.f32 %v2445, %v2534
    %v2536 = vpop.f32.mrb[0].mxu0
    %v2537 = vadd.f32 %v2449, %v2536
    %2538 = vmatprep.mubr.f32.mxu0 0.0
    %2539 = vmatmul.mubr.f32.gmra.mrb[0].mxu0 %v2370
    %v2540 = vpop.f32.mrb[0].mxu0
    %v2541 = vadd.f32 %v2445, %v2540
    %v2542 = vpop.f32.mrb[0].mxu0
    %v2543 = vadd.f32 %v2449, %v2542
    %2544 = vmatprep.mubr.f32.mxu0 0.0
    %2545 = vmatmul.mubr.f32.gmra.mrb[0].mxu0 %v2371
    %v2546 = vpop.f32.mrb[0].mxu0
    %v2547 = vadd.f32 %v2445, %v2546
    %v2548 = vpop.f32.mrb[0].mxu0
    %v2549 = vadd.f32 %v2449, %v2548
    %2550 = vmatprep.mubr.f32.mxu0 0.0
    %2551 = vmatmul.mubr.f32.gmra.mrb[0].mxu0 %v2372
    %v2552 = vpop.f32.mrb[0].mxu0
    %v2553 = vadd.f32 %v2445, %v2552
    %v2554 = vpop.f32.mrb[0].mxu0
    %v2555 = vadd.f32 %v2449, %v2554
    %2556 = vmatprep.mubr.f32.mxu0 0.0
    %2557 = vmatmul.mubr.f32.gmra.mrb[0].mxu0 %v2373
    %v2558 = vpop.f32.mrb[0].mxu0
    %v2559 = vadd.f32 %v2445, %v2558
    %v2560 = vpop.f32.mrb[0].mxu0
    %v2561 = vadd.f32 %v2449, %v2560
    %2562 = vmatprep.mubr.f32.mxu0 0.0
    %2563 = vmatmul.mubr.f32.gmra.mrb[0].mxu0 %v2374
    %v2564 = vpop.f32.mrb[0].mxu0
    %v2565 = vadd.f32 %v2445, %v2564
    %v2566 = vpop.f32.mrb[0].mxu0
    %v2567 = vadd.f32 %v2449, %v2566
    %2568 = vmatprep.mubr.f32.mxu0 0.0
    %2569 = vmatmul.mubr.f32.gmra.mrb[0].mxu0 %v2375
    %v2570 = vpop.f32.mrb[0].mxu0
    %v2571 = vadd.f32 %v2445, %v2570
    %v2572 = vpop.f32.mrb[0].mxu0
    %v2573 = vadd.f32 %v2449, %v2572
    %2574 = vdwg.mxu0
    %2575 = vmatprep.subr.mxu0 %v2379
    %2576 = vmatpush1.msra.mxu0 %v2378
    %2577 = vmatprep.subr.mxu0 %v2383
    %2578 = vmatpush1.msra.mxu0 %v2382
    %2579 = vmatprep.subr.mxu0 %v2387
    %2580 = vmatpush1.msra.mxu0 %v2386
    %2581 = vmatprep.subr.mxu0 %v2391
    %2582 = vmatpush1.msra.mxu0 %v2390
    %2583 = vmatprep.subr.mxu0 %v2395
    %2584 = vmatpush1.msra.mxu0 %v2394
    %2585 = vmatprep.subr.mxu0 %v2399
    %2586 = vmatpush1.msra.mxu0 %v2398
    %2587 = vmatprep.subr.mxu0 %v2403
    %2588 = vmatpush1.msra.mxu0 %v2402
    %2589 = vmatprep.subr.mxu0 %v2407
    %2590 = vmatpush1.msra.mxu0 %v2406
    %2591 = vmatprep.subr.mxu0 %v2411
    %2592 = vmatpush1.msra.mxu0 %v2410
    %2593 = vmatprep.subr.mxu0 %v2415
    %2594 = vmatpush1.msra.mxu0 %v2414
    %2595 = vmatprep.subr.mxu0 %v2419
    %2596 = vmatpush1.msra.mxu0 %v2418
    %2597 = vmatprep.subr.mxu0 %v2423
    %2598 = vmatpush1.msra.mxu0 %v2422
    %2599 = vmatprep.subr.mxu0 %v2427
    %2600 = vmatpush1.msra.mxu0 %v2426
    %2601 = vmatprep.subr.mxu0 %v2431
    %2602 = vmatpush1.msra.mxu0 %v2430
    %2603 = vmatprep.subr.mxu0 %v2435
    %2604 = vmatpush1.msra.mxu0 %v2434
    %2605 = vmatprep.subr.mxu0 %v2439
    %2606 = vmatpush1.msra.mxu0 %v2438
    %2607 = vmatprep.subr.mxu0 0.0
    %2608 = vmatpush1.msra.mxu0 0.0
    %2609 = vmatprep.subr.mxu0 0.0
    %2610 = vmatpush1.msra.mxu0 0.0
    %2611 = vmatprep.subr.mxu0 0.0
    %2612 = vmatpush1.msra.mxu0 0.0
    %2613 = vmatprep.subr.mxu0 0.0
    %2614 = vmatpush1.msra.mxu0 0.0
    %2615 = vmatprep.subr.mxu0 0.0
    %2616 = vmatpush1.msra.mxu0 0.0
    %2617 = vmatprep.subr.mxu0 0.0
    %2618 = vmatpush1.msra.mxu0 0.0
    %2619 = vmatprep.subr.mxu0 0.0
    %2620 = vmatpush1.msra.mxu0 0.0
    %2621 = vmatprep.subr.mxu0 0.0
    %2622 = vmatpush1.msra.mxu0 0.0
    %2623 = vmatprep.subr.mxu0 0.0
    %2624 = vmatpush1.msra.mxu0 0.0
    %2625 = vmatprep.subr.mxu0 0.0
    %2626 = vmatpush1.msra.mxu0 0.0
    %2627 = vmatprep.subr.mxu0 0.0
    %2628 = vmatpush1.msra.mxu0 0.0
    %2629 = vmatprep.subr.mxu0 0.0
    %2630 = vmatpush1.msra.mxu0 0.0
    %2631 = vmatprep.subr.mxu0 0.0
    %2632 = vmatpush1.msra.mxu0 0.0
    %2633 = vmatprep.subr.mxu0 0.0
    %2634 = vmatpush1.msra.mxu0 0.0
    %2635 = vmatprep.subr.mxu0 0.0
    %2636 = vmatpush1.msra.mxu0 0.0
    %2637 = vmatprep.subr.mxu0 0.0
    %2638 = vmatpush1.msra.mxu0 0.0
    %2639 = vmatprep.mubr.f32.mxu0 0.0
    %2640 = vmatmul.mubr.f32.gmra.mrb[0].mxu0 %v2368
    %v2641 = vpop.f32.mrb[0].mxu0
    %v2642 = vadd.f32 %v2453, %v2641
    %v2643 = vpop.f32.mrb[0].mxu0
    %v2644 = vadd.f32 %v2457, %v2643
    %2645 = vmatprep.mubr.f32.mxu0 0.0
    %2646 = vmatmul.mubr.f32.gmra.mrb[0].mxu0 %v2369
    %v2647 = vpop.f32.mrb[0].mxu0
    %v2648 = vadd.f32 %v2453, %v2647
    %v2649 = vpop.f32.mrb[0].mxu0
    %v2650 = vadd.f32 %v2457, %v2649
    %2651 = vmatprep.mubr.f32.mxu0 0.0
    %2652 = vmatmul.mubr.f32.gmra.mrb[0].mxu0 %v2370
    %v2653 = vpop.f32.mrb[0].mxu0
    %v2654 = vadd.f32 %v2453, %v2653
    %v2655 = vpop.f32.mrb[0].mxu0
    %v2656 = vadd.f32 %v2457, %v2655
    %2657 = vmatprep.mubr.f32.mxu0 0.0
    %2658 = vmatmul.mubr.f32.gmra.mrb[0].mxu0 %v2371
    %v2659 = vpop.f32.mrb[0].mxu0
    %v2660 = vadd.f32 %v2453, %v2659
    %v2661 = vpop.f32.mrb[0].mxu0
    %v2662 = vadd.f32 %v2457, %v2661
    %2663 = vmatprep.mubr.f32.mxu0 0.0
    %2664 = vmatmul.mubr.f32.gmra.mrb[0].mxu0 %v2372
    %v2665 = vpop.f32.mrb[0].mxu0
    %v2666 = vadd.f32 %v2453, %v2665
    %v2667 = vpop.f32.mrb[0].mxu0
    %v2668 = vadd.f32 %v2457, %v2667
    %2669 = vmatprep.mubr.f32.mxu0 0.0
    %2670 = vmatmul.mubr.f32.gmra.mrb[0].mxu0 %v2373
    %v2671 = vpop.f32.mrb[0].mxu0
    %v2672 = vadd.f32 %v2453, %v2671
    %v2673 = vpop.f32.mrb[0].mxu0
    %v2674 = vadd.f32 %v2457, %v2673
    %2675 = vmatprep.mubr.f32.mxu0 0.0
    %2676 = vmatmul.mubr.f32.gmra.mrb[0].mxu0 %v2374
    %v2677 = vpop.f32.mrb[0].mxu0
    %v2678 = vadd.f32 %v2453, %v2677
    %v2679 = vpop.f32.mrb[0].mxu0
    %v2680 = vadd.f32 %v2457, %v2679
    %2681 = vmatprep.mubr.f32.mxu0 0.0
    %2682 = vmatmul.mubr.f32.gmra.mrb[0].mxu0 %v2375
    %v2683 = vpop.f32.mrb[0].mxu0
    %v2684 = vadd.f32 %v2453, %v2683
    %v2685 = vpop.f32.mrb[0].mxu0
    %v2686 = vadd.f32 %v2457, %v2685
    %2687 = vdwg.mxu0
    %2688 = vst [vmem:[#allocation3] sm:$0xff] %v2529
    %2689 = vst [vmem:[#allocation3 + $0x8] sm:$0xff] %v2531
    %2690 = vst [vmem:[#allocation3 + $0x10] sm:$0xff] %v2642
    %2691 = vst [vmem:[#allocation3 + $0x18] sm:$0xff] %v2644
    %2692 = vst [vmem:[#allocation3 + $0x20] sm:$0xff] %v2535
    %2693 = vst [vmem:[#allocation3 + $0x28] sm:$0xff] %v2537
    %2694 = vst [vmem:[#allocation3 + $0x30] sm:$0xff] %v2648
    %2695 = vst [vmem:[#allocation3 + $0x38] sm:$0xff] %v2650
    %2696 = vst [vmem:[#allocation3 + $0x40] sm:$0xff] %v2541
    %2697 = vst [vmem:[#allocation3 + $0x48] sm:$0xff] %v2543
    %2698 = vst [vmem:[#allocation3 + $0x50] sm:$0xff] %v2654
    %2699 = vst [vmem:[#allocation3 + $0x58] sm:$0xff] %v2656
    %2700 = vst [vmem:[#allocation3 + $0x60] sm:$0xff] %v2547
    %2701 = vst [vmem:[#allocation3 + $0x68] sm:$0xff] %v2549
    %2702 = vst [vmem:[#allocation3 + $0x70] sm:$0xff] %v2660
    %2703 = vst [vmem:[#allocation3 + $0x78] sm:$0xff] %v2662
    %2704 = vst [vmem:[#allocation3 + $0x80] sm:$0xff] %v2553
    %2705 = vst [vmem:[#allocation3 + $0x88] sm:$0xff] %v2555
    %2706 = vst [vmem:[#allocation3 + $0x90] sm:$0xff] %v2666
    %2707 = vst [vmem:[#allocation3 + $0x98] sm:$0xff] %v2668
    %2708 = vst [vmem:[#allocation3 + $0xa0] sm:$0xff] %v2559
    %2709 = vst [vmem:[#allocation3 + $0xa8] sm:$0xff] %v2561
    %2710 = vst [vmem:[#allocation3 + $0xb0] sm:$0xff] %v2672
    %2711 = vst [vmem:[#allocation3 + $0xb8] sm:$0xff] %v2674
    %2712 = vst [vmem:[#allocation3 + $0xc0] sm:$0xff] %v2565
    %2713 = vst [vmem:[#allocation3 + $0xc8] sm:$0xff] %v2567
    %2714 = vst [vmem:[#allocation3 + $0xd0] sm:$0xff] %v2678
    %2715 = vst [vmem:[#allocation3 + $0xd8] sm:$0xff] %v2680
    %2716 = vst [vmem:[#allocation3 + $0xe0] sm:$0xff] %v2571
    %2717 = vst [vmem:[#allocation3 + $0xe8] sm:$0xff] %v2573
    %2718 = vst [vmem:[#allocation3 + $0xf0] sm:$0xff] %v2684
    %2719 = vst [vmem:[#allocation3 + $0xf8] sm:$0xff] %v2686
    %2720 = vst [vmem:[#allocation4] sm:$0xff] 0.0
    %2721 = vst [vmem:[#allocation5] sm:$0xff] 0.0
    %v2722 = vld [vmem:[#allocation4] sm:$0xff]
    %v2723 = vld [vmem:[#allocation5] sm:$0xff]
    %v2724 = vld [vmem:[#allocation3] sm:$0xff]
    %v2725 = vld [vmem:[#allocation3 + $0x8] sm:$0xff]
    %v2726 = vld [vmem:[#allocation3 + $0x10] sm:$0xff]
    %v2727 = vld [vmem:[#allocation3 + $0x18] sm:$0xff]
    %v2728 = vld [vmem:[#allocation10] sm:$0xff]
    %v2729 = vld [vmem:[#allocation10 + $0x8] sm:$0xff]
    %v2730 = vld [vmem:[#allocation10 + $0x10] sm:$0xff]
    %v2731 = vld [vmem:[#allocation10 + $0x18] sm:$0xff]
    %v2732 = vld [vmem:[#allocation10 + $0x20] sm:$0xff]
    %v2733 = vld [vmem:[#allocation10 + $0x28] sm:$0xff]
    %v2734 = vld [vmem:[#allocation10 + $0x30] sm:$0xff]
    %v2735 = vld [vmem:[#allocation10 + $0x38] sm:$0xff]
    %v2736 = vld [vmem:[#allocation10 + $0x40] sm:$0xff]
    %v2737 = vld [vmem:[#allocation10 + $0x48] sm:$0xff]
    %v2738 = vld [vmem:[#allocation10 + $0x50] sm:$0xff]
    %v2739 = vld [vmem:[#allocation10 + $0x58] sm:$0xff]
    %v2740 = vld [vmem:[#allocation10 + $0x60] sm:$0xff]
    %v2741 = vld [vmem:[#allocation10 + $0x68] sm:$0xff]
    %v2742 = vld [vmem:[#allocation10 + $0x70] sm:$0xff]
    %v2743 = vld [vmem:[#allocation10 + $0x78] sm:$0xff]
    %v2744 = vld [vmem:[#allocation10 + $0x80] sm:$0xff]
    %v2745 = vld [vmem:[#allocation10 + $0x88] sm:$0xff]
    %v2746 = vld [vmem:[#allocation10 + $0x90] sm:$0xff]
    %v2747 = vld [vmem:[#allocation10 + $0x98] sm:$0xff]
    %v2748 = vld [vmem:[#allocation10 + $0xa0] sm:$0xff]
    %v2749 = vld [vmem:[#allocation10 + $0xa8] sm:$0xff]
    %v2750 = vld [vmem:[#allocation10 + $0xb0] sm:$0xff]
    %v2751 = vld [vmem:[#allocation10 + $0xb8] sm:$0xff]
    %v2752 = vld [vmem:[#allocation10 + $0xc0] sm:$0xff]
    %v2753 = vld [vmem:[#allocation10 + $0xc8] sm:$0xff]
    %v2754 = vld [vmem:[#allocation10 + $0xd0] sm:$0xff]
    %v2755 = vld [vmem:[#allocation10 + $0xd8] sm:$0xff]
    %v2756 = vld [vmem:[#allocation10 + $0xe0] sm:$0xff]
    %v2757 = vld [vmem:[#allocation10 + $0xe8] sm:$0xff]
    %v2758 = vld [vmem:[#allocation10 + $0xf0] sm:$0xff]
    %v2759 = vld [vmem:[#allocation10 + $0xf8] sm:$0xff]
    %v2760 = vld [vmem:[#allocation10 + $0x100] sm:$0xff]
    %v2761 = vld [vmem:[#allocation10 + $0x108] sm:$0xff]
    %v2762 = vld [vmem:[#allocation10 + $0x110] sm:$0xff]
    %v2763 = vld [vmem:[#allocation10 + $0x118] sm:$0xff]
    %v2764 = vld [vmem:[#allocation10 + $0x120] sm:$0xff]
    %v2765 = vld [vmem:[#allocation10 + $0x128] sm:$0xff]
    %v2766 = vld [vmem:[#allocation10 + $0x130] sm:$0xff]
    %v2767 = vld [vmem:[#allocation10 + $0x138] sm:$0xff]
    %v2768 = vld [vmem:[#allocation10 + $0x140] sm:$0xff]
    %v2769 = vld [vmem:[#allocation10 + $0x148] sm:$0xff]
    %v2770 = vld [vmem:[#allocation10 + $0x150] sm:$0xff]
    %v2771 = vld [vmem:[#allocation10 + $0x158] sm:$0xff]
    %v2772 = vld [vmem:[#allocation10 + $0x160] sm:$0xff]
    %v2773 = vld [vmem:[#allocation10 + $0x168] sm:$0xff]
    %v2774 = vld [vmem:[#allocation10 + $0x170] sm:$0xff]
    %v2775 = vld [vmem:[#allocation10 + $0x178] sm:$0xff]
    %v2776 = vld [vmem:[#allocation10 + $0x180] sm:$0xff]
    %v2777 = vld [vmem:[#allocation10 + $0x188] sm:$0xff]
    %v2778 = vld [vmem:[#allocation10 + $0x190] sm:$0xff]
    %v2779 = vld [vmem:[#allocation10 + $0x198] sm:$0xff]
    %v2780 = vld [vmem:[#allocation10 + $0x1a0] sm:$0xff]
    %v2781 = vld [vmem:[#allocation10 + $0x1a8] sm:$0xff]
    %v2782 = vld [vmem:[#allocation10 + $0x1b0] sm:$0xff]
    %v2783 = vld [vmem:[#allocation10 + $0x1b8] sm:$0xff]
    %v2784 = vld [vmem:[#allocation10 + $0x1c0] sm:$0xff]
    %v2785 = vld [vmem:[#allocation10 + $0x1c8] sm:$0xff]
    %v2786 = vld [vmem:[#allocation10 + $0x1d0] sm:$0xff]
    %v2787 = vld [vmem:[#allocation10 + $0x1d8] sm:$0xff]
    %v2788 = vld [vmem:[#allocation10 + $0x1e0] sm:$0xff]
    %v2789 = vld [vmem:[#allocation10 + $0x1e8] sm:$0xff]
    %v2790 = vld [vmem:[#allocation10 + $0x1f0] sm:$0xff]
    %v2791 = vld [vmem:[#allocation10 + $0x1f8] sm:$0xff]
    %2792 = vmatprep.subr.mxu0 %v2729
    %2793 = vmatpush1.msra.mxu0 %v2728
    %2794 = vmatprep.subr.mxu0 %v2733
    %2795 = vmatpush1.msra.mxu0 %v2732
    %2796 = vmatprep.subr.mxu0 %v2737
    %2797 = vmatpush1.msra.mxu0 %v2736
    %2798 = vmatprep.subr.mxu0 %v2741
    %2799 = vmatpush1.msra.mxu0 %v2740
    %2800 = vmatprep.subr.mxu0 %v2745
    %2801 = vmatpush1.msra.mxu0 %v2744
    %2802 = vmatprep.subr.mxu0 %v2749
    %2803 = vmatpush1.msra.mxu0 %v2748
    %2804 = vmatprep.subr.mxu0 %v2753
    %2805 = vmatpush1.msra.mxu0 %v2752
    %2806 = vmatprep.subr.mxu0 %v2757
    %2807 = vmatpush1.msra.mxu0 %v2756
    %2808 = vmatprep.subr.mxu0 %v2761
    %2809 = vmatpush1.msra.mxu0 %v2760
    %2810 = vmatprep.subr.mxu0 %v2765
    %2811 = vmatpush1.msra.mxu0 %v2764
    %2812 = vmatprep.subr.mxu0 %v2769
    %2813 = vmatpush1.msra.mxu0 %v2768
    %2814 = vmatprep.subr.mxu0 %v2773
    %2815 = vmatpush1.msra.mxu0 %v2772
    %2816 = vmatprep.subr.mxu0 %v2777
    %2817 = vmatpush1.msra.mxu0 %v2776
    %2818 = vmatprep.subr.mxu0 %v2781
    %2819 = vmatpush1.msra.mxu0 %v2780
    %2820 = vmatprep.subr.mxu0 %v2785
    %2821 = vmatpush1.msra.mxu0 %v2784
    %2822 = vmatprep.subr.mxu0 %v2789
    %2823 = vmatpush1.msra.mxu0 %v2788
    %2824 = vmatprep.subr.mxu0 0.0
    %2825 = vmatpush1.msra.mxu0 0.0
    %2826 = vmatprep.subr.mxu0 0.0
    %2827 = vmatpush1.msra.mxu0 0.0
    %2828 = vmatprep.subr.mxu0 0.0
    %2829 = vmatpush1.msra.mxu0 0.0
    %2830 = vmatprep.subr.mxu0 0.0
    %2831 = vmatpush1.msra.mxu0 0.0
    %2832 = vmatprep.subr.mxu0 0.0
    %2833 = vmatpush1.msra.mxu0 0.0
    %2834 = vmatprep.subr.mxu0 0.0
    %2835 = vmatpush1.msra.mxu0 0.0
    %2836 = vmatprep.subr.mxu0 0.0
    %2837 = vmatpush1.msra.mxu0 0.0
    %2838 = vmatprep.subr.mxu0 0.0
    %2839 = vmatpush1.msra.mxu0 0.0
    %2840 = vmatprep.subr.mxu0 0.0
    %2841 = vmatpush1.msra.mxu0 0.0
    %2842 = vmatprep.subr.mxu0 0.0
    %2843 = vmatpush1.msra.mxu0 0.0
    %2844 = vmatprep.subr.mxu0 0.0
    %2845 = vmatpush1.msra.mxu0 0.0
    %2846 = vmatprep.subr.mxu0 0.0
    %2847 = vmatpush1.msra.mxu0 0.0
    %2848 = vmatprep.subr.mxu0 0.0
    %2849 = vmatpush1.msra.mxu0 0.0
    %2850 = vmatprep.subr.mxu0 0.0
    %2851 = vmatpush1.msra.mxu0 0.0
    %2852 = vmatprep.subr.mxu0 0.0
    %2853 = vmatpush1.msra.mxu0 0.0
    %2854 = vmatprep.subr.mxu0 0.0
    %2855 = vmatpush1.msra.mxu0 0.0
    %2856 = vmatprep.mubr.f32.mxu0 0.0
    %2857 = vmatmul.mubr.f32.gmra.mrb[0].mxu0 %v2722
    %v2858 = vpop.f32.mrb[0].mxu0
    %v2859 = vadd.f32 0.0, %v2858
    %v2860 = vpop.f32.mrb[0].mxu0
    %v2861 = vadd.f32 0.0, %v2860
    %2862 = vdwg.mxu0
    %2863 = vmatprep.subr.mxu0 %v2731
    %2864 = vmatpush1.msra.mxu0 %v2730
    %2865 = vmatprep.subr.mxu0 %v2735
    %2866 = vmatpush1.msra.mxu0 %v2734
    %2867 = vmatprep.subr.mxu0 %v2739
    %2868 = vmatpush1.msra.mxu0 %v2738
    %2869 = vmatprep.subr.mxu0 %v2743
    %2870 = vmatpush1.msra.mxu0 %v2742
    %2871 = vmatprep.subr.mxu0 %v2747
    %2872 = vmatpush1.msra.mxu0 %v2746
    %2873 = vmatprep.subr.mxu0 %v2751
    %2874 = vmatpush1.msra.mxu0 %v2750
    %2875 = vmatprep.subr.mxu0 %v2755
    %2876 = vmatpush1.msra.mxu0 %v2754
    %2877 = vmatprep.subr.mxu0 %v2759
    %2878 = vmatpush1.msra.mxu0 %v2758
    %2879 = vmatprep.subr.mxu0 %v2763
    %2880 = vmatpush1.msra.mxu0 %v2762
    %2881 = vmatprep.subr.mxu0 %v2767
    %2882 = vmatpush1.msra.mxu0 %v2766
    %2883 = vmatprep.subr.mxu0 %v2771
    %2884 = vmatpush1.msra.mxu0 %v2770
    %2885 = vmatprep.subr.mxu0 %v2775
    %2886 = vmatpush1.msra.mxu0 %v2774
    %2887 = vmatprep.subr.mxu0 %v2779
    %2888 = vmatpush1.msra.mxu0 %v2778
    %2889 = vmatprep.subr.mxu0 %v2783
    %2890 = vmatpush1.msra.mxu0 %v2782
    %2891 = vmatprep.subr.mxu0 %v2787
    %2892 = vmatpush1.msra.mxu0 %v2786
    %2893 = vmatprep.subr.mxu0 %v2791
    %2894 = vmatpush1.msra.mxu0 %v2790
    %2895 = vmatprep.subr.mxu0 0.0
    %2896 = vmatpush1.msra.mxu0 0.0
    %2897 = vmatprep.subr.mxu0 0.0
    %2898 = vmatpush1.msra.mxu0 0.0
    %2899 = vmatprep.subr.mxu0 0.0
    %2900 = vmatpush1.msra.mxu0 0.0
    %2901 = vmatprep.subr.mxu0 0.0
    %2902 = vmatpush1.msra.mxu0 0.0
    %2903 = vmatprep.subr.mxu0 0.0
    %2904 = vmatpush1.msra.mxu0 0.0
    %2905 = vmatprep.subr.mxu0 0.0
    %2906 = vmatpush1.msra.mxu0 0.0
    %2907 = vmatprep.subr.mxu0 0.0
    %2908 = vmatpush1.msra.mxu0 0.0
    %2909 = vmatprep.subr.mxu0 0.0
    %2910 = vmatpush1.msra.mxu0 0.0
    %2911 = vmatprep.subr.mxu0 0.0
    %2912 = vmatpush1.msra.mxu0 0.0
    %2913 = vmatprep.subr.mxu0 0.0
    %2914 = vmatpush1.msra.mxu0 0.0
    %2915 = vmatprep.subr.mxu0 0.0
    %2916 = vmatpush1.msra.mxu0 0.0
    %2917 = vmatprep.subr.mxu0 0.0
    %2918 = vmatpush1.msra.mxu0 0.0
    %2919 = vmatprep.subr.mxu0 0.0
    %2920 = vmatpush1.msra.mxu0 0.0
    %2921 = vmatprep.subr.mxu0 0.0
    %2922 = vmatpush1.msra.mxu0 0.0
    %2923 = vmatprep.subr.mxu0 0.0
    %2924 = vmatpush1.msra.mxu0 0.0
    %2925 = vmatprep.subr.mxu0 0.0
    %2926 = vmatpush1.msra.mxu0 0.0
    %2927 = vmatprep.mubr.f32.mxu0 0.0
    %2928 = vmatmul.mubr.f32.gmra.mrb[0].mxu0 %v2722
    %v2929 = vpop.f32.mrb[0].mxu0
    %v2930 = vadd.f32 0.0, %v2929
    %v2931 = vpop.f32.mrb[0].mxu0
    %v2932 = vadd.f32 0.0, %v2931
    %2933 = vdwg.mxu0
    %v2934 = vadd.f32 %v2724, %v2859
    %v2935 = vadd.f32 %v2725, %v2861
    %v2936 = vadd.f32 %v2726, %v2930
    %v2937 = vadd.f32 %v2727, %v2932
    %v2938 = vxor.u32 %v2934, 2147483648
    %v2939 = vmul.f32 %v2938, 1.442695
    %v2940 = vpow.pop %v2939
    %v2941 = vadd.f32 %v2940, 1.0
    %v2942 = vrcp.pop %v2941
    %v2943 = vmul.f32 1.0, %v2942
    %v2944 = vxor.u32 %v2935, 2147483648
    %v2945 = vmul.f32 %v2944, 1.442695
    %v2946 = vpow.pop %v2945
    %v2947 = vadd.f32 %v2946, 1.0
    %v2948 = vrcp.pop %v2947
    %v2949 = vmul.f32 1.0, %v2948
    %v2950 = vtanh.pop %v2936
    %v2951 = vxor.u32 %v2937, 2147483648
    %v2952 = vmul.f32 %v2951, 1.442695
    %v2953 = vpow.pop %v2952
    %v2954 = vadd.f32 %v2953, 1.0
    %v2955 = vrcp.pop %v2954
    %v2956 = vmul.f32 1.0, %v2955
    %v2957 = vmul.f32 %v2949, %v2723
    %v2958 = vmul.f32 %v2943, %v2950
    %v2959 = vadd.f32 %v2957, %v2958
    %v2960 = vtanh.pop %v2959
    %v2961 = vmul.f32 %v2956, %v2960
    %2962 = vst [vmem:[#allocation4] sm:$0xff] %v2961
    %2963 = vst [vmem:[#allocation5] sm:$0xff] %v2959
    %2964 = vst [vmem:[#allocation2] sm:$0xff] %v2961
    %v2965 = vld [vmem:[#allocation4] sm:$0xff]
    %v2966 = vld [vmem:[#allocation5] sm:$0xff]
    %v2967 = vld [vmem:[%s655] sm:$0xff]
    %v2968 = vld [vmem:[%s655 + $0x8] sm:$0xff]
    %v2969 = vld [vmem:[%s655 + $0x10] sm:$0xff]
    %v2970 = vld [vmem:[%s655 + $0x18] sm:$0xff]
    %v2971 = vld [vmem:[#allocation10] sm:$0xff]
    %v2972 = vld [vmem:[#allocation10 + $0x8] sm:$0xff]
    %v2973 = vld [vmem:[#allocation10 + $0x10] sm:$0xff]
    %v2974 = vld [vmem:[#allocation10 + $0x18] sm:$0xff]
    %v2975 = vld [vmem:[#allocation10 + $0x20] sm:$0xff]
    %v2976 = vld [vmem:[#allocation10 + $0x28] sm:$0xff]
    %v2977 = vld [vmem:[#allocation10 + $0x30] sm:$0xff]
    %v2978 = vld [vmem:[#allocation10 + $0x38] sm:$0xff]
    %v2979 = vld [vmem:[#allocation10 + $0x40] sm:$0xff]
    %v2980 = vld [vmem:[#allocation10 + $0x48] sm:$0xff]
    %v2981 = vld [vmem:[#allocation10 + $0x50] sm:$0xff]
    %v2982 = vld [vmem:[#allocation10 + $0x58] sm:$0xff]
    %v2983 = vld [vmem:[#allocation10 + $0x60] sm:$0xff]
    %v2984 = vld [vmem:[#allocation10 + $0x68] sm:$0xff]
    %v2985 = vld [vmem:[#allocation10 + $0x70] sm:$0xff]
    %v2986 = vld [vmem:[#allocation10 + $0x78] sm:$0xff]
    %v2987 = vld [vmem:[#allocation10 + $0x80] sm:$0xff]
    %v2988 = vld [vmem:[#allocation10 + $0x88] sm:$0xff]
    %v2989 = vld [vmem:[#allocation10 + $0x90] sm:$0xff]
    %v2990 = vld [vmem:[#allocation10 + $0x98] sm:$0xff]
    %v2991 = vld [vmem:[#allocation10 + $0xa0] sm:$0xff]
    %v2992 = vld [vmem:[#allocation10 + $0xa8] sm:$0xff]
    %v2993 = vld [vmem:[#allocation10 + $0xb0] sm:$0xff]
    %v2994 = vld [vmem:[#allocation10 + $0xb8] sm:$0xff]
    %v2995 = vld [vmem:[#allocation10 + $0xc0] sm:$0xff]
    %v2996 = vld [vmem:[#allocation10 + $0xc8] sm:$0xff]
    %v2997 = vld [vmem:[#allocation10 + $0xd0] sm:$0xff]
    %v2998 = vld [vmem:[#allocation10 + $0xd8] sm:$0xff]
    %v2999 = vld [vmem:[#allocation10 + $0xe0] sm:$0xff]
    %v3000 = vld [vmem:[#allocation10 + $0xe8] sm:$0xff]
    %v3001 = vld [vmem:[#allocation10 + $0xf0] sm:$0xff]
    %v3002 = vld [vmem:[#allocation10 + $0xf8] sm:$0xff]
    %v3003 = vld [vmem:[#allocation10 + $0x100] sm:$0xff]
    %v3004 = vld [vmem:[#allocation10 + $0x108] sm:$0xff]
    %v3005 = vld [vmem:[#allocation10 + $0x110] sm:$0xff]
    %v3006 = vld [vmem:[#allocation10 + $0x118] sm:$0xff]
    %v3007 = vld [vmem:[#allocation10 + $0x120] sm:$0xff]
    %v3008 = vld [vmem:[#allocation10 + $0x128] sm:$0xff]
    %v3009 = vld [vmem:[#allocation10 + $0x130] sm:$0xff]
    %v3010 = vld [vmem:[#allocation10 + $0x138] sm:$0xff]
    %v3011 = vld [vmem:[#allocation10 + $0x140] sm:$0xff]
    %v3012 = vld [vmem:[#allocation10 + $0x148] sm:$0xff]
    %v3013 = vld [vmem:[#allocation10 + $0x150] sm:$0xff]
    %v3014 = vld [vmem:[#allocation10 + $0x158] sm:$0xff]
    %v3015 = vld [vmem:[#allocation10 + $0x160] sm:$0xff]
    %v3016 = vld [vmem:[#allocation10 + $0x168] sm:$0xff]
    %v3017 = vld [vmem:[#allocation10 + $0x170] sm:$0xff]
    %v3018 = vld [vmem:[#allocation10 + $0x178] sm:$0xff]
    %v3019 = vld [vmem:[#allocation10 + $0x180] sm:$0xff]
    %v3020 = vld [vmem:[#allocation10 + $0x188] sm:$0xff]
    %v3021 = vld [vmem:[#allocation10 + $0x190] sm:$0xff]
    %v3022 = vld [vmem:[#allocation10 + $0x198] sm:$0xff]
    %v3023 = vld [vmem:[#allocation10 + $0x1a0] sm:$0xff]
    %v3024 = vld [vmem:[#allocation10 + $0x1a8] sm:$0xff]
    %v3025 = vld [vmem:[#allocation10 + $0x1b0] sm:$0xff]
    %v3026 = vld [vmem:[#allocation10 + $0x1b8] sm:$0xff]
    %v3027 = vld [vmem:[#allocation10 + $0x1c0] sm:$0xff]
    %v3028 = vld [vmem:[#allocation10 + $0x1c8] sm:$0xff]
    %v3029 = vld [vmem:[#allocation10 + $0x1d0] sm:$0xff]
    %v3030 = vld [vmem:[#allocation10 + $0x1d8] sm:$0xff]
    %v3031 = vld [vmem:[#allocation10 + $0x1e0] sm:$0xff]
    %v3032 = vld [vmem:[#allocation10 + $0x1e8] sm:$0xff]
    %v3033 = vld [vmem:[#allocation10 + $0x1f0] sm:$0xff]
    %v3034 = vld [vmem:[#allocation10 + $0x1f8] sm:$0xff]
    %3035 = vmatprep.subr.mxu0 %v2972
    %3036 = vmatpush1.msra.mxu0 %v2971
    %3037 = vmatprep.subr.mxu0 %v2976
    %3038 = vmatpush1.msra.mxu0 %v2975
    %3039 = vmatprep.subr.mxu0 %v2980
    %3040 = vmatpush1.msra.mxu0 %v2979
    %3041 = vmatprep.subr.mxu0 %v2984
    %3042 = vmatpush1.msra.mxu0 %v2983
    %3043 = vmatprep.subr.mxu0 %v2988
    %3044 = vmatpush1.msra.mxu0 %v2987
    %3045 = vmatprep.subr.mxu0 %v2992
    %3046 = vmatpush1.msra.mxu0 %v2991
    %3047 = vmatprep.subr.mxu0 %v2996
    %3048 = vmatpush1.msra.mxu0 %v2995
    %3049 = vmatprep.subr.mxu0 %v3000
    %3050 = vmatpush1.msra.mxu0 %v2999
    %3051 = vmatprep.subr.mxu0 %v3004
    %3052 = vmatpush1.msra.mxu0 %v3003
    %3053 = vmatprep.subr.mxu0 %v3008
    %3054 = vmatpush1.msra.mxu0 %v3007
    %3055 = vmatprep.subr.mxu0 %v3012
    %3056 = vmatpush1.msra.mxu0 %v3011
    %3057 = vmatprep.subr.mxu0 %v3016
    %3058 = vmatpush1.msra.mxu0 %v3015
    %3059 = vmatprep.subr.mxu0 %v3020
    %3060 = vmatpush1.msra.mxu0 %v3019
    %3061 = vmatprep.subr.mxu0 %v3024
    %3062 = vmatpush1.msra.mxu0 %v3023
    %3063 = vmatprep.subr.mxu0 %v3028
    %3064 = vmatpush1.msra.mxu0 %v3027
    %3065 = vmatprep.subr.mxu0 %v3032
    %3066 = vmatpush1.msra.mxu0 %v3031
    %3067 = vmatprep.subr.mxu0 0.0
    %3068 = vmatpush1.msra.mxu0 0.0
    %3069 = vmatprep.subr.mxu0 0.0
    %3070 = vmatpush1.msra.mxu0 0.0
    %3071 = vmatprep.subr.mxu0 0.0
    %3072 = vmatpush1.msra.mxu0 0.0
    %3073 = vmatprep.subr.mxu0 0.0
    %3074 = vmatpush1.msra.mxu0 0.0
    %3075 = vmatprep.subr.mxu0 0.0
    %3076 = vmatpush1.msra.mxu0 0.0
    %3077 = vmatprep.subr.mxu0 0.0
    %3078 = vmatpush1.msra.mxu0 0.0
    %3079 = vmatprep.subr.mxu0 0.0
    %3080 = vmatpush1.msra.mxu0 0.0
    %3081 = vmatprep.subr.mxu0 0.0
    %3082 = vmatpush1.msra.mxu0 0.0
    %3083 = vmatprep.subr.mxu0 0.0
    %3084 = vmatpush1.msra.mxu0 0.0
    %3085 = vmatprep.subr.mxu0 0.0
    %3086 = vmatpush1.msra.mxu0 0.0
    %3087 = vmatprep.subr.mxu0 0.0
    %3088 = vmatpush1.msra.mxu0 0.0
    %3089 = vmatprep.subr.mxu0 0.0
    %3090 = vmatpush1.msra.mxu0 0.0
    %3091 = vmatprep.subr.mxu0 0.0
    %3092 = vmatpush1.msra.mxu0 0.0
    %3093 = vmatprep.subr.mxu0 0.0
    %3094 = vmatpush1.msra.mxu0 0.0
    %3095 = vmatprep.subr.mxu0 0.0
    %3096 = vmatpush1.msra.mxu0 0.0
    %3097 = vmatprep.subr.mxu0 0.0
    %3098 = vmatpush1.msra.mxu0 0.0
    %3099 = vmatprep.mubr.f32.mxu0 0.0
    %3100 = vmatmul.mubr.f32.gmra.mrb[0].mxu0 %v2965
    %v3101 = vpop.f32.mrb[0].mxu0
    %v3102 = vadd.f32 0.0, %v3101
    %v3103 = vpop.f32.mrb[0].mxu0
    %v3104 = vadd.f32 0.0, %v3103
    %3105 = vdwg.mxu0
    %3106 = vmatprep.subr.mxu0 %v2974
    %3107 = vmatpush1.msra.mxu0 %v2973
    %3108 = vmatprep.subr.mxu0 %v2978
    %3109 = vmatpush1.msra.mxu0 %v2977
    %3110 = vmatprep.subr.mxu0 %v2982
    %3111 = vmatpush1.msra.mxu0 %v2981
    %3112 = vmatprep.subr.mxu0 %v2986
    %3113 = vmatpush1.msra.mxu0 %v2985
    %3114 = vmatprep.subr.mxu0 %v2990
    %3115 = vmatpush1.msra.mxu0 %v2989
    %3116 = vmatprep.subr.mxu0 %v2994
    %3117 = vmatpush1.msra.mxu0 %v2993
    %3118 = vmatprep.subr.mxu0 %v2998
    %3119 = vmatpush1.msra.mxu0 %v2997
    %3120 = vmatprep.subr.mxu0 %v3002
    %3121 = vmatpush1.msra.mxu0 %v3001
    %3122 = vmatprep.subr.mxu0 %v3006
    %3123 = vmatpush1.msra.mxu0 %v3005
    %3124 = vmatprep.subr.mxu0 %v3010
    %3125 = vmatpush1.msra.mxu0 %v3009
    %3126 = vmatprep.subr.mxu0 %v3014
    %3127 = vmatpush1.msra.mxu0 %v3013
    %3128 = vmatprep.subr.mxu0 %v3018
    %3129 = vmatpush1.msra.mxu0 %v3017
    %3130 = vmatprep.subr.mxu0 %v3022
    %3131 = vmatpush1.msra.mxu0 %v3021
    %3132 = vmatprep.subr.mxu0 %v3026
    %3133 = vmatpush1.msra.mxu0 %v3025
    %3134 = vmatprep.subr.mxu0 %v3030
    %3135 = vmatpush1.msra.mxu0 %v3029
    %3136 = vmatprep.subr.mxu0 %v3034
    %3137 = vmatpush1.msra.mxu0 %v3033
    %3138 = vmatprep.subr.mxu0 0.0
    %3139 = vmatpush1.msra.mxu0 0.0
    %3140 = vmatprep.subr.mxu0 0.0
    %3141 = vmatpush1.msra.mxu0 0.0
    %3142 = vmatprep.subr.mxu0 0.0
    %3143 = vmatpush1.msra.mxu0 0.0
    %3144 = vmatprep.subr.mxu0 0.0
    %3145 = vmatpush1.msra.mxu0 0.0
    %3146 = vmatprep.subr.mxu0 0.0
    %3147 = vmatpush1.msra.mxu0 0.0
    %3148 = vmatprep.subr.mxu0 0.0
    %3149 = vmatpush1.msra.mxu0 0.0
    %3150 = vmatprep.subr.mxu0 0.0
    %3151 = vmatpush1.msra.mxu0 0.0
    %3152 = vmatprep.subr.mxu0 0.0
    %3153 = vmatpush1.msra.mxu0 0.0
    %3154 = vmatprep.subr.mxu0 0.0
    %3155 = vmatpush1.msra.mxu0 0.0
    %3156 = vmatprep.subr.mxu0 0.0
    %3157 = vmatpush1.msra.mxu0 0.0
    %3158 = vmatprep.subr.mxu0 0.0
    %3159 = vmatpush1.msra.mxu0 0.0
    %3160 = vmatprep.subr.mxu0 0.0
    %3161 = vmatpush1.msra.mxu0 0.0
    %3162 = vmatprep.subr.mxu0 0.0
    %3163 = vmatpush1.msra.mxu0 0.0
    %3164 = vmatprep.subr.mxu0 0.0
    %3165 = vmatpush1.msra.mxu0 0.0
    %3166 = vmatprep.subr.mxu0 0.0
    %3167 = vmatpush1.msra.mxu0 0.0
    %3168 = vmatprep.subr.mxu0 0.0
    %3169 = vmatpush1.msra.mxu0 0.0
    %3170 = vmatprep.mubr.f32.mxu0 0.0
    %3171 = vmatmul.mubr.f32.gmra.mrb[0].mxu0 %v2965
    %v3172 = vpop.f32.mrb[0].mxu0
    %v3173 = vadd.f32 0.0, %v3172
    %v3174 = vpop.f32.mrb[0].mxu0
    %v3175 = vadd.f32 0.0, %v3174
    %3176 = vdwg.mxu0
    %v3177 = vadd.f32 %v2967, %v3102
    %v3178 = vadd.f32 %v2968, %v3104
    %v3179 = vadd.f32 %v2969, %v3173
    %v3180 = vadd.f32 %v2970, %v3175
    %v3181 = vxor.u32 %v3177, 2147483648
    %v3182 = vmul.f32 %v3181, 1.442695
    %v3183 = vpow.pop %v3182
    %v3184 = vadd.f32 %v3183, 1.0
    %v3185 = vrcp.pop %v3184
    %v3186 = vmul.f32 1.0, %v3185
    %v3187 = vxor.u32 %v3178, 2147483648
    %v3188 = vmul.f32 %v3187, 1.442695
    %v3189 = vpow.pop %v3188
    %v3190 = vadd.f32 %v3189, 1.0
    %v3191 = vrcp.pop %v3190
    %v3192 = vmul.f32 1.0, %v3191
    %v3193 = vtanh.pop %v3179
    %v3194 = vxor.u32 %v3180, 2147483648
    %v3195 = vmul.f32 %v3194, 1.442695
    %v3196 = vpow.pop %v3195
    %v3197 = vadd.f32 %v3196, 1.0
    %v3198 = vrcp.pop %v3197
    %v3199 = vmul.f32 1.0, %v3198
    %v3200 = vmul.f32 %v3192, %v2966
    %v3201 = vmul.f32 %v3186, %v3193
    %v3202 = vadd.f32 %v3200, %v3201
    %v3203 = vtanh.pop %v3202
    %v3204 = vmul.f32 %v3199, %v3203
    %3205 = vst [vmem:[#allocation4] sm:$0xff] %v3204
    %3206 = vst [vmem:[#allocation5] sm:$0xff] %v3202
    %3207 = vst [vmem:[%s896] sm:$0xff] %v3204
    %v3208 = vld [vmem:[#allocation4] sm:$0xff]
    %v3209 = vld [vmem:[#allocation5] sm:$0xff]
    %v3210 = vld [vmem:[%s900] sm:$0xff]
    %v3211 = vld [vmem:[%s900 + $0x8] sm:$0xff]
    %v3212 = vld [vmem:[%s900 + $0x10] sm:$0xff]
    %v3213 = vld [vmem:[%s900 + $0x18] sm:$0xff]
    %v3214 = vld [vmem:[#allocation10] sm:$0xff]
    %v3215 = vld [vmem:[#allocation10 + $0x8] sm:$0xff]
    %v3216 = vld [vmem:[#allocation10 + $0x10] sm:$0xff]
    %v3217 = vld [vmem:[#allocation10 + $0x18] sm:$0xff]
    %v3218 = vld [vmem:[#allocation10 + $0x20] sm:$0xff]
    %v3219 = vld [vmem:[#allocation10 + $0x28] sm:$0xff]
    %v3220 = vld [vmem:[#allocation10 + $0x30] sm:$0xff]
    %v3221 = vld [vmem:[#allocation10 + $0x38] sm:$0xff]
    %v3222 = vld [vmem:[#allocation10 + $0x40] sm:$0xff]
    %v3223 = vld [vmem:[#allocation10 + $0x48] sm:$0xff]
    %v3224 = vld [vmem:[#allocation10 + $0x50] sm:$0xff]
    %v3225 = vld [vmem:[#allocation10 + $0x58] sm:$0xff]
    %v3226 = vld [vmem:[#allocation10 + $0x60] sm:$0xff]
    %v3227 = vld [vmem:[#allocation10 + $0x68] sm:$0xff]
    %v3228 = vld [vmem:[#allocation10 + $0x70] sm:$0xff]
    %v3229 = vld [vmem:[#allocation10 + $0x78] sm:$0xff]
    %v3230 = vld [vmem:[#allocation10 + $0x80] sm:$0xff]
    %v3231 = vld [vmem:[#allocation10 + $0x88] sm:$0xff]
    %v3232 = vld [vmem:[#allocation10 + $0x90] sm:$0xff]
    %v3233 = vld [vmem:[#allocation10 + $0x98] sm:$0xff]
    %v3234 = vld [vmem:[#allocation10 + $0xa0] sm:$0xff]
    %v3235 = vld [vmem:[#allocation10 + $0xa8] sm:$0xff]
    %v3236 = vld [vmem:[#allocation10 + $0xb0] sm:$0xff]
    %v3237 = vld [vmem:[#allocation10 + $0xb8] sm:$0xff]
    %v3238 = vld [vmem:[#allocation10 + $0xc0] sm:$0xff]
    %v3239 = vld [vmem:[#allocation10 + $0xc8] sm:$0xff]
    %v3240 = vld [vmem:[#allocation10 + $0xd0] sm:$0xff]
    %v3241 = vld [vmem:[#allocation10 + $0xd8] sm:$0xff]
    %v3242 = vld [vmem:[#allocation10 + $0xe0] sm:$0xff]
    %v3243 = vld [vmem:[#allocation10 + $0xe8] sm:$0xff]
    %v3244 = vld [vmem:[#allocation10 + $0xf0] sm:$0xff]
    %v3245 = vld [vmem:[#allocation10 + $0xf8] sm:$0xff]
    %v3246 = vld [vmem:[#allocation10 + $0x100] sm:$0xff]
    %v3247 = vld [vmem:[#allocation10 + $0x108] sm:$0xff]
    %v3248 = vld [vmem:[#allocation10 + $0x110] sm:$0xff]
    %v3249 = vld [vmem:[#allocation10 + $0x118] sm:$0xff]
    %v3250 = vld [vmem:[#allocation10 + $0x120] sm:$0xff]
    %v3251 = vld [vmem:[#allocation10 + $0x128] sm:$0xff]
    %v3252 = vld [vmem:[#allocation10 + $0x130] sm:$0xff]
    %v3253 = vld [vmem:[#allocation10 + $0x138] sm:$0xff]
    %v3254 = vld [vmem:[#allocation10 + $0x140] sm:$0xff]
    %v3255 = vld [vmem:[#allocation10 + $0x148] sm:$0xff]
    %v3256 = vld [vmem:[#allocation10 + $0x150] sm:$0xff]
    %v3257 = vld [vmem:[#allocation10 + $0x158] sm:$0xff]
    %v3258 = vld [vmem:[#allocation10 + $0x160] sm:$0xff]
    %v3259 = vld [vmem:[#allocation10 + $0x168] sm:$0xff]
    %v3260 = vld [vmem:[#allocation10 + $0x170] sm:$0xff]
    %v3261 = vld [vmem:[#allocation10 + $0x178] sm:$0xff]
    %v3262 = vld [vmem:[#allocation10 + $0x180] sm:$0xff]
    %v3263 = vld [vmem:[#allocation10 + $0x188] sm:$0xff]
    %v3264 = vld [vmem:[#allocation10 + $0x190] sm:$0xff]
    %v3265 = vld [vmem:[#allocation10 + $0x198] sm:$0xff]
    %v3266 = vld [vmem:[#allocation10 + $0x1a0] sm:$0xff]
    %v3267 = vld [vmem:[#allocation10 + $0x1a8] sm:$0xff]
    %v3268 = vld [vmem:[#allocation10 + $0x1b0] sm:$0xff]
    %v3269 = vld [vmem:[#allocation10 + $0x1b8] sm:$0xff]
    %v3270 = vld [vmem:[#allocation10 + $0x1c0] sm:$0xff]
    %v3271 = vld [vmem:[#allocation10 + $0x1c8] sm:$0xff]
    %v3272 = vld [vmem:[#allocation10 + $0x1d0] sm:$0xff]
    %v3273 = vld [vmem:[#allocation10 + $0x1d8] sm:$0xff]
    %v3274 = vld [vmem:[#allocation10 + $0x1e0] sm:$0xff]
    %v3275 = vld [vmem:[#allocation10 + $0x1e8] sm:$0xff]
    %v3276 = vld [vmem:[#allocation10 + $0x1f0] sm:$0xff]
    %v3277 = vld [vmem:[#allocation10 + $0x1f8] sm:$0xff]
    %3278 = vmatprep.subr.mxu0 %v3215
    %3279 = vmatpush1.msra.mxu0 %v3214
    %3280 = vmatprep.subr.mxu0 %v3219
    %3281 = vmatpush1.msra.mxu0 %v3218
    %3282 = vmatprep.subr.mxu0 %v3223
    %3283 = vmatpush1.msra.mxu0 %v3222
    %3284 = vmatprep.subr.mxu0 %v3227
    %3285 = vmatpush1.msra.mxu0 %v3226
    %3286 = vmatprep.subr.mxu0 %v3231
    %3287 = vmatpush1.msra.mxu0 %v3230
    %3288 = vmatprep.subr.mxu0 %v3235
    %3289 = vmatpush1.msra.mxu0 %v3234
    %3290 = vmatprep.subr.mxu0 %v3239
    %3291 = vmatpush1.msra.mxu0 %v3238
    %3292 = vmatprep.subr.mxu0 %v3243
    %3293 = vmatpush1.msra.mxu0 %v3242
    %3294 = vmatprep.subr.mxu0 %v3247
    %3295 = vmatpush1.msra.mxu0 %v3246
    %3296 = vmatprep.subr.mxu0 %v3251
    %3297 = vmatpush1.msra.mxu0 %v3250
    %3298 = vmatprep.subr.mxu0 %v3255
    %3299 = vmatpush1.msra.mxu0 %v3254
    %3300 = vmatprep.subr.mxu0 %v3259
    %3301 = vmatpush1.msra.mxu0 %v3258
    %3302 = vmatprep.subr.mxu0 %v3263
    %3303 = vmatpush1.msra.mxu0 %v3262
    %3304 = vmatprep.subr.mxu0 %v3267
    %3305 = vmatpush1.msra.mxu0 %v3266
    %3306 = vmatprep.subr.mxu0 %v3271
    %3307 = vmatpush1.msra.mxu0 %v3270
    %3308 = vmatprep.subr.mxu0 %v3275
    %3309 = vmatpush1.msra.mxu0 %v3274
    %3310 = vmatprep.subr.mxu0 0.0
    %3311 = vmatpush1.msra.mxu0 0.0
    %3312 = vmatprep.subr.mxu0 0.0
    %3313 = vmatpush1.msra.mxu0 0.0
    %3314 = vmatprep.subr.mxu0 0.0
    %3315 = vmatpush1.msra.mxu0 0.0
    %3316 = vmatprep.subr.mxu0 0.0
    %3317 = vmatpush1.msra.mxu0 0.0
    %3318 = vmatprep.subr.mxu0 0.0
    %3319 = vmatpush1.msra.mxu0 0.0
    %3320 = vmatprep.subr.mxu0 0.0
    %3321 = vmatpush1.msra.mxu0 0.0
    %3322 = vmatprep.subr.mxu0 0.0
    %3323 = vmatpush1.msra.mxu0 0.0
    %3324 = vmatprep.subr.mxu0 0.0
    %3325 = vmatpush1.msra.mxu0 0.0
    %3326 = vmatprep.subr.mxu0 0.0
    %3327 = vmatpush1.msra.mxu0 0.0
    %3328 = vmatprep.subr.mxu0 0.0
    %3329 = vmatpush1.msra.mxu0 0.0
    %3330 = vmatprep.subr.mxu0 0.0
    %3331 = vmatpush1.msra.mxu0 0.0
    %3332 = vmatprep.subr.mxu0 0.0
    %3333 = vmatpush1.msra.mxu0 0.0
    %3334 = vmatprep.subr.mxu0 0.0
    %3335 = vmatpush1.msra.mxu0 0.0
    %3336 = vmatprep.subr.mxu0 0.0
    %3337 = vmatpush1.msra.mxu0 0.0
    %3338 = vmatprep.subr.mxu0 0.0
    %3339 = vmatpush1.msra.mxu0 0.0
    %3340 = vmatprep.subr.mxu0 0.0
    %3341 = vmatpush1.msra.mxu0 0.0
    %3342 = vmatprep.mubr.f32.mxu0 0.0
    %3343 = vmatmul.mubr.f32.gmra.mrb[0].mxu0 %v3208
    %v3344 = vpop.f32.mrb[0].mxu0
    %v3345 = vadd.f32 0.0, %v3344
    %v3346 = vpop.f32.mrb[0].mxu0
    %v3347 = vadd.f32 0.0, %v3346
    %3348 = vdwg.mxu0
    %3349 = vmatprep.subr.mxu0 %v3217
    %3350 = vmatpush1.msra.mxu0 %v3216
    %3351 = vmatprep.subr.mxu0 %v3221
    %3352 = vmatpush1.msra.mxu0 %v3220
    %3353 = vmatprep.subr.mxu0 %v3225
    %3354 = vmatpush1.msra.mxu0 %v3224
    %3355 = vmatprep.subr.mxu0 %v3229
    %3356 = vmatpush1.msra.mxu0 %v3228
    %3357 = vmatprep.subr.mxu0 %v3233
    %3358 = vmatpush1.msra.mxu0 %v3232
    %3359 = vmatprep.subr.mxu0 %v3237
    %3360 = vmatpush1.msra.mxu0 %v3236
    %3361 = vmatprep.subr.mxu0 %v3241
    %3362 = vmatpush1.msra.mxu0 %v3240
    %3363 = vmatprep.subr.mxu0 %v3245
    %3364 = vmatpush1.msra.mxu0 %v3244
    %3365 = vmatprep.subr.mxu0 %v3249
    %3366 = vmatpush1.msra.mxu0 %v3248
    %3367 = vmatprep.subr.mxu0 %v3253
    %3368 = vmatpush1.msra.mxu0 %v3252
    %3369 = vmatprep.subr.mxu0 %v3257
    %3370 = vmatpush1.msra.mxu0 %v3256
    %3371 = vmatprep.subr.mxu0 %v3261
    %3372 = vmatpush1.msra.mxu0 %v3260
    %3373 = vmatprep.subr.mxu0 %v3265
    %3374 = vmatpush1.msra.mxu0 %v3264
    %3375 = vmatprep.subr.mxu0 %v3269
    %3376 = vmatpush1.msra.mxu0 %v3268
    %3377 = vmatprep.subr.mxu0 %v3273
    %3378 = vmatpush1.msra.mxu0 %v3272
    %3379 = vmatprep.subr.mxu0 %v3277
    %3380 = vmatpush1.msra.mxu0 %v3276
    %3381 = vmatprep.subr.mxu0 0.0
    %3382 = vmatpush1.msra.mxu0 0.0
    %3383 = vmatprep.subr.mxu0 0.0
    %3384 = vmatpush1.msra.mxu0 0.0
    %3385 = vmatprep.subr.mxu0 0.0
    %3386 = vmatpush1.msra.mxu0 0.0
    %3387 = vmatprep.subr.mxu0 0.0
    %3388 = vmatpush1.msra.mxu0 0.0
    %3389 = vmatprep.subr.mxu0 0.0
    %3390 = vmatpush1.msra.mxu0 0.0
    %3391 = vmatprep.subr.mxu0 0.0
    %3392 = vmatpush1.msra.mxu0 0.0
    %3393 = vmatprep.subr.mxu0 0.0
    %3394 = vmatpush1.msra.mxu0 0.0
    %3395 = vmatprep.subr.mxu0 0.0
    %3396 = vmatpush1.msra.mxu0 0.0
    %3397 = vmatprep.subr.mxu0 0.0
    %3398 = vmatpush1.msra.mxu0 0.0
    %3399 = vmatprep.subr.mxu0 0.0
    %3400 = vmatpush1.msra.mxu0 0.0
    %3401 = vmatprep.subr.mxu0 0.0
    %3402 = vmatpush1.msra.mxu0 0.0
    %3403 = vmatprep.subr.mxu0 0.0
    %3404 = vmatpush1.msra.mxu0 0.0
    %3405 = vmatprep.subr.mxu0 0.0
    %3406 = vmatpush1.msra.mxu0 0.0
    %3407 = vmatprep.subr.mxu0 0.0
    %3408 = vmatpush1.msra.mxu0 0.0
    %3409 = vmatprep.subr.mxu0 0.0
    %3410 = vmatpush1.msra.mxu0 0.0
    %3411 = vmatprep.subr.mxu0 0.0
    %3412 = vmatpush1.msra.mxu0 0.0
    %3413 = vmatprep.mubr.f32.mxu0 0.0
    %3414 = vmatmul.mubr.f32.gmra.mrb[0].mxu0 %v3208
    %v3415 = vpop.f32.mrb[0].mxu0
    %v3416 = vadd.f32 0.0, %v3415
    %v3417 = vpop.f32.mrb[0].mxu0
    %v3418 = vadd.f32 0.0, %v3417
    %3419 = vdwg.mxu0
    %v3420 = vadd.f32 %v3210, %v3345
    %v3421 = vadd.f32 %v3211, %v3347
    %v3422 = vadd.f32 %v3212, %v3416
    %v3423 = vadd.f32 %v3213, %v3418
    %v3424 = vxor.u32 %v3420, 2147483648
    %v3425 = vmul.f32 %v3424, 1.442695
    %v3426 = vpow.pop %v3425
    %v3427 = vadd.f32 %v3426, 1.0
    %v3428 = vrcp.pop %v3427
    %v3429 = vmul.f32 1.0, %v3428
    %v3430 = vxor.u32 %v3421, 2147483648
    %v3431 = vmul.f32 %v3430, 1.442695
    %v3432 = vpow.pop %v3431
    %v3433 = vadd.f32 %v3432, 1.0
    %v3434 = vrcp.pop %v3433
    %v3435 = vmul.f32 1.0, %v3434
    %v3436 = vtanh.pop %v3422
    %v3437 = vxor.u32 %v3423, 2147483648
    %v3438 = vmul.f32 %v3437, 1.442695
    %v3439 = vpow.pop %v3438
    %v3440 = vadd.f32 %v3439, 1.0
    %v3441 = vrcp.pop %v3440
    %v3442 = vmul.f32 1.0, %v3441
    %v3443 = vmul.f32 %v3435, %v3209
    %v3444 = vmul.f32 %v3429, %v3436
    %v3445 = vadd.f32 %v3443, %v3444
    %v3446 = vtanh.pop %v3445
    %v3447 = vmul.f32 %v3442, %v3446
    %3448 = vst [vmem:[#allocation4] sm:$0xff] %v3447
    %3449 = vst [vmem:[#allocation5] sm:$0xff] %v3445
    %3450 = vst [vmem:[%s1141] sm:$0xff] %v3447
    %v3451 = vld [vmem:[#allocation4] sm:$0xff]
    %v3452 = vld [vmem:[#allocation5] sm:$0xff]
    %v3453 = vld [vmem:[%s1145] sm:$0xff]
    %v3454 = vld [vmem:[%s1145 + $0x8] sm:$0xff]
    %v3455 = vld [vmem:[%s1145 + $0x10] sm:$0xff]
    %v3456 = vld [vmem:[%s1145 + $0x18] sm:$0xff]
    %v3457 = vld [vmem:[#allocation10] sm:$0xff]
    %v3458 = vld [vmem:[#allocation10 + $0x8] sm:$0xff]
    %v3459 = vld [vmem:[#allocation10 + $0x10] sm:$0xff]
    %v3460 = vld [vmem:[#allocation10 + $0x18] sm:$0xff]
    %v3461 = vld [vmem:[#allocation10 + $0x20] sm:$0xff]
    %v3462 = vld [vmem:[#allocation10 + $0x28] sm:$0xff]
    %v3463 = vld [vmem:[#allocation10 + $0x30] sm:$0xff]
    %v3464 = vld [vmem:[#allocation10 + $0x38] sm:$0xff]
    %v3465 = vld [vmem:[#allocation10 + $0x40] sm:$0xff]
    %v3466 = vld [vmem:[#allocation10 + $0x48] sm:$0xff]
    %v3467 = vld [vmem:[#allocation10 + $0x50] sm:$0xff]
    %v3468 = vld [vmem:[#allocation10 + $0x58] sm:$0xff]
    %v3469 = vld [vmem:[#allocation10 + $0x60] sm:$0xff]
    %v3470 = vld [vmem:[#allocation10 + $0x68] sm:$0xff]
    %v3471 = vld [vmem:[#allocation10 + $0x70] sm:$0xff]
    %v3472 = vld [vmem:[#allocation10 + $0x78] sm:$0xff]
    %v3473 = vld [vmem:[#allocation10 + $0x80] sm:$0xff]
    %v3474 = vld [vmem:[#allocation10 + $0x88] sm:$0xff]
    %v3475 = vld [vmem:[#allocation10 + $0x90] sm:$0xff]
    %v3476 = vld [vmem:[#allocation10 + $0x98] sm:$0xff]
    %v3477 = vld [vmem:[#allocation10 + $0xa0] sm:$0xff]
    %v3478 = vld [vmem:[#allocation10 + $0xa8] sm:$0xff]
    %v3479 = vld [vmem:[#allocation10 + $0xb0] sm:$0xff]
    %v3480 = vld [vmem:[#allocation10 + $0xb8] sm:$0xff]
    %v3481 = vld [vmem:[#allocation10 + $0xc0] sm:$0xff]
    %v3482 = vld [vmem:[#allocation10 + $0xc8] sm:$0xff]
    %v3483 = vld [vmem:[#allocation10 + $0xd0] sm:$0xff]
    %v3484 = vld [vmem:[#allocation10 + $0xd8] sm:$0xff]
    %v3485 = vld [vmem:[#allocation10 + $0xe0] sm:$0xff]
    %v3486 = vld [vmem:[#allocation10 + $0xe8] sm:$0xff]
    %v3487 = vld [vmem:[#allocation10 + $0xf0] sm:$0xff]
    %v3488 = vld [vmem:[#allocation10 + $0xf8] sm:$0xff]
    %v3489 = vld [vmem:[#allocation10 + $0x100] sm:$0xff]
    %v3490 = vld [vmem:[#allocation10 + $0x108] sm:$0xff]
    %v3491 = vld [vmem:[#allocation10 + $0x110] sm:$0xff]
    %v3492 = vld [vmem:[#allocation10 + $0x118] sm:$0xff]
    %v3493 = vld [vmem:[#allocation10 + $0x120] sm:$0xff]
    %v3494 = vld [vmem:[#allocation10 + $0x128] sm:$0xff]
    %v3495 = vld [vmem:[#allocation10 + $0x130] sm:$0xff]
    %v3496 = vld [vmem:[#allocation10 + $0x138] sm:$0xff]
    %v3497 = vld [vmem:[#allocation10 + $0x140] sm:$0xff]
    %v3498 = vld [vmem:[#allocation10 + $0x148] sm:$0xff]
    %v3499 = vld [vmem:[#allocation10 + $0x150] sm:$0xff]
    %v3500 = vld [vmem:[#allocation10 + $0x158] sm:$0xff]
    %v3501 = vld [vmem:[#allocation10 + $0x160] sm:$0xff]
    %v3502 = vld [vmem:[#allocation10 + $0x168] sm:$0xff]
    %v3503 = vld [vmem:[#allocation10 + $0x170] sm:$0xff]
    %v3504 = vld [vmem:[#allocation10 + $0x178] sm:$0xff]
    %v3505 = vld [vmem:[#allocation10 + $0x180] sm:$0xff]
    %v3506 = vld [vmem:[#allocation10 + $0x188] sm:$0xff]
    %v3507 = vld [vmem:[#allocation10 + $0x190] sm:$0xff]
    %v3508 = vld [vmem:[#allocation10 + $0x198] sm:$0xff]
    %v3509 = vld [vmem:[#allocation10 + $0x1a0] sm:$0xff]
    %v3510 = vld [vmem:[#allocation10 + $0x1a8] sm:$0xff]
    %v3511 = vld [vmem:[#allocation10 + $0x1b0] sm:$0xff]
    %v3512 = vld [vmem:[#allocation10 + $0x1b8] sm:$0xff]
    %v3513 = vld [vmem:[#allocation10 + $0x1c0] sm:$0xff]
    %v3514 = vld [vmem:[#allocation10 + $0x1c8] sm:$0xff]
    %v3515 = vld [vmem:[#allocation10 + $0x1d0] sm:$0xff]
    %v3516 = vld [vmem:[#allocation10 + $0x1d8] sm:$0xff]
    %v3517 = vld [vmem:[#allocation10 + $0x1e0] sm:$0xff]
    %v3518 = vld [vmem:[#allocation10 + $0x1e8] sm:$0xff]
    %v3519 = vld [vmem:[#allocation10 + $0x1f0] sm:$0xff]
    %v3520 = vld [vmem:[#allocation10 + $0x1f8] sm:$0xff]
    %3521 = vmatprep.subr.mxu0 %v3458
    %3522 = vmatpush1.msra.mxu0 %v3457
    %3523 = vmatprep.subr.mxu0 %v3462
    %3524 = vmatpush1.msra.mxu0 %v3461
    %3525 = vmatprep.subr.mxu0 %v3466
    %3526 = vmatpush1.msra.mxu0 %v3465
    %3527 = vmatprep.subr.mxu0 %v3470
    %3528 = vmatpush1.msra.mxu0 %v3469
    %3529 = vmatprep.subr.mxu0 %v3474
    %3530 = vmatpush1.msra.mxu0 %v3473
    %3531 = vmatprep.subr.mxu0 %v3478
    %3532 = vmatpush1.msra.mxu0 %v3477
    %3533 = vmatprep.subr.mxu0 %v3482
    %3534 = vmatpush1.msra.mxu0 %v3481
    %3535 = vmatprep.subr.mxu0 %v3486
    %3536 = vmatpush1.msra.mxu0 %v3485
    %3537 = vmatprep.subr.mxu0 %v3490
    %3538 = vmatpush1.msra.mxu0 %v3489
    %3539 = vmatprep.subr.mxu0 %v3494
    %3540 = vmatpush1.msra.mxu0 %v3493
    %3541 = vmatprep.subr.mxu0 %v3498
    %3542 = vmatpush1.msra.mxu0 %v3497
    %3543 = vmatprep.subr.mxu0 %v3502
    %3544 = vmatpush1.msra.mxu0 %v3501
    %3545 = vmatprep.subr.mxu0 %v3506
    %3546 = vmatpush1.msra.mxu0 %v3505
    %3547 = vmatprep.subr.mxu0 %v3510
    %3548 = vmatpush1.msra.mxu0 %v3509
    %3549 = vmatprep.subr.mxu0 %v3514
    %3550 = vmatpush1.msra.mxu0 %v3513
    %3551 = vmatprep.subr.mxu0 %v3518
    %3552 = vmatpush1.msra.mxu0 %v3517
    %3553 = vmatprep.subr.mxu0 0.0
    %3554 = vmatpush1.msra.mxu0 0.0
    %3555 = vmatprep.subr.mxu0 0.0
    %3556 = vmatpush1.msra.mxu0 0.0
    %3557 = vmatprep.subr.mxu0 0.0
    %3558 = vmatpush1.msra.mxu0 0.0
    %3559 = vmatprep.subr.mxu0 0.0
    %3560 = vmatpush1.msra.mxu0 0.0
    %3561 = vmatprep.subr.mxu0 0.0
    %3562 = vmatpush1.msra.mxu0 0.0
    %3563 = vmatprep.subr.mxu0 0.0
    %3564 = vmatpush1.msra.mxu0 0.0
    %3565 = vmatprep.subr.mxu0 0.0
    %3566 = vmatpush1.msra.mxu0 0.0
    %3567 = vmatprep.subr.mxu0 0.0
    %3568 = vmatpush1.msra.mxu0 0.0
    %3569 = vmatprep.subr.mxu0 0.0
    %3570 = vmatpush1.msra.mxu0 0.0
    %3571 = vmatprep.subr.mxu0 0.0
    %3572 = vmatpush1.msra.mxu0 0.0
    %3573 = vmatprep.subr.mxu0 0.0
    %3574 = vmatpush1.msra.mxu0 0.0
    %3575 = vmatprep.subr.mxu0 0.0
    %3576 = vmatpush1.msra.mxu0 0.0
    %3577 = vmatprep.subr.mxu0 0.0
    %3578 = vmatpush1.msra.mxu0 0.0
    %3579 = vmatprep.subr.mxu0 0.0
    %3580 = vmatpush1.msra.mxu0 0.0
    %3581 = vmatprep.subr.mxu0 0.0
    %3582 = vmatpush1.msra.mxu0 0.0
    %3583 = vmatprep.subr.mxu0 0.0
    %3584 = vmatpush1.msra.mxu0 0.0
    %3585 = vmatprep.mubr.f32.mxu0 0.0
    %3586 = vmatmul.mubr.f32.gmra.mrb[0].mxu0 %v3451
    %v3587 = vpop.f32.mrb[0].mxu0
    %v3588 = vadd.f32 0.0, %v3587
    %v3589 = vpop.f32.mrb[0].mxu0
    %v3590 = vadd.f32 0.0, %v3589
    %3591 = vdwg.mxu0
    %3592 = vmatprep.subr.mxu0 %v3460
    %3593 = vmatpush1.msra.mxu0 %v3459
    %3594 = vmatprep.subr.mxu0 %v3464
    %3595 = vmatpush1.msra.mxu0 %v3463
    %3596 = vmatprep.subr.mxu0 %v3468
    %3597 = vmatpush1.msra.mxu0 %v3467
    %3598 = vmatprep.subr.mxu0 %v3472
    %3599 = vmatpush1.msra.mxu0 %v3471
    %3600 = vmatprep.subr.mxu0 %v3476
    %3601 = vmatpush1.msra.mxu0 %v3475
    %3602 = vmatprep.subr.mxu0 %v3480
    %3603 = vmatpush1.msra.mxu0 %v3479
    %3604 = vmatprep.subr.mxu0 %v3484
    %3605 = vmatpush1.msra.mxu0 %v3483
    %3606 = vmatprep.subr.mxu0 %v3488
    %3607 = vmatpush1.msra.mxu0 %v3487
    %3608 = vmatprep.subr.mxu0 %v3492
    %3609 = vmatpush1.msra.mxu0 %v3491
    %3610 = vmatprep.subr.mxu0 %v3496
    %3611 = vmatpush1.msra.mxu0 %v3495
    %3612 = vmatprep.subr.mxu0 %v3500
    %3613 = vmatpush1.msra.mxu0 %v3499
    %3614 = vmatprep.subr.mxu0 %v3504
    %3615 = vmatpush1.msra.mxu0 %v3503
    %3616 = vmatprep.subr.mxu0 %v3508
    %3617 = vmatpush1.msra.mxu0 %v3507
    %3618 = vmatprep.subr.mxu0 %v3512
    %3619 = vmatpush1.msra.mxu0 %v3511
    %3620 = vmatprep.subr.mxu0 %v3516
    %3621 = vmatpush1.msra.mxu0 %v3515
    %3622 = vmatprep.subr.mxu0 %v3520
    %3623 = vmatpush1.msra.mxu0 %v3519
    %3624 = vmatprep.subr.mxu0 0.0
    %3625 = vmatpush1.msra.mxu0 0.0
    %3626 = vmatprep.subr.mxu0 0.0
    %3627 = vmatpush1.msra.mxu0 0.0
    %3628 = vmatprep.subr.mxu0 0.0
    %3629 = vmatpush1.msra.mxu0 0.0
    %3630 = vmatprep.subr.mxu0 0.0
    %3631 = vmatpush1.msra.mxu0 0.0
    %3632 = vmatprep.subr.mxu0 0.0
    %3633 = vmatpush1.msra.mxu0 0.0
    %3634 = vmatprep.subr.mxu0 0.0
    %3635 = vmatpush1.msra.mxu0 0.0
    %3636 = vmatprep.subr.mxu0 0.0
    %3637 = vmatpush1.msra.mxu0 0.0
    %3638 = vmatprep.subr.mxu0 0.0
    %3639 = vmatpush1.msra.mxu0 0.0
    %3640 = vmatprep.subr.mxu0 0.0
    %3641 = vmatpush1.msra.mxu0 0.0
    %3642 = vmatprep.subr.mxu0 0.0
    %3643 = vmatpush1.msra.mxu0 0.0
    %3644 = vmatprep.subr.mxu0 0.0
    %3645 = vmatpush1.msra.mxu0 0.0
    %3646 = vmatprep.subr.mxu0 0.0
    %3647 = vmatpush1.msra.mxu0 0.0
    %3648 = vmatprep.subr.mxu0 0.0
    %3649 = vmatpush1.msra.mxu0 0.0
    %3650 = vmatprep.subr.mxu0 0.0
    %3651 = vmatpush1.msra.mxu0 0.0
    %3652 = vmatprep.subr.mxu0 0.0
    %3653 = vmatpush1.msra.mxu0 0.0
    %3654 = vmatprep.subr.mxu0 0.0
    %3655 = vmatpush1.msra.mxu0 0.0
    %3656 = vmatprep.mubr.f32.mxu0 0.0
    %3657 = vmatmul.mubr.f32.gmra.mrb[0].mxu0 %v3451
    %v3658 = vpop.f32.mrb[0].mxu0
    %v3659 = vadd.f32 0.0, %v3658
    %v3660 = vpop.f32.mrb[0].mxu0
    %v3661 = vadd.f32 0.0, %v3660
    %3662 = vdwg.mxu0
    %v3663 = vadd.f32 %v3453, %v3588
    %v3664 = vadd.f32 %v3454, %v3590
    %v3665 = vadd.f32 %v3455, %v3659
    %v3666 = vadd.f32 %v3456, %v3661
    %v3667 = vxor.u32 %v3663, 2147483648
    %v3668 = vmul.f32 %v3667, 1.442695
    %v3669 = vpow.pop %v3668
    %v3670 = vadd.f32 %v3669, 1.0
    %v3671 = vrcp.pop %v3670
    %v3672 = vmul.f32 1.0, %v3671
    %v3673 = vxor.u32 %v3664, 2147483648
    %v3674 = vmul.f32 %v3673, 1.442695
    %v3675 = vpow.pop %v3674
    %v3676 = vadd.f32 %v3675, 1.0
    %v3677 = vrcp.pop %v3676
    %v3678 = vmul.f32 1.0, %v3677
    %v3679 = vtanh.pop %v3665
    %v3680 = vxor.u32 %v3666, 2147483648
    %v3681 = vmul.f32 %v3680, 1.442695
    %v3682 = vpow.pop %v3681
    %v3683 = vadd.f32 %v3682, 1.0
    %v3684 = vrcp.pop %v3683
    %v3685 = vmul.f32 1.0, %v3684
    %v3686 = vmul.f32 %v3678, %v3452
    %v3687 = vmul.f32 %v3672, %v3679
    %v3688 = vadd.f32 %v3686, %v3687
    %v3689 = vtanh.pop %v3688
    %v3690 = vmul.f32 %v3685, %v3689
    %3691 = vst [vmem:[#allocation4] sm:$0xff] %v3690
    %3692 = vst [vmem:[#allocation5] sm:$0xff] %v3688
    %3693 = vst [vmem:[%s1386] sm:$0xff] %v3690
    %v3694 = vld [vmem:[#allocation4] sm:$0xff]
    %v3695 = vld [vmem:[#allocation5] sm:$0xff]
    %v3696 = vld [vmem:[%s1390] sm:$0xff]
    %v3697 = vld [vmem:[%s1390 + $0x8] sm:$0xff]
    %v3698 = vld [vmem:[%s1390 + $0x10] sm:$0xff]
    %v3699 = vld [vmem:[%s1390 + $0x18] sm:$0xff]
    %v3700 = vld [vmem:[#allocation10] sm:$0xff]
    %v3701 = vld [vmem:[#allocation10 + $0x8] sm:$0xff]
    %v3702 = vld [vmem:[#allocation10 + $0x10] sm:$0xff]
    %v3703 = vld [vmem:[#allocation10 + $0x18] sm:$0xff]
    %v3704 = vld [vmem:[#allocation10 + $0x20] sm:$0xff]
    %v3705 = vld [vmem:[#allocation10 + $0x28] sm:$0xff]
    %v3706 = vld [vmem:[#allocation10 + $0x30] sm:$0xff]
    %v3707 = vld [vmem:[#allocation10 + $0x38] sm:$0xff]
    %v3708 = vld [vmem:[#allocation10 + $0x40] sm:$0xff]
    %v3709 = vld [vmem:[#allocation10 + $0x48] sm:$0xff]
    %v3710 = vld [vmem:[#allocation10 + $0x50] sm:$0xff]
    %v3711 = vld [vmem:[#allocation10 + $0x58] sm:$0xff]
    %v3712 = vld [vmem:[#allocation10 + $0x60] sm:$0xff]
    %v3713 = vld [vmem:[#allocation10 + $0x68] sm:$0xff]
    %v3714 = vld [vmem:[#allocation10 + $0x70] sm:$0xff]
    %v3715 = vld [vmem:[#allocation10 + $0x78] sm:$0xff]
    %v3716 = vld [vmem:[#allocation10 + $0x80] sm:$0xff]
    %v3717 = vld [vmem:[#allocation10 + $0x88] sm:$0xff]
    %v3718 = vld [vmem:[#allocation10 + $0x90] sm:$0xff]
    %v3719 = vld [vmem:[#allocation10 + $0x98] sm:$0xff]
    %v3720 = vld [vmem:[#allocation10 + $0xa0] sm:$0xff]
    %v3721 = vld [vmem:[#allocation10 + $0xa8] sm:$0xff]
    %v3722 = vld [vmem:[#allocation10 + $0xb0] sm:$0xff]
    %v3723 = vld [vmem:[#allocation10 + $0xb8] sm:$0xff]
    %v3724 = vld [vmem:[#allocation10 + $0xc0] sm:$0xff]
    %v3725 = vld [vmem:[#allocation10 + $0xc8] sm:$0xff]
    %v3726 = vld [vmem:[#allocation10 + $0xd0] sm:$0xff]
    %v3727 = vld [vmem:[#allocation10 + $0xd8] sm:$0xff]
    %v3728 = vld [vmem:[#allocation10 + $0xe0] sm:$0xff]
    %v3729 = vld [vmem:[#allocation10 + $0xe8] sm:$0xff]
    %v3730 = vld [vmem:[#allocation10 + $0xf0] sm:$0xff]
    %v3731 = vld [vmem:[#allocation10 + $0xf8] sm:$0xff]
    %v3732 = vld [vmem:[#allocation10 + $0x100] sm:$0xff]
    %v3733 = vld [vmem:[#allocation10 + $0x108] sm:$0xff]
    %v3734 = vld [vmem:[#allocation10 + $0x110] sm:$0xff]
    %v3735 = vld [vmem:[#allocation10 + $0x118] sm:$0xff]
    %v3736 = vld [vmem:[#allocation10 + $0x120] sm:$0xff]
    %v3737 = vld [vmem:[#allocation10 + $0x128] sm:$0xff]
    %v3738 = vld [vmem:[#allocation10 + $0x130] sm:$0xff]
    %v3739 = vld [vmem:[#allocation10 + $0x138] sm:$0xff]
    %v3740 = vld [vmem:[#allocation10 + $0x140] sm:$0xff]
    %v3741 = vld [vmem:[#allocation10 + $0x148] sm:$0xff]
    %v3742 = vld [vmem:[#allocation10 + $0x150] sm:$0xff]
    %v3743 = vld [vmem:[#allocation10 + $0x158] sm:$0xff]
    %v3744 = vld [vmem:[#allocation10 + $0x160] sm:$0xff]
    %v3745 = vld [vmem:[#allocation10 + $0x168] sm:$0xff]
    %v3746 = vld [vmem:[#allocation10 + $0x170] sm:$0xff]
    %v3747 = vld [vmem:[#allocation10 + $0x178] sm:$0xff]
    %v3748 = vld [vmem:[#allocation10 + $0x180] sm:$0xff]
    %v3749 = vld [vmem:[#allocation10 + $0x188] sm:$0xff]
    %v3750 = vld [vmem:[#allocation10 + $0x190] sm:$0xff]
    %v3751 = vld [vmem:[#allocation10 + $0x198] sm:$0xff]
    %v3752 = vld [vmem:[#allocation10 + $0x1a0] sm:$0xff]
    %v3753 = vld [vmem:[#allocation10 + $0x1a8] sm:$0xff]
    %v3754 = vld [vmem:[#allocation10 + $0x1b0] sm:$0xff]
    %v3755 = vld [vmem:[#allocation10 + $0x1b8] sm:$0xff]
    %v3756 = vld [vmem:[#allocation10 + $0x1c0] sm:$0xff]
    %v3757 = vld [vmem:[#allocation10 + $0x1c8] sm:$0xff]
    %v3758 = vld [vmem:[#allocation10 + $0x1d0] sm:$0xff]
    %v3759 = vld [vmem:[#allocation10 + $0x1d8] sm:$0xff]
    %v3760 = vld [vmem:[#allocation10 + $0x1e0] sm:$0xff]
    %v3761 = vld [vmem:[#allocation10 + $0x1e8] sm:$0xff]
    %v3762 = vld [vmem:[#allocation10 + $0x1f0] sm:$0xff]
    %v3763 = vld [vmem:[#allocation10 + $0x1f8] sm:$0xff]
    %3764 = vmatprep.subr.mxu0 %v3701
    %3765 = vmatpush1.msra.mxu0 %v3700
    %3766 = vmatprep.subr.mxu0 %v3705
    %3767 = vmatpush1.msra.mxu0 %v3704
    %3768 = vmatprep.subr.mxu0 %v3709
    %3769 = vmatpush1.msra.mxu0 %v3708
    %3770 = vmatprep.subr.mxu0 %v3713
    %3771 = vmatpush1.msra.mxu0 %v3712
    %3772 = vmatprep.subr.mxu0 %v3717
    %3773 = vmatpush1.msra.mxu0 %v3716
    %3774 = vmatprep.subr.mxu0 %v3721
    %3775 = vmatpush1.msra.mxu0 %v3720
    %3776 = vmatprep.subr.mxu0 %v3725
    %3777 = vmatpush1.msra.mxu0 %v3724
    %3778 = vmatprep.subr.mxu0 %v3729
    %3779 = vmatpush1.msra.mxu0 %v3728
    %3780 = vmatprep.subr.mxu0 %v3733
    %3781 = vmatpush1.msra.mxu0 %v3732
    %3782 = vmatprep.subr.mxu0 %v3737
    %3783 = vmatpush1.msra.mxu0 %v3736
    %3784 = vmatprep.subr.mxu0 %v3741
    %3785 = vmatpush1.msra.mxu0 %v3740
    %3786 = vmatprep.subr.mxu0 %v3745
    %3787 = vmatpush1.msra.mxu0 %v3744
    %3788 = vmatprep.subr.mxu0 %v3749
    %3789 = vmatpush1.msra.mxu0 %v3748
    %3790 = vmatprep.subr.mxu0 %v3753
    %3791 = vmatpush1.msra.mxu0 %v3752
    %3792 = vmatprep.subr.mxu0 %v3757
    %3793 = vmatpush1.msra.mxu0 %v3756
    %3794 = vmatprep.subr.mxu0 %v3761
    %3795 = vmatpush1.msra.mxu0 %v3760
    %3796 = vmatprep.subr.mxu0 0.0
    %3797 = vmatpush1.msra.mxu0 0.0
    %3798 = vmatprep.subr.mxu0 0.0
    %3799 = vmatpush1.msra.mxu0 0.0
    %3800 = vmatprep.subr.mxu0 0.0
    %3801 = vmatpush1.msra.mxu0 0.0
    %3802 = vmatprep.subr.mxu0 0.0
    %3803 = vmatpush1.msra.mxu0 0.0
    %3804 = vmatprep.subr.mxu0 0.0
    %3805 = vmatpush1.msra.mxu0 0.0
    %3806 = vmatprep.subr.mxu0 0.0
    %3807 = vmatpush1.msra.mxu0 0.0
    %3808 = vmatprep.subr.mxu0 0.0
    %3809 = vmatpush1.msra.mxu0 0.0
    %3810 = vmatprep.subr.mxu0 0.0
    %3811 = vmatpush1.msra.mxu0 0.0
    %3812 = vmatprep.subr.mxu0 0.0
    %3813 = vmatpush1.msra.mxu0 0.0
    %3814 = vmatprep.subr.mxu0 0.0
    %3815 = vmatpush1.msra.mxu0 0.0
    %3816 = vmatprep.subr.mxu0 0.0
    %3817 = vmatpush1.msra.mxu0 0.0
    %3818 = vmatprep.subr.mxu0 0.0
    %3819 = vmatpush1.msra.mxu0 0.0
    %3820 = vmatprep.subr.mxu0 0.0
    %3821 = vmatpush1.msra.mxu0 0.0
    %3822 = vmatprep.subr.mxu0 0.0
    %3823 = vmatpush1.msra.mxu0 0.0
    %3824 = vmatprep.subr.mxu0 0.0
    %3825 = vmatpush1.msra.mxu0 0.0
    %3826 = vmatprep.subr.mxu0 0.0
    %3827 = vmatpush1.msra.mxu0 0.0
    %3828 = vmatprep.mubr.f32.mxu0 0.0
    %3829 = vmatmul.mubr.f32.gmra.mrb[0].mxu0 %v3694
    %v3830 = vpop.f32.mrb[0].mxu0
    %v3831 = vadd.f32 0.0, %v3830
    %v3832 = vpop.f32.mrb[0].mxu0
    %v3833 = vadd.f32 0.0, %v3832
    %3834 = vdwg.mxu0
    %3835 = vmatprep.subr.mxu0 %v3703
    %3836 = vmatpush1.msra.mxu0 %v3702
    %3837 = vmatprep.subr.mxu0 %v3707
    %3838 = vmatpush1.msra.mxu0 %v3706
    %3839 = vmatprep.subr.mxu0 %v3711
    %3840 = vmatpush1.msra.mxu0 %v3710
    %3841 = vmatprep.subr.mxu0 %v3715
    %3842 = vmatpush1.msra.mxu0 %v3714
    %3843 = vmatprep.subr.mxu0 %v3719
    %3844 = vmatpush1.msra.mxu0 %v3718
    %3845 = vmatprep.subr.mxu0 %v3723
    %3846 = vmatpush1.msra.mxu0 %v3722
    %3847 = vmatprep.subr.mxu0 %v3727
    %3848 = vmatpush1.msra.mxu0 %v3726
    %3849 = vmatprep.subr.mxu0 %v3731
    %3850 = vmatpush1.msra.mxu0 %v3730
    %3851 = vmatprep.subr.mxu0 %v3735
    %3852 = vmatpush1.msra.mxu0 %v3734
    %3853 = vmatprep.subr.mxu0 %v3739
    %3854 = vmatpush1.msra.mxu0 %v3738
    %3855 = vmatprep.subr.mxu0 %v3743
    %3856 = vmatpush1.msra.mxu0 %v3742
    %3857 = vmatprep.subr.mxu0 %v3747
    %3858 = vmatpush1.msra.mxu0 %v3746
    %3859 = vmatprep.subr.mxu0 %v3751
    %3860 = vmatpush1.msra.mxu0 %v3750
    %3861 = vmatprep.subr.mxu0 %v3755
    %3862 = vmatpush1.msra.mxu0 %v3754
    %3863 = vmatprep.subr.mxu0 %v3759
    %3864 = vmatpush1.msra.mxu0 %v3758
    %3865 = vmatprep.subr.mxu0 %v3763
    %3866 = vmatpush1.msra.mxu0 %v3762
    %3867 = vmatprep.subr.mxu0 0.0
    %3868 = vmatpush1.msra.mxu0 0.0
    %3869 = vmatprep.subr.mxu0 0.0
    %3870 = vmatpush1.msra.mxu0 0.0
    %3871 = vmatprep.subr.mxu0 0.0
    %3872 = vmatpush1.msra.mxu0 0.0
    %3873 = vmatprep.subr.mxu0 0.0
    %3874 = vmatpush1.msra.mxu0 0.0
    %3875 = vmatprep.subr.mxu0 0.0
    %3876 = vmatpush1.msra.mxu0 0.0
    %3877 = vmatprep.subr.mxu0 0.0
    %3878 = vmatpush1.msra.mxu0 0.0
    %3879 = vmatprep.subr.mxu0 0.0
    %3880 = vmatpush1.msra.mxu0 0.0
    %3881 = vmatprep.subr.mxu0 0.0
    %3882 = vmatpush1.msra.mxu0 0.0
    %3883 = vmatprep.subr.mxu0 0.0
    %3884 = vmatpush1.msra.mxu0 0.0
    %3885 = vmatprep.subr.mxu0 0.0
    %3886 = vmatpush1.msra.mxu0 0.0
    %3887 = vmatprep.subr.mxu0 0.0
    %3888 = vmatpush1.msra.mxu0 0.0
    %3889 = vmatprep.subr.mxu0 0.0
    %3890 = vmatpush1.msra.mxu0 0.0
    %3891 = vmatprep.subr.mxu0 0.0
    %3892 = vmatpush1.msra.mxu0 0.0
    %3893 = vmatprep.subr.mxu0 0.0
    %3894 = vmatpush1.msra.mxu0 0.0
    %3895 = vmatprep.subr.mxu0 0.0
    %3896 = vmatpush1.msra.mxu0 0.0
    %3897 = vmatprep.subr.mxu0 0.0
    %3898 = vmatpush1.msra.mxu0 0.0
    %3899 = vmatprep.mubr.f32.mxu0 0.0
    %3900 = vmatmul.mubr.f32.gmra.mrb[0].mxu0 %v3694
    %v3901 = vpop.f32.mrb[0].mxu0
    %v3902 = vadd.f32 0.0, %v3901
    %v3903 = vpop.f32.mrb[0].mxu0
    %v3904 = vadd.f32 0.0, %v3903
    %3905 = vdwg.mxu0
    %v3906 = vadd.f32 %v3696, %v3831
    %v3907 = vadd.f32 %v3697, %v3833
    %v3908 = vadd.f32 %v3698, %v3902
    %v3909 = vadd.f32 %v3699, %v3904
    %v3910 = vxor.u32 %v3906, 2147483648
    %v3911 = vmul.f32 %v3910, 1.442695
    %v3912 = vpow.pop %v3911
    %v3913 = vadd.f32 %v3912, 1.0
    %v3914 = vrcp.pop %v3913
    %v3915 = vmul.f32 1.0, %v3914
    %v3916 = vxor.u32 %v3907, 2147483648
    %v3917 = vmul.f32 %v3916, 1.442695
    %v3918 = vpow.pop %v3917
    %v3919 = vadd.f32 %v3918, 1.0
    %v3920 = vrcp.pop %v3919
    %v3921 = vmul.f32 1.0, %v3920
    %v3922 = vtanh.pop %v3908
    %v3923 = vxor.u32 %v3909, 2147483648
    %v3924 = vmul.f32 %v3923, 1.442695
    %v3925 = vpow.pop %v3924
    %v3926 = vadd.f32 %v3925, 1.0
    %v3927 = vrcp.pop %v3926
    %v3928 = vmul.f32 1.0, %v3927
    %v3929 = vmul.f32 %v3921, %v3695
    %v3930 = vmul.f32 %v3915, %v3922
    %v3931 = vadd.f32 %v3929, %v3930
    %v3932 = vtanh.pop %v3931
    %v3933 = vmul.f32 %v3928, %v3932
    %3934 = vst [vmem:[#allocation4] sm:$0xff] %v3933
    %3935 = vst [vmem:[#allocation5] sm:$0xff] %v3931
    %3936 = vst [vmem:[%s1631] sm:$0xff] %v3933
    %v3937 = vld [vmem:[#allocation4] sm:$0xff]
    %v3938 = vld [vmem:[#allocation5] sm:$0xff]
    %v3939 = vld [vmem:[%s1635] sm:$0xff]
    %v3940 = vld [vmem:[%s1635 + $0x8] sm:$0xff]
    %v3941 = vld [vmem:[%s1635 + $0x10] sm:$0xff]
    %v3942 = vld [vmem:[%s1635 + $0x18] sm:$0xff]
    %v3943 = vld [vmem:[#allocation10] sm:$0xff]
    %v3944 = vld [vmem:[#allocation10 + $0x8] sm:$0xff]
    %v3945 = vld [vmem:[#allocation10 + $0x10] sm:$0xff]
    %v3946 = vld [vmem:[#allocation10 + $0x18] sm:$0xff]
    %v3947 = vld [vmem:[#allocation10 + $0x20] sm:$0xff]
    %v3948 = vld [vmem:[#allocation10 + $0x28] sm:$0xff]
    %v3949 = vld [vmem:[#allocation10 + $0x30] sm:$0xff]
    %v3950 = vld [vmem:[#allocation10 + $0x38] sm:$0xff]
    %v3951 = vld [vmem:[#allocation10 + $0x40] sm:$0xff]
    %v3952 = vld [vmem:[#allocation10 + $0x48] sm:$0xff]
    %v3953 = vld [vmem:[#allocation10 + $0x50] sm:$0xff]
    %v3954 = vld [vmem:[#allocation10 + $0x58] sm:$0xff]
    %v3955 = vld [vmem:[#allocation10 + $0x60] sm:$0xff]
    %v3956 = vld [vmem:[#allocation10 + $0x68] sm:$0xff]
    %v3957 = vld [vmem:[#allocation10 + $0x70] sm:$0xff]
    %v3958 = vld [vmem:[#allocation10 + $0x78] sm:$0xff]
    %v3959 = vld [vmem:[#allocation10 + $0x80] sm:$0xff]
    %v3960 = vld [vmem:[#allocation10 + $0x88] sm:$0xff]
    %v3961 = vld [vmem:[#allocation10 + $0x90] sm:$0xff]
    %v3962 = vld [vmem:[#allocation10 + $0x98] sm:$0xff]
    %v3963 = vld [vmem:[#allocation10 + $0xa0] sm:$0xff]
    %v3964 = vld [vmem:[#allocation10 + $0xa8] sm:$0xff]
    %v3965 = vld [vmem:[#allocation10 + $0xb0] sm:$0xff]
    %v3966 = vld [vmem:[#allocation10 + $0xb8] sm:$0xff]
    %v3967 = vld [vmem:[#allocation10 + $0xc0] sm:$0xff]
    %v3968 = vld [vmem:[#allocation10 + $0xc8] sm:$0xff]
    %v3969 = vld [vmem:[#allocation10 + $0xd0] sm:$0xff]
    %v3970 = vld [vmem:[#allocation10 + $0xd8] sm:$0xff]
    %v3971 = vld [vmem:[#allocation10 + $0xe0] sm:$0xff]
    %v3972 = vld [vmem:[#allocation10 + $0xe8] sm:$0xff]
    %v3973 = vld [vmem:[#allocation10 + $0xf0] sm:$0xff]
    %v3974 = vld [vmem:[#allocation10 + $0xf8] sm:$0xff]
    %v3975 = vld [vmem:[#allocation10 + $0x100] sm:$0xff]
    %v3976 = vld [vmem:[#allocation10 + $0x108] sm:$0xff]
    %v3977 = vld [vmem:[#allocation10 + $0x110] sm:$0xff]
    %v3978 = vld [vmem:[#allocation10 + $0x118] sm:$0xff]
    %v3979 = vld [vmem:[#allocation10 + $0x120] sm:$0xff]
    %v3980 = vld [vmem:[#allocation10 + $0x128] sm:$0xff]
    %v3981 = vld [vmem:[#allocation10 + $0x130] sm:$0xff]
    %v3982 = vld [vmem:[#allocation10 + $0x138] sm:$0xff]
    %v3983 = vld [vmem:[#allocation10 + $0x140] sm:$0xff]
    %v3984 = vld [vmem:[#allocation10 + $0x148] sm:$0xff]
    %v3985 = vld [vmem:[#allocation10 + $0x150] sm:$0xff]
    %v3986 = vld [vmem:[#allocation10 + $0x158] sm:$0xff]
    %v3987 = vld [vmem:[#allocation10 + $0x160] sm:$0xff]
    %v3988 = vld [vmem:[#allocation10 + $0x168] sm:$0xff]
    %v3989 = vld [vmem:[#allocation10 + $0x170] sm:$0xff]
    %v3990 = vld [vmem:[#allocation10 + $0x178] sm:$0xff]
    %v3991 = vld [vmem:[#allocation10 + $0x180] sm:$0xff]
    %v3992 = vld [vmem:[#allocation10 + $0x188] sm:$0xff]
    %v3993 = vld [vmem:[#allocation10 + $0x190] sm:$0xff]
    %v3994 = vld [vmem:[#allocation10 + $0x198] sm:$0xff]
    %v3995 = vld [vmem:[#allocation10 + $0x1a0] sm:$0xff]
    %v3996 = vld [vmem:[#allocation10 + $0x1a8] sm:$0xff]
    %v3997 = vld [vmem:[#allocation10 + $0x1b0] sm:$0xff]
    %v3998 = vld [vmem:[#allocation10 + $0x1b8] sm:$0xff]
    %v3999 = vld [vmem:[#allocation10 + $0x1c0] sm:$0xff]
    %v4000 = vld [vmem:[#allocation10 + $0x1c8] sm:$0xff]
    %v4001 = vld [vmem:[#allocation10 + $0x1d0] sm:$0xff]
    %v4002 = vld [vmem:[#allocation10 + $0x1d8] sm:$0xff]
    %v4003 = vld [vmem:[#allocation10 + $0x1e0] sm:$0xff]
    %v4004 = vld [vmem:[#allocation10 + $0x1e8] sm:$0xff]
    %v4005 = vld [vmem:[#allocation10 + $0x1f0] sm:$0xff]
    %v4006 = vld [vmem:[#allocation10 + $0x1f8] sm:$0xff]
    %4007 = vmatprep.subr.mxu0 %v3944
    %4008 = vmatpush1.msra.mxu0 %v3943
    %4009 = vmatprep.subr.mxu0 %v3948
    %4010 = vmatpush1.msra.mxu0 %v3947
    %4011 = vmatprep.subr.mxu0 %v3952
    %4012 = vmatpush1.msra.mxu0 %v3951
    %4013 = vmatprep.subr.mxu0 %v3956
    %4014 = vmatpush1.msra.mxu0 %v3955
    %4015 = vmatprep.subr.mxu0 %v3960
    %4016 = vmatpush1.msra.mxu0 %v3959
    %4017 = vmatprep.subr.mxu0 %v3964
    %4018 = vmatpush1.msra.mxu0 %v3963
    %4019 = vmatprep.subr.mxu0 %v3968
    %4020 = vmatpush1.msra.mxu0 %v3967
    %4021 = vmatprep.subr.mxu0 %v3972
    %4022 = vmatpush1.msra.mxu0 %v3971
    %4023 = vmatprep.subr.mxu0 %v3976
    %4024 = vmatpush1.msra.mxu0 %v3975
    %4025 = vmatprep.subr.mxu0 %v3980
    %4026 = vmatpush1.msra.mxu0 %v3979
    %4027 = vmatprep.subr.mxu0 %v3984
    %4028 = vmatpush1.msra.mxu0 %v3983
    %4029 = vmatprep.subr.mxu0 %v3988
    %4030 = vmatpush1.msra.mxu0 %v3987
    %4031 = vmatprep.subr.mxu0 %v3992
    %4032 = vmatpush1.msra.mxu0 %v3991
    %4033 = vmatprep.subr.mxu0 %v3996
    %4034 = vmatpush1.msra.mxu0 %v3995
    %4035 = vmatprep.subr.mxu0 %v4000
    %4036 = vmatpush1.msra.mxu0 %v3999
    %4037 = vmatprep.subr.mxu0 %v4004
    %4038 = vmatpush1.msra.mxu0 %v4003
    %4039 = vmatprep.subr.mxu0 0.0
    %4040 = vmatpush1.msra.mxu0 0.0
    %4041 = vmatprep.subr.mxu0 0.0
    %4042 = vmatpush1.msra.mxu0 0.0
    %4043 = vmatprep.subr.mxu0 0.0
    %4044 = vmatpush1.msra.mxu0 0.0
    %4045 = vmatprep.subr.mxu0 0.0
    %4046 = vmatpush1.msra.mxu0 0.0
    %4047 = vmatprep.subr.mxu0 0.0
    %4048 = vmatpush1.msra.mxu0 0.0
    %4049 = vmatprep.subr.mxu0 0.0
    %4050 = vmatpush1.msra.mxu0 0.0
    %4051 = vmatprep.subr.mxu0 0.0
    %4052 = vmatpush1.msra.mxu0 0.0
    %4053 = vmatprep.subr.mxu0 0.0
    %4054 = vmatpush1.msra.mxu0 0.0
    %4055 = vmatprep.subr.mxu0 0.0
    %4056 = vmatpush1.msra.mxu0 0.0
    %4057 = vmatprep.subr.mxu0 0.0
    %4058 = vmatpush1.msra.mxu0 0.0
    %4059 = vmatprep.subr.mxu0 0.0
    %4060 = vmatpush1.msra.mxu0 0.0
    %4061 = vmatprep.subr.mxu0 0.0
    %4062 = vmatpush1.msra.mxu0 0.0
    %4063 = vmatprep.subr.mxu0 0.0
    %4064 = vmatpush1.msra.mxu0 0.0
    %4065 = vmatprep.subr.mxu0 0.0
    %4066 = vmatpush1.msra.mxu0 0.0
    %4067 = vmatprep.subr.mxu0 0.0
    %4068 = vmatpush1.msra.mxu0 0.0
    %4069 = vmatprep.subr.mxu0 0.0
    %4070 = vmatpush1.msra.mxu0 0.0
    %4071 = vmatprep.mubr.f32.mxu0 0.0
    %4072 = vmatmul.mubr.f32.gmra.mrb[0].mxu0 %v3937
    %v4073 = vpop.f32.mrb[0].mxu0
    %v4074 = vadd.f32 0.0, %v4073
    %v4075 = vpop.f32.mrb[0].mxu0
    %v4076 = vadd.f32 0.0, %v4075
    %4077 = vdwg.mxu0
    %4078 = vmatprep.subr.mxu0 %v3946
    %4079 = vmatpush1.msra.mxu0 %v3945
    %4080 = vmatprep.subr.mxu0 %v3950
    %4081 = vmatpush1.msra.mxu0 %v3949
    %4082 = vmatprep.subr.mxu0 %v3954
    %4083 = vmatpush1.msra.mxu0 %v3953
    %4084 = vmatprep.subr.mxu0 %v3958
    %4085 = vmatpush1.msra.mxu0 %v3957
    %4086 = vmatprep.subr.mxu0 %v3962
    %4087 = vmatpush1.msra.mxu0 %v3961
    %4088 = vmatprep.subr.mxu0 %v3966
    %4089 = vmatpush1.msra.mxu0 %v3965
    %4090 = vmatprep.subr.mxu0 %v3970
    %4091 = vmatpush1.msra.mxu0 %v3969
    %4092 = vmatprep.subr.mxu0 %v3974
    %4093 = vmatpush1.msra.mxu0 %v3973
    %4094 = vmatprep.subr.mxu0 %v3978
    %4095 = vmatpush1.msra.mxu0 %v3977
    %4096 = vmatprep.subr.mxu0 %v3982
    %4097 = vmatpush1.msra.mxu0 %v3981
    %4098 = vmatprep.subr.mxu0 %v3986
    %4099 = vmatpush1.msra.mxu0 %v3985
    %4100 = vmatprep.subr.mxu0 %v3990
    %4101 = vmatpush1.msra.mxu0 %v3989
    %4102 = vmatprep.subr.mxu0 %v3994
    %4103 = vmatpush1.msra.mxu0 %v3993
    %4104 = vmatprep.subr.mxu0 %v3998
    %4105 = vmatpush1.msra.mxu0 %v3997
    %4106 = vmatprep.subr.mxu0 %v4002
    %4107 = vmatpush1.msra.mxu0 %v4001
    %4108 = vmatprep.subr.mxu0 %v4006
    %4109 = vmatpush1.msra.mxu0 %v4005
    %4110 = vmatprep.subr.mxu0 0.0
    %4111 = vmatpush1.msra.mxu0 0.0
    %4112 = vmatprep.subr.mxu0 0.0
    %4113 = vmatpush1.msra.mxu0 0.0
    %4114 = vmatprep.subr.mxu0 0.0
    %4115 = vmatpush1.msra.mxu0 0.0
    %4116 = vmatprep.subr.mxu0 0.0
    %4117 = vmatpush1.msra.mxu0 0.0
    %4118 = vmatprep.subr.mxu0 0.0
    %4119 = vmatpush1.msra.mxu0 0.0
    %4120 = vmatprep.subr.mxu0 0.0
    %4121 = vmatpush1.msra.mxu0 0.0
    %4122 = vmatprep.subr.mxu0 0.0
    %4123 = vmatpush1.msra.mxu0 0.0
    %4124 = vmatprep.subr.mxu0 0.0
    %4125 = vmatpush1.msra.mxu0 0.0
    %4126 = vmatprep.subr.mxu0 0.0
    %4127 = vmatpush1.msra.mxu0 0.0
    %4128 = vmatprep.subr.mxu0 0.0
    %4129 = vmatpush1.msra.mxu0 0.0
    %4130 = vmatprep.subr.mxu0 0.0
    %4131 = vmatpush1.msra.mxu0 0.0
    %4132 = vmatprep.subr.mxu0 0.0
    %4133 = vmatpush1.msra.mxu0 0.0
    %4134 = vmatprep.subr.mxu0 0.0
    %4135 = vmatpush1.msra.mxu0 0.0
    %4136 = vmatprep.subr.mxu0 0.0
    %4137 = vmatpush1.msra.mxu0 0.0
    %4138 = vmatprep.subr.mxu0 0.0
    %4139 = vmatpush1.msra.mxu0 0.0
    %4140 = vmatprep.subr.mxu0 0.0
    %4141 = vmatpush1.msra.mxu0 0.0
    %4142 = vmatprep.mubr.f32.mxu0 0.0
    %4143 = vmatmul.mubr.f32.gmra.mrb[0].mxu0 %v3937
    %v4144 = vpop.f32.mrb[0].mxu0
    %v4145 = vadd.f32 0.0, %v4144
    %v4146 = vpop.f32.mrb[0].mxu0
    %v4147 = vadd.f32 0.0, %v4146
    %4148 = vdwg.mxu0
    %v4149 = vadd.f32 %v3939, %v4074
    %v4150 = vadd.f32 %v3940, %v4076
    %v4151 = vadd.f32 %v3941, %v4145
    %v4152 = vadd.f32 %v3942, %v4147
    %v4153 = vxor.u32 %v4149, 2147483648
    %v4154 = vmul.f32 %v4153, 1.442695
    %v4155 = vpow.pop %v4154
    %v4156 = vadd.f32 %v4155, 1.0
    %v4157 = vrcp.pop %v4156
    %v4158 = vmul.f32 1.0, %v4157
    %v4159 = vxor.u32 %v4150, 2147483648
    %v4160 = vmul.f32 %v4159, 1.442695
    %v4161 = vpow.pop %v4160
    %v4162 = vadd.f32 %v4161, 1.0
    %v4163 = vrcp.pop %v4162
    %v4164 = vmul.f32 1.0, %v4163
    %v4165 = vtanh.pop %v4151
    %v4166 = vxor.u32 %v4152, 2147483648
    %v4167 = vmul.f32 %v4166, 1.442695
    %v4168 = vpow.pop %v4167
    %v4169 = vadd.f32 %v4168, 1.0
    %v4170 = vrcp.pop %v4169
    %v4171 = vmul.f32 1.0, %v4170
    %v4172 = vmul.f32 %v4164, %v3938
    %v4173 = vmul.f32 %v4158, %v4165
    %v4174 = vadd.f32 %v4172, %v4173
    %v4175 = vtanh.pop %v4174
    %v4176 = vmul.f32 %v4171, %v4175
    %4177 = vst [vmem:[#allocation4] sm:$0xff] %v4176
    %4178 = vst [vmem:[#allocation5] sm:$0xff] %v4174
    %4179 = vst [vmem:[%s1876] sm:$0xff] %v4176
    %v4180 = vld [vmem:[#allocation4] sm:$0xff]
    %v4181 = vld [vmem:[#allocation5] sm:$0xff]
    %v4182 = vld [vmem:[%s1880] sm:$0xff]
    %v4183 = vld [vmem:[%s1880 + $0x8] sm:$0xff]
    %v4184 = vld [vmem:[%s1880 + $0x10] sm:$0xff]
    %v4185 = vld [vmem:[%s1880 + $0x18] sm:$0xff]
    %v4186 = vld [vmem:[#allocation10] sm:$0xff]
    %v4187 = vld [vmem:[#allocation10 + $0x8] sm:$0xff]
    %v4188 = vld [vmem:[#allocation10 + $0x10] sm:$0xff]
    %v4189 = vld [vmem:[#allocation10 + $0x18] sm:$0xff]
    %v4190 = vld [vmem:[#allocation10 + $0x20] sm:$0xff]
    %v4191 = vld [vmem:[#allocation10 + $0x28] sm:$0xff]
    %v4192 = vld [vmem:[#allocation10 + $0x30] sm:$0xff]
    %v4193 = vld [vmem:[#allocation10 + $0x38] sm:$0xff]
    %v4194 = vld [vmem:[#allocation10 + $0x40] sm:$0xff]
    %v4195 = vld [vmem:[#allocation10 + $0x48] sm:$0xff]
    %v4196 = vld [vmem:[#allocation10 + $0x50] sm:$0xff]
    %v4197 = vld [vmem:[#allocation10 + $0x58] sm:$0xff]
    %v4198 = vld [vmem:[#allocation10 + $0x60] sm:$0xff]
    %v4199 = vld [vmem:[#allocation10 + $0x68] sm:$0xff]
    %v4200 = vld [vmem:[#allocation10 + $0x70] sm:$0xff]
    %v4201 = vld [vmem:[#allocation10 + $0x78] sm:$0xff]
    %v4202 = vld [vmem:[#allocation10 + $0x80] sm:$0xff]
    %v4203 = vld [vmem:[#allocation10 + $0x88] sm:$0xff]
    %v4204 = vld [vmem:[#allocation10 + $0x90] sm:$0xff]
    %v4205 = vld [vmem:[#allocation10 + $0x98] sm:$0xff]
    %v4206 = vld [vmem:[#allocation10 + $0xa0] sm:$0xff]
    %v4207 = vld [vmem:[#allocation10 + $0xa8] sm:$0xff]
    %v4208 = vld [vmem:[#allocation10 + $0xb0] sm:$0xff]
    %v4209 = vld [vmem:[#allocation10 + $0xb8] sm:$0xff]
    %v4210 = vld [vmem:[#allocation10 + $0xc0] sm:$0xff]
    %v4211 = vld [vmem:[#allocation10 + $0xc8] sm:$0xff]
    %v4212 = vld [vmem:[#allocation10 + $0xd0] sm:$0xff]
    %v4213 = vld [vmem:[#allocation10 + $0xd8] sm:$0xff]
    %v4214 = vld [vmem:[#allocation10 + $0xe0] sm:$0xff]
    %v4215 = vld [vmem:[#allocation10 + $0xe8] sm:$0xff]
    %v4216 = vld [vmem:[#allocation10 + $0xf0] sm:$0xff]
    %v4217 = vld [vmem:[#allocation10 + $0xf8] sm:$0xff]
    %v4218 = vld [vmem:[#allocation10 + $0x100] sm:$0xff]
    %v4219 = vld [vmem:[#allocation10 + $0x108] sm:$0xff]
    %v4220 = vld [vmem:[#allocation10 + $0x110] sm:$0xff]
    %v4221 = vld [vmem:[#allocation10 + $0x118] sm:$0xff]
    %v4222 = vld [vmem:[#allocation10 + $0x120] sm:$0xff]
    %v4223 = vld [vmem:[#allocation10 + $0x128] sm:$0xff]
    %v4224 = vld [vmem:[#allocation10 + $0x130] sm:$0xff]
    %v4225 = vld [vmem:[#allocation10 + $0x138] sm:$0xff]
    %v4226 = vld [vmem:[#allocation10 + $0x140] sm:$0xff]
    %v4227 = vld [vmem:[#allocation10 + $0x148] sm:$0xff]
    %v4228 = vld [vmem:[#allocation10 + $0x150] sm:$0xff]
    %v4229 = vld [vmem:[#allocation10 + $0x158] sm:$0xff]
    %v4230 = vld [vmem:[#allocation10 + $0x160] sm:$0xff]
    %v4231 = vld [vmem:[#allocation10 + $0x168] sm:$0xff]
    %v4232 = vld [vmem:[#allocation10 + $0x170] sm:$0xff]
    %v4233 = vld [vmem:[#allocation10 + $0x178] sm:$0xff]
    %v4234 = vld [vmem:[#allocation10 + $0x180] sm:$0xff]
    %v4235 = vld [vmem:[#allocation10 + $0x188] sm:$0xff]
    %v4236 = vld [vmem:[#allocation10 + $0x190] sm:$0xff]
    %v4237 = vld [vmem:[#allocation10 + $0x198] sm:$0xff]
    %v4238 = vld [vmem:[#allocation10 + $0x1a0] sm:$0xff]
    %v4239 = vld [vmem:[#allocation10 + $0x1a8] sm:$0xff]
    %v4240 = vld [vmem:[#allocation10 + $0x1b0] sm:$0xff]
    %v4241 = vld [vmem:[#allocation10 + $0x1b8] sm:$0xff]
    %v4242 = vld [vmem:[#allocation10 + $0x1c0] sm:$0xff]
    %v4243 = vld [vmem:[#allocation10 + $0x1c8] sm:$0xff]
    %v4244 = vld [vmem:[#allocation10 + $0x1d0] sm:$0xff]
    %v4245 = vld [vmem:[#allocation10 + $0x1d8] sm:$0xff]
    %v4246 = vld [vmem:[#allocation10 + $0x1e0] sm:$0xff]
    %v4247 = vld [vmem:[#allocation10 + $0x1e8] sm:$0xff]
    %v4248 = vld [vmem:[#allocation10 + $0x1f0] sm:$0xff]
    %v4249 = vld [vmem:[#allocation10 + $0x1f8] sm:$0xff]
    %4250 = vmatprep.subr.mxu0 %v4187
    %4251 = vmatpush1.msra.mxu0 %v4186
    %4252 = vmatprep.subr.mxu0 %v4191
    %4253 = vmatpush1.msra.mxu0 %v4190
    %4254 = vmatprep.subr.mxu0 %v4195
    %4255 = vmatpush1.msra.mxu0 %v4194
    %4256 = vmatprep.subr.mxu0 %v4199
    %4257 = vmatpush1.msra.mxu0 %v4198
    %4258 = vmatprep.subr.mxu0 %v4203
    %4259 = vmatpush1.msra.mxu0 %v4202
    %4260 = vmatprep.subr.mxu0 %v4207
    %4261 = vmatpush1.msra.mxu0 %v4206
    %4262 = vmatprep.subr.mxu0 %v4211
    %4263 = vmatpush1.msra.mxu0 %v4210
    %4264 = vmatprep.subr.mxu0 %v4215
    %4265 = vmatpush1.msra.mxu0 %v4214
    %4266 = vmatprep.subr.mxu0 %v4219
    %4267 = vmatpush1.msra.mxu0 %v4218
    %4268 = vmatprep.subr.mxu0 %v4223
    %4269 = vmatpush1.msra.mxu0 %v4222
    %4270 = vmatprep.subr.mxu0 %v4227
    %4271 = vmatpush1.msra.mxu0 %v4226
    %4272 = vmatprep.subr.mxu0 %v4231
    %4273 = vmatpush1.msra.mxu0 %v4230
    %4274 = vmatprep.subr.mxu0 %v4235
    %4275 = vmatpush1.msra.mxu0 %v4234
    %4276 = vmatprep.subr.mxu0 %v4239
    %4277 = vmatpush1.msra.mxu0 %v4238
    %4278 = vmatprep.subr.mxu0 %v4243
    %4279 = vmatpush1.msra.mxu0 %v4242
    %4280 = vmatprep.subr.mxu0 %v4247
    %4281 = vmatpush1.msra.mxu0 %v4246
    %4282 = vmatprep.subr.mxu0 0.0
    %4283 = vmatpush1.msra.mxu0 0.0
    %4284 = vmatprep.subr.mxu0 0.0
    %4285 = vmatpush1.msra.mxu0 0.0
    %4286 = vmatprep.subr.mxu0 0.0
    %4287 = vmatpush1.msra.mxu0 0.0
    %4288 = vmatprep.subr.mxu0 0.0
    %4289 = vmatpush1.msra.mxu0 0.0
    %4290 = vmatprep.subr.mxu0 0.0
    %4291 = vmatpush1.msra.mxu0 0.0
    %4292 = vmatprep.subr.mxu0 0.0
    %4293 = vmatpush1.msra.mxu0 0.0
    %4294 = vmatprep.subr.mxu0 0.0
    %4295 = vmatpush1.msra.mxu0 0.0
    %4296 = vmatprep.subr.mxu0 0.0
    %4297 = vmatpush1.msra.mxu0 0.0
    %4298 = vmatprep.subr.mxu0 0.0
    %4299 = vmatpush1.msra.mxu0 0.0
    %4300 = vmatprep.subr.mxu0 0.0
    %4301 = vmatpush1.msra.mxu0 0.0
    %4302 = vmatprep.subr.mxu0 0.0
    %4303 = vmatpush1.msra.mxu0 0.0
    %4304 = vmatprep.subr.mxu0 0.0
    %4305 = vmatpush1.msra.mxu0 0.0
    %4306 = vmatprep.subr.mxu0 0.0
    %4307 = vmatpush1.msra.mxu0 0.0
    %4308 = vmatprep.subr.mxu0 0.0
    %4309 = vmatpush1.msra.mxu0 0.0
    %4310 = vmatprep.subr.mxu0 0.0
    %4311 = vmatpush1.msra.mxu0 0.0
    %4312 = vmatprep.subr.mxu0 0.0
    %4313 = vmatpush1.msra.mxu0 0.0
    %4314 = vmatprep.mubr.f32.mxu0 0.0
    %4315 = vmatmul.mubr.f32.gmra.mrb[0].mxu0 %v4180
    %v4316 = vpop.f32.mrb[0].mxu0
    %v4317 = vadd.f32 0.0, %v4316
    %v4318 = vpop.f32.mrb[0].mxu0
    %v4319 = vadd.f32 0.0, %v4318
    %4320 = vdwg.mxu0
    %4321 = vmatprep.subr.mxu0 %v4189
    %4322 = vmatpush1.msra.mxu0 %v4188
    %4323 = vmatprep.subr.mxu0 %v4193
    %4324 = vmatpush1.msra.mxu0 %v4192
    %4325 = vmatprep.subr.mxu0 %v4197
    %4326 = vmatpush1.msra.mxu0 %v4196
    %4327 = vmatprep.subr.mxu0 %v4201
    %4328 = vmatpush1.msra.mxu0 %v4200
    %4329 = vmatprep.subr.mxu0 %v4205
    %4330 = vmatpush1.msra.mxu0 %v4204
    %4331 = vmatprep.subr.mxu0 %v4209
    %4332 = vmatpush1.msra.mxu0 %v4208
    %4333 = vmatprep.subr.mxu0 %v4213
    %4334 = vmatpush1.msra.mxu0 %v4212
    %4335 = vmatprep.subr.mxu0 %v4217
    %4336 = vmatpush1.msra.mxu0 %v4216
    %4337 = vmatprep.subr.mxu0 %v4221
    %4338 = vmatpush1.msra.mxu0 %v4220
    %4339 = vmatprep.subr.mxu0 %v4225
    %4340 = vmatpush1.msra.mxu0 %v4224
    %4341 = vmatprep.subr.mxu0 %v4229
    %4342 = vmatpush1.msra.mxu0 %v4228
    %4343 = vmatprep.subr.mxu0 %v4233
    %4344 = vmatpush1.msra.mxu0 %v4232
    %4345 = vmatprep.subr.mxu0 %v4237
    %4346 = vmatpush1.msra.mxu0 %v4236
    %4347 = vmatprep.subr.mxu0 %v4241
    %4348 = vmatpush1.msra.mxu0 %v4240
    %4349 = vmatprep.subr.mxu0 %v4245
    %4350 = vmatpush1.msra.mxu0 %v4244
    %4351 = vmatprep.subr.mxu0 %v4249
    %4352 = vmatpush1.msra.mxu0 %v4248
    %4353 = vmatprep.subr.mxu0 0.0
    %4354 = vmatpush1.msra.mxu0 0.0
    %4355 = vmatprep.subr.mxu0 0.0
    %4356 = vmatpush1.msra.mxu0 0.0
    %4357 = vmatprep.subr.mxu0 0.0
    %4358 = vmatpush1.msra.mxu0 0.0
    %4359 = vmatprep.subr.mxu0 0.0
    %4360 = vmatpush1.msra.mxu0 0.0
    %4361 = vmatprep.subr.mxu0 0.0
    %4362 = vmatpush1.msra.mxu0 0.0
    %4363 = vmatprep.subr.mxu0 0.0
    %4364 = vmatpush1.msra.mxu0 0.0
    %4365 = vmatprep.subr.mxu0 0.0
    %4366 = vmatpush1.msra.mxu0 0.0
    %4367 = vmatprep.subr.mxu0 0.0
    %4368 = vmatpush1.msra.mxu0 0.0
    %4369 = vmatprep.subr.mxu0 0.0
    %4370 = vmatpush1.msra.mxu0 0.0
    %4371 = vmatprep.subr.mxu0 0.0
    %4372 = vmatpush1.msra.mxu0 0.0
    %4373 = vmatprep.subr.mxu0 0.0
    %4374 = vmatpush1.msra.mxu0 0.0
    %4375 = vmatprep.subr.mxu0 0.0
    %4376 = vmatpush1.msra.mxu0 0.0
    %4377 = vmatprep.subr.mxu0 0.0
    %4378 = vmatpush1.msra.mxu0 0.0
    %4379 = vmatprep.subr.mxu0 0.0
    %4380 = vmatpush1.msra.mxu0 0.0
    %4381 = vmatprep.subr.mxu0 0.0
    %4382 = vmatpush1.msra.mxu0 0.0
    %4383 = vmatprep.subr.mxu0 0.0
    %4384 = vmatpush1.msra.mxu0 0.0
    %4385 = vmatprep.mubr.f32.mxu0 0.0
    %4386 = vmatmul.mubr.f32.gmra.mrb[0].mxu0 %v4180
    %v4387 = vpop.f32.mrb[0].mxu0
    %v4388 = vadd.f32 0.0, %v4387
    %v4389 = vpop.f32.mrb[0].mxu0
    %v4390 = vadd.f32 0.0, %v4389
    %4391 = vdwg.mxu0
    %v4392 = vadd.f32 %v4182, %v4317
    %v4393 = vadd.f32 %v4183, %v4319
    %v4394 = vadd.f32 %v4184, %v4388
    %v4395 = vadd.f32 %v4185, %v4390
    %v4396 = vxor.u32 %v4392, 2147483648
    %v4397 = vmul.f32 %v4396, 1.442695
    %v4398 = vpow.pop %v4397
    %v4399 = vadd.f32 %v4398, 1.0
    %v4400 = vrcp.pop %v4399
    %v4401 = vmul.f32 1.0, %v4400
    %v4402 = vxor.u32 %v4393, 2147483648
    %v4403 = vmul.f32 %v4402, 1.442695
    %v4404 = vpow.pop %v4403
    %v4405 = vadd.f32 %v4404, 1.0
    %v4406 = vrcp.pop %v4405
    %v4407 = vmul.f32 1.0, %v4406
    %v4408 = vtanh.pop %v4394
    %v4409 = vxor.u32 %v4395, 2147483648
    %v4410 = vmul.f32 %v4409, 1.442695
    %v4411 = vpow.pop %v4410
    %v4412 = vadd.f32 %v4411, 1.0
    %v4413 = vrcp.pop %v4412
    %v4414 = vmul.f32 1.0, %v4413
    %v4415 = vmul.f32 %v4407, %v4181
    %v4416 = vmul.f32 %v4401, %v4408
    %v4417 = vadd.f32 %v4415, %v4416
    %v4418 = vtanh.pop %v4417
    %v4419 = vmul.f32 %v4414, %v4418
    %4420 = vst [vmem:[#allocation4] sm:$0xff] %v4419
    %4421 = vst [vmem:[#allocation5] sm:$0xff] %v4417
    %4422 = vst [vmem:[%s2121] sm:$0xff] %v4419
    %v4423 = vld [vmem:[#allocation4] sm:$0xff]
    %v4424 = vld [vmem:[#allocation5] sm:$0xff]
    %v4425 = vld [vmem:[%s2125] sm:$0xff]
    %v4426 = vld [vmem:[%s2125 + $0x8] sm:$0xff]
    %v4427 = vld [vmem:[%s2125 + $0x10] sm:$0xff]
    %v4428 = vld [vmem:[%s2125 + $0x18] sm:$0xff]
    %v4429 = vld [vmem:[#allocation10] sm:$0xff]
    %v4430 = vld [vmem:[#allocation10 + $0x8] sm:$0xff]
    %v4431 = vld [vmem:[#allocation10 + $0x10] sm:$0xff]
    %v4432 = vld [vmem:[#allocation10 + $0x18] sm:$0xff]
    %v4433 = vld [vmem:[#allocation10 + $0x20] sm:$0xff]
    %v4434 = vld [vmem:[#allocation10 + $0x28] sm:$0xff]
    %v4435 = vld [vmem:[#allocation10 + $0x30] sm:$0xff]
    %v4436 = vld [vmem:[#allocation10 + $0x38] sm:$0xff]
    %v4437 = vld [vmem:[#allocation10 + $0x40] sm:$0xff]
    %v4438 = vld [vmem:[#allocation10 + $0x48] sm:$0xff]
    %v4439 = vld [vmem:[#allocation10 + $0x50] sm:$0xff]
    %v4440 = vld [vmem:[#allocation10 + $0x58] sm:$0xff]
    %v4441 = vld [vmem:[#allocation10 + $0x60] sm:$0xff]
    %v4442 = vld [vmem:[#allocation10 + $0x68] sm:$0xff]
    %v4443 = vld [vmem:[#allocation10 + $0x70] sm:$0xff]
    %v4444 = vld [vmem:[#allocation10 + $0x78] sm:$0xff]
    %v4445 = vld [vmem:[#allocation10 + $0x80] sm:$0xff]
    %v4446 = vld [vmem:[#allocation10 + $0x88] sm:$0xff]
    %v4447 = vld [vmem:[#allocation10 + $0x90] sm:$0xff]
    %v4448 = vld [vmem:[#allocation10 + $0x98] sm:$0xff]
    %v4449 = vld [vmem:[#allocation10 + $0xa0] sm:$0xff]
    %v4450 = vld [vmem:[#allocation10 + $0xa8] sm:$0xff]
    %v4451 = vld [vmem:[#allocation10 + $0xb0] sm:$0xff]
    %v4452 = vld [vmem:[#allocation10 + $0xb8] sm:$0xff]
    %v4453 = vld [vmem:[#allocation10 + $0xc0] sm:$0xff]
    %v4454 = vld [vmem:[#allocation10 + $0xc8] sm:$0xff]
    %v4455 = vld [vmem:[#allocation10 + $0xd0] sm:$0xff]
    %v4456 = vld [vmem:[#allocation10 + $0xd8] sm:$0xff]
    %v4457 = vld [vmem:[#allocation10 + $0xe0] sm:$0xff]
    %v4458 = vld [vmem:[#allocation10 + $0xe8] sm:$0xff]
    %v4459 = vld [vmem:[#allocation10 + $0xf0] sm:$0xff]
    %v4460 = vld [vmem:[#allocation10 + $0xf8] sm:$0xff]
    %v4461 = vld [vmem:[#allocation10 + $0x100] sm:$0xff]
    %v4462 = vld [vmem:[#allocation10 + $0x108] sm:$0xff]
    %v4463 = vld [vmem:[#allocation10 + $0x110] sm:$0xff]
    %v4464 = vld [vmem:[#allocation10 + $0x118] sm:$0xff]
    %v4465 = vld [vmem:[#allocation10 + $0x120] sm:$0xff]
    %v4466 = vld [vmem:[#allocation10 + $0x128] sm:$0xff]
    %v4467 = vld [vmem:[#allocation10 + $0x130] sm:$0xff]
    %v4468 = vld [vmem:[#allocation10 + $0x138] sm:$0xff]
    %v4469 = vld [vmem:[#allocation10 + $0x140] sm:$0xff]
    %v4470 = vld [vmem:[#allocation10 + $0x148] sm:$0xff]
    %v4471 = vld [vmem:[#allocation10 + $0x150] sm:$0xff]
    %v4472 = vld [vmem:[#allocation10 + $0x158] sm:$0xff]
    %v4473 = vld [vmem:[#allocation10 + $0x160] sm:$0xff]
    %v4474 = vld [vmem:[#allocation10 + $0x168] sm:$0xff]
    %v4475 = vld [vmem:[#allocation10 + $0x170] sm:$0xff]
    %v4476 = vld [vmem:[#allocation10 + $0x178] sm:$0xff]
    %v4477 = vld [vmem:[#allocation10 + $0x180] sm:$0xff]
    %v4478 = vld [vmem:[#allocation10 + $0x188] sm:$0xff]
    %v4479 = vld [vmem:[#allocation10 + $0x190] sm:$0xff]
    %v4480 = vld [vmem:[#allocation10 + $0x198] sm:$0xff]
    %v4481 = vld [vmem:[#allocation10 + $0x1a0] sm:$0xff]
    %v4482 = vld [vmem:[#allocation10 + $0x1a8] sm:$0xff]
    %v4483 = vld [vmem:[#allocation10 + $0x1b0] sm:$0xff]
    %v4484 = vld [vmem:[#allocation10 + $0x1b8] sm:$0xff]
    %v4485 = vld [vmem:[#allocation10 + $0x1c0] sm:$0xff]
    %v4486 = vld [vmem:[#allocation10 + $0x1c8] sm:$0xff]
    %v4487 = vld [vmem:[#allocation10 + $0x1d0] sm:$0xff]
    %v4488 = vld [vmem:[#allocation10 + $0x1d8] sm:$0xff]
    %v4489 = vld [vmem:[#allocation10 + $0x1e0] sm:$0xff]
    %v4490 = vld [vmem:[#allocation10 + $0x1e8] sm:$0xff]
    %v4491 = vld [vmem:[#allocation10 + $0x1f0] sm:$0xff]
    %v4492 = vld [vmem:[#allocation10 + $0x1f8] sm:$0xff]
    %4493 = vmatprep.subr.mxu0 %v4430
    %4494 = vmatpush1.msra.mxu0 %v4429
    %4495 = vmatprep.subr.mxu0 %v4434
    %4496 = vmatpush1.msra.mxu0 %v4433
    %4497 = vmatprep.subr.mxu0 %v4438
    %4498 = vmatpush1.msra.mxu0 %v4437
    %4499 = vmatprep.subr.mxu0 %v4442
    %4500 = vmatpush1.msra.mxu0 %v4441
    %4501 = vmatprep.subr.mxu0 %v4446
    %4502 = vmatpush1.msra.mxu0 %v4445
    %4503 = vmatprep.subr.mxu0 %v4450
    %4504 = vmatpush1.msra.mxu0 %v4449
    %4505 = vmatprep.subr.mxu0 %v4454
    %4506 = vmatpush1.msra.mxu0 %v4453
    %4507 = vmatprep.subr.mxu0 %v4458
    %4508 = vmatpush1.msra.mxu0 %v4457
    %4509 = vmatprep.subr.mxu0 %v4462
    %4510 = vmatpush1.msra.mxu0 %v4461
    %4511 = vmatprep.subr.mxu0 %v4466
    %4512 = vmatpush1.msra.mxu0 %v4465
    %4513 = vmatprep.subr.mxu0 %v4470
    %4514 = vmatpush1.msra.mxu0 %v4469
    %4515 = vmatprep.subr.mxu0 %v4474
    %4516 = vmatpush1.msra.mxu0 %v4473
    %4517 = vmatprep.subr.mxu0 %v4478
    %4518 = vmatpush1.msra.mxu0 %v4477
    %4519 = vmatprep.subr.mxu0 %v4482
    %4520 = vmatpush1.msra.mxu0 %v4481
    %4521 = vmatprep.subr.mxu0 %v4486
    %4522 = vmatpush1.msra.mxu0 %v4485
    %4523 = vmatprep.subr.mxu0 %v4490
    %4524 = vmatpush1.msra.mxu0 %v4489
    %4525 = vmatprep.subr.mxu0 0.0
    %4526 = vmatpush1.msra.mxu0 0.0
    %4527 = vmatprep.subr.mxu0 0.0
    %4528 = vmatpush1.msra.mxu0 0.0
    %4529 = vmatprep.subr.mxu0 0.0
    %4530 = vmatpush1.msra.mxu0 0.0
    %4531 = vmatprep.subr.mxu0 0.0
    %4532 = vmatpush1.msra.mxu0 0.0
    %4533 = vmatprep.subr.mxu0 0.0
    %4534 = vmatpush1.msra.mxu0 0.0
    %4535 = vmatprep.subr.mxu0 0.0
    %4536 = vmatpush1.msra.mxu0 0.0
    %4537 = vmatprep.subr.mxu0 0.0
    %4538 = vmatpush1.msra.mxu0 0.0
    %4539 = vmatprep.subr.mxu0 0.0
    %4540 = vmatpush1.msra.mxu0 0.0
    %4541 = vmatprep.subr.mxu0 0.0
    %4542 = vmatpush1.msra.mxu0 0.0
    %4543 = vmatprep.subr.mxu0 0.0
    %4544 = vmatpush1.msra.mxu0 0.0
    %4545 = vmatprep.subr.mxu0 0.0
    %4546 = vmatpush1.msra.mxu0 0.0
    %4547 = vmatprep.subr.mxu0 0.0
    %4548 = vmatpush1.msra.mxu0 0.0
    %4549 = vmatprep.subr.mxu0 0.0
    %4550 = vmatpush1.msra.mxu0 0.0
    %4551 = vmatprep.subr.mxu0 0.0
    %4552 = vmatpush1.msra.mxu0 0.0
    %4553 = vmatprep.subr.mxu0 0.0
    %4554 = vmatpush1.msra.mxu0 0.0
    %4555 = vmatprep.subr.mxu0 0.0
    %4556 = vmatpush1.msra.mxu0 0.0
    %4557 = vmatprep.mubr.f32.mxu0 0.0
    %4558 = vmatmul.mubr.f32.gmra.mrb[0].mxu0 %v4423
    %v4559 = vpop.f32.mrb[0].mxu0
    %v4560 = vadd.f32 0.0, %v4559
    %v4561 = vpop.f32.mrb[0].mxu0
    %v4562 = vadd.f32 0.0, %v4561
    %4563 = vdwg.mxu0
    %4564 = vmatprep.subr.mxu0 %v4432
    %4565 = vmatpush1.msra.mxu0 %v4431
    %4566 = vmatprep.subr.mxu0 %v4436
    %4567 = vmatpush1.msra.mxu0 %v4435
    %4568 = vmatprep.subr.mxu0 %v4440
    %4569 = vmatpush1.msra.mxu0 %v4439
    %4570 = vmatprep.subr.mxu0 %v4444
    %4571 = vmatpush1.msra.mxu0 %v4443
    %4572 = vmatprep.subr.mxu0 %v4448
    %4573 = vmatpush1.msra.mxu0 %v4447
    %4574 = vmatprep.subr.mxu0 %v4452
    %4575 = vmatpush1.msra.mxu0 %v4451
    %4576 = vmatprep.subr.mxu0 %v4456
    %4577 = vmatpush1.msra.mxu0 %v4455
    %4578 = vmatprep.subr.mxu0 %v4460
    %4579 = vmatpush1.msra.mxu0 %v4459
    %4580 = vmatprep.subr.mxu0 %v4464
    %4581 = vmatpush1.msra.mxu0 %v4463
    %4582 = vmatprep.subr.mxu0 %v4468
    %4583 = vmatpush1.msra.mxu0 %v4467
    %4584 = vmatprep.subr.mxu0 %v4472
    %4585 = vmatpush1.msra.mxu0 %v4471
    %4586 = vmatprep.subr.mxu0 %v4476
    %4587 = vmatpush1.msra.mxu0 %v4475
    %4588 = vmatprep.subr.mxu0 %v4480
    %4589 = vmatpush1.msra.mxu0 %v4479
    %4590 = vmatprep.subr.mxu0 %v4484
    %4591 = vmatpush1.msra.mxu0 %v4483
    %4592 = vmatprep.subr.mxu0 %v4488
    %4593 = vmatpush1.msra.mxu0 %v4487
    %4594 = vmatprep.subr.mxu0 %v4492
    %4595 = vmatpush1.msra.mxu0 %v4491
    %4596 = vmatprep.subr.mxu0 0.0
    %4597 = vmatpush1.msra.mxu0 0.0
    %4598 = vmatprep.subr.mxu0 0.0
    %4599 = vmatpush1.msra.mxu0 0.0
    %4600 = vmatprep.subr.mxu0 0.0
    %4601 = vmatpush1.msra.mxu0 0.0
    %4602 = vmatprep.subr.mxu0 0.0
    %4603 = vmatpush1.msra.mxu0 0.0
    %4604 = vmatprep.subr.mxu0 0.0
    %4605 = vmatpush1.msra.mxu0 0.0
    %4606 = vmatprep.subr.mxu0 0.0
    %4607 = vmatpush1.msra.mxu0 0.0
    %4608 = vmatprep.subr.mxu0 0.0
    %4609 = vmatpush1.msra.mxu0 0.0
    %4610 = vmatprep.subr.mxu0 0.0
    %4611 = vmatpush1.msra.mxu0 0.0
    %4612 = vmatprep.subr.mxu0 0.0
    %4613 = vmatpush1.msra.mxu0 0.0
    %4614 = vmatprep.subr.mxu0 0.0
    %4615 = vmatpush1.msra.mxu0 0.0
    %4616 = vmatprep.subr.mxu0 0.0
    %4617 = vmatpush1.msra.mxu0 0.0
    %4618 = vmatprep.subr.mxu0 0.0
    %4619 = vmatpush1.msra.mxu0 0.0
    %4620 = vmatprep.subr.mxu0 0.0
    %4621 = vmatpush1.msra.mxu0 0.0
    %4622 = vmatprep.subr.mxu0 0.0
    %4623 = vmatpush1.msra.mxu0 0.0
    %4624 = vmatprep.subr.mxu0 0.0
    %4625 = vmatpush1.msra.mxu0 0.0
    %4626 = vmatprep.subr.mxu0 0.0
    %4627 = vmatpush1.msra.mxu0 0.0
    %4628 = vmatprep.mubr.f32.mxu0 0.0
    %4629 = vmatmul.mubr.f32.gmra.mrb[0].mxu0 %v4423
    %v4630 = vpop.f32.mrb[0].mxu0
    %v4631 = vadd.f32 0.0, %v4630
    %v4632 = vpop.f32.mrb[0].mxu0
    %v4633 = vadd.f32 0.0, %v4632
    %4634 = vdwg.mxu0
    %v4635 = vadd.f32 %v4425, %v4560
    %v4636 = vadd.f32 %v4426, %v4562
    %v4637 = vadd.f32 %v4427, %v4631
    %v4638 = vadd.f32 %v4428, %v4633
    %v4639 = vxor.u32 %v4635, 2147483648
    %v4640 = vmul.f32 %v4639, 1.442695
    %v4641 = vpow.pop %v4640
    %v4642 = vadd.f32 %v4641, 1.0
    %v4643 = vrcp.pop %v4642
    %v4644 = vmul.f32 1.0, %v4643
    %v4645 = vxor.u32 %v4636, 2147483648
    %v4646 = vmul.f32 %v4645, 1.442695
    %v4647 = vpow.pop %v4646
    %v4648 = vadd.f32 %v4647, 1.0
    %v4649 = vrcp.pop %v4648
    %v4650 = vmul.f32 1.0, %v4649
    %v4651 = vtanh.pop %v4637
    %v4652 = vxor.u32 %v4638, 2147483648
    %v4653 = vmul.f32 %v4652, 1.442695
    %v4654 = vpow.pop %v4653
    %v4655 = vadd.f32 %v4654, 1.0
    %v4656 = vrcp.pop %v4655
    %v4657 = vmul.f32 1.0, %v4656
    %v4658 = vmul.f32 %v4650, %v4424
    %v4659 = vmul.f32 %v4644, %v4651
    %v4660 = vadd.f32 %v4658, %v4659
    %v4661 = vtanh.pop %v4660
    %v4662 = vmul.f32 %v4657, %v4661
    %4663 = vst [vmem:[#allocation4] sm:$0xff] %v4662
    %4664 = vst [vmem:[#allocation5] sm:$0xff] %v4660
    %4665 = vst [vmem:[%s2366] sm:$0xff] %v4662
    %v4666 = vld [vmem:[#allocation4] sm:$0xff]
    %v4667 = vld [vmem:[#allocation11] sm:$0xff]
    %v4668 = vld [vmem:[#allocation11 + $0x8] sm:$0xff]
    %v4669 = vld [vmem:[#allocation11 + $0x10] sm:$0xff]
    %v4670 = vld [vmem:[#allocation11 + $0x18] sm:$0xff]
    %v4671 = vld [vmem:[#allocation11 + $0x20] sm:$0xff]
    %v4672 = vld [vmem:[#allocation11 + $0x28] sm:$0xff]
    %v4673 = vld [vmem:[#allocation11 + $0x30] sm:$0xff]
    %v4674 = vld [vmem:[#allocation11 + $0x38] sm:$0xff]
    %v4675 = vld [vmem:[#allocation11 + $0x40] sm:$0xff]
    %v4676 = vld [vmem:[#allocation11 + $0x48] sm:$0xff]
    %v4677 = vld [vmem:[#allocation11 + $0x50] sm:$0xff]
    %v4678 = vld [vmem:[#allocation11 + $0x58] sm:$0xff]
    %v4679 = vld [vmem:[#allocation11 + $0x60] sm:$0xff]
    %v4680 = vld [vmem:[#allocation11 + $0x68] sm:$0xff]
    %v4681 = vld [vmem:[#allocation11 + $0x70] sm:$0xff]
    %v4682 = vld [vmem:[#allocation11 + $0x78] sm:$0xff]
    %v4683 = vld [vmem:[%s8] sm:$0x1]
    %v4685 = vlaneseq
    %v4686 = vshrl.u32 %v4685, 7
    %v4687 = vsub.s32 0, %v4686
    %v4688 = vrot.slane %v4683, %v4687
    %4690 = vmatprep.subr.mxu0 0.0
    %4691 = vmatpush1.msra.mxu0 %v4667
    %4692 = vmatprep.subr.mxu0 0.0
    %4693 = vmatpush1.msra.mxu0 %v4668
    %4694 = vmatprep.subr.mxu0 0.0
    %4695 = vmatpush1.msra.mxu0 %v4669
    %4696 = vmatprep.subr.mxu0 0.0
    %4697 = vmatpush1.msra.mxu0 %v4670
    %4698 = vmatprep.subr.mxu0 0.0
    %4699 = vmatpush1.msra.mxu0 %v4671
    %4700 = vmatprep.subr.mxu0 0.0
    %4701 = vmatpush1.msra.mxu0 %v4672
    %4702 = vmatprep.subr.mxu0 0.0
    %4703 = vmatpush1.msra.mxu0 %v4673
    %4704 = vmatprep.subr.mxu0 0.0
    %4705 = vmatpush1.msra.mxu0 %v4674
    %4706 = vmatprep.subr.mxu0 0.0
    %4707 = vmatpush1.msra.mxu0 %v4675
    %4708 = vmatprep.subr.mxu0 0.0
    %4709 = vmatpush1.msra.mxu0 %v4676
    %4710 = vmatprep.subr.mxu0 0.0
    %4711 = vmatpush1.msra.mxu0 %v4677
    %4712 = vmatprep.subr.mxu0 0.0
    %4713 = vmatpush1.msra.mxu0 %v4678
    %4714 = vmatprep.subr.mxu0 0.0
    %4715 = vmatpush1.msra.mxu0 %v4679
    %4716 = vmatprep.subr.mxu0 0.0
    %4717 = vmatpush1.msra.mxu0 %v4680
    %4718 = vmatprep.subr.mxu0 0.0
    %4719 = vmatpush1.msra.mxu0 %v4681
    %4720 = vmatprep.subr.mxu0 0.0
    %4721 = vmatpush1.msra.mxu0 %v4682
    %4722 = vmatprep.subr.mxu0 0.0
    %4723 = vmatpush1.msra.mxu0 0.0
    %4724 = vmatprep.subr.mxu0 0.0
    %4725 = vmatpush1.msra.mxu0 0.0
    %4726 = vmatprep.subr.mxu0 0.0
    %4727 = vmatpush1.msra.mxu0 0.0
    %4728 = vmatprep.subr.mxu0 0.0
    %4729 = vmatpush1.msra.mxu0 0.0
    %4730 = vmatprep.subr.mxu0 0.0
    %4731 = vmatpush1.msra.mxu0 0.0
    %4732 = vmatprep.subr.mxu0 0.0
    %4733 = vmatpush1.msra.mxu0 0.0
    %4734 = vmatprep.subr.mxu0 0.0
    %4735 = vmatpush1.msra.mxu0 0.0
    %4736 = vmatprep.subr.mxu0 0.0
    %4737 = vmatpush1.msra.mxu0 0.0
    %4738 = vmatprep.subr.mxu0 0.0
    %4739 = vmatpush1.msra.mxu0 0.0
    %4740 = vmatprep.subr.mxu0 0.0
    %4741 = vmatpush1.msra.mxu0 0.0
    %4742 = vmatprep.subr.mxu0 0.0
    %4743 = vmatpush1.msra.mxu0 0.0
    %4744 = vmatprep.subr.mxu0 0.0
    %4745 = vmatpush1.msra.mxu0 0.0
    %4746 = vmatprep.subr.mxu0 0.0
    %4747 = vmatpush1.msra.mxu0 0.0
    %4748 = vmatprep.subr.mxu0 0.0
    %4749 = vmatpush1.msra.mxu0 0.0
    %4750 = vmatprep.subr.mxu0 0.0
    %4751 = vmatpush1.msra.mxu0 0.0
    %4752 = vmatprep.subr.mxu0 0.0
    %4753 = vmatpush1.msra.mxu0 0.0
    %4754 = vmatprep.mubr.f32.mxu0 0.0
    %4755 = vmatmul.mubr.f32.gmra.mrb[0].mxu0 %v4666
    %v4756 = vpop.f32.mrb[0].mxu0
    %v4757 = vadd.f32 %v4688, %v4756
    %v4758 = vpop.f32.mrb[0].mxu0
    %4759 = vdwg.mxu0
    %4760 = vst [vmem:[%s9] sm:$0xff] %v4757
    // Predicated region
    $region54: #{lstm_predictor_forward.1} parent=1 // pred_check
      _
    $region55: #{lstm_predictor_forward.1} parent=1 // pred_check_branch
      %4762 = sbr.rel (0) target = $region57
    $region56: #{lstm_predictor_forward.1} parent=1 // pred_region
      _
    $region57: #{lstm_predictor_forward.1} parent=1 // pred_fallthru
      _
    // Predicated region
    $region58: #{lstm_predictor_forward.1} parent=1 // pred_check
      _
    $region59: #{lstm_predictor_forward.1} parent=1 // pred_check_branch
      %4764 = sbr.rel (0) target = $region61
    $region60: #{lstm_predictor_forward.1} parent=1 // pred_region
      _
    $region61: #{lstm_predictor_forward.1} parent=1 // pred_fallthru
      _
    %4765 = vsyncpa [#allocation7], 1
    %4766 = vsyncpa [#allocation9], 1
    %4767 = vsyncpa [#allocation12], 1

</llo_original>
